<compile_context>
chip_gen: v5e
topology: v5e:2x2
jax: 0.10.0
libtpu: 0.0.40
codegen_flags: <defaults>
</compile_context>

<pallas_src>
import functools

import jax
import jax.numpy as jnp
from jax.experimental import pallas as pl
from jax.experimental.pallas import tpu as pltpu


# ---------------------------------------------------------------------------
# Fused kernel: all GRU layers + decoder in one invocation (grid = ()).
# Ref layout:
#   refs[0]                      : x            (T, B, C_in)
#   refs[1 + 10*l : 1 + 10*(l+1)]: layer l refs:
#       w_ir, w_iz, w_in  (in_dim, H)   -- pre-transposed, per-gate
#       w_hr, w_hz, w_hn  (H, H)        -- pre-transposed, per-gate
#       b_r, b_z          (1, H)        -- b_ih + b_hh pre-summed (r, z gates)
#       b_in, b_hn        (1, H)        -- n-gate biases kept separate
#   refs[1 + 10*L], refs[2 + 10*L]: decoder weight (1, H), bias (1, 1)
#   refs[3 + 10*L]               : output (B, 1)
#   refs[4 + 10*L : ]            : VMEM scratch: hseq, gi_r, gi_z, gi_n  (T,B,H)
# ---------------------------------------------------------------------------
def gru_model_kernel(num_layers, T, B, H, *refs):
    x_ref = refs[0]
    w_dec_ref = refs[1 + 10 * num_layers]
    b_dec_ref = refs[2 + 10 * num_layers]
    o_ref = refs[3 + 10 * num_layers]
    hseq_ref, gir_ref, giz_ref, gin_ref = refs[4 + 10 * num_layers:]

    h_last = None
    for layer in range(num_layers):
        (w_ir, w_iz, w_in, w_hr, w_hz, w_hn,
         b_r, b_z, b_in, b_hn) = refs[1 + 10 * layer: 1 + 10 * (layer + 1)]

        src = x_ref if layer == 0 else hseq_ref          # (T, B, in_dim)
        in_dim = src.shape[-1]

        # ---- hoisted input projection: one time-batched matmul per gate ----
        # (off the sequential path; MXU sees M = T*B rows instead of M = B)
        x2 = src[...].reshape(T * B, in_dim)
        gir_ref[...] = (jnp.dot(x2, w_ir[...], preferred_element_type=jnp.float32)
                        + b_r[...]).reshape(T, B, H)
        giz_ref[...] = (jnp.dot(x2, w_iz[...], preferred_element_type=jnp.float32)
                        + b_z[...]).reshape(T, B, H)
        gin_ref[...] = (jnp.dot(x2, w_in[...], preferred_element_type=jnp.float32)
                        + b_in[...]).reshape(T, B, H)

        # ---- sequential recurrence: only h @ W_hh + gate math per step -----
        w_hr_v = w_hr[...]
        w_hz_v = w_hz[...]
        w_hn_v = w_hn[...]
        b_hn_v = jnp.broadcast_to(b_hn[...], (B, H))     # hoisted broadcast
        is_last = layer == num_layers - 1

        def step(t, h_prev):
            gr = gir_ref[t]                               # (B, H)
            gz = giz_ref[t]
            gn = gin_ref[t]
            hr = jnp.dot(h_prev, w_hr_v, preferred_element_type=jnp.float32)
            hz = jnp.dot(h_prev, w_hz_v, preferred_element_type=jnp.float32)
            hn = jnp.dot(h_prev, w_hn_v, preferred_element_type=jnp.float32)
            # PyTorch GRU gate order: r, z, n
            r = jax.nn.sigmoid(gr + hr)
            z = jax.nn.sigmoid(gz + hz)
            n = jnp.tanh(gn + r * (hn + b_hn_v))
            h_new = (1.0 - z) * n + z * h_prev
            if not is_last:                               # static condition
                hseq_ref[t] = h_new                       # next layer's input
            return h_new

        h_last = jax.lax.fori_loop(0, T, step,
                                   jnp.zeros((B, H), jnp.float32),
                                   unroll=True)

    # ---- decoder: Linear(H, 1) on the last timestep's hidden state ----------
    o_ref[...] = (jnp.sum(h_last * w_dec_ref[...], axis=-1, keepdims=True)
                  + b_dec_ref[...])


# ---------------------------------------------------------------------------
# Wrapper: PyTorch-layout params -> per-gate, pre-transposed, bias-folded
# kernel arguments; single pallas_call for the whole forward pass.
# ---------------------------------------------------------------------------
@jax.jit
def gru_model_forward(x_bct, params):
    """x_bct: (B, C_in, T) -- same layout PyTorch's forward receives."""
    B, _, T = x_bct.shape
    H = params["gru"][0]["w_hh"].shape[1]
    L = len(params["gru"])

    # permute(0, 2, 1) -> (B, T, C); then time-major (T, B, C) for the kernel.
    x_tbc = jnp.transpose(x_bct, (2, 0, 1)).astype(jnp.float32)

    flat = []
    for lp in params["gru"]:
        w_ih, w_hh = lp["w_ih"], lp["w_hh"]          # (3H, in_dim), (3H, H)
        b_ih, b_hh = lp["b_ih"], lp["b_hh"]          # (3H,), (3H,)
        # split PyTorch gate order [r, z, n]; pre-transpose to (in, H)/(H, H)
        w_ir, w_iz, w_in = (w_ih[0:H].T, w_ih[H:2 * H].T, w_ih[2 * H:3 * H].T)
        w_hr, w_hz, w_hn = (w_hh[0:H].T, w_hh[H:2 * H].T, w_hh[2 * H:3 * H].T)
        b_r = (b_ih[0:H] + b_hh[0:H]).reshape(1, H)
        b_z = (b_ih[H:2 * H] + b_hh[H:2 * H]).reshape(1, H)
        b_in = b_ih[2 * H:3 * H].reshape(1, H)
        b_hn = b_hh[2 * H:3 * H].reshape(1, H)
        flat += [w_ir, w_iz, w_in, w_hr, w_hz, w_hn, b_r, b_z, b_in, b_hn]

    w_dec = params["w_dec"]                          # (1, H)
    b_dec = params["b_dec"].reshape(1, 1)

    kernel = functools.partial(gru_model_kernel, L, T, B, H)
    return pl.pallas_call(
        kernel,
        out_shape=jax.ShapeDtypeStruct((B, 1), jnp.float32),
        scratch_shapes=[
            pltpu.VMEM((T, B, H), jnp.float32),   # inter-layer hidden sequence
            pltpu.VMEM((T, B, H), jnp.float32),   # hoisted gi_r
            pltpu.VMEM((T, B, H), jnp.float32),   # hoisted gi_z
            pltpu.VMEM((T, B, H), jnp.float32),   # hoisted gi_n
        ],
    )(x_tbc, *flat, w_dec, b_dec)


# ---------------------------------------------------------------------------
# Parameter init mirroring PyTorch (uniform(-1/sqrt(H), 1/sqrt(H))).
# ---------------------------------------------------------------------------
def init_params(key, hidden_dim, num_layers, input_channels):
    bound = 1.0 / (hidden_dim ** 0.5)
    layers = []
    for layer in range(num_layers):
        in_dim = input_channels if layer == 0 else hidden_dim
        key, k1, k2, k3, k4 = jax.random.split(key, 5)
        layers.append(dict(
            w_ih=jax.random.uniform(k1, (3 * hidden_dim, in_dim), jnp.float32,
                                    -bound, bound),
            w_hh=jax.random.uniform(k2, (3 * hidden_dim, hidden_dim), jnp.float32,
                                    -bound, bound),
            b_ih=jax.random.uniform(k3, (3 * hidden_dim,), jnp.float32,
                                    -bound, bound),
            b_hh=jax.random.uniform(k4, (3 * hidden_dim,), jnp.float32,
                                    -bound, bound),
        ))
    key, k5, k6 = jax.random.split(key, 3)
    w_dec = jax.random.uniform(k5, (1, hidden_dim), jnp.float32, -bound, bound)
    b_dec = jax.random.uniform(k6, (1,), jnp.float32, -bound, bound)
    return {"gru": layers, "w_dec": w_dec, "b_dec": b_dec}


# ---------------------------------------------------------------------------
# Pure-JAX reference (lax.scan, PyTorch-layout weights) for verification.
# ---------------------------------------------------------------------------
def gru_model_ref(x_bct, params):
    x_tbc = jnp.transpose(x_bct, (2, 0, 1)).astype(jnp.float32)
    seq = x_tbc
    for lp in params["gru"]:
        w_ih, w_hh, b_ih, b_hh = lp["w_ih"], lp["w_hh"], lp["b_ih"], lp["b_hh"]
        H = w_hh.shape[1]
        B = seq.shape[1]

        def step(h_prev, x_t):
            gi = x_t @ w_ih.T + b_ih
            gh = h_prev @ w_hh.T + b_hh
            r = jax.nn.sigmoid(gi[:, 0:H] + gh[:, 0:H])
            z = jax.nn.sigmoid(gi[:, H:2 * H] + gh[:, H:2 * H])
            n = jnp.tanh(gi[:, 2 * H:3 * H] + r * gh[:, 2 * H:3 * H])
            h_new = (1.0 - z) * n + z * h_prev
            return h_new, h_new

        _, seq = jax.lax.scan(step, jnp.zeros((B, H), jnp.float32), seq)
    h_last = seq[-1]
    return h_last @ params["w_dec"].T + params["b_dec"].reshape(1, 1)


if __name__ == "__main__":
    B, C_IN, T = 2, 4, 16
    HIDDEN, NUM_LAYERS = 32, 2

    key = jax.random.PRNGKey(0)
    key_p, key_x = jax.random.split(key)
    params = init_params(key_p, HIDDEN, NUM_LAYERS, C_IN)

    # PyTorch-layout input: (B, C_in, T)
    x = jax.random.normal(key_x, (B, C_IN, T), dtype=jnp.float32)

    out = jax.block_until_ready(gru_model_forward(x, params))
    ref = jax.block_until_ready(gru_model_ref(x, params))

    assert out.shape == (B, 1), out.shape
    assert jnp.allclose(out, ref, atol=1e-3, rtol=1e-3), (out, ref)

    print("KERNEL_OK")
</pallas_src>

<mosaic_0001>
module attributes {stable_mosaic.version = 11 : i64} {
  func.func @gru_model_kernel(%arg0: memref<16x2x4xf32, #tpu.memory_space<vmem>>, %arg1: memref<4x32xf32, #tpu.memory_space<vmem>>, %arg2: memref<4x32xf32, #tpu.memory_space<vmem>>, %arg3: memref<4x32xf32, #tpu.memory_space<vmem>>, %arg4: memref<32x32xf32, #tpu.memory_space<vmem>>, %arg5: memref<32x32xf32, #tpu.memory_space<vmem>>, %arg6: memref<32x32xf32, #tpu.memory_space<vmem>>, %arg7: memref<1x32xf32, #tpu.memory_space<vmem>>, %arg8: memref<1x32xf32, #tpu.memory_space<vmem>>, %arg9: memref<1x32xf32, #tpu.memory_space<vmem>>, %arg10: memref<1x32xf32, #tpu.memory_space<vmem>>, %arg11: memref<32x32xf32, #tpu.memory_space<vmem>>, %arg12: memref<32x32xf32, #tpu.memory_space<vmem>>, %arg13: memref<32x32xf32, #tpu.memory_space<vmem>>, %arg14: memref<32x32xf32, #tpu.memory_space<vmem>>, %arg15: memref<32x32xf32, #tpu.memory_space<vmem>>, %arg16: memref<32x32xf32, #tpu.memory_space<vmem>>, %arg17: memref<1x32xf32, #tpu.memory_space<vmem>>, %arg18: memref<1x32xf32, #tpu.memory_space<vmem>>, %arg19: memref<1x32xf32, #tpu.memory_space<vmem>>, %arg20: memref<1x32xf32, #tpu.memory_space<vmem>>, %arg21: memref<1x32xf32, #tpu.memory_space<vmem>>, %arg22: memref<1x1xf32, #tpu.memory_space<vmem>>, %arg23: memref<2x1xf32, #tpu.memory_space<vmem>>, %arg24: memref<16x2x32xf32, #tpu.memory_space<vmem>>, %arg25: memref<16x2x32xf32, #tpu.memory_space<vmem>>, %arg26: memref<16x2x32xf32, #tpu.memory_space<vmem>>, %arg27: memref<16x2x32xf32, #tpu.memory_space<vmem>>) attributes {dimension_semantics = [], scalar_prefetch = 0 : i64, scratch_operands = 4 : i64, tpu.core_type = #tpu.core_type<tc>} {
    %c0 = arith.constant 0 : index
    %c0_0 = arith.constant 0 : index
    %c0_1 = arith.constant 0 : index
    %0 = vector.load %arg0[%c0, %c0_0, %c0_1] : memref<16x2x4xf32, #tpu.memory_space<vmem>>, vector<16x2x4xf32>
    %1 = vector.shape_cast %0 : vector<16x2x4xf32> to vector<32x4xf32>
    %c0_2 = arith.constant 0 : index
    %c0_3 = arith.constant 0 : index
    %2 = vector.load %arg1[%c0_2, %c0_3] : memref<4x32xf32, #tpu.memory_space<vmem>>, vector<4x32xf32>
    %cst = arith.constant dense<0.000000e+00> : vector<32x32xf32>
    %3 = tpu.matmul %1, %2, %cst {dimension_numbers = #tpu.dot_dimension_numbers<[1], [0], [0], [1], [0, 0, 1, 1], [], []>} : vector<32x4xf32>, vector<4x32xf32>, vector<32x32xf32> -> vector<32x32xf32>
    %c0_4 = arith.constant 0 : index
    %c0_5 = arith.constant 0 : index
    %4 = vector.load %arg7[%c0_4, %c0_5] : memref<1x32xf32, #tpu.memory_space<vmem>>, vector<1x32xf32>
    %5 = vector.broadcast %4 : vector<1x32xf32> to vector<32x32xf32>
    %6 = arith.addf %3, %5 : vector<32x32xf32>
    %7 = vector.shape_cast %6 : vector<32x32xf32> to vector<16x2x32xf32>
    %c0_6 = arith.constant 0 : index
    %c0_7 = arith.constant 0 : index
    %c0_8 = arith.constant 0 : index
    %8 = vector.load %arg25[%c0_6, %c0_7, %c0_8] : memref<16x2x32xf32, #tpu.memory_space<vmem>>, vector<16x2x32xf32>
    tpu.vector_store %arg25[%c0_6, %c0_7, %c0_8], %7 {strides = array<i32>} : memref<16x2x32xf32, #tpu.memory_space<vmem>>, vector<16x2x32xf32>,
    %c0_9 = arith.constant 0 : index
    %c0_10 = arith.constant 0 : index
    %9 = vector.load %arg2[%c0_9, %c0_10] : memref<4x32xf32, #tpu.memory_space<vmem>>, vector<4x32xf32>
    %cst_11 = arith.constant dense<0.000000e+00> : vector<32x32xf32>
    %10 = tpu.matmul %1, %9, %cst_11 {dimension_numbers = #tpu.dot_dimension_numbers<[1], [0], [0], [1], [0, 0, 1, 1], [], []>} : vector<32x4xf32>, vector<4x32xf32>, vector<32x32xf32> -> vector<32x32xf32>
    %c0_12 = arith.constant 0 : index
    %c0_13 = arith.constant 0 : index
    %11 = vector.load %arg8[%c0_12, %c0_13] : memref<1x32xf32, #tpu.memory_space<vmem>>, vector<1x32xf32>
    %12 = vector.broadcast %11 : vector<1x32xf32> to vector<32x32xf32>
    %13 = arith.addf %10, %12 : vector<32x32xf32>
    %14 = vector.shape_cast %13 : vector<32x32xf32> to vector<16x2x32xf32>
    %c0_14 = arith.constant 0 : index
    %c0_15 = arith.constant 0 : index
    %c0_16 = arith.constant 0 : index
    %15 = vector.load %arg26[%c0_14, %c0_15, %c0_16] : memref<16x2x32xf32, #tpu.memory_space<vmem>>, vector<16x2x32xf32>
    tpu.vector_store %arg26[%c0_14, %c0_15, %c0_16], %14 {strides = array<i32>} : memref<16x2x32xf32, #tpu.memory_space<vmem>>, vector<16x2x32xf32>,
    %c0_17 = arith.constant 0 : index
    %c0_18 = arith.constant 0 : index
    %16 = vector.load %arg3[%c0_17, %c0_18] : memref<4x32xf32, #tpu.memory_space<vmem>>, vector<4x32xf32>
    %cst_19 = arith.constant dense<0.000000e+00> : vector<32x32xf32>
    %17 = tpu.matmul %1, %16, %cst_19 {dimension_numbers = #tpu.dot_dimension_numbers<[1], [0], [0], [1], [0, 0, 1, 1], [], []>} : vector<32x4xf32>, vector<4x32xf32>, vector<32x32xf32> -> vector<32x32xf32>
    %c0_20 = arith.constant 0 : index
    %c0_21 = arith.constant 0 : index
    %18 = vector.load %arg9[%c0_20, %c0_21] : memref<1x32xf32, #tpu.memory_space<vmem>>, vector<1x32xf32>
    %19 = vector.broadcast %18 : vector<1x32xf32> to vector<32x32xf32>
    %20 = arith.addf %17, %19 : vector<32x32xf32>
    %21 = vector.shape_cast %20 : vector<32x32xf32> to vector<16x2x32xf32>
    %c0_22 = arith.constant 0 : index
    %c0_23 = arith.constant 0 : index
    %c0_24 = arith.constant 0 : index
    %22 = vector.load %arg27[%c0_22, %c0_23, %c0_24] : memref<16x2x32xf32, #tpu.memory_space<vmem>>, vector<16x2x32xf32>
    tpu.vector_store %arg27[%c0_22, %c0_23, %c0_24], %21 {strides = array<i32>} : memref<16x2x32xf32, #tpu.memory_space<vmem>>, vector<16x2x32xf32>,
    %c0_25 = arith.constant 0 : index
    %c0_26 = arith.constant 0 : index
    %23 = vector.load %arg4[%c0_25, %c0_26] : memref<32x32xf32, #tpu.memory_space<vmem>>, vector<32x32xf32>
    %c0_27 = arith.constant 0 : index
    %c0_28 = arith.constant 0 : index
    %24 = vector.load %arg5[%c0_27, %c0_28] : memref<32x32xf32, #tpu.memory_space<vmem>>, vector<32x32xf32>
    %c0_29 = arith.constant 0 : index
    %c0_30 = arith.constant 0 : index
    %25 = vector.load %arg6[%c0_29, %c0_30] : memref<32x32xf32, #tpu.memory_space<vmem>>, vector<32x32xf32>
    %c0_31 = arith.constant 0 : index
    %c0_32 = arith.constant 0 : index
    %26 = vector.load %arg10[%c0_31, %c0_32] : memref<1x32xf32, #tpu.memory_space<vmem>>, vector<1x32xf32>
    %27 = vector.shape_cast %26 : vector<1x32xf32> to vector<1x32xf32>
    %28 = vector.broadcast %27 : vector<1x32xf32> to vector<2x32xf32>
    %cst_33 = arith.constant 0.000000e+00 : f32
    %29 = vector.broadcast %cst_33 : f32 to vector<2x32xf32>
    %c0_i32 = arith.constant 0 : i32
    %30 = arith.index_cast %c0_i32 : i32 to index
    %c0_34 = arith.constant 0 : index
    %c0_35 = arith.constant 0 : index
    %31 = vector.load %arg25[%30, %c0_34, %c0_35] : memref<16x2x32xf32, #tpu.memory_space<vmem>>, vector<1x2x32xf32>
    %32 = vector.shape_cast %31 : vector<1x2x32xf32> to vector<2x32xf32>
    %33 = arith.index_cast %c0_i32 : i32 to index
    %c0_36 = arith.constant 0 : index
    %c0_37 = arith.constant 0 : index
    %34 = vector.load %arg26[%33, %c0_36, %c0_37] : memref<16x2x32xf32, #tpu.memory_space<vmem>>, vector<1x2x32xf32>
    %35 = vector.shape_cast %34 : vector<1x2x32xf32> to vector<2x32xf32>
    %36 = arith.index_cast %c0_i32 : i32 to index
    %c0_38 = arith.constant 0 : index
    %c0_39 = arith.constant 0 : index
    %37 = vector.load %arg27[%36, %c0_38, %c0_39] : memref<16x2x32xf32, #tpu.memory_space<vmem>>, vector<1x2x32xf32>
    %38 = vector.shape_cast %37 : vector<1x2x32xf32> to vector<2x32xf32>
    %cst_40 = arith.constant dense<0.000000e+00> : vector<2x32xf32>
    %39 = tpu.matmul %29, %23, %cst_40 {dimension_numbers = #tpu.dot_dimension_numbers<[1], [0], [0], [1], [0, 0, 1, 1], [], []>} : vector<2x32xf32>, vector<32x32xf32>, vector<2x32xf32> -> vector<2x32xf32>
    %cst_41 = arith.constant dense<0.000000e+00> : vector<2x32xf32>
    %40 = tpu.matmul %29, %24, %cst_41 {dimension_numbers = #tpu.dot_dimension_numbers<[1], [0], [0], [1], [0, 0, 1, 1], [], []>} : vector<2x32xf32>, vector<32x32xf32>, vector<2x32xf32> -> vector<2x32xf32>
    %cst_42 = arith.constant dense<0.000000e+00> : vector<2x32xf32>
    %41 = tpu.matmul %29, %25, %cst_42 {dimension_numbers = #tpu.dot_dimension_numbers<[1], [0], [0], [1], [0, 0, 1, 1], [], []>} : vector<2x32xf32>, vector<32x32xf32>, vector<2x32xf32> -> vector<2x32xf32>
    %42 = arith.addf %32, %39 : vector<2x32xf32>
    %43 = arith.negf %42 : vector<2x32xf32>
    %44 = math.exp %43 : vector<2x32xf32>
    %cst_43 = arith.constant 1.000000e+00 : f32
    %45 = vector.broadcast %cst_43 : f32 to vector<2x32xf32>
    %46 = arith.addf %45, %44 : vector<2x32xf32>
    %47 = arith.divf %45, %46 : vector<2x32xf32>
    %48 = arith.addf %35, %40 : vector<2x32xf32>
    %49 = arith.negf %48 : vector<2x32xf32>
    %50 = math.exp %49 : vector<2x32xf32>
    %cst_44 = arith.constant 1.000000e+00 : f32
    %51 = vector.broadcast %cst_44 : f32 to vector<2x32xf32>
    %52 = arith.addf %51, %50 : vector<2x32xf32>
    %53 = arith.divf %51, %52 : vector<2x32xf32>
    %54 = arith.addf %41, %28 : vector<2x32xf32>
    %55 = arith.mulf %47, %54 : vector<2x32xf32>
    %56 = arith.addf %38, %55 : vector<2x32xf32>
    %57 = math.tanh %56 : vector<2x32xf32>
    %cst_45 = arith.constant 1.000000e+00 : f32
    %58 = vector.broadcast %cst_45 : f32 to vector<2x32xf32>
    %59 = arith.subf %58, %53 : vector<2x32xf32>
    %60 = arith.mulf %59, %57 : vector<2x32xf32>
    %61 = arith.mulf %53, %29 : vector<2x32xf32>
    %62 = arith.addf %60, %61 : vector<2x32xf32>
    %63 = arith.index_cast %c0_i32 : i32 to index
    %c0_46 = arith.constant 0 : index
    %c0_47 = arith.constant 0 : index
    %64 = vector.load %arg24[%63, %c0_46, %c0_47] : memref<16x2x32xf32, #tpu.memory_space<vmem>>, vector<1x2x32xf32>
    %65 = vector.shape_cast %64 : vector<1x2x32xf32> to vector<2x32xf32>
    %66 = vector.shape_cast %62 : vector<2x32xf32> to vector<1x2x32xf32>
    tpu.vector_store %arg24[%63, %c0_46, %c0_47], %66 {strides = array<i32>} : memref<16x2x32xf32, #tpu.memory_space<vmem>>, vector<1x2x32xf32>,
    %c1_i32 = arith.constant 1 : i32
    %67 = arith.index_cast %c1_i32 : i32 to index
    %c0_48 = arith.constant 0 : index
    %c0_49 = arith.constant 0 : index
    %68 = vector.load %arg25[%67, %c0_48, %c0_49] : memref<16x2x32xf32, #tpu.memory_space<vmem>>, vector<1x2x32xf32>
    %69 = vector.shape_cast %68 : vector<1x2x32xf32> to vector<2x32xf32>
    %70 = arith.index_cast %c1_i32 : i32 to index
    %c0_50 = arith.constant 0 : index
    %c0_51 = arith.constant 0 : index
    %71 = vector.load %arg26[%70, %c0_50, %c0_51] : memref<16x2x32xf32, #tpu.memory_space<vmem>>, vector<1x2x32xf32>
    %72 = vector.shape_cast %71 : vector<1x2x32xf32> to vector<2x32xf32>
    %73 = arith.index_cast %c1_i32 : i32 to index
    %c0_52 = arith.constant 0 : index
    %c0_53 = arith.constant 0 : index
    %74 = vector.load %arg27[%73, %c0_52, %c0_53] : memref<16x2x32xf32, #tpu.memory_space<vmem>>, vector<1x2x32xf32>
    %75 = vector.shape_cast %74 : vector<1x2x32xf32> to vector<2x32xf32>
    %cst_54 = arith.constant dense<0.000000e+00> : vector<2x32xf32>
    %76 = tpu.matmul %62, %23, %cst_54 {dimension_numbers = #tpu.dot_dimension_numbers<[1], [0], [0], [1], [0, 0, 1, 1], [], []>} : vector<2x32xf32>, vector<32x32xf32>, vector<2x32xf32> -> vector<2x32xf32>
    %cst_55 = arith.constant dense<0.000000e+00> : vector<2x32xf32>
    %77 = tpu.matmul %62, %24, %cst_55 {dimension_numbers = #tpu.dot_dimension_numbers<[1], [0], [0], [1], [0, 0, 1, 1], [], []>} : vector<2x32xf32>, vector<32x32xf32>, vector<2x32xf32> -> vector<2x32xf32>
    %cst_56 = arith.constant dense<0.000000e+00> : vector<2x32xf32>
    %78 = tpu.matmul %62, %25, %cst_56 {dimension_numbers = #tpu.dot_dimension_numbers<[1], [0], [0], [1], [0, 0, 1, 1], [], []>} : vector<2x32xf32>, vector<32x32xf32>, vector<2x32xf32> -> vector<2x32xf32>
    %79 = arith.addf %69, %76 : vector<2x32xf32>
    %80 = arith.negf %79 : vector<2x32xf32>
    %81 = math.exp %80 : vector<2x32xf32>
    %cst_57 = arith.constant 1.000000e+00 : f32
    %82 = vector.broadcast %cst_57 : f32 to vector<2x32xf32>
    %83 = arith.addf %82, %81 : vector<2x32xf32>
    %84 = arith.divf %82, %83 : vector<2x32xf32>
    %85 = arith.addf %72, %77 : vector<2x32xf32>
    %86 = arith.negf %85 : vector<2x32xf32>
    %87 = math.exp %86 : vector<2x32xf32>
    %cst_58 = arith.constant 1.000000e+00 : f32
    %88 = vector.broadcast %cst_58 : f32 to vector<2x32xf32>
    %89 = arith.addf %88, %87 : vector<2x32xf32>
    %90 = arith.divf %88, %89 : vector<2x32xf32>
    %91 = arith.addf %78, %28 : vector<2x32xf32>
    %92 = arith.mulf %84, %91 : vector<2x32xf32>
    %93 = arith.addf %75, %92 : vector<2x32xf32>
    %94 = math.tanh %93 : vector<2x32xf32>
    %cst_59 = arith.constant 1.000000e+00 : f32
    %95 = vector.broadcast %cst_59 : f32 to vector<2x32xf32>
    %96 = arith.subf %95, %90 : vector<2x32xf32>
    %97 = arith.mulf %96, %94 : vector<2x32xf32>
    %98 = arith.mulf %90, %62 : vector<2x32xf32>
    %99 = arith.addf %97, %98 : vector<2x32xf32>
    %100 = arith.index_cast %c1_i32 : i32 to index
    %c0_60 = arith.constant 0 : index
    %c0_61 = arith.constant 0 : index
    %101 = vector.load %arg24[%100, %c0_60, %c0_61] : memref<16x2x32xf32, #tpu.memory_space<vmem>>, vector<1x2x32xf32>
    %102 = vector.shape_cast %101 : vector<1x2x32xf32> to vector<2x32xf32>
    %103 = vector.shape_cast %99 : vector<2x32xf32> to vector<1x2x32xf32>
    tpu.vector_store %arg24[%100, %c0_60, %c0_61], %103 {strides = array<i32>} : memref<16x2x32xf32, #tpu.memory_space<vmem>>, vector<1x2x32xf32>,
    %c2_i32 = arith.constant 2 : i32
    %104 = arith.index_cast %c2_i32 : i32 to index
    %c0_62 = arith.constant 0 : index
    %c0_63 = arith.constant 0 : index
    %105 = vector.load %arg25[%104, %c0_62, %c0_63] : memref<16x2x32xf32, #tpu.memory_space<vmem>>, vector<1x2x32xf32>
    %106 = vector.shape_cast %105 : vector<1x2x32xf32> to vector<2x32xf32>
    %107 = arith.index_cast %c2_i32 : i32 to index
    %c0_64 = arith.constant 0 : index
    %c0_65 = arith.constant 0 : index
    %108 = vector.load %arg26[%107, %c0_64, %c0_65] : memref<16x2x32xf32, #tpu.memory_space<vmem>>, vector<1x2x32xf32>
    %109 = vector.shape_cast %108 : vector<1x2x32xf32> to vector<2x32xf32>
    %110 = arith.index_cast %c2_i32 : i32 to index
    %c0_66 = arith.constant 0 : index
    %c0_67 = arith.constant 0 : index
    %111 = vector.load %arg27[%110, %c0_66, %c0_67] : memref<16x2x32xf32, #tpu.memory_space<vmem>>, vector<1x2x32xf32>
    %112 = vector.shape_cast %111 : vector<1x2x32xf32> to vector<2x32xf32>
    %cst_68 = arith.constant dense<0.000000e+00> : vector<2x32xf32>
    %113 = tpu.matmul %99, %23, %cst_68 {dimension_numbers = #tpu.dot_dimension_numbers<[1], [0], [0], [1], [0, 0, 1, 1], [], []>} : vector<2x32xf32>, vector<32x32xf32>, vector<2x32xf32> -> vector<2x32xf32>
    %cst_69 = arith.constant dense<0.000000e+00> : vector<2x32xf32>
    %114 = tpu.matmul %99, %24, %cst_69 {dimension_numbers = #tpu.dot_dimension_numbers<[1], [0], [0], [1], [0, 0, 1, 1], [], []>} : vector<2x32xf32>, vector<32x32xf32>, vector<2x32xf32> -> vector<2x32xf32>
    %cst_70 = arith.constant dense<0.000000e+00> : vector<2x32xf32>
    %115 = tpu.matmul %99, %25, %cst_70 {dimension_numbers = #tpu.dot_dimension_numbers<[1], [0], [0], [1], [0, 0, 1, 1], [], []>} : vector<2x32xf32>, vector<32x32xf32>, vector<2x32xf32> -> vector<2x32xf32>
    %116 = arith.addf %106, %113 : vector<2x32xf32>
    %117 = arith.negf %116 : vector<2x32xf32>
    %118 = math.exp %117 : vector<2x32xf32>
    %cst_71 = arith.constant 1.000000e+00 : f32
    %119 = vector.broadcast %cst_71 : f32 to vector<2x32xf32>
    %120 = arith.addf %119, %118 : vector<2x32xf32>
    %121 = arith.divf %119, %120 : vector<2x32xf32>
    %122 = arith.addf %109, %114 : vector<2x32xf32>
    %123 = arith.negf %122 : vector<2x32xf32>
    %124 = math.exp %123 : vector<2x32xf32>
    %cst_72 = arith.constant 1.000000e+00 : f32
    %125 = vector.broadcast %cst_72 : f32 to vector<2x32xf32>
    %126 = arith.addf %125, %124 : vector<2x32xf32>
    %127 = arith.divf %125, %126 : vector<2x32xf32>
    %128 = arith.addf %115, %28 : vector<2x32xf32>
    %129 = arith.mulf %121, %128 : vector<2x32xf32>
    %130 = arith.addf %112, %129 : vector<2x32xf32>
    %131 = math.tanh %130 : vector<2x32xf32>
    %cst_73 = arith.constant 1.000000e+00 : f32
    %132 = vector.broadcast %cst_73 : f32 to vector<2x32xf32>
    %133 = arith.subf %132, %127 : vector<2x32xf32>
    %134 = arith.mulf %133, %131 : vector<2x32xf32>
    %135 = arith.mulf %127, %99 : vector<2x32xf32>
    %136 = arith.addf %134, %135 : vector<2x32xf32>
    %137 = arith.index_cast %c2_i32 : i32 to index
    %c0_74 = arith.constant 0 : index
    %c0_75 = arith.constant 0 : index
    %138 = vector.load %arg24[%137, %c0_74, %c0_75] : memref<16x2x32xf32, #tpu.memory_space<vmem>>, vector<1x2x32xf32>
    %139 = vector.shape_cast %138 : vector<1x2x32xf32> to vector<2x32xf32>
    %140 = vector.shape_cast %136 : vector<2x32xf32> to vector<1x2x32xf32>
    tpu.vector_store %arg24[%137, %c0_74, %c0_75], %140 {strides = array<i32>} : memref<16x2x32xf32, #tpu.memory_space<vmem>>, vector<1x2x32xf32>,
    %c3_i32 = arith.constant 3 : i32
    %141 = arith.index_cast %c3_i32 : i32 to index
    %c0_76 = arith.constant 0 : index
    %c0_77 = arith.constant 0 : index
    %142 = vector.load %arg25[%141, %c0_76, %c0_77] : memref<16x2x32xf32, #tpu.memory_space<vmem>>, vector<1x2x32xf32>
    %143 = vector.shape_cast %142 : vector<1x2x32xf32> to vector<2x32xf32>
    %144 = arith.index_cast %c3_i32 : i32 to index
    %c0_78 = arith.constant 0 : index
    %c0_79 = arith.constant 0 : index
    %145 = vector.load %arg26[%144, %c0_78, %c0_79] : memref<16x2x32xf32, #tpu.memory_space<vmem>>, vector<1x2x32xf32>
    %146 = vector.shape_cast %145 : vector<1x2x32xf32> to vector<2x32xf32>
    %147 = arith.index_cast %c3_i32 : i32 to index
    %c0_80 = arith.constant 0 : index
    %c0_81 = arith.constant 0 : index
    %148 = vector.load %arg27[%147, %c0_80, %c0_81] : memref<16x2x32xf32, #tpu.memory_space<vmem>>, vector<1x2x32xf32>
    %149 = vector.shape_cast %148 : vector<1x2x32xf32> to vector<2x32xf32>
    %cst_82 = arith.constant dense<0.000000e+00> : vector<2x32xf32>
    %150 = tpu.matmul %136, %23, %cst_82 {dimension_numbers = #tpu.dot_dimension_numbers<[1], [0], [0], [1], [0, 0, 1, 1], [], []>} : vector<2x32xf32>, vector<32x32xf32>, vector<2x32xf32> -> vector<2x32xf32>
    %cst_83 = arith.constant dense<0.000000e+00> : vector<2x32xf32>
    %151 = tpu.matmul %136, %24, %cst_83 {dimension_numbers = #tpu.dot_dimension_numbers<[1], [0], [0], [1], [0, 0, 1, 1], [], []>} : vector<2x32xf32>, vector<32x32xf32>, vector<2x32xf32> -> vector<2x32xf32>
    %cst_84 = arith.constant dense<0.000000e+00> : vector<2x32xf32>
    %152 = tpu.matmul %136, %25, %cst_84 {dimension_numbers = #tpu.dot_dimension_numbers<[1], [0], [0], [1], [0, 0, 1, 1], [], []>} : vector<2x32xf32>, vector<32x32xf32>, vector<2x32xf32> -> vector<2x32xf32>
    %153 = arith.addf %143, %150 : vector<2x32xf32>
    %154 = arith.negf %153 : vector<2x32xf32>
    %155 = math.exp %154 : vector<2x32xf32>
    %cst_85 = arith.constant 1.000000e+00 : f32
    %156 = vector.broadcast %cst_85 : f32 to vector<2x32xf32>
    %157 = arith.addf %156, %155 : vector<2x32xf32>
    %158 = arith.divf %156, %157 : vector<2x32xf32>
    %159 = arith.addf %146, %151 : vector<2x32xf32>
    %160 = arith.negf %159 : vector<2x32xf32>
    %161 = math.exp %160 : vector<2x32xf32>
    %cst_86 = arith.constant 1.000000e+00 : f32
    %162 = vector.broadcast %cst_86 : f32 to vector<2x32xf32>
    %163 = arith.addf %162, %161 : vector<2x32xf32>
    %164 = arith.divf %162, %163 : vector<2x32xf32>
    %165 = arith.addf %152, %28 : vector<2x32xf32>
    %166 = arith.mulf %158, %165 : vector<2x32xf32>
    %167 = arith.addf %149, %166 : vector<2x32xf32>
    %168 = math.tanh %167 : vector<2x32xf32>
    %cst_87 = arith.constant 1.000000e+00 : f32
    %169 = vector.broadcast %cst_87 : f32 to vector<2x32xf32>
    %170 = arith.subf %169, %164 : vector<2x32xf32>
    %171 = arith.mulf %170, %168 : vector<2x32xf32>
    %172 = arith.mulf %164, %136 : vector<2x32xf32>
    %173 = arith.addf %171, %172 : vector<2x32xf32>
    %174 = arith.index_cast %c3_i32 : i32 to index
    %c0_88 = arith.constant 0 : index
    %c0_89 = arith.constant 0 : index
    %175 = vector.load %arg24[%174, %c0_88, %c0_89] : memref<16x2x32xf32, #tpu.memory_space<vmem>>, vector<1x2x32xf32>
    %176 = vector.shape_cast %175 : vector<1x2x32xf32> to vector<2x32xf32>
    %177 = vector.shape_cast %173 : vector<2x32xf32> to vector<1x2x32xf32>
    tpu.vector_store %arg24[%174, %c0_88, %c0_89], %177 {strides = array<i32>} : memref<16x2x32xf32, #tpu.memory_space<vmem>>, vector<1x2x32xf32>,
    %c4_i32 = arith.constant 4 : i32
    %178 = arith.index_cast %c4_i32 : i32 to index
    %c0_90 = arith.constant 0 : index
    %c0_91 = arith.constant 0 : index
    %179 = vector.load %arg25[%178, %c0_90, %c0_91] : memref<16x2x32xf32, #tpu.memory_space<vmem>>, vector<1x2x32xf32>
    %180 = vector.shape_cast %179 : vector<1x2x32xf32> to vector<2x32xf32>
    %181 = arith.index_cast %c4_i32 : i32 to index
    %c0_92 = arith.constant 0 : index
    %c0_93 = arith.constant 0 : index
    %182 = vector.load %arg26[%181, %c0_92, %c0_93] : memref<16x2x32xf32, #tpu.memory_space<vmem>>, vector<1x2x32xf32>
    %183 = vector.shape_cast %182 : vector<1x2x32xf32> to vector<2x32xf32>
    %184 = arith.index_cast %c4_i32 : i32 to index
    %c0_94 = arith.constant 0 : index
    %c0_95 = arith.constant 0 : index
    %185 = vector.load %arg27[%184, %c0_94, %c0_95] : memref<16x2x32xf32, #tpu.memory_space<vmem>>, vector<1x2x32xf32>
    %186 = vector.shape_cast %185 : vector<1x2x32xf32> to vector<2x32xf32>
    %cst_96 = arith.constant dense<0.000000e+00> : vector<2x32xf32>
    %187 = tpu.matmul %173, %23, %cst_96 {dimension_numbers = #tpu.dot_dimension_numbers<[1], [0], [0], [1], [0, 0, 1, 1], [], []>} : vector<2x32xf32>, vector<32x32xf32>, vector<2x32xf32> -> vector<2x32xf32>
    %cst_97 = arith.constant dense<0.000000e+00> : vector<2x32xf32>
    %188 = tpu.matmul %173, %24, %cst_97 {dimension_numbers = #tpu.dot_dimension_numbers<[1], [0], [0], [1], [0, 0, 1, 1], [], []>} : vector<2x32xf32>, vector<32x32xf32>, vector<2x32xf32> -> vector<2x32xf32>
    %cst_98 = arith.constant dense<0.000000e+00> : vector<2x32xf32>
    %189 = tpu.matmul %173, %25, %cst_98 {dimension_numbers = #tpu.dot_dimension_numbers<[1], [0], [0], [1], [0, 0, 1, 1], [], []>} : vector<2x32xf32>, vector<32x32xf32>, vector<2x32xf32> -> vector<2x32xf32>
    %190 = arith.addf %180, %187 : vector<2x32xf32>
    %191 = arith.negf %190 : vector<2x32xf32>
    %192 = math.exp %191 : vector<2x32xf32>
    %cst_99 = arith.constant 1.000000e+00 : f32
    %193 = vector.broadcast %cst_99 : f32 to vector<2x32xf32>
    %194 = arith.addf %193, %192 : vector<2x32xf32>
    %195 = arith.divf %193, %194 : vector<2x32xf32>
    %196 = arith.addf %183, %188 : vector<2x32xf32>
    %197 = arith.negf %196 : vector<2x32xf32>
    %198 = math.exp %197 : vector<2x32xf32>
    %cst_100 = arith.constant 1.000000e+00 : f32
    %199 = vector.broadcast %cst_100 : f32 to vector<2x32xf32>
    %200 = arith.addf %199, %198 : vector<2x32xf32>
    %201 = arith.divf %199, %200 : vector<2x32xf32>
    %202 = arith.addf %189, %28 : vector<2x32xf32>
    %203 = arith.mulf %195, %202 : vector<2x32xf32>
    %204 = arith.addf %186, %203 : vector<2x32xf32>
    %205 = math.tanh %204 : vector<2x32xf32>
    %cst_101 = arith.constant 1.000000e+00 : f32
    %206 = vector.broadcast %cst_101 : f32 to vector<2x32xf32>
    %207 = arith.subf %206, %201 : vector<2x32xf32>
    %208 = arith.mulf %207, %205 : vector<2x32xf32>
    %209 = arith.mulf %201, %173 : vector<2x32xf32>
    %210 = arith.addf %208, %209 : vector<2x32xf32>
    %211 = arith.index_cast %c4_i32 : i32 to index
    %c0_102 = arith.constant 0 : index
    %c0_103 = arith.constant 0 : index
    %212 = vector.load %arg24[%211, %c0_102, %c0_103] : memref<16x2x32xf32, #tpu.memory_space<vmem>>, vector<1x2x32xf32>
    %213 = vector.shape_cast %212 : vector<1x2x32xf32> to vector<2x32xf32>
    %214 = vector.shape_cast %210 : vector<2x32xf32> to vector<1x2x32xf32>
    tpu.vector_store %arg24[%211, %c0_102, %c0_103], %214 {strides = array<i32>} : memref<16x2x32xf32, #tpu.memory_space<vmem>>, vector<1x2x32xf32>,
    %c5_i32 = arith.constant 5 : i32
    %215 = arith.index_cast %c5_i32 : i32 to index
    %c0_104 = arith.constant 0 : index
    %c0_105 = arith.constant 0 : index
    %216 = vector.load %arg25[%215, %c0_104, %c0_105] : memref<16x2x32xf32, #tpu.memory_space<vmem>>, vector<1x2x32xf32>
    %217 = vector.shape_cast %216 : vector<1x2x32xf32> to vector<2x32xf32>
    %218 = arith.index_cast %c5_i32 : i32 to index
    %c0_106 = arith.constant 0 : index
    %c0_107 = arith.constant 0 : index
    %219 = vector.load %arg26[%218, %c0_106, %c0_107] : memref<16x2x32xf32, #tpu.memory_space<vmem>>, vector<1x2x32xf32>
    %220 = vector.shape_cast %219 : vector<1x2x32xf32> to vector<2x32xf32>
    %221 = arith.index_cast %c5_i32 : i32 to index
    %c0_108 = arith.constant 0 : index
    %c0_109 = arith.constant 0 : index
    %222 = vector.load %arg27[%221, %c0_108, %c0_109] : memref<16x2x32xf32, #tpu.memory_space<vmem>>, vector<1x2x32xf32>
    %223 = vector.shape_cast %222 : vector<1x2x32xf32> to vector<2x32xf32>
    %cst_110 = arith.constant dense<0.000000e+00> : vector<2x32xf32>
    %224 = tpu.matmul %210, %23, %cst_110 {dimension_numbers = #tpu.dot_dimension_numbers<[1], [0], [0], [1], [0, 0, 1, 1], [], []>} : vector<2x32xf32>, vector<32x32xf32>, vector<2x32xf32> -> vector<2x32xf32>
    %cst_111 = arith.constant dense<0.000000e+00> : vector<2x32xf32>
    %225 = tpu.matmul %210, %24, %cst_111 {dimension_numbers = #tpu.dot_dimension_numbers<[1], [0], [0], [1], [0, 0, 1, 1], [], []>} : vector<2x32xf32>, vector<32x32xf32>, vector<2x32xf32> -> vector<2x32xf32>
    %cst_112 = arith.constant dense<0.000000e+00> : vector<2x32xf32>
    %226 = tpu.matmul %210, %25, %cst_112 {dimension_numbers = #tpu.dot_dimension_numbers<[1], [0], [0], [1], [0, 0, 1, 1], [], []>} : vector<2x32xf32>, vector<32x32xf32>, vector<2x32xf32> -> vector<2x32xf32>
    %227 = arith.addf %217, %224 : vector<2x32xf32>
    %228 = arith.negf %227 : vector<2x32xf32>
    %229 = math.exp %228 : vector<2x32xf32>
    %cst_113 = arith.constant 1.000000e+00 : f32
    %230 = vector.broadcast %cst_113 : f32 to vector<2x32xf32>
    %231 = arith.addf %230, %229 : vector<2x32xf32>
    %232 = arith.divf %230, %231 : vector<2x32xf32>
    %233 = arith.addf %220, %225 : vector<2x32xf32>
    %234 = arith.negf %233 : vector<2x32xf32>
    %235 = math.exp %234 : vector<2x32xf32>
    %cst_114 = arith.constant 1.000000e+00 : f32
    %236 = vector.broadcast %cst_114 : f32 to vector<2x32xf32>
    %237 = arith.addf %236, %235 : vector<2x32xf32>
    %238 = arith.divf %236, %237 : vector<2x32xf32>
    %239 = arith.addf %226, %28 : vector<2x32xf32>
    %240 = arith.mulf %232, %239 : vector<2x32xf32>
    %241 = arith.addf %223, %240 : vector<2x32xf32>
    %242 = math.tanh %241 : vector<2x32xf32>
    %cst_115 = arith.constant 1.000000e+00 : f32
    %243 = vector.broadcast %cst_115 : f32 to vector<2x32xf32>
    %244 = arith.subf %243, %238 : vector<2x32xf32>
    %245 = arith.mulf %244, %242 : vector<2x32xf32>
    %246 = arith.mulf %238, %210 : vector<2x32xf32>
    %247 = arith.addf %245, %246 : vector<2x32xf32>
    %248 = arith.index_cast %c5_i32 : i32 to index
    %c0_116 = arith.constant 0 : index
    %c0_117 = arith.constant 0 : index
    %249 = vector.load %arg24[%248, %c0_116, %c0_117] : memref<16x2x32xf32, #tpu.memory_space<vmem>>, vector<1x2x32xf32>
    %250 = vector.shape_cast %249 : vector<1x2x32xf32> to vector<2x32xf32>
    %251 = vector.shape_cast %247 : vector<2x32xf32> to vector<1x2x32xf32>
    tpu.vector_store %arg24[%248, %c0_116, %c0_117], %251 {strides = array<i32>} : memref<16x2x32xf32, #tpu.memory_space<vmem>>, vector<1x2x32xf32>,
    %c6_i32 = arith.constant 6 : i32
    %252 = arith.index_cast %c6_i32 : i32 to index
    %c0_118 = arith.constant 0 : index
    %c0_119 = arith.constant 0 : index
    %253 = vector.load %arg25[%252, %c0_118, %c0_119] : memref<16x2x32xf32, #tpu.memory_space<vmem>>, vector<1x2x32xf32>
    %254 = vector.shape_cast %253 : vector<1x2x32xf32> to vector<2x32xf32>
    %255 = arith.index_cast %c6_i32 : i32 to index
    %c0_120 = arith.constant 0 : index
    %c0_121 = arith.constant 0 : index
    %256 = vector.load %arg26[%255, %c0_120, %c0_121] : memref<16x2x32xf32, #tpu.memory_space<vmem>>, vector<1x2x32xf32>
    %257 = vector.shape_cast %256 : vector<1x2x32xf32> to vector<2x32xf32>
    %258 = arith.index_cast %c6_i32 : i32 to index
    %c0_122 = arith.constant 0 : index
    %c0_123 = arith.constant 0 : index
    %259 = vector.load %arg27[%258, %c0_122, %c0_123] : memref<16x2x32xf32, #tpu.memory_space<vmem>>, vector<1x2x32xf32>
    %260 = vector.shape_cast %259 : vector<1x2x32xf32> to vector<2x32xf32>
    %cst_124 = arith.constant dense<0.000000e+00> : vector<2x32xf32>
    %261 = tpu.matmul %247, %23, %cst_124 {dimension_numbers = #tpu.dot_dimension_numbers<[1], [0], [0], [1], [0, 0, 1, 1], [], []>} : vector<2x32xf32>, vector<32x32xf32>, vector<2x32xf32> -> vector<2x32xf32>
    %cst_125 = arith.constant dense<0.000000e+00> : vector<2x32xf32>
    %262 = tpu.matmul %247, %24, %cst_125 {dimension_numbers = #tpu.dot_dimension_numbers<[1], [0], [0], [1], [0, 0, 1, 1], [], []>} : vector<2x32xf32>, vector<32x32xf32>, vector<2x32xf32> -> vector<2x32xf32>
    %cst_126 = arith.constant dense<0.000000e+00> : vector<2x32xf32>
    %263 = tpu.matmul %247, %25, %cst_126 {dimension_numbers = #tpu.dot_dimension_numbers<[1], [0], [0], [1], [0, 0, 1, 1], [], []>} : vector<2x32xf32>, vector<32x32xf32>, vector<2x32xf32> -> vector<2x32xf32>
    %264 = arith.addf %254, %261 : vector<2x32xf32>
    %265 = arith.negf %264 : vector<2x32xf32>
    %266 = math.exp %265 : vector<2x32xf32>
    %cst_127 = arith.constant 1.000000e+00 : f32
    %267 = vector.broadcast %cst_127 : f32 to vector<2x32xf32>
    %268 = arith.addf %267, %266 : vector<2x32xf32>
    %269 = arith.divf %267, %268 : vector<2x32xf32>
    %270 = arith.addf %257, %262 : vector<2x32xf32>
    %271 = arith.negf %270 : vector<2x32xf32>
    %272 = math.exp %271 : vector<2x32xf32>
    %cst_128 = arith.constant 1.000000e+00 : f32
    %273 = vector.broadcast %cst_128 : f32 to vector<2x32xf32>
    %274 = arith.addf %273, %272 : vector<2x32xf32>
    %275 = arith.divf %273, %274 : vector<2x32xf32>
    %276 = arith.addf %263, %28 : vector<2x32xf32>
    %277 = arith.mulf %269, %276 : vector<2x32xf32>
    %278 = arith.addf %260, %277 : vector<2x32xf32>
    %279 = math.tanh %278 : vector<2x32xf32>
    %cst_129 = arith.constant 1.000000e+00 : f32
    %280 = vector.broadcast %cst_129 : f32 to vector<2x32xf32>
    %281 = arith.subf %280, %275 : vector<2x32xf32>
    %282 = arith.mulf %281, %279 : vector<2x32xf32>
    %283 = arith.mulf %275, %247 : vector<2x32xf32>
    %284 = arith.addf %282, %283 : vector<2x32xf32>
    %285 = arith.index_cast %c6_i32 : i32 to index
    %c0_130 = arith.constant 0 : index
    %c0_131 = arith.constant 0 : index
    %286 = vector.load %arg24[%285, %c0_130, %c0_131] : memref<16x2x32xf32, #tpu.memory_space<vmem>>, vector<1x2x32xf32>
    %287 = vector.shape_cast %286 : vector<1x2x32xf32> to vector<2x32xf32>
    %288 = vector.shape_cast %284 : vector<2x32xf32> to vector<1x2x32xf32>
    tpu.vector_store %arg24[%285, %c0_130, %c0_131], %288 {strides = array<i32>} : memref<16x2x32xf32, #tpu.memory_space<vmem>>, vector<1x2x32xf32>,
    %c7_i32 = arith.constant 7 : i32
    %289 = arith.index_cast %c7_i32 : i32 to index
    %c0_132 = arith.constant 0 : index
    %c0_133 = arith.constant 0 : index
    %290 = vector.load %arg25[%289, %c0_132, %c0_133] : memref<16x2x32xf32, #tpu.memory_space<vmem>>, vector<1x2x32xf32>
    %291 = vector.shape_cast %290 : vector<1x2x32xf32> to vector<2x32xf32>
    %292 = arith.index_cast %c7_i32 : i32 to index
    %c0_134 = arith.constant 0 : index
    %c0_135 = arith.constant 0 : index
    %293 = vector.load %arg26[%292, %c0_134, %c0_135] : memref<16x2x32xf32, #tpu.memory_space<vmem>>, vector<1x2x32xf32>
    %294 = vector.shape_cast %293 : vector<1x2x32xf32> to vector<2x32xf32>
    %295 = arith.index_cast %c7_i32 : i32 to index
    %c0_136 = arith.constant 0 : index
    %c0_137 = arith.constant 0 : index
    %296 = vector.load %arg27[%295, %c0_136, %c0_137] : memref<16x2x32xf32, #tpu.memory_space<vmem>>, vector<1x2x32xf32>
    %297 = vector.shape_cast %296 : vector<1x2x32xf32> to vector<2x32xf32>
    %cst_138 = arith.constant dense<0.000000e+00> : vector<2x32xf32>
    %298 = tpu.matmul %284, %23, %cst_138 {dimension_numbers = #tpu.dot_dimension_numbers<[1], [0], [0], [1], [0, 0, 1, 1], [], []>} : vector<2x32xf32>, vector<32x32xf32>, vector<2x32xf32> -> vector<2x32xf32>
    %cst_139 = arith.constant dense<0.000000e+00> : vector<2x32xf32>
    %299 = tpu.matmul %284, %24, %cst_139 {dimension_numbers = #tpu.dot_dimension_numbers<[1], [0], [0], [1], [0, 0, 1, 1], [], []>} : vector<2x32xf32>, vector<32x32xf32>, vector<2x32xf32> -> vector<2x32xf32>
    %cst_140 = arith.constant dense<0.000000e+00> : vector<2x32xf32>
    %300 = tpu.matmul %284, %25, %cst_140 {dimension_numbers = #tpu.dot_dimension_numbers<[1], [0], [0], [1], [0, 0, 1, 1], [], []>} : vector<2x32xf32>, vector<32x32xf32>, vector<2x32xf32> -> vector<2x32xf32>
    %301 = arith.addf %291, %298 : vector<2x32xf32>
    %302 = arith.negf %301 : vector<2x32xf32>
    %303 = math.exp %302 : vector<2x32xf32>
    %cst_141 = arith.constant 1.000000e+00 : f32
    %304 = vector.broadcast %cst_141 : f32 to vector<2x32xf32>
    %305 = arith.addf %304, %303 : vector<2x32xf32>
    %306 = arith.divf %304, %305 : vector<2x32xf32>
    %307 = arith.addf %294, %299 : vector<2x32xf32>
    %308 = arith.negf %307 : vector<2x32xf32>
    %309 = math.exp %308 : vector<2x32xf32>
    %cst_142 = arith.constant 1.000000e+00 : f32
    %310 = vector.broadcast %cst_142 : f32 to vector<2x32xf32>
    %311 = arith.addf %310, %309 : vector<2x32xf32>
    %312 = arith.divf %310, %311 : vector<2x32xf32>
    %313 = arith.addf %300, %28 : vector<2x32xf32>
    %314 = arith.mulf %306, %313 : vector<2x32xf32>
    %315 = arith.addf %297, %314 : vector<2x32xf32>
    %316 = math.tanh %315 : vector<2x32xf32>
    %cst_143 = arith.constant 1.000000e+00 : f32
    %317 = vector.broadcast %cst_143 : f32 to vector<2x32xf32>
    %318 = arith.subf %317, %312 : vector<2x32xf32>
    %319 = arith.mulf %318, %316 : vector<2x32xf32>
    %320 = arith.mulf %312, %284 : vector<2x32xf32>
    %321 = arith.addf %319, %320 : vector<2x32xf32>
    %322 = arith.index_cast %c7_i32 : i32 to index
    %c0_144 = arith.constant 0 : index
    %c0_145 = arith.constant 0 : index
    %323 = vector.load %arg24[%322, %c0_144, %c0_145] : memref<16x2x32xf32, #tpu.memory_space<vmem>>, vector<1x2x32xf32>
    %324 = vector.shape_cast %323 : vector<1x2x32xf32> to vector<2x32xf32>
    %325 = vector.shape_cast %321 : vector<2x32xf32> to vector<1x2x32xf32>
    tpu.vector_store %arg24[%322, %c0_144, %c0_145], %325 {strides = array<i32>} : memref<16x2x32xf32, #tpu.memory_space<vmem>>, vector<1x2x32xf32>,
    %c8_i32 = arith.constant 8 : i32
    %326 = arith.index_cast %c8_i32 : i32 to index
    %c0_146 = arith.constant 0 : index
    %c0_147 = arith.constant 0 : index
    %327 = vector.load %arg25[%326, %c0_146, %c0_147] : memref<16x2x32xf32, #tpu.memory_space<vmem>>, vector<1x2x32xf32>
    %328 = vector.shape_cast %327 : vector<1x2x32xf32> to vector<2x32xf32>
    %329 = arith.index_cast %c8_i32 : i32 to index
    %c0_148 = arith.constant 0 : index
    %c0_149 = arith.constant 0 : index
    %330 = vector.load %arg26[%329, %c0_148, %c0_149] : memref<16x2x32xf32, #tpu.memory_space<vmem>>, vector<1x2x32xf32>
    %331 = vector.shape_cast %330 : vector<1x2x32xf32> to vector<2x32xf32>
    %332 = arith.index_cast %c8_i32 : i32 to index
    %c0_150 = arith.constant 0 : index
    %c0_151 = arith.constant 0 : index
    %333 = vector.load %arg27[%332, %c0_150, %c0_151] : memref<16x2x32xf32, #tpu.memory_space<vmem>>, vector<1x2x32xf32>
    %334 = vector.shape_cast %333 : vector<1x2x32xf32> to vector<2x32xf32>
    %cst_152 = arith.constant dense<0.000000e+00> : vector<2x32xf32>
    %335 = tpu.matmul %321, %23, %cst_152 {dimension_numbers = #tpu.dot_dimension_numbers<[1], [0], [0], [1], [0, 0, 1, 1], [], []>} : vector<2x32xf32>, vector<32x32xf32>, vector<2x32xf32> -> vector<2x32xf32>
    %cst_153 = arith.constant dense<0.000000e+00> : vector<2x32xf32>
    %336 = tpu.matmul %321, %24, %cst_153 {dimension_numbers = #tpu.dot_dimension_numbers<[1], [0], [0], [1], [0, 0, 1, 1], [], []>} : vector<2x32xf32>, vector<32x32xf32>, vector<2x32xf32> -> vector<2x32xf32>
    %cst_154 = arith.constant dense<0.000000e+00> : vector<2x32xf32>
    %337 = tpu.matmul %321, %25, %cst_154 {dimension_numbers = #tpu.dot_dimension_numbers<[1], [0], [0], [1], [0, 0, 1, 1], [], []>} : vector<2x32xf32>, vector<32x32xf32>, vector<2x32xf32> -> vector<2x32xf32>
    %338 = arith.addf %328, %335 : vector<2x32xf32>
    %339 = arith.negf %338 : vector<2x32xf32>
    %340 = math.exp %339 : vector<2x32xf32>
    %cst_155 = arith.constant 1.000000e+00 : f32
    %341 = vector.broadcast %cst_155 : f32 to vector<2x32xf32>
    %342 = arith.addf %341, %340 : vector<2x32xf32>
    %343 = arith.divf %341, %342 : vector<2x32xf32>
    %344 = arith.addf %331, %336 : vector<2x32xf32>
    %345 = arith.negf %344 : vector<2x32xf32>
    %346 = math.exp %345 : vector<2x32xf32>
    %cst_156 = arith.constant 1.000000e+00 : f32
    %347 = vector.broadcast %cst_156 : f32 to vector<2x32xf32>
    %348 = arith.addf %347, %346 : vector<2x32xf32>
    %349 = arith.divf %347, %348 : vector<2x32xf32>
    %350 = arith.addf %337, %28 : vector<2x32xf32>
    %351 = arith.mulf %343, %350 : vector<2x32xf32>
    %352 = arith.addf %334, %351 : vector<2x32xf32>
    %353 = math.tanh %352 : vector<2x32xf32>
    %cst_157 = arith.constant 1.000000e+00 : f32
    %354 = vector.broadcast %cst_157 : f32 to vector<2x32xf32>
    %355 = arith.subf %354, %349 : vector<2x32xf32>
    %356 = arith.mulf %355, %353 : vector<2x32xf32>
    %357 = arith.mulf %349, %321 : vector<2x32xf32>
    %358 = arith.addf %356, %357 : vector<2x32xf32>
    %359 = arith.index_cast %c8_i32 : i32 to index
    %c0_158 = arith.constant 0 : index
    %c0_159 = arith.constant 0 : index
    %360 = vector.load %arg24[%359, %c0_158, %c0_159] : memref<16x2x32xf32, #tpu.memory_space<vmem>>, vector<1x2x32xf32>
    %361 = vector.shape_cast %360 : vector<1x2x32xf32> to vector<2x32xf32>
    %362 = vector.shape_cast %358 : vector<2x32xf32> to vector<1x2x32xf32>
    tpu.vector_store %arg24[%359, %c0_158, %c0_159], %362 {strides = array<i32>} : memref<16x2x32xf32, #tpu.memory_space<vmem>>, vector<1x2x32xf32>,
    %c9_i32 = arith.constant 9 : i32
    %363 = arith.index_cast %c9_i32 : i32 to index
    %c0_160 = arith.constant 0 : index
    %c0_161 = arith.constant 0 : index
    %364 = vector.load %arg25[%363, %c0_160, %c0_161] : memref<16x2x32xf32, #tpu.memory_space<vmem>>, vector<1x2x32xf32>
    %365 = vector.shape_cast %364 : vector<1x2x32xf32> to vector<2x32xf32>
    %366 = arith.index_cast %c9_i32 : i32 to index
    %c0_162 = arith.constant 0 : index
    %c0_163 = arith.constant 0 : index
    %367 = vector.load %arg26[%366, %c0_162, %c0_163] : memref<16x2x32xf32, #tpu.memory_space<vmem>>, vector<1x2x32xf32>
    %368 = vector.shape_cast %367 : vector<1x2x32xf32> to vector<2x32xf32>
    %369 = arith.index_cast %c9_i32 : i32 to index
    %c0_164 = arith.constant 0 : index
    %c0_165 = arith.constant 0 : index
    %370 = vector.load %arg27[%369, %c0_164, %c0_165] : memref<16x2x32xf32, #tpu.memory_space<vmem>>, vector<1x2x32xf32>
    %371 = vector.shape_cast %370 : vector<1x2x32xf32> to vector<2x32xf32>
    %cst_166 = arith.constant dense<0.000000e+00> : vector<2x32xf32>
    %372 = tpu.matmul %358, %23, %cst_166 {dimension_numbers = #tpu.dot_dimension_numbers<[1], [0], [0], [1], [0, 0, 1, 1], [], []>} : vector<2x32xf32>, vector<32x32xf32>, vector<2x32xf32> -> vector<2x32xf32>
    %cst_167 = arith.constant dense<0.000000e+00> : vector<2x32xf32>
    %373 = tpu.matmul %358, %24, %cst_167 {dimension_numbers = #tpu.dot_dimension_numbers<[1], [0], [0], [1], [0, 0, 1, 1], [], []>} : vector<2x32xf32>, vector<32x32xf32>, vector<2x32xf32> -> vector<2x32xf32>
    %cst_168 = arith.constant dense<0.000000e+00> : vector<2x32xf32>
    %374 = tpu.matmul %358, %25, %cst_168 {dimension_numbers = #tpu.dot_dimension_numbers<[1], [0], [0], [1], [0, 0, 1, 1], [], []>} : vector<2x32xf32>, vector<32x32xf32>, vector<2x32xf32> -> vector<2x32xf32>
    %375 = arith.addf %365, %372 : vector<2x32xf32>
    %376 = arith.negf %375 : vector<2x32xf32>
    %377 = math.exp %376 : vector<2x32xf32>
    %cst_169 = arith.constant 1.000000e+00 : f32
    %378 = vector.broadcast %cst_169 : f32 to vector<2x32xf32>
    %379 = arith.addf %378, %377 : vector<2x32xf32>
    %380 = arith.divf %378, %379 : vector<2x32xf32>
    %381 = arith.addf %368, %373 : vector<2x32xf32>
    %382 = arith.negf %381 : vector<2x32xf32>
    %383 = math.exp %382 : vector<2x32xf32>
    %cst_170 = arith.constant 1.000000e+00 : f32
    %384 = vector.broadcast %cst_170 : f32 to vector<2x32xf32>
    %385 = arith.addf %384, %383 : vector<2x32xf32>
    %386 = arith.divf %384, %385 : vector<2x32xf32>
    %387 = arith.addf %374, %28 : vector<2x32xf32>
    %388 = arith.mulf %380, %387 : vector<2x32xf32>
    %389 = arith.addf %371, %388 : vector<2x32xf32>
    %390 = math.tanh %389 : vector<2x32xf32>
    %cst_171 = arith.constant 1.000000e+00 : f32
    %391 = vector.broadcast %cst_171 : f32 to vector<2x32xf32>
    %392 = arith.subf %391, %386 : vector<2x32xf32>
    %393 = arith.mulf %392, %390 : vector<2x32xf32>
    %394 = arith.mulf %386, %358 : vector<2x32xf32>
    %395 = arith.addf %393, %394 : vector<2x32xf32>
    %396 = arith.index_cast %c9_i32 : i32 to index
    %c0_172 = arith.constant 0 : index
    %c0_173 = arith.constant 0 : index
    %397 = vector.load %arg24[%396, %c0_172, %c0_173] : memref<16x2x32xf32, #tpu.memory_space<vmem>>, vector<1x2x32xf32>
    %398 = vector.shape_cast %397 : vector<1x2x32xf32> to vector<2x32xf32>
    %399 = vector.shape_cast %395 : vector<2x32xf32> to vector<1x2x32xf32>
    tpu.vector_store %arg24[%396, %c0_172, %c0_173], %399 {strides = array<i32>} : memref<16x2x32xf32, #tpu.memory_space<vmem>>, vector<1x2x32xf32>,
    %c10_i32 = arith.constant 10 : i32
    %400 = arith.index_cast %c10_i32 : i32 to index
    %c0_174 = arith.constant 0 : index
    %c0_175 = arith.constant 0 : index
    %401 = vector.load %arg25[%400, %c0_174, %c0_175] : memref<16x2x32xf32, #tpu.memory_space<vmem>>, vector<1x2x32xf32>
    %402 = vector.shape_cast %401 : vector<1x2x32xf32> to vector<2x32xf32>
    %403 = arith.index_cast %c10_i32 : i32 to index
    %c0_176 = arith.constant 0 : index
    %c0_177 = arith.constant 0 : index
    %404 = vector.load %arg26[%403, %c0_176, %c0_177] : memref<16x2x32xf32, #tpu.memory_space<vmem>>, vector<1x2x32xf32>
    %405 = vector.shape_cast %404 : vector<1x2x32xf32> to vector<2x32xf32>
    %406 = arith.index_cast %c10_i32 : i32 to index
    %c0_178 = arith.constant 0 : index
    %c0_179 = arith.constant 0 : index
    %407 = vector.load %arg27[%406, %c0_178, %c0_179] : memref<16x2x32xf32, #tpu.memory_space<vmem>>, vector<1x2x32xf32>
    %408 = vector.shape_cast %407 : vector<1x2x32xf32> to vector<2x32xf32>
    %cst_180 = arith.constant dense<0.000000e+00> : vector<2x32xf32>
    %409 = tpu.matmul %395, %23, %cst_180 {dimension_numbers = #tpu.dot_dimension_numbers<[1], [0], [0], [1], [0, 0, 1, 1], [], []>} : vector<2x32xf32>, vector<32x32xf32>, vector<2x32xf32> -> vector<2x32xf32>
    %cst_181 = arith.constant dense<0.000000e+00> : vector<2x32xf32>
    %410 = tpu.matmul %395, %24, %cst_181 {dimension_numbers = #tpu.dot_dimension_numbers<[1], [0], [0], [1], [0, 0, 1, 1], [], []>} : vector<2x32xf32>, vector<32x32xf32>, vector<2x32xf32> -> vector<2x32xf32>
    %cst_182 = arith.constant dense<0.000000e+00> : vector<2x32xf32>
    %411 = tpu.matmul %395, %25, %cst_182 {dimension_numbers = #tpu.dot_dimension_numbers<[1], [0], [0], [1], [0, 0, 1, 1], [], []>} : vector<2x32xf32>, vector<32x32xf32>, vector<2x32xf32> -> vector<2x32xf32>
    %412 = arith.addf %402, %409 : vector<2x32xf32>
    %413 = arith.negf %412 : vector<2x32xf32>
    %414 = math.exp %413 : vector<2x32xf32>
    %cst_183 = arith.constant 1.000000e+00 : f32
    %415 = vector.broadcast %cst_183 : f32 to vector<2x32xf32>
    %416 = arith.addf %415, %414 : vector<2x32xf32>
    %417 = arith.divf %415, %416 : vector<2x32xf32>
    %418 = arith.addf %405, %410 : vector<2x32xf32>
    %419 = arith.negf %418 : vector<2x32xf32>
    %420 = math.exp %419 : vector<2x32xf32>
    %cst_184 = arith.constant 1.000000e+00 : f32
    %421 = vector.broadcast %cst_184 : f32 to vector<2x32xf32>
    %422 = arith.addf %421, %420 : vector<2x32xf32>
    %423 = arith.divf %421, %422 : vector<2x32xf32>
    %424 = arith.addf %411, %28 : vector<2x32xf32>
    %425 = arith.mulf %417, %424 : vector<2x32xf32>
    %426 = arith.addf %408, %425 : vector<2x32xf32>
    %427 = math.tanh %426 : vector<2x32xf32>
    %cst_185 = arith.constant 1.000000e+00 : f32
    %428 = vector.broadcast %cst_185 : f32 to vector<2x32xf32>
    %429 = arith.subf %428, %423 : vector<2x32xf32>
    %430 = arith.mulf %429, %427 : vector<2x32xf32>
    %431 = arith.mulf %423, %395 : vector<2x32xf32>
    %432 = arith.addf %430, %431 : vector<2x32xf32>
    %433 = arith.index_cast %c10_i32 : i32 to index
    %c0_186 = arith.constant 0 : index
    %c0_187 = arith.constant 0 : index
    %434 = vector.load %arg24[%433, %c0_186, %c0_187] : memref<16x2x32xf32, #tpu.memory_space<vmem>>, vector<1x2x32xf32>
    %435 = vector.shape_cast %434 : vector<1x2x32xf32> to vector<2x32xf32>
    %436 = vector.shape_cast %432 : vector<2x32xf32> to vector<1x2x32xf32>
    tpu.vector_store %arg24[%433, %c0_186, %c0_187], %436 {strides = array<i32>} : memref<16x2x32xf32, #tpu.memory_space<vmem>>, vector<1x2x32xf32>,
    %c11_i32 = arith.constant 11 : i32
    %437 = arith.index_cast %c11_i32 : i32 to index
    %c0_188 = arith.constant 0 : index
    %c0_189 = arith.constant 0 : index
    %438 = vector.load %arg25[%437, %c0_188, %c0_189] : memref<16x2x32xf32, #tpu.memory_space<vmem>>, vector<1x2x32xf32>
    %439 = vector.shape_cast %438 : vector<1x2x32xf32> to vector<2x32xf32>
    %440 = arith.index_cast %c11_i32 : i32 to index
    %c0_190 = arith.constant 0 : index
    %c0_191 = arith.constant 0 : index
    %441 = vector.load %arg26[%440, %c0_190, %c0_191] : memref<16x2x32xf32, #tpu.memory_space<vmem>>, vector<1x2x32xf32>
    %442 = vector.shape_cast %441 : vector<1x2x32xf32> to vector<2x32xf32>
    %443 = arith.index_cast %c11_i32 : i32 to index
    %c0_192 = arith.constant 0 : index
    %c0_193 = arith.constant 0 : index
    %444 = vector.load %arg27[%443, %c0_192, %c0_193] : memref<16x2x32xf32, #tpu.memory_space<vmem>>, vector<1x2x32xf32>
    %445 = vector.shape_cast %444 : vector<1x2x32xf32> to vector<2x32xf32>
    %cst_194 = arith.constant dense<0.000000e+00> : vector<2x32xf32>
    %446 = tpu.matmul %432, %23, %cst_194 {dimension_numbers = #tpu.dot_dimension_numbers<[1], [0], [0], [1], [0, 0, 1, 1], [], []>} : vector<2x32xf32>, vector<32x32xf32>, vector<2x32xf32> -> vector<2x32xf32>
    %cst_195 = arith.constant dense<0.000000e+00> : vector<2x32xf32>
    %447 = tpu.matmul %432, %24, %cst_195 {dimension_numbers = #tpu.dot_dimension_numbers<[1], [0], [0], [1], [0, 0, 1, 1], [], []>} : vector<2x32xf32>, vector<32x32xf32>, vector<2x32xf32> -> vector<2x32xf32>
    %cst_196 = arith.constant dense<0.000000e+00> : vector<2x32xf32>
    %448 = tpu.matmul %432, %25, %cst_196 {dimension_numbers = #tpu.dot_dimension_numbers<[1], [0], [0], [1], [0, 0, 1, 1], [], []>} : vector<2x32xf32>, vector<32x32xf32>, vector<2x32xf32> -> vector<2x32xf32>
    %449 = arith.addf %439, %446 : vector<2x32xf32>
    %450 = arith.negf %449 : vector<2x32xf32>
    %451 = math.exp %450 : vector<2x32xf32>
    %cst_197 = arith.constant 1.000000e+00 : f32
    %452 = vector.broadcast %cst_197 : f32 to vector<2x32xf32>
    %453 = arith.addf %452, %451 : vector<2x32xf32>
    %454 = arith.divf %452, %453 : vector<2x32xf32>
    %455 = arith.addf %442, %447 : vector<2x32xf32>
    %456 = arith.negf %455 : vector<2x32xf32>
    %457 = math.exp %456 : vector<2x32xf32>
    %cst_198 = arith.constant 1.000000e+00 : f32
    %458 = vector.broadcast %cst_198 : f32 to vector<2x32xf32>
    %459 = arith.addf %458, %457 : vector<2x32xf32>
    %460 = arith.divf %458, %459 : vector<2x32xf32>
    %461 = arith.addf %448, %28 : vector<2x32xf32>
    %462 = arith.mulf %454, %461 : vector<2x32xf32>
    %463 = arith.addf %445, %462 : vector<2x32xf32>
    %464 = math.tanh %463 : vector<2x32xf32>
    %cst_199 = arith.constant 1.000000e+00 : f32
    %465 = vector.broadcast %cst_199 : f32 to vector<2x32xf32>
    %466 = arith.subf %465, %460 : vector<2x32xf32>
    %467 = arith.mulf %466, %464 : vector<2x32xf32>
    %468 = arith.mulf %460, %432 : vector<2x32xf32>
    %469 = arith.addf %467, %468 : vector<2x32xf32>
    %470 = arith.index_cast %c11_i32 : i32 to index
    %c0_200 = arith.constant 0 : index
    %c0_201 = arith.constant 0 : index
    %471 = vector.load %arg24[%470, %c0_200, %c0_201] : memref<16x2x32xf32, #tpu.memory_space<vmem>>, vector<1x2x32xf32>
    %472 = vector.shape_cast %471 : vector<1x2x32xf32> to vector<2x32xf32>
    %473 = vector.shape_cast %469 : vector<2x32xf32> to vector<1x2x32xf32>
    tpu.vector_store %arg24[%470, %c0_200, %c0_201], %473 {strides = array<i32>} : memref<16x2x32xf32, #tpu.memory_space<vmem>>, vector<1x2x32xf32>,
    %c12_i32 = arith.constant 12 : i32
    %474 = arith.index_cast %c12_i32 : i32 to index
    %c0_202 = arith.constant 0 : index
    %c0_203 = arith.constant 0 : index
    %475 = vector.load %arg25[%474, %c0_202, %c0_203] : memref<16x2x32xf32, #tpu.memory_space<vmem>>, vector<1x2x32xf32>
    %476 = vector.shape_cast %475 : vector<1x2x32xf32> to vector<2x32xf32>
    %477 = arith.index_cast %c12_i32 : i32 to index
    %c0_204 = arith.constant 0 : index
    %c0_205 = arith.constant 0 : index
    %478 = vector.load %arg26[%477, %c0_204, %c0_205] : memref<16x2x32xf32, #tpu.memory_space<vmem>>, vector<1x2x32xf32>
    %479 = vector.shape_cast %478 : vector<1x2x32xf32> to vector<2x32xf32>
    %480 = arith.index_cast %c12_i32 : i32 to index
    %c0_206 = arith.constant 0 : index
    %c0_207 = arith.constant 0 : index
    %481 = vector.load %arg27[%480, %c0_206, %c0_207] : memref<16x2x32xf32, #tpu.memory_space<vmem>>, vector<1x2x32xf32>
    %482 = vector.shape_cast %481 : vector<1x2x32xf32> to vector<2x32xf32>
    %cst_208 = arith.constant dense<0.000000e+00> : vector<2x32xf32>
    %483 = tpu.matmul %469, %23, %cst_208 {dimension_numbers = #tpu.dot_dimension_numbers<[1], [0], [0], [1], [0, 0, 1, 1], [], []>} : vector<2x32xf32>, vector<32x32xf32>, vector<2x32xf32> -> vector<2x32xf32>
    %cst_209 = arith.constant dense<0.000000e+00> : vector<2x32xf32>
    %484 = tpu.matmul %469, %24, %cst_209 {dimension_numbers = #tpu.dot_dimension_numbers<[1], [0], [0], [1], [0, 0, 1, 1], [], []>} : vector<2x32xf32>, vector<32x32xf32>, vector<2x32xf32> -> vector<2x32xf32>
    %cst_210 = arith.constant dense<0.000000e+00> : vector<2x32xf32>
    %485 = tpu.matmul %469, %25, %cst_210 {dimension_numbers = #tpu.dot_dimension_numbers<[1], [0], [0], [1], [0, 0, 1, 1], [], []>} : vector<2x32xf32>, vector<32x32xf32>, vector<2x32xf32> -> vector<2x32xf32>
    %486 = arith.addf %476, %483 : vector<2x32xf32>
    %487 = arith.negf %486 : vector<2x32xf32>
    %488 = math.exp %487 : vector<2x32xf32>
    %cst_211 = arith.constant 1.000000e+00 : f32
    %489 = vector.broadcast %cst_211 : f32 to vector<2x32xf32>
    %490 = arith.addf %489, %488 : vector<2x32xf32>
    %491 = arith.divf %489, %490 : vector<2x32xf32>
    %492 = arith.addf %479, %484 : vector<2x32xf32>
    %493 = arith.negf %492 : vector<2x32xf32>
    %494 = math.exp %493 : vector<2x32xf32>
    %cst_212 = arith.constant 1.000000e+00 : f32
    %495 = vector.broadcast %cst_212 : f32 to vector<2x32xf32>
    %496 = arith.addf %495, %494 : vector<2x32xf32>
    %497 = arith.divf %495, %496 : vector<2x32xf32>
    %498 = arith.addf %485, %28 : vector<2x32xf32>
    %499 = arith.mulf %491, %498 : vector<2x32xf32>
    %500 = arith.addf %482, %499 : vector<2x32xf32>
    %501 = math.tanh %500 : vector<2x32xf32>
    %cst_213 = arith.constant 1.000000e+00 : f32
    %502 = vector.broadcast %cst_213 : f32 to vector<2x32xf32>
    %503 = arith.subf %502, %497 : vector<2x32xf32>
    %504 = arith.mulf %503, %501 : vector<2x32xf32>
    %505 = arith.mulf %497, %469 : vector<2x32xf32>
    %506 = arith.addf %504, %505 : vector<2x32xf32>
    %507 = arith.index_cast %c12_i32 : i32 to index
    %c0_214 = arith.constant 0 : index
    %c0_215 = arith.constant 0 : index
    %508 = vector.load %arg24[%507, %c0_214, %c0_215] : memref<16x2x32xf32, #tpu.memory_space<vmem>>, vector<1x2x32xf32>
    %509 = vector.shape_cast %508 : vector<1x2x32xf32> to vector<2x32xf32>
    %510 = vector.shape_cast %506 : vector<2x32xf32> to vector<1x2x32xf32>
    tpu.vector_store %arg24[%507, %c0_214, %c0_215], %510 {strides = array<i32>} : memref<16x2x32xf32, #tpu.memory_space<vmem>>, vector<1x2x32xf32>,
    %c13_i32 = arith.constant 13 : i32
    %511 = arith.index_cast %c13_i32 : i32 to index
    %c0_216 = arith.constant 0 : index
    %c0_217 = arith.constant 0 : index
    %512 = vector.load %arg25[%511, %c0_216, %c0_217] : memref<16x2x32xf32, #tpu.memory_space<vmem>>, vector<1x2x32xf32>
    %513 = vector.shape_cast %512 : vector<1x2x32xf32> to vector<2x32xf32>
    %514 = arith.index_cast %c13_i32 : i32 to index
    %c0_218 = arith.constant 0 : index
    %c0_219 = arith.constant 0 : index
    %515 = vector.load %arg26[%514, %c0_218, %c0_219] : memref<16x2x32xf32, #tpu.memory_space<vmem>>, vector<1x2x32xf32>
    %516 = vector.shape_cast %515 : vector<1x2x32xf32> to vector<2x32xf32>
    %517 = arith.index_cast %c13_i32 : i32 to index
    %c0_220 = arith.constant 0 : index
    %c0_221 = arith.constant 0 : index
    %518 = vector.load %arg27[%517, %c0_220, %c0_221] : memref<16x2x32xf32, #tpu.memory_space<vmem>>, vector<1x2x32xf32>
    %519 = vector.shape_cast %518 : vector<1x2x32xf32> to vector<2x32xf32>
    %cst_222 = arith.constant dense<0.000000e+00> : vector<2x32xf32>
    %520 = tpu.matmul %506, %23, %cst_222 {dimension_numbers = #tpu.dot_dimension_numbers<[1], [0], [0], [1], [0, 0, 1, 1], [], []>} : vector<2x32xf32>, vector<32x32xf32>, vector<2x32xf32> -> vector<2x32xf32>
    %cst_223 = arith.constant dense<0.000000e+00> : vector<2x32xf32>
    %521 = tpu.matmul %506, %24, %cst_223 {dimension_numbers = #tpu.dot_dimension_numbers<[1], [0], [0], [1], [0, 0, 1, 1], [], []>} : vector<2x32xf32>, vector<32x32xf32>, vector<2x32xf32> -> vector<2x32xf32>
    %cst_224 = arith.constant dense<0.000000e+00> : vector<2x32xf32>
    %522 = tpu.matmul %506, %25, %cst_224 {dimension_numbers = #tpu.dot_dimension_numbers<[1], [0], [0], [1], [0, 0, 1, 1], [], []>} : vector<2x32xf32>, vector<32x32xf32>, vector<2x32xf32> -> vector<2x32xf32>
    %523 = arith.addf %513, %520 : vector<2x32xf32>
    %524 = arith.negf %523 : vector<2x32xf32>
    %525 = math.exp %524 : vector<2x32xf32>
    %cst_225 = arith.constant 1.000000e+00 : f32
    %526 = vector.broadcast %cst_225 : f32 to vector<2x32xf32>
    %527 = arith.addf %526, %525 : vector<2x32xf32>
    %528 = arith.divf %526, %527 : vector<2x32xf32>
    %529 = arith.addf %516, %521 : vector<2x32xf32>
    %530 = arith.negf %529 : vector<2x32xf32>
    %531 = math.exp %530 : vector<2x32xf32>
    %cst_226 = arith.constant 1.000000e+00 : f32
    %532 = vector.broadcast %cst_226 : f32 to vector<2x32xf32>
    %533 = arith.addf %532, %531 : vector<2x32xf32>
    %534 = arith.divf %532, %533 : vector<2x32xf32>
    %535 = arith.addf %522, %28 : vector<2x32xf32>
    %536 = arith.mulf %528, %535 : vector<2x32xf32>
    %537 = arith.addf %519, %536 : vector<2x32xf32>
    %538 = math.tanh %537 : vector<2x32xf32>
    %cst_227 = arith.constant 1.000000e+00 : f32
    %539 = vector.broadcast %cst_227 : f32 to vector<2x32xf32>
    %540 = arith.subf %539, %534 : vector<2x32xf32>
    %541 = arith.mulf %540, %538 : vector<2x32xf32>
    %542 = arith.mulf %534, %506 : vector<2x32xf32>
    %543 = arith.addf %541, %542 : vector<2x32xf32>
    %544 = arith.index_cast %c13_i32 : i32 to index
    %c0_228 = arith.constant 0 : index
    %c0_229 = arith.constant 0 : index
    %545 = vector.load %arg24[%544, %c0_228, %c0_229] : memref<16x2x32xf32, #tpu.memory_space<vmem>>, vector<1x2x32xf32>
    %546 = vector.shape_cast %545 : vector<1x2x32xf32> to vector<2x32xf32>
    %547 = vector.shape_cast %543 : vector<2x32xf32> to vector<1x2x32xf32>
    tpu.vector_store %arg24[%544, %c0_228, %c0_229], %547 {strides = array<i32>} : memref<16x2x32xf32, #tpu.memory_space<vmem>>, vector<1x2x32xf32>,
    %c14_i32 = arith.constant 14 : i32
    %548 = arith.index_cast %c14_i32 : i32 to index
    %c0_230 = arith.constant 0 : index
    %c0_231 = arith.constant 0 : index
    %549 = vector.load %arg25[%548, %c0_230, %c0_231] : memref<16x2x32xf32, #tpu.memory_space<vmem>>, vector<1x2x32xf32>
    %550 = vector.shape_cast %549 : vector<1x2x32xf32> to vector<2x32xf32>
    %551 = arith.index_cast %c14_i32 : i32 to index
    %c0_232 = arith.constant 0 : index
    %c0_233 = arith.constant 0 : index
    %552 = vector.load %arg26[%551, %c0_232, %c0_233] : memref<16x2x32xf32, #tpu.memory_space<vmem>>, vector<1x2x32xf32>
    %553 = vector.shape_cast %552 : vector<1x2x32xf32> to vector<2x32xf32>
    %554 = arith.index_cast %c14_i32 : i32 to index
    %c0_234 = arith.constant 0 : index
    %c0_235 = arith.constant 0 : index
    %555 = vector.load %arg27[%554, %c0_234, %c0_235] : memref<16x2x32xf32, #tpu.memory_space<vmem>>, vector<1x2x32xf32>
    %556 = vector.shape_cast %555 : vector<1x2x32xf32> to vector<2x32xf32>
    %cst_236 = arith.constant dense<0.000000e+00> : vector<2x32xf32>
    %557 = tpu.matmul %543, %23, %cst_236 {dimension_numbers = #tpu.dot_dimension_numbers<[1], [0], [0], [1], [0, 0, 1, 1], [], []>} : vector<2x32xf32>, vector<32x32xf32>, vector<2x32xf32> -> vector<2x32xf32>
    %cst_237 = arith.constant dense<0.000000e+00> : vector<2x32xf32>
    %558 = tpu.matmul %543, %24, %cst_237 {dimension_numbers = #tpu.dot_dimension_numbers<[1], [0], [0], [1], [0, 0, 1, 1], [], []>} : vector<2x32xf32>, vector<32x32xf32>, vector<2x32xf32> -> vector<2x32xf32>
    %cst_238 = arith.constant dense<0.000000e+00> : vector<2x32xf32>
    %559 = tpu.matmul %543, %25, %cst_238 {dimension_numbers = #tpu.dot_dimension_numbers<[1], [0], [0], [1], [0, 0, 1, 1], [], []>} : vector<2x32xf32>, vector<32x32xf32>, vector<2x32xf32> -> vector<2x32xf32>
    %560 = arith.addf %550, %557 : vector<2x32xf32>
    %561 = arith.negf %560 : vector<2x32xf32>
    %562 = math.exp %561 : vector<2x32xf32>
    %cst_239 = arith.constant 1.000000e+00 : f32
    %563 = vector.broadcast %cst_239 : f32 to vector<2x32xf32>
    %564 = arith.addf %563, %562 : vector<2x32xf32>
    %565 = arith.divf %563, %564 : vector<2x32xf32>
    %566 = arith.addf %553, %558 : vector<2x32xf32>
    %567 = arith.negf %566 : vector<2x32xf32>
    %568 = math.exp %567 : vector<2x32xf32>
    %cst_240 = arith.constant 1.000000e+00 : f32
    %569 = vector.broadcast %cst_240 : f32 to vector<2x32xf32>
    %570 = arith.addf %569, %568 : vector<2x32xf32>
    %571 = arith.divf %569, %570 : vector<2x32xf32>
    %572 = arith.addf %559, %28 : vector<2x32xf32>
    %573 = arith.mulf %565, %572 : vector<2x32xf32>
    %574 = arith.addf %556, %573 : vector<2x32xf32>
    %575 = math.tanh %574 : vector<2x32xf32>
    %cst_241 = arith.constant 1.000000e+00 : f32
    %576 = vector.broadcast %cst_241 : f32 to vector<2x32xf32>
    %577 = arith.subf %576, %571 : vector<2x32xf32>
    %578 = arith.mulf %577, %575 : vector<2x32xf32>
    %579 = arith.mulf %571, %543 : vector<2x32xf32>
    %580 = arith.addf %578, %579 : vector<2x32xf32>
    %581 = arith.index_cast %c14_i32 : i32 to index
    %c0_242 = arith.constant 0 : index
    %c0_243 = arith.constant 0 : index
    %582 = vector.load %arg24[%581, %c0_242, %c0_243] : memref<16x2x32xf32, #tpu.memory_space<vmem>>, vector<1x2x32xf32>
    %583 = vector.shape_cast %582 : vector<1x2x32xf32> to vector<2x32xf32>
    %584 = vector.shape_cast %580 : vector<2x32xf32> to vector<1x2x32xf32>
    tpu.vector_store %arg24[%581, %c0_242, %c0_243], %584 {strides = array<i32>} : memref<16x2x32xf32, #tpu.memory_space<vmem>>, vector<1x2x32xf32>,
    %c15_i32 = arith.constant 15 : i32
    %585 = arith.index_cast %c15_i32 : i32 to index
    %c0_244 = arith.constant 0 : index
    %c0_245 = arith.constant 0 : index
    %586 = vector.load %arg25[%585, %c0_244, %c0_245] : memref<16x2x32xf32, #tpu.memory_space<vmem>>, vector<1x2x32xf32>
    %587 = vector.shape_cast %586 : vector<1x2x32xf32> to vector<2x32xf32>
    %588 = arith.index_cast %c15_i32 : i32 to index
    %c0_246 = arith.constant 0 : index
    %c0_247 = arith.constant 0 : index
    %589 = vector.load %arg26[%588, %c0_246, %c0_247] : memref<16x2x32xf32, #tpu.memory_space<vmem>>, vector<1x2x32xf32>
    %590 = vector.shape_cast %589 : vector<1x2x32xf32> to vector<2x32xf32>
    %591 = arith.index_cast %c15_i32 : i32 to index
    %c0_248 = arith.constant 0 : index
    %c0_249 = arith.constant 0 : index
    %592 = vector.load %arg27[%591, %c0_248, %c0_249] : memref<16x2x32xf32, #tpu.memory_space<vmem>>, vector<1x2x32xf32>
    %593 = vector.shape_cast %592 : vector<1x2x32xf32> to vector<2x32xf32>
    %cst_250 = arith.constant dense<0.000000e+00> : vector<2x32xf32>
    %594 = tpu.matmul %580, %23, %cst_250 {dimension_numbers = #tpu.dot_dimension_numbers<[1], [0], [0], [1], [0, 0, 1, 1], [], []>} : vector<2x32xf32>, vector<32x32xf32>, vector<2x32xf32> -> vector<2x32xf32>
    %cst_251 = arith.constant dense<0.000000e+00> : vector<2x32xf32>
    %595 = tpu.matmul %580, %24, %cst_251 {dimension_numbers = #tpu.dot_dimension_numbers<[1], [0], [0], [1], [0, 0, 1, 1], [], []>} : vector<2x32xf32>, vector<32x32xf32>, vector<2x32xf32> -> vector<2x32xf32>
    %cst_252 = arith.constant dense<0.000000e+00> : vector<2x32xf32>
    %596 = tpu.matmul %580, %25, %cst_252 {dimension_numbers = #tpu.dot_dimension_numbers<[1], [0], [0], [1], [0, 0, 1, 1], [], []>} : vector<2x32xf32>, vector<32x32xf32>, vector<2x32xf32> -> vector<2x32xf32>
    %597 = arith.addf %587, %594 : vector<2x32xf32>
    %598 = arith.negf %597 : vector<2x32xf32>
    %599 = math.exp %598 : vector<2x32xf32>
    %cst_253 = arith.constant 1.000000e+00 : f32
    %600 = vector.broadcast %cst_253 : f32 to vector<2x32xf32>
    %601 = arith.addf %600, %599 : vector<2x32xf32>
    %602 = arith.divf %600, %601 : vector<2x32xf32>
    %603 = arith.addf %590, %595 : vector<2x32xf32>
    %604 = arith.negf %603 : vector<2x32xf32>
    %605 = math.exp %604 : vector<2x32xf32>
    %cst_254 = arith.constant 1.000000e+00 : f32
    %606 = vector.broadcast %cst_254 : f32 to vector<2x32xf32>
    %607 = arith.addf %606, %605 : vector<2x32xf32>
    %608 = arith.divf %606, %607 : vector<2x32xf32>
    %609 = arith.addf %596, %28 : vector<2x32xf32>
    %610 = arith.mulf %602, %609 : vector<2x32xf32>
    %611 = arith.addf %593, %610 : vector<2x32xf32>
    %612 = math.tanh %611 : vector<2x32xf32>
    %cst_255 = arith.constant 1.000000e+00 : f32
    %613 = vector.broadcast %cst_255 : f32 to vector<2x32xf32>
    %614 = arith.subf %613, %608 : vector<2x32xf32>
    %615 = arith.mulf %614, %612 : vector<2x32xf32>
    %616 = arith.mulf %608, %580 : vector<2x32xf32>
    %617 = arith.addf %615, %616 : vector<2x32xf32>
    %618 = arith.index_cast %c15_i32 : i32 to index
    %c0_256 = arith.constant 0 : index
    %c0_257 = arith.constant 0 : index
    %619 = vector.load %arg24[%618, %c0_256, %c0_257] : memref<16x2x32xf32, #tpu.memory_space<vmem>>, vector<1x2x32xf32>
    %620 = vector.shape_cast %619 : vector<1x2x32xf32> to vector<2x32xf32>
    %621 = vector.shape_cast %617 : vector<2x32xf32> to vector<1x2x32xf32>
    tpu.vector_store %arg24[%618, %c0_256, %c0_257], %621 {strides = array<i32>} : memref<16x2x32xf32, #tpu.memory_space<vmem>>, vector<1x2x32xf32>,
    %c16_i32 = arith.constant 16 : i32
    %c0_258 = arith.constant 0 : index
    %c0_259 = arith.constant 0 : index
    %c0_260 = arith.constant 0 : index
    %622 = vector.load %arg24[%c0_258, %c0_259, %c0_260] : memref<16x2x32xf32, #tpu.memory_space<vmem>>, vector<16x2x32xf32>
    %623 = vector.shape_cast %622 : vector<16x2x32xf32> to vector<32x32xf32>
    %c0_261 = arith.constant 0 : index
    %c0_262 = arith.constant 0 : index
    %624 = vector.load %arg11[%c0_261, %c0_262] : memref<32x32xf32, #tpu.memory_space<vmem>>, vector<32x32xf32>
    %cst_263 = arith.constant dense<0.000000e+00> : vector<32x32xf32>
    %625 = tpu.matmul %623, %624, %cst_263 {dimension_numbers = #tpu.dot_dimension_numbers<[1], [0], [0], [1], [0, 0, 1, 1], [], []>} : vector<32x32xf32>, vector<32x32xf32>, vector<32x32xf32> -> vector<32x32xf32>
    %c0_264 = arith.constant 0 : index
    %c0_265 = arith.constant 0 : index
    %626 = vector.load %arg17[%c0_264, %c0_265] : memref<1x32xf32, #tpu.memory_space<vmem>>, vector<1x32xf32>
    %627 = vector.broadcast %626 : vector<1x32xf32> to vector<32x32xf32>
    %628 = arith.addf %625, %627 : vector<32x32xf32>
    %629 = vector.shape_cast %628 : vector<32x32xf32> to vector<16x2x32xf32>
    %c0_266 = arith.constant 0 : index
    %c0_267 = arith.constant 0 : index
    %c0_268 = arith.constant 0 : index
    %630 = vector.load %arg25[%c0_266, %c0_267, %c0_268] : memref<16x2x32xf32, #tpu.memory_space<vmem>>, vector<16x2x32xf32>
    tpu.vector_store %arg25[%c0_266, %c0_267, %c0_268], %629 {strides = array<i32>} : memref<16x2x32xf32, #tpu.memory_space<vmem>>, vector<16x2x32xf32>,
    %c0_269 = arith.constant 0 : index
    %c0_270 = arith.constant 0 : index
    %631 = vector.load %arg12[%c0_269, %c0_270] : memref<32x32xf32, #tpu.memory_space<vmem>>, vector<32x32xf32>
    %cst_271 = arith.constant dense<0.000000e+00> : vector<32x32xf32>
    %632 = tpu.matmul %623, %631, %cst_271 {dimension_numbers = #tpu.dot_dimension_numbers<[1], [0], [0], [1], [0, 0, 1, 1], [], []>} : vector<32x32xf32>, vector<32x32xf32>, vector<32x32xf32> -> vector<32x32xf32>
    %c0_272 = arith.constant 0 : index
    %c0_273 = arith.constant 0 : index
    %633 = vector.load %arg18[%c0_272, %c0_273] : memref<1x32xf32, #tpu.memory_space<vmem>>, vector<1x32xf32>
    %634 = vector.broadcast %633 : vector<1x32xf32> to vector<32x32xf32>
    %635 = arith.addf %632, %634 : vector<32x32xf32>
    %636 = vector.shape_cast %635 : vector<32x32xf32> to vector<16x2x32xf32>
    %c0_274 = arith.constant 0 : index
    %c0_275 = arith.constant 0 : index
    %c0_276 = arith.constant 0 : index
    %637 = vector.load %arg26[%c0_274, %c0_275, %c0_276] : memref<16x2x32xf32, #tpu.memory_space<vmem>>, vector<16x2x32xf32>
    tpu.vector_store %arg26[%c0_274, %c0_275, %c0_276], %636 {strides = array<i32>} : memref<16x2x32xf32, #tpu.memory_space<vmem>>, vector<16x2x32xf32>,
    %c0_277 = arith.constant 0 : index
    %c0_278 = arith.constant 0 : index
    %638 = vector.load %arg13[%c0_277, %c0_278] : memref<32x32xf32, #tpu.memory_space<vmem>>, vector<32x32xf32>
    %cst_279 = arith.constant dense<0.000000e+00> : vector<32x32xf32>
    %639 = tpu.matmul %623, %638, %cst_279 {dimension_numbers = #tpu.dot_dimension_numbers<[1], [0], [0], [1], [0, 0, 1, 1], [], []>} : vector<32x32xf32>, vector<32x32xf32>, vector<32x32xf32> -> vector<32x32xf32>
    %c0_280 = arith.constant 0 : index
    %c0_281 = arith.constant 0 : index
    %640 = vector.load %arg19[%c0_280, %c0_281] : memref<1x32xf32, #tpu.memory_space<vmem>>, vector<1x32xf32>
    %641 = vector.broadcast %640 : vector<1x32xf32> to vector<32x32xf32>
    %642 = arith.addf %639, %641 : vector<32x32xf32>
    %643 = vector.shape_cast %642 : vector<32x32xf32> to vector<16x2x32xf32>
    %c0_282 = arith.constant 0 : index
    %c0_283 = arith.constant 0 : index
    %c0_284 = arith.constant 0 : index
    %644 = vector.load %arg27[%c0_282, %c0_283, %c0_284] : memref<16x2x32xf32, #tpu.memory_space<vmem>>, vector<16x2x32xf32>
    tpu.vector_store %arg27[%c0_282, %c0_283, %c0_284], %643 {strides = array<i32>} : memref<16x2x32xf32, #tpu.memory_space<vmem>>, vector<16x2x32xf32>,
    %c0_285 = arith.constant 0 : index
    %c0_286 = arith.constant 0 : index
    %645 = vector.load %arg14[%c0_285, %c0_286] : memref<32x32xf32, #tpu.memory_space<vmem>>, vector<32x32xf32>
    %c0_287 = arith.constant 0 : index
    %c0_288 = arith.constant 0 : index
    %646 = vector.load %arg15[%c0_287, %c0_288] : memref<32x32xf32, #tpu.memory_space<vmem>>, vector<32x32xf32>
    %c0_289 = arith.constant 0 : index
    %c0_290 = arith.constant 0 : index
    %647 = vector.load %arg16[%c0_289, %c0_290] : memref<32x32xf32, #tpu.memory_space<vmem>>, vector<32x32xf32>
    %c0_291 = arith.constant 0 : index
    %c0_292 = arith.constant 0 : index
    %648 = vector.load %arg20[%c0_291, %c0_292] : memref<1x32xf32, #tpu.memory_space<vmem>>, vector<1x32xf32>
    %649 = vector.shape_cast %648 : vector<1x32xf32> to vector<1x32xf32>
    %650 = vector.broadcast %649 : vector<1x32xf32> to vector<2x32xf32>
    %cst_293 = arith.constant 0.000000e+00 : f32
    %651 = vector.broadcast %cst_293 : f32 to vector<2x32xf32>
    %c0_i32_294 = arith.constant 0 : i32
    %652 = arith.index_cast %c0_i32_294 : i32 to index
    %c0_295 = arith.constant 0 : index
    %c0_296 = arith.constant 0 : index
    %653 = vector.load %arg25[%652, %c0_295, %c0_296] : memref<16x2x32xf32, #tpu.memory_space<vmem>>, vector<1x2x32xf32>
    %654 = vector.shape_cast %653 : vector<1x2x32xf32> to vector<2x32xf32>
    %655 = arith.index_cast %c0_i32_294 : i32 to index
    %c0_297 = arith.constant 0 : index
    %c0_298 = arith.constant 0 : index
    %656 = vector.load %arg26[%655, %c0_297, %c0_298] : memref<16x2x32xf32, #tpu.memory_space<vmem>>, vector<1x2x32xf32>
    %657 = vector.shape_cast %656 : vector<1x2x32xf32> to vector<2x32xf32>
    %658 = arith.index_cast %c0_i32_294 : i32 to index
    %c0_299 = arith.constant 0 : index
    %c0_300 = arith.constant 0 : index
    %659 = vector.load %arg27[%658, %c0_299, %c0_300] : memref<16x2x32xf32, #tpu.memory_space<vmem>>, vector<1x2x32xf32>
    %660 = vector.shape_cast %659 : vector<1x2x32xf32> to vector<2x32xf32>
    %cst_301 = arith.constant dense<0.000000e+00> : vector<2x32xf32>
    %661 = tpu.matmul %651, %645, %cst_301 {dimension_numbers = #tpu.dot_dimension_numbers<[1], [0], [0], [1], [0, 0, 1, 1], [], []>} : vector<2x32xf32>, vector<32x32xf32>, vector<2x32xf32> -> vector<2x32xf32>
    %cst_302 = arith.constant dense<0.000000e+00> : vector<2x32xf32>
    %662 = tpu.matmul %651, %646, %cst_302 {dimension_numbers = #tpu.dot_dimension_numbers<[1], [0], [0], [1], [0, 0, 1, 1], [], []>} : vector<2x32xf32>, vector<32x32xf32>, vector<2x32xf32> -> vector<2x32xf32>
    %cst_303 = arith.constant dense<0.000000e+00> : vector<2x32xf32>
    %663 = tpu.matmul %651, %647, %cst_303 {dimension_numbers = #tpu.dot_dimension_numbers<[1], [0], [0], [1], [0, 0, 1, 1], [], []>} : vector<2x32xf32>, vector<32x32xf32>, vector<2x32xf32> -> vector<2x32xf32>
    %664 = arith.addf %654, %661 : vector<2x32xf32>
    %665 = arith.negf %664 : vector<2x32xf32>
    %666 = math.exp %665 : vector<2x32xf32>
    %cst_304 = arith.constant 1.000000e+00 : f32
    %667 = vector.broadcast %cst_304 : f32 to vector<2x32xf32>
    %668 = arith.addf %667, %666 : vector<2x32xf32>
    %669 = arith.divf %667, %668 : vector<2x32xf32>
    %670 = arith.addf %657, %662 : vector<2x32xf32>
    %671 = arith.negf %670 : vector<2x32xf32>
    %672 = math.exp %671 : vector<2x32xf32>
    %cst_305 = arith.constant 1.000000e+00 : f32
    %673 = vector.broadcast %cst_305 : f32 to vector<2x32xf32>
    %674 = arith.addf %673, %672 : vector<2x32xf32>
    %675 = arith.divf %673, %674 : vector<2x32xf32>
    %676 = arith.addf %663, %650 : vector<2x32xf32>
    %677 = arith.mulf %669, %676 : vector<2x32xf32>
    %678 = arith.addf %660, %677 : vector<2x32xf32>
    %679 = math.tanh %678 : vector<2x32xf32>
    %cst_306 = arith.constant 1.000000e+00 : f32
    %680 = vector.broadcast %cst_306 : f32 to vector<2x32xf32>
    %681 = arith.subf %680, %675 : vector<2x32xf32>
    %682 = arith.mulf %681, %679 : vector<2x32xf32>
    %683 = arith.mulf %675, %651 : vector<2x32xf32>
    %684 = arith.addf %682, %683 : vector<2x32xf32>
    %c1_i32_307 = arith.constant 1 : i32
    %685 = arith.index_cast %c1_i32_307 : i32 to index
    %c0_308 = arith.constant 0 : index
    %c0_309 = arith.constant 0 : index
    %686 = vector.load %arg25[%685, %c0_308, %c0_309] : memref<16x2x32xf32, #tpu.memory_space<vmem>>, vector<1x2x32xf32>
    %687 = vector.shape_cast %686 : vector<1x2x32xf32> to vector<2x32xf32>
    %688 = arith.index_cast %c1_i32_307 : i32 to index
    %c0_310 = arith.constant 0 : index
    %c0_311 = arith.constant 0 : index
    %689 = vector.load %arg26[%688, %c0_310, %c0_311] : memref<16x2x32xf32, #tpu.memory_space<vmem>>, vector<1x2x32xf32>
    %690 = vector.shape_cast %689 : vector<1x2x32xf32> to vector<2x32xf32>
    %691 = arith.index_cast %c1_i32_307 : i32 to index
    %c0_312 = arith.constant 0 : index
    %c0_313 = arith.constant 0 : index
    %692 = vector.load %arg27[%691, %c0_312, %c0_313] : memref<16x2x32xf32, #tpu.memory_space<vmem>>, vector<1x2x32xf32>
    %693 = vector.shape_cast %692 : vector<1x2x32xf32> to vector<2x32xf32>
    %cst_314 = arith.constant dense<0.000000e+00> : vector<2x32xf32>
    %694 = tpu.matmul %684, %645, %cst_314 {dimension_numbers = #tpu.dot_dimension_numbers<[1], [0], [0], [1], [0, 0, 1, 1], [], []>} : vector<2x32xf32>, vector<32x32xf32>, vector<2x32xf32> -> vector<2x32xf32>
    %cst_315 = arith.constant dense<0.000000e+00> : vector<2x32xf32>
    %695 = tpu.matmul %684, %646, %cst_315 {dimension_numbers = #tpu.dot_dimension_numbers<[1], [0], [0], [1], [0, 0, 1, 1], [], []>} : vector<2x32xf32>, vector<32x32xf32>, vector<2x32xf32> -> vector<2x32xf32>
    %cst_316 = arith.constant dense<0.000000e+00> : vector<2x32xf32>
    %696 = tpu.matmul %684, %647, %cst_316 {dimension_numbers = #tpu.dot_dimension_numbers<[1], [0], [0], [1], [0, 0, 1, 1], [], []>} : vector<2x32xf32>, vector<32x32xf32>, vector<2x32xf32> -> vector<2x32xf32>
    %697 = arith.addf %687, %694 : vector<2x32xf32>
    %698 = arith.negf %697 : vector<2x32xf32>
    %699 = math.exp %698 : vector<2x32xf32>
    %cst_317 = arith.constant 1.000000e+00 : f32
    %700 = vector.broadcast %cst_317 : f32 to vector<2x32xf32>
    %701 = arith.addf %700, %699 : vector<2x32xf32>
    %702 = arith.divf %700, %701 : vector<2x32xf32>
    %703 = arith.addf %690, %695 : vector<2x32xf32>
    %704 = arith.negf %703 : vector<2x32xf32>
    %705 = math.exp %704 : vector<2x32xf32>
    %cst_318 = arith.constant 1.000000e+00 : f32
    %706 = vector.broadcast %cst_318 : f32 to vector<2x32xf32>
    %707 = arith.addf %706, %705 : vector<2x32xf32>
    %708 = arith.divf %706, %707 : vector<2x32xf32>
    %709 = arith.addf %696, %650 : vector<2x32xf32>
    %710 = arith.mulf %702, %709 : vector<2x32xf32>
    %711 = arith.addf %693, %710 : vector<2x32xf32>
    %712 = math.tanh %711 : vector<2x32xf32>
    %cst_319 = arith.constant 1.000000e+00 : f32
    %713 = vector.broadcast %cst_319 : f32 to vector<2x32xf32>
    %714 = arith.subf %713, %708 : vector<2x32xf32>
    %715 = arith.mulf %714, %712 : vector<2x32xf32>
    %716 = arith.mulf %708, %684 : vector<2x32xf32>
    %717 = arith.addf %715, %716 : vector<2x32xf32>
    %c2_i32_320 = arith.constant 2 : i32
    %718 = arith.index_cast %c2_i32_320 : i32 to index
    %c0_321 = arith.constant 0 : index
    %c0_322 = arith.constant 0 : index
    %719 = vector.load %arg25[%718, %c0_321, %c0_322] : memref<16x2x32xf32, #tpu.memory_space<vmem>>, vector<1x2x32xf32>
    %720 = vector.shape_cast %719 : vector<1x2x32xf32> to vector<2x32xf32>
    %721 = arith.index_cast %c2_i32_320 : i32 to index
    %c0_323 = arith.constant 0 : index
    %c0_324 = arith.constant 0 : index
    %722 = vector.load %arg26[%721, %c0_323, %c0_324] : memref<16x2x32xf32, #tpu.memory_space<vmem>>, vector<1x2x32xf32>
    %723 = vector.shape_cast %722 : vector<1x2x32xf32> to vector<2x32xf32>
    %724 = arith.index_cast %c2_i32_320 : i32 to index
    %c0_325 = arith.constant 0 : index
    %c0_326 = arith.constant 0 : index
    %725 = vector.load %arg27[%724, %c0_325, %c0_326] : memref<16x2x32xf32, #tpu.memory_space<vmem>>, vector<1x2x32xf32>
    %726 = vector.shape_cast %725 : vector<1x2x32xf32> to vector<2x32xf32>
    %cst_327 = arith.constant dense<0.000000e+00> : vector<2x32xf32>
    %727 = tpu.matmul %717, %645, %cst_327 {dimension_numbers = #tpu.dot_dimension_numbers<[1], [0], [0], [1], [0, 0, 1, 1], [], []>} : vector<2x32xf32>, vector<32x32xf32>, vector<2x32xf32> -> vector<2x32xf32>
    %cst_328 = arith.constant dense<0.000000e+00> : vector<2x32xf32>
    %728 = tpu.matmul %717, %646, %cst_328 {dimension_numbers = #tpu.dot_dimension_numbers<[1], [0], [0], [1], [0, 0, 1, 1], [], []>} : vector<2x32xf32>, vector<32x32xf32>, vector<2x32xf32> -> vector<2x32xf32>
    %cst_329 = arith.constant dense<0.000000e+00> : vector<2x32xf32>
    %729 = tpu.matmul %717, %647, %cst_329 {dimension_numbers = #tpu.dot_dimension_numbers<[1], [0], [0], [1], [0, 0, 1, 1], [], []>} : vector<2x32xf32>, vector<32x32xf32>, vector<2x32xf32> -> vector<2x32xf32>
    %730 = arith.addf %720, %727 : vector<2x32xf32>
    %731 = arith.negf %730 : vector<2x32xf32>
    %732 = math.exp %731 : vector<2x32xf32>
    %cst_330 = arith.constant 1.000000e+00 : f32
    %733 = vector.broadcast %cst_330 : f32 to vector<2x32xf32>
    %734 = arith.addf %733, %732 : vector<2x32xf32>
    %735 = arith.divf %733, %734 : vector<2x32xf32>
    %736 = arith.addf %723, %728 : vector<2x32xf32>
    %737 = arith.negf %736 : vector<2x32xf32>
    %738 = math.exp %737 : vector<2x32xf32>
    %cst_331 = arith.constant 1.000000e+00 : f32
    %739 = vector.broadcast %cst_331 : f32 to vector<2x32xf32>
    %740 = arith.addf %739, %738 : vector<2x32xf32>
    %741 = arith.divf %739, %740 : vector<2x32xf32>
    %742 = arith.addf %729, %650 : vector<2x32xf32>
    %743 = arith.mulf %735, %742 : vector<2x32xf32>
    %744 = arith.addf %726, %743 : vector<2x32xf32>
    %745 = math.tanh %744 : vector<2x32xf32>
    %cst_332 = arith.constant 1.000000e+00 : f32
    %746 = vector.broadcast %cst_332 : f32 to vector<2x32xf32>
    %747 = arith.subf %746, %741 : vector<2x32xf32>
    %748 = arith.mulf %747, %745 : vector<2x32xf32>
    %749 = arith.mulf %741, %717 : vector<2x32xf32>
    %750 = arith.addf %748, %749 : vector<2x32xf32>
    %c3_i32_333 = arith.constant 3 : i32
    %751 = arith.index_cast %c3_i32_333 : i32 to index
    %c0_334 = arith.constant 0 : index
    %c0_335 = arith.constant 0 : index
    %752 = vector.load %arg25[%751, %c0_334, %c0_335] : memref<16x2x32xf32, #tpu.memory_space<vmem>>, vector<1x2x32xf32>
    %753 = vector.shape_cast %752 : vector<1x2x32xf32> to vector<2x32xf32>
    %754 = arith.index_cast %c3_i32_333 : i32 to index
    %c0_336 = arith.constant 0 : index
    %c0_337 = arith.constant 0 : index
    %755 = vector.load %arg26[%754, %c0_336, %c0_337] : memref<16x2x32xf32, #tpu.memory_space<vmem>>, vector<1x2x32xf32>
    %756 = vector.shape_cast %755 : vector<1x2x32xf32> to vector<2x32xf32>
    %757 = arith.index_cast %c3_i32_333 : i32 to index
    %c0_338 = arith.constant 0 : index
    %c0_339 = arith.constant 0 : index
    %758 = vector.load %arg27[%757, %c0_338, %c0_339] : memref<16x2x32xf32, #tpu.memory_space<vmem>>, vector<1x2x32xf32>
    %759 = vector.shape_cast %758 : vector<1x2x32xf32> to vector<2x32xf32>
    %cst_340 = arith.constant dense<0.000000e+00> : vector<2x32xf32>
    %760 = tpu.matmul %750, %645, %cst_340 {dimension_numbers = #tpu.dot_dimension_numbers<[1], [0], [0], [1], [0, 0, 1, 1], [], []>} : vector<2x32xf32>, vector<32x32xf32>, vector<2x32xf32> -> vector<2x32xf32>
    %cst_341 = arith.constant dense<0.000000e+00> : vector<2x32xf32>
    %761 = tpu.matmul %750, %646, %cst_341 {dimension_numbers = #tpu.dot_dimension_numbers<[1], [0], [0], [1], [0, 0, 1, 1], [], []>} : vector<2x32xf32>, vector<32x32xf32>, vector<2x32xf32> -> vector<2x32xf32>
    %cst_342 = arith.constant dense<0.000000e+00> : vector<2x32xf32>
    %762 = tpu.matmul %750, %647, %cst_342 {dimension_numbers = #tpu.dot_dimension_numbers<[1], [0], [0], [1], [0, 0, 1, 1], [], []>} : vector<2x32xf32>, vector<32x32xf32>, vector<2x32xf32> -> vector<2x32xf32>
    %763 = arith.addf %753, %760 : vector<2x32xf32>
    %764 = arith.negf %763 : vector<2x32xf32>
    %765 = math.exp %764 : vector<2x32xf32>
    %cst_343 = arith.constant 1.000000e+00 : f32
    %766 = vector.broadcast %cst_343 : f32 to vector<2x32xf32>
    %767 = arith.addf %766, %765 : vector<2x32xf32>
    %768 = arith.divf %766, %767 : vector<2x32xf32>
    %769 = arith.addf %756, %761 : vector<2x32xf32>
    %770 = arith.negf %769 : vector<2x32xf32>
    %771 = math.exp %770 : vector<2x32xf32>
    %cst_344 = arith.constant 1.000000e+00 : f32
    %772 = vector.broadcast %cst_344 : f32 to vector<2x32xf32>
    %773 = arith.addf %772, %771 : vector<2x32xf32>
    %774 = arith.divf %772, %773 : vector<2x32xf32>
    %775 = arith.addf %762, %650 : vector<2x32xf32>
    %776 = arith.mulf %768, %775 : vector<2x32xf32>
    %777 = arith.addf %759, %776 : vector<2x32xf32>
    %778 = math.tanh %777 : vector<2x32xf32>
    %cst_345 = arith.constant 1.000000e+00 : f32
    %779 = vector.broadcast %cst_345 : f32 to vector<2x32xf32>
    %780 = arith.subf %779, %774 : vector<2x32xf32>
    %781 = arith.mulf %780, %778 : vector<2x32xf32>
    %782 = arith.mulf %774, %750 : vector<2x32xf32>
    %783 = arith.addf %781, %782 : vector<2x32xf32>
    %c4_i32_346 = arith.constant 4 : i32
    %784 = arith.index_cast %c4_i32_346 : i32 to index
    %c0_347 = arith.constant 0 : index
    %c0_348 = arith.constant 0 : index
    %785 = vector.load %arg25[%784, %c0_347, %c0_348] : memref<16x2x32xf32, #tpu.memory_space<vmem>>, vector<1x2x32xf32>
    %786 = vector.shape_cast %785 : vector<1x2x32xf32> to vector<2x32xf32>
    %787 = arith.index_cast %c4_i32_346 : i32 to index
    %c0_349 = arith.constant 0 : index
    %c0_350 = arith.constant 0 : index
    %788 = vector.load %arg26[%787, %c0_349, %c0_350] : memref<16x2x32xf32, #tpu.memory_space<vmem>>, vector<1x2x32xf32>
    %789 = vector.shape_cast %788 : vector<1x2x32xf32> to vector<2x32xf32>
    %790 = arith.index_cast %c4_i32_346 : i32 to index
    %c0_351 = arith.constant 0 : index
    %c0_352 = arith.constant 0 : index
    %791 = vector.load %arg27[%790, %c0_351, %c0_352] : memref<16x2x32xf32, #tpu.memory_space<vmem>>, vector<1x2x32xf32>
    %792 = vector.shape_cast %791 : vector<1x2x32xf32> to vector<2x32xf32>
    %cst_353 = arith.constant dense<0.000000e+00> : vector<2x32xf32>
    %793 = tpu.matmul %783, %645, %cst_353 {dimension_numbers = #tpu.dot_dimension_numbers<[1], [0], [0], [1], [0, 0, 1, 1], [], []>} : vector<2x32xf32>, vector<32x32xf32>, vector<2x32xf32> -> vector<2x32xf32>
    %cst_354 = arith.constant dense<0.000000e+00> : vector<2x32xf32>
    %794 = tpu.matmul %783, %646, %cst_354 {dimension_numbers = #tpu.dot_dimension_numbers<[1], [0], [0], [1], [0, 0, 1, 1], [], []>} : vector<2x32xf32>, vector<32x32xf32>, vector<2x32xf32> -> vector<2x32xf32>
    %cst_355 = arith.constant dense<0.000000e+00> : vector<2x32xf32>
    %795 = tpu.matmul %783, %647, %cst_355 {dimension_numbers = #tpu.dot_dimension_numbers<[1], [0], [0], [1], [0, 0, 1, 1], [], []>} : vector<2x32xf32>, vector<32x32xf32>, vector<2x32xf32> -> vector<2x32xf32>
    %796 = arith.addf %786, %793 : vector<2x32xf32>
    %797 = arith.negf %796 : vector<2x32xf32>
    %798 = math.exp %797 : vector<2x32xf32>
    %cst_356 = arith.constant 1.000000e+00 : f32
    %799 = vector.broadcast %cst_356 : f32 to vector<2x32xf32>
    %800 = arith.addf %799, %798 : vector<2x32xf32>
    %801 = arith.divf %799, %800 : vector<2x32xf32>
    %802 = arith.addf %789, %794 : vector<2x32xf32>
    %803 = arith.negf %802 : vector<2x32xf32>
    %804 = math.exp %803 : vector<2x32xf32>
    %cst_357 = arith.constant 1.000000e+00 : f32
    %805 = vector.broadcast %cst_357 : f32 to vector<2x32xf32>
    %806 = arith.addf %805, %804 : vector<2x32xf32>
    %807 = arith.divf %805, %806 : vector<2x32xf32>
    %808 = arith.addf %795, %650 : vector<2x32xf32>
    %809 = arith.mulf %801, %808 : vector<2x32xf32>
    %810 = arith.addf %792, %809 : vector<2x32xf32>
    %811 = math.tanh %810 : vector<2x32xf32>
    %cst_358 = arith.constant 1.000000e+00 : f32
    %812 = vector.broadcast %cst_358 : f32 to vector<2x32xf32>
    %813 = arith.subf %812, %807 : vector<2x32xf32>
    %814 = arith.mulf %813, %811 : vector<2x32xf32>
    %815 = arith.mulf %807, %783 : vector<2x32xf32>
    %816 = arith.addf %814, %815 : vector<2x32xf32>
    %c5_i32_359 = arith.constant 5 : i32
    %817 = arith.index_cast %c5_i32_359 : i32 to index
    %c0_360 = arith.constant 0 : index
    %c0_361 = arith.constant 0 : index
    %818 = vector.load %arg25[%817, %c0_360, %c0_361] : memref<16x2x32xf32, #tpu.memory_space<vmem>>, vector<1x2x32xf32>
    %819 = vector.shape_cast %818 : vector<1x2x32xf32> to vector<2x32xf32>
    %820 = arith.index_cast %c5_i32_359 : i32 to index
    %c0_362 = arith.constant 0 : index
    %c0_363 = arith.constant 0 : index
    %821 = vector.load %arg26[%820, %c0_362, %c0_363] : memref<16x2x32xf32, #tpu.memory_space<vmem>>, vector<1x2x32xf32>
    %822 = vector.shape_cast %821 : vector<1x2x32xf32> to vector<2x32xf32>
    %823 = arith.index_cast %c5_i32_359 : i32 to index
    %c0_364 = arith.constant 0 : index
    %c0_365 = arith.constant 0 : index
    %824 = vector.load %arg27[%823, %c0_364, %c0_365] : memref<16x2x32xf32, #tpu.memory_space<vmem>>, vector<1x2x32xf32>
    %825 = vector.shape_cast %824 : vector<1x2x32xf32> to vector<2x32xf32>
    %cst_366 = arith.constant dense<0.000000e+00> : vector<2x32xf32>
    %826 = tpu.matmul %816, %645, %cst_366 {dimension_numbers = #tpu.dot_dimension_numbers<[1], [0], [0], [1], [0, 0, 1, 1], [], []>} : vector<2x32xf32>, vector<32x32xf32>, vector<2x32xf32> -> vector<2x32xf32>
    %cst_367 = arith.constant dense<0.000000e+00> : vector<2x32xf32>
    %827 = tpu.matmul %816, %646, %cst_367 {dimension_numbers = #tpu.dot_dimension_numbers<[1], [0], [0], [1], [0, 0, 1, 1], [], []>} : vector<2x32xf32>, vector<32x32xf32>, vector<2x32xf32> -> vector<2x32xf32>
    %cst_368 = arith.constant dense<0.000000e+00> : vector<2x32xf32>
    %828 = tpu.matmul %816, %647, %cst_368 {dimension_numbers = #tpu.dot_dimension_numbers<[1], [0], [0], [1], [0, 0, 1, 1], [], []>} : vector<2x32xf32>, vector<32x32xf32>, vector<2x32xf32> -> vector<2x32xf32>
    %829 = arith.addf %819, %826 : vector<2x32xf32>
    %830 = arith.negf %829 : vector<2x32xf32>
    %831 = math.exp %830 : vector<2x32xf32>
    %cst_369 = arith.constant 1.000000e+00 : f32
    %832 = vector.broadcast %cst_369 : f32 to vector<2x32xf32>
    %833 = arith.addf %832, %831 : vector<2x32xf32>
    %834 = arith.divf %832, %833 : vector<2x32xf32>
    %835 = arith.addf %822, %827 : vector<2x32xf32>
    %836 = arith.negf %835 : vector<2x32xf32>
    %837 = math.exp %836 : vector<2x32xf32>
    %cst_370 = arith.constant 1.000000e+00 : f32
    %838 = vector.broadcast %cst_370 : f32 to vector<2x32xf32>
    %839 = arith.addf %838, %837 : vector<2x32xf32>
    %840 = arith.divf %838, %839 : vector<2x32xf32>
    %841 = arith.addf %828, %650 : vector<2x32xf32>
    %842 = arith.mulf %834, %841 : vector<2x32xf32>
    %843 = arith.addf %825, %842 : vector<2x32xf32>
    %844 = math.tanh %843 : vector<2x32xf32>
    %cst_371 = arith.constant 1.000000e+00 : f32
    %845 = vector.broadcast %cst_371 : f32 to vector<2x32xf32>
    %846 = arith.subf %845, %840 : vector<2x32xf32>
    %847 = arith.mulf %846, %844 : vector<2x32xf32>
    %848 = arith.mulf %840, %816 : vector<2x32xf32>
    %849 = arith.addf %847, %848 : vector<2x32xf32>
    %c6_i32_372 = arith.constant 6 : i32
    %850 = arith.index_cast %c6_i32_372 : i32 to index
    %c0_373 = arith.constant 0 : index
    %c0_374 = arith.constant 0 : index
    %851 = vector.load %arg25[%850, %c0_373, %c0_374] : memref<16x2x32xf32, #tpu.memory_space<vmem>>, vector<1x2x32xf32>
    %852 = vector.shape_cast %851 : vector<1x2x32xf32> to vector<2x32xf32>
    %853 = arith.index_cast %c6_i32_372 : i32 to index
    %c0_375 = arith.constant 0 : index
    %c0_376 = arith.constant 0 : index
    %854 = vector.load %arg26[%853, %c0_375, %c0_376] : memref<16x2x32xf32, #tpu.memory_space<vmem>>, vector<1x2x32xf32>
    %855 = vector.shape_cast %854 : vector<1x2x32xf32> to vector<2x32xf32>
    %856 = arith.index_cast %c6_i32_372 : i32 to index
    %c0_377 = arith.constant 0 : index
    %c0_378 = arith.constant 0 : index
    %857 = vector.load %arg27[%856, %c0_377, %c0_378] : memref<16x2x32xf32, #tpu.memory_space<vmem>>, vector<1x2x32xf32>
    %858 = vector.shape_cast %857 : vector<1x2x32xf32> to vector<2x32xf32>
    %cst_379 = arith.constant dense<0.000000e+00> : vector<2x32xf32>
    %859 = tpu.matmul %849, %645, %cst_379 {dimension_numbers = #tpu.dot_dimension_numbers<[1], [0], [0], [1], [0, 0, 1, 1], [], []>} : vector<2x32xf32>, vector<32x32xf32>, vector<2x32xf32> -> vector<2x32xf32>
    %cst_380 = arith.constant dense<0.000000e+00> : vector<2x32xf32>
    %860 = tpu.matmul %849, %646, %cst_380 {dimension_numbers = #tpu.dot_dimension_numbers<[1], [0], [0], [1], [0, 0, 1, 1], [], []>} : vector<2x32xf32>, vector<32x32xf32>, vector<2x32xf32> -> vector<2x32xf32>
    %cst_381 = arith.constant dense<0.000000e+00> : vector<2x32xf32>
    %861 = tpu.matmul %849, %647, %cst_381 {dimension_numbers = #tpu.dot_dimension_numbers<[1], [0], [0], [1], [0, 0, 1, 1], [], []>} : vector<2x32xf32>, vector<32x32xf32>, vector<2x32xf32> -> vector<2x32xf32>
    %862 = arith.addf %852, %859 : vector<2x32xf32>
    %863 = arith.negf %862 : vector<2x32xf32>
    %864 = math.exp %863 : vector<2x32xf32>
    %cst_382 = arith.constant 1.000000e+00 : f32
    %865 = vector.broadcast %cst_382 : f32 to vector<2x32xf32>
    %866 = arith.addf %865, %864 : vector<2x32xf32>
    %867 = arith.divf %865, %866 : vector<2x32xf32>
    %868 = arith.addf %855, %860 : vector<2x32xf32>
    %869 = arith.negf %868 : vector<2x32xf32>
    %870 = math.exp %869 : vector<2x32xf32>
    %cst_383 = arith.constant 1.000000e+00 : f32
    %871 = vector.broadcast %cst_383 : f32 to vector<2x32xf32>
    %872 = arith.addf %871, %870 : vector<2x32xf32>
    %873 = arith.divf %871, %872 : vector<2x32xf32>
    %874 = arith.addf %861, %650 : vector<2x32xf32>
    %875 = arith.mulf %867, %874 : vector<2x32xf32>
    %876 = arith.addf %858, %875 : vector<2x32xf32>
    %877 = math.tanh %876 : vector<2x32xf32>
    %cst_384 = arith.constant 1.000000e+00 : f32
    %878 = vector.broadcast %cst_384 : f32 to vector<2x32xf32>
    %879 = arith.subf %878, %873 : vector<2x32xf32>
    %880 = arith.mulf %879, %877 : vector<2x32xf32>
    %881 = arith.mulf %873, %849 : vector<2x32xf32>
    %882 = arith.addf %880, %881 : vector<2x32xf32>
    %c7_i32_385 = arith.constant 7 : i32
    %883 = arith.index_cast %c7_i32_385 : i32 to index
    %c0_386 = arith.constant 0 : index
    %c0_387 = arith.constant 0 : index
    %884 = vector.load %arg25[%883, %c0_386, %c0_387] : memref<16x2x32xf32, #tpu.memory_space<vmem>>, vector<1x2x32xf32>
    %885 = vector.shape_cast %884 : vector<1x2x32xf32> to vector<2x32xf32>
    %886 = arith.index_cast %c7_i32_385 : i32 to index
    %c0_388 = arith.constant 0 : index
    %c0_389 = arith.constant 0 : index
    %887 = vector.load %arg26[%886, %c0_388, %c0_389] : memref<16x2x32xf32, #tpu.memory_space<vmem>>, vector<1x2x32xf32>
    %888 = vector.shape_cast %887 : vector<1x2x32xf32> to vector<2x32xf32>
    %889 = arith.index_cast %c7_i32_385 : i32 to index
    %c0_390 = arith.constant 0 : index
    %c0_391 = arith.constant 0 : index
    %890 = vector.load %arg27[%889, %c0_390, %c0_391] : memref<16x2x32xf32, #tpu.memory_space<vmem>>, vector<1x2x32xf32>
    %891 = vector.shape_cast %890 : vector<1x2x32xf32> to vector<2x32xf32>
    %cst_392 = arith.constant dense<0.000000e+00> : vector<2x32xf32>
    %892 = tpu.matmul %882, %645, %cst_392 {dimension_numbers = #tpu.dot_dimension_numbers<[1], [0], [0], [1], [0, 0, 1, 1], [], []>} : vector<2x32xf32>, vector<32x32xf32>, vector<2x32xf32> -> vector<2x32xf32>
    %cst_393 = arith.constant dense<0.000000e+00> : vector<2x32xf32>
    %893 = tpu.matmul %882, %646, %cst_393 {dimension_numbers = #tpu.dot_dimension_numbers<[1], [0], [0], [1], [0, 0, 1, 1], [], []>} : vector<2x32xf32>, vector<32x32xf32>, vector<2x32xf32> -> vector<2x32xf32>
    %cst_394 = arith.constant dense<0.000000e+00> : vector<2x32xf32>
    %894 = tpu.matmul %882, %647, %cst_394 {dimension_numbers = #tpu.dot_dimension_numbers<[1], [0], [0], [1], [0, 0, 1, 1], [], []>} : vector<2x32xf32>, vector<32x32xf32>, vector<2x32xf32> -> vector<2x32xf32>
    %895 = arith.addf %885, %892 : vector<2x32xf32>
    %896 = arith.negf %895 : vector<2x32xf32>
    %897 = math.exp %896 : vector<2x32xf32>
    %cst_395 = arith.constant 1.000000e+00 : f32
    %898 = vector.broadcast %cst_395 : f32 to vector<2x32xf32>
    %899 = arith.addf %898, %897 : vector<2x32xf32>
    %900 = arith.divf %898, %899 : vector<2x32xf32>
    %901 = arith.addf %888, %893 : vector<2x32xf32>
    %902 = arith.negf %901 : vector<2x32xf32>
    %903 = math.exp %902 : vector<2x32xf32>
    %cst_396 = arith.constant 1.000000e+00 : f32
    %904 = vector.broadcast %cst_396 : f32 to vector<2x32xf32>
    %905 = arith.addf %904, %903 : vector<2x32xf32>
    %906 = arith.divf %904, %905 : vector<2x32xf32>
    %907 = arith.addf %894, %650 : vector<2x32xf32>
    %908 = arith.mulf %900, %907 : vector<2x32xf32>
    %909 = arith.addf %891, %908 : vector<2x32xf32>
    %910 = math.tanh %909 : vector<2x32xf32>
    %cst_397 = arith.constant 1.000000e+00 : f32
    %911 = vector.broadcast %cst_397 : f32 to vector<2x32xf32>
    %912 = arith.subf %911, %906 : vector<2x32xf32>
    %913 = arith.mulf %912, %910 : vector<2x32xf32>
    %914 = arith.mulf %906, %882 : vector<2x32xf32>
    %915 = arith.addf %913, %914 : vector<2x32xf32>
    %c8_i32_398 = arith.constant 8 : i32
    %916 = arith.index_cast %c8_i32_398 : i32 to index
    %c0_399 = arith.constant 0 : index
    %c0_400 = arith.constant 0 : index
    %917 = vector.load %arg25[%916, %c0_399, %c0_400] : memref<16x2x32xf32, #tpu.memory_space<vmem>>, vector<1x2x32xf32>
    %918 = vector.shape_cast %917 : vector<1x2x32xf32> to vector<2x32xf32>
    %919 = arith.index_cast %c8_i32_398 : i32 to index
    %c0_401 = arith.constant 0 : index
    %c0_402 = arith.constant 0 : index
    %920 = vector.load %arg26[%919, %c0_401, %c0_402] : memref<16x2x32xf32, #tpu.memory_space<vmem>>, vector<1x2x32xf32>
    %921 = vector.shape_cast %920 : vector<1x2x32xf32> to vector<2x32xf32>
    %922 = arith.index_cast %c8_i32_398 : i32 to index
    %c0_403 = arith.constant 0 : index
    %c0_404 = arith.constant 0 : index
    %923 = vector.load %arg27[%922, %c0_403, %c0_404] : memref<16x2x32xf32, #tpu.memory_space<vmem>>, vector<1x2x32xf32>
    %924 = vector.shape_cast %923 : vector<1x2x32xf32> to vector<2x32xf32>
    %cst_405 = arith.constant dense<0.000000e+00> : vector<2x32xf32>
    %925 = tpu.matmul %915, %645, %cst_405 {dimension_numbers = #tpu.dot_dimension_numbers<[1], [0], [0], [1], [0, 0, 1, 1], [], []>} : vector<2x32xf32>, vector<32x32xf32>, vector<2x32xf32> -> vector<2x32xf32>
    %cst_406 = arith.constant dense<0.000000e+00> : vector<2x32xf32>
    %926 = tpu.matmul %915, %646, %cst_406 {dimension_numbers = #tpu.dot_dimension_numbers<[1], [0], [0], [1], [0, 0, 1, 1], [], []>} : vector<2x32xf32>, vector<32x32xf32>, vector<2x32xf32> -> vector<2x32xf32>
    %cst_407 = arith.constant dense<0.000000e+00> : vector<2x32xf32>
    %927 = tpu.matmul %915, %647, %cst_407 {dimension_numbers = #tpu.dot_dimension_numbers<[1], [0], [0], [1], [0, 0, 1, 1], [], []>} : vector<2x32xf32>, vector<32x32xf32>, vector<2x32xf32> -> vector<2x32xf32>
    %928 = arith.addf %918, %925 : vector<2x32xf32>
    %929 = arith.negf %928 : vector<2x32xf32>
    %930 = math.exp %929 : vector<2x32xf32>
    %cst_408 = arith.constant 1.000000e+00 : f32
    %931 = vector.broadcast %cst_408 : f32 to vector<2x32xf32>
    %932 = arith.addf %931, %930 : vector<2x32xf32>
    %933 = arith.divf %931, %932 : vector<2x32xf32>
    %934 = arith.addf %921, %926 : vector<2x32xf32>
    %935 = arith.negf %934 : vector<2x32xf32>
    %936 = math.exp %935 : vector<2x32xf32>
    %cst_409 = arith.constant 1.000000e+00 : f32
    %937 = vector.broadcast %cst_409 : f32 to vector<2x32xf32>
    %938 = arith.addf %937, %936 : vector<2x32xf32>
    %939 = arith.divf %937, %938 : vector<2x32xf32>
    %940 = arith.addf %927, %650 : vector<2x32xf32>
    %941 = arith.mulf %933, %940 : vector<2x32xf32>
    %942 = arith.addf %924, %941 : vector<2x32xf32>
    %943 = math.tanh %942 : vector<2x32xf32>
    %cst_410 = arith.constant 1.000000e+00 : f32
    %944 = vector.broadcast %cst_410 : f32 to vector<2x32xf32>
    %945 = arith.subf %944, %939 : vector<2x32xf32>
    %946 = arith.mulf %945, %943 : vector<2x32xf32>
    %947 = arith.mulf %939, %915 : vector<2x32xf32>
    %948 = arith.addf %946, %947 : vector<2x32xf32>
    %c9_i32_411 = arith.constant 9 : i32
    %949 = arith.index_cast %c9_i32_411 : i32 to index
    %c0_412 = arith.constant 0 : index
    %c0_413 = arith.constant 0 : index
    %950 = vector.load %arg25[%949, %c0_412, %c0_413] : memref<16x2x32xf32, #tpu.memory_space<vmem>>, vector<1x2x32xf32>
    %951 = vector.shape_cast %950 : vector<1x2x32xf32> to vector<2x32xf32>
    %952 = arith.index_cast %c9_i32_411 : i32 to index
    %c0_414 = arith.constant 0 : index
    %c0_415 = arith.constant 0 : index
    %953 = vector.load %arg26[%952, %c0_414, %c0_415] : memref<16x2x32xf32, #tpu.memory_space<vmem>>, vector<1x2x32xf32>
    %954 = vector.shape_cast %953 : vector<1x2x32xf32> to vector<2x32xf32>
    %955 = arith.index_cast %c9_i32_411 : i32 to index
    %c0_416 = arith.constant 0 : index
    %c0_417 = arith.constant 0 : index
    %956 = vector.load %arg27[%955, %c0_416, %c0_417] : memref<16x2x32xf32, #tpu.memory_space<vmem>>, vector<1x2x32xf32>
    %957 = vector.shape_cast %956 : vector<1x2x32xf32> to vector<2x32xf32>
    %cst_418 = arith.constant dense<0.000000e+00> : vector<2x32xf32>
    %958 = tpu.matmul %948, %645, %cst_418 {dimension_numbers = #tpu.dot_dimension_numbers<[1], [0], [0], [1], [0, 0, 1, 1], [], []>} : vector<2x32xf32>, vector<32x32xf32>, vector<2x32xf32> -> vector<2x32xf32>
    %cst_419 = arith.constant dense<0.000000e+00> : vector<2x32xf32>
    %959 = tpu.matmul %948, %646, %cst_419 {dimension_numbers = #tpu.dot_dimension_numbers<[1], [0], [0], [1], [0, 0, 1, 1], [], []>} : vector<2x32xf32>, vector<32x32xf32>, vector<2x32xf32> -> vector<2x32xf32>
    %cst_420 = arith.constant dense<0.000000e+00> : vector<2x32xf32>
    %960 = tpu.matmul %948, %647, %cst_420 {dimension_numbers = #tpu.dot_dimension_numbers<[1], [0], [0], [1], [0, 0, 1, 1], [], []>} : vector<2x32xf32>, vector<32x32xf32>, vector<2x32xf32> -> vector<2x32xf32>
    %961 = arith.addf %951, %958 : vector<2x32xf32>
    %962 = arith.negf %961 : vector<2x32xf32>
    %963 = math.exp %962 : vector<2x32xf32>
    %cst_421 = arith.constant 1.000000e+00 : f32
    %964 = vector.broadcast %cst_421 : f32 to vector<2x32xf32>
    %965 = arith.addf %964, %963 : vector<2x32xf32>
    %966 = arith.divf %964, %965 : vector<2x32xf32>
    %967 = arith.addf %954, %959 : vector<2x32xf32>
    %968 = arith.negf %967 : vector<2x32xf32>
    %969 = math.exp %968 : vector<2x32xf32>
    %cst_422 = arith.constant 1.000000e+00 : f32
    %970 = vector.broadcast %cst_422 : f32 to vector<2x32xf32>
    %971 = arith.addf %970, %969 : vector<2x32xf32>
    %972 = arith.divf %970, %971 : vector<2x32xf32>
    %973 = arith.addf %960, %650 : vector<2x32xf32>
    %974 = arith.mulf %966, %973 : vector<2x32xf32>
    %975 = arith.addf %957, %974 : vector<2x32xf32>
    %976 = math.tanh %975 : vector<2x32xf32>
    %cst_423 = arith.constant 1.000000e+00 : f32
    %977 = vector.broadcast %cst_423 : f32 to vector<2x32xf32>
    %978 = arith.subf %977, %972 : vector<2x32xf32>
    %979 = arith.mulf %978, %976 : vector<2x32xf32>
    %980 = arith.mulf %972, %948 : vector<2x32xf32>
    %981 = arith.addf %979, %980 : vector<2x32xf32>
    %c10_i32_424 = arith.constant 10 : i32
    %982 = arith.index_cast %c10_i32_424 : i32 to index
    %c0_425 = arith.constant 0 : index
    %c0_426 = arith.constant 0 : index
    %983 = vector.load %arg25[%982, %c0_425, %c0_426] : memref<16x2x32xf32, #tpu.memory_space<vmem>>, vector<1x2x32xf32>
    %984 = vector.shape_cast %983 : vector<1x2x32xf32> to vector<2x32xf32>
    %985 = arith.index_cast %c10_i32_424 : i32 to index
    %c0_427 = arith.constant 0 : index
    %c0_428 = arith.constant 0 : index
    %986 = vector.load %arg26[%985, %c0_427, %c0_428] : memref<16x2x32xf32, #tpu.memory_space<vmem>>, vector<1x2x32xf32>
    %987 = vector.shape_cast %986 : vector<1x2x32xf32> to vector<2x32xf32>
    %988 = arith.index_cast %c10_i32_424 : i32 to index
    %c0_429 = arith.constant 0 : index
    %c0_430 = arith.constant 0 : index
    %989 = vector.load %arg27[%988, %c0_429, %c0_430] : memref<16x2x32xf32, #tpu.memory_space<vmem>>, vector<1x2x32xf32>
    %990 = vector.shape_cast %989 : vector<1x2x32xf32> to vector<2x32xf32>
    %cst_431 = arith.constant dense<0.000000e+00> : vector<2x32xf32>
    %991 = tpu.matmul %981, %645, %cst_431 {dimension_numbers = #tpu.dot_dimension_numbers<[1], [0], [0], [1], [0, 0, 1, 1], [], []>} : vector<2x32xf32>, vector<32x32xf32>, vector<2x32xf32> -> vector<2x32xf32>
    %cst_432 = arith.constant dense<0.000000e+00> : vector<2x32xf32>
    %992 = tpu.matmul %981, %646, %cst_432 {dimension_numbers = #tpu.dot_dimension_numbers<[1], [0], [0], [1], [0, 0, 1, 1], [], []>} : vector<2x32xf32>, vector<32x32xf32>, vector<2x32xf32> -> vector<2x32xf32>
    %cst_433 = arith.constant dense<0.000000e+00> : vector<2x32xf32>
    %993 = tpu.matmul %981, %647, %cst_433 {dimension_numbers = #tpu.dot_dimension_numbers<[1], [0], [0], [1], [0, 0, 1, 1], [], []>} : vector<2x32xf32>, vector<32x32xf32>, vector<2x32xf32> -> vector<2x32xf32>
    %994 = arith.addf %984, %991 : vector<2x32xf32>
    %995 = arith.negf %994 : vector<2x32xf32>
    %996 = math.exp %995 : vector<2x32xf32>
    %cst_434 = arith.constant 1.000000e+00 : f32
    %997 = vector.broadcast %cst_434 : f32 to vector<2x32xf32>
    %998 = arith.addf %997, %996 : vector<2x32xf32>
    %999 = arith.divf %997, %998 : vector<2x32xf32>
    %1000 = arith.addf %987, %992 : vector<2x32xf32>
    %1001 = arith.negf %1000 : vector<2x32xf32>
    %1002 = math.exp %1001 : vector<2x32xf32>
    %cst_435 = arith.constant 1.000000e+00 : f32
    %1003 = vector.broadcast %cst_435 : f32 to vector<2x32xf32>
    %1004 = arith.addf %1003, %1002 : vector<2x32xf32>
    %1005 = arith.divf %1003, %1004 : vector<2x32xf32>
    %1006 = arith.addf %993, %650 : vector<2x32xf32>
    %1007 = arith.mulf %999, %1006 : vector<2x32xf32>
    %1008 = arith.addf %990, %1007 : vector<2x32xf32>
    %1009 = math.tanh %1008 : vector<2x32xf32>
    %cst_436 = arith.constant 1.000000e+00 : f32
    %1010 = vector.broadcast %cst_436 : f32 to vector<2x32xf32>
    %1011 = arith.subf %1010, %1005 : vector<2x32xf32>
    %1012 = arith.mulf %1011, %1009 : vector<2x32xf32>
    %1013 = arith.mulf %1005, %981 : vector<2x32xf32>
    %1014 = arith.addf %1012, %1013 : vector<2x32xf32>
    %c11_i32_437 = arith.constant 11 : i32
    %1015 = arith.index_cast %c11_i32_437 : i32 to index
    %c0_438 = arith.constant 0 : index
    %c0_439 = arith.constant 0 : index
    %1016 = vector.load %arg25[%1015, %c0_438, %c0_439] : memref<16x2x32xf32, #tpu.memory_space<vmem>>, vector<1x2x32xf32>
    %1017 = vector.shape_cast %1016 : vector<1x2x32xf32> to vector<2x32xf32>
    %1018 = arith.index_cast %c11_i32_437 : i32 to index
    %c0_440 = arith.constant 0 : index
    %c0_441 = arith.constant 0 : index
    %1019 = vector.load %arg26[%1018, %c0_440, %c0_441] : memref<16x2x32xf32, #tpu.memory_space<vmem>>, vector<1x2x32xf32>
    %1020 = vector.shape_cast %1019 : vector<1x2x32xf32> to vector<2x32xf32>
    %1021 = arith.index_cast %c11_i32_437 : i32 to index
    %c0_442 = arith.constant 0 : index
    %c0_443 = arith.constant 0 : index
    %1022 = vector.load %arg27[%1021, %c0_442, %c0_443] : memref<16x2x32xf32, #tpu.memory_space<vmem>>, vector<1x2x32xf32>
    %1023 = vector.shape_cast %1022 : vector<1x2x32xf32> to vector<2x32xf32>
    %cst_444 = arith.constant dense<0.000000e+00> : vector<2x32xf32>
    %1024 = tpu.matmul %1014, %645, %cst_444 {dimension_numbers = #tpu.dot_dimension_numbers<[1], [0], [0], [1], [0, 0, 1, 1], [], []>} : vector<2x32xf32>, vector<32x32xf32>, vector<2x32xf32> -> vector<2x32xf32>
    %cst_445 = arith.constant dense<0.000000e+00> : vector<2x32xf32>
    %1025 = tpu.matmul %1014, %646, %cst_445 {dimension_numbers = #tpu.dot_dimension_numbers<[1], [0], [0], [1], [0, 0, 1, 1], [], []>} : vector<2x32xf32>, vector<32x32xf32>, vector<2x32xf32> -> vector<2x32xf32>
    %cst_446 = arith.constant dense<0.000000e+00> : vector<2x32xf32>
    %1026 = tpu.matmul %1014, %647, %cst_446 {dimension_numbers = #tpu.dot_dimension_numbers<[1], [0], [0], [1], [0, 0, 1, 1], [], []>} : vector<2x32xf32>, vector<32x32xf32>, vector<2x32xf32> -> vector<2x32xf32>
    %1027 = arith.addf %1017, %1024 : vector<2x32xf32>
    %1028 = arith.negf %1027 : vector<2x32xf32>
    %1029 = math.exp %1028 : vector<2x32xf32>
    %cst_447 = arith.constant 1.000000e+00 : f32
    %1030 = vector.broadcast %cst_447 : f32 to vector<2x32xf32>
    %1031 = arith.addf %1030, %1029 : vector<2x32xf32>
    %1032 = arith.divf %1030, %1031 : vector<2x32xf32>
    %1033 = arith.addf %1020, %1025 : vector<2x32xf32>
    %1034 = arith.negf %1033 : vector<2x32xf32>
    %1035 = math.exp %1034 : vector<2x32xf32>
    %cst_448 = arith.constant 1.000000e+00 : f32
    %1036 = vector.broadcast %cst_448 : f32 to vector<2x32xf32>
    %1037 = arith.addf %1036, %1035 : vector<2x32xf32>
    %1038 = arith.divf %1036, %1037 : vector<2x32xf32>
    %1039 = arith.addf %1026, %650 : vector<2x32xf32>
    %1040 = arith.mulf %1032, %1039 : vector<2x32xf32>
    %1041 = arith.addf %1023, %1040 : vector<2x32xf32>
    %1042 = math.tanh %1041 : vector<2x32xf32>
    %cst_449 = arith.constant 1.000000e+00 : f32
    %1043 = vector.broadcast %cst_449 : f32 to vector<2x32xf32>
    %1044 = arith.subf %1043, %1038 : vector<2x32xf32>
    %1045 = arith.mulf %1044, %1042 : vector<2x32xf32>
    %1046 = arith.mulf %1038, %1014 : vector<2x32xf32>
    %1047 = arith.addf %1045, %1046 : vector<2x32xf32>
    %c12_i32_450 = arith.constant 12 : i32
    %1048 = arith.index_cast %c12_i32_450 : i32 to index
    %c0_451 = arith.constant 0 : index
    %c0_452 = arith.constant 0 : index
    %1049 = vector.load %arg25[%1048, %c0_451, %c0_452] : memref<16x2x32xf32, #tpu.memory_space<vmem>>, vector<1x2x32xf32>
    %1050 = vector.shape_cast %1049 : vector<1x2x32xf32> to vector<2x32xf32>
    %1051 = arith.index_cast %c12_i32_450 : i32 to index
    %c0_453 = arith.constant 0 : index
    %c0_454 = arith.constant 0 : index
    %1052 = vector.load %arg26[%1051, %c0_453, %c0_454] : memref<16x2x32xf32, #tpu.memory_space<vmem>>, vector<1x2x32xf32>
    %1053 = vector.shape_cast %1052 : vector<1x2x32xf32> to vector<2x32xf32>
    %1054 = arith.index_cast %c12_i32_450 : i32 to index
    %c0_455 = arith.constant 0 : index
    %c0_456 = arith.constant 0 : index
    %1055 = vector.load %arg27[%1054, %c0_455, %c0_456] : memref<16x2x32xf32, #tpu.memory_space<vmem>>, vector<1x2x32xf32>
    %1056 = vector.shape_cast %1055 : vector<1x2x32xf32> to vector<2x32xf32>
    %cst_457 = arith.constant dense<0.000000e+00> : vector<2x32xf32>
    %1057 = tpu.matmul %1047, %645, %cst_457 {dimension_numbers = #tpu.dot_dimension_numbers<[1], [0], [0], [1], [0, 0, 1, 1], [], []>} : vector<2x32xf32>, vector<32x32xf32>, vector<2x32xf32> -> vector<2x32xf32>
    %cst_458 = arith.constant dense<0.000000e+00> : vector<2x32xf32>
    %1058 = tpu.matmul %1047, %646, %cst_458 {dimension_numbers = #tpu.dot_dimension_numbers<[1], [0], [0], [1], [0, 0, 1, 1], [], []>} : vector<2x32xf32>, vector<32x32xf32>, vector<2x32xf32> -> vector<2x32xf32>
    %cst_459 = arith.constant dense<0.000000e+00> : vector<2x32xf32>
    %1059 = tpu.matmul %1047, %647, %cst_459 {dimension_numbers = #tpu.dot_dimension_numbers<[1], [0], [0], [1], [0, 0, 1, 1], [], []>} : vector<2x32xf32>, vector<32x32xf32>, vector<2x32xf32> -> vector<2x32xf32>
    %1060 = arith.addf %1050, %1057 : vector<2x32xf32>
    %1061 = arith.negf %1060 : vector<2x32xf32>
    %1062 = math.exp %1061 : vector<2x32xf32>
    %cst_460 = arith.constant 1.000000e+00 : f32
    %1063 = vector.broadcast %cst_460 : f32 to vector<2x32xf32>
    %1064 = arith.addf %1063, %1062 : vector<2x32xf32>
    %1065 = arith.divf %1063, %1064 : vector<2x32xf32>
    %1066 = arith.addf %1053, %1058 : vector<2x32xf32>
    %1067 = arith.negf %1066 : vector<2x32xf32>
    %1068 = math.exp %1067 : vector<2x32xf32>
    %cst_461 = arith.constant 1.000000e+00 : f32
    %1069 = vector.broadcast %cst_461 : f32 to vector<2x32xf32>
    %1070 = arith.addf %1069, %1068 : vector<2x32xf32>
    %1071 = arith.divf %1069, %1070 : vector<2x32xf32>
    %1072 = arith.addf %1059, %650 : vector<2x32xf32>
    %1073 = arith.mulf %1065, %1072 : vector<2x32xf32>
    %1074 = arith.addf %1056, %1073 : vector<2x32xf32>
    %1075 = math.tanh %1074 : vector<2x32xf32>
    %cst_462 = arith.constant 1.000000e+00 : f32
    %1076 = vector.broadcast %cst_462 : f32 to vector<2x32xf32>
    %1077 = arith.subf %1076, %1071 : vector<2x32xf32>
    %1078 = arith.mulf %1077, %1075 : vector<2x32xf32>
    %1079 = arith.mulf %1071, %1047 : vector<2x32xf32>
    %1080 = arith.addf %1078, %1079 : vector<2x32xf32>
    %c13_i32_463 = arith.constant 13 : i32
    %1081 = arith.index_cast %c13_i32_463 : i32 to index
    %c0_464 = arith.constant 0 : index
    %c0_465 = arith.constant 0 : index
    %1082 = vector.load %arg25[%1081, %c0_464, %c0_465] : memref<16x2x32xf32, #tpu.memory_space<vmem>>, vector<1x2x32xf32>
    %1083 = vector.shape_cast %1082 : vector<1x2x32xf32> to vector<2x32xf32>
    %1084 = arith.index_cast %c13_i32_463 : i32 to index
    %c0_466 = arith.constant 0 : index
    %c0_467 = arith.constant 0 : index
    %1085 = vector.load %arg26[%1084, %c0_466, %c0_467] : memref<16x2x32xf32, #tpu.memory_space<vmem>>, vector<1x2x32xf32>
    %1086 = vector.shape_cast %1085 : vector<1x2x32xf32> to vector<2x32xf32>
    %1087 = arith.index_cast %c13_i32_463 : i32 to index
    %c0_468 = arith.constant 0 : index
    %c0_469 = arith.constant 0 : index
    %1088 = vector.load %arg27[%1087, %c0_468, %c0_469] : memref<16x2x32xf32, #tpu.memory_space<vmem>>, vector<1x2x32xf32>
    %1089 = vector.shape_cast %1088 : vector<1x2x32xf32> to vector<2x32xf32>
    %cst_470 = arith.constant dense<0.000000e+00> : vector<2x32xf32>
    %1090 = tpu.matmul %1080, %645, %cst_470 {dimension_numbers = #tpu.dot_dimension_numbers<[1], [0], [0], [1], [0, 0, 1, 1], [], []>} : vector<2x32xf32>, vector<32x32xf32>, vector<2x32xf32> -> vector<2x32xf32>
    %cst_471 = arith.constant dense<0.000000e+00> : vector<2x32xf32>
    %1091 = tpu.matmul %1080, %646, %cst_471 {dimension_numbers = #tpu.dot_dimension_numbers<[1], [0], [0], [1], [0, 0, 1, 1], [], []>} : vector<2x32xf32>, vector<32x32xf32>, vector<2x32xf32> -> vector<2x32xf32>
    %cst_472 = arith.constant dense<0.000000e+00> : vector<2x32xf32>
    %1092 = tpu.matmul %1080, %647, %cst_472 {dimension_numbers = #tpu.dot_dimension_numbers<[1], [0], [0], [1], [0, 0, 1, 1], [], []>} : vector<2x32xf32>, vector<32x32xf32>, vector<2x32xf32> -> vector<2x32xf32>
    %1093 = arith.addf %1083, %1090 : vector<2x32xf32>
    %1094 = arith.negf %1093 : vector<2x32xf32>
    %1095 = math.exp %1094 : vector<2x32xf32>
    %cst_473 = arith.constant 1.000000e+00 : f32
    %1096 = vector.broadcast %cst_473 : f32 to vector<2x32xf32>
    %1097 = arith.addf %1096, %1095 : vector<2x32xf32>
    %1098 = arith.divf %1096, %1097 : vector<2x32xf32>
    %1099 = arith.addf %1086, %1091 : vector<2x32xf32>
    %1100 = arith.negf %1099 : vector<2x32xf32>
    %1101 = math.exp %1100 : vector<2x32xf32>
    %cst_474 = arith.constant 1.000000e+00 : f32
    %1102 = vector.broadcast %cst_474 : f32 to vector<2x32xf32>
    %1103 = arith.addf %1102, %1101 : vector<2x32xf32>
    %1104 = arith.divf %1102, %1103 : vector<2x32xf32>
    %1105 = arith.addf %1092, %650 : vector<2x32xf32>
    %1106 = arith.mulf %1098, %1105 : vector<2x32xf32>
    %1107 = arith.addf %1089, %1106 : vector<2x32xf32>
    %1108 = math.tanh %1107 : vector<2x32xf32>
    %cst_475 = arith.constant 1.000000e+00 : f32
    %1109 = vector.broadcast %cst_475 : f32 to vector<2x32xf32>
    %1110 = arith.subf %1109, %1104 : vector<2x32xf32>
    %1111 = arith.mulf %1110, %1108 : vector<2x32xf32>
    %1112 = arith.mulf %1104, %1080 : vector<2x32xf32>
    %1113 = arith.addf %1111, %1112 : vector<2x32xf32>
    %c14_i32_476 = arith.constant 14 : i32
    %1114 = arith.index_cast %c14_i32_476 : i32 to index
    %c0_477 = arith.constant 0 : index
    %c0_478 = arith.constant 0 : index
    %1115 = vector.load %arg25[%1114, %c0_477, %c0_478] : memref<16x2x32xf32, #tpu.memory_space<vmem>>, vector<1x2x32xf32>
    %1116 = vector.shape_cast %1115 : vector<1x2x32xf32> to vector<2x32xf32>
    %1117 = arith.index_cast %c14_i32_476 : i32 to index
    %c0_479 = arith.constant 0 : index
    %c0_480 = arith.constant 0 : index
    %1118 = vector.load %arg26[%1117, %c0_479, %c0_480] : memref<16x2x32xf32, #tpu.memory_space<vmem>>, vector<1x2x32xf32>
    %1119 = vector.shape_cast %1118 : vector<1x2x32xf32> to vector<2x32xf32>
    %1120 = arith.index_cast %c14_i32_476 : i32 to index
    %c0_481 = arith.constant 0 : index
    %c0_482 = arith.constant 0 : index
    %1121 = vector.load %arg27[%1120, %c0_481, %c0_482] : memref<16x2x32xf32, #tpu.memory_space<vmem>>, vector<1x2x32xf32>
    %1122 = vector.shape_cast %1121 : vector<1x2x32xf32> to vector<2x32xf32>
    %cst_483 = arith.constant dense<0.000000e+00> : vector<2x32xf32>
    %1123 = tpu.matmul %1113, %645, %cst_483 {dimension_numbers = #tpu.dot_dimension_numbers<[1], [0], [0], [1], [0, 0, 1, 1], [], []>} : vector<2x32xf32>, vector<32x32xf32>, vector<2x32xf32> -> vector<2x32xf32>
    %cst_484 = arith.constant dense<0.000000e+00> : vector<2x32xf32>
    %1124 = tpu.matmul %1113, %646, %cst_484 {dimension_numbers = #tpu.dot_dimension_numbers<[1], [0], [0], [1], [0, 0, 1, 1], [], []>} : vector<2x32xf32>, vector<32x32xf32>, vector<2x32xf32> -> vector<2x32xf32>
    %cst_485 = arith.constant dense<0.000000e+00> : vector<2x32xf32>
    %1125 = tpu.matmul %1113, %647, %cst_485 {dimension_numbers = #tpu.dot_dimension_numbers<[1], [0], [0], [1], [0, 0, 1, 1], [], []>} : vector<2x32xf32>, vector<32x32xf32>, vector<2x32xf32> -> vector<2x32xf32>
    %1126 = arith.addf %1116, %1123 : vector<2x32xf32>
    %1127 = arith.negf %1126 : vector<2x32xf32>
    %1128 = math.exp %1127 : vector<2x32xf32>
    %cst_486 = arith.constant 1.000000e+00 : f32
    %1129 = vector.broadcast %cst_486 : f32 to vector<2x32xf32>
    %1130 = arith.addf %1129, %1128 : vector<2x32xf32>
    %1131 = arith.divf %1129, %1130 : vector<2x32xf32>
    %1132 = arith.addf %1119, %1124 : vector<2x32xf32>
    %1133 = arith.negf %1132 : vector<2x32xf32>
    %1134 = math.exp %1133 : vector<2x32xf32>
    %cst_487 = arith.constant 1.000000e+00 : f32
    %1135 = vector.broadcast %cst_487 : f32 to vector<2x32xf32>
    %1136 = arith.addf %1135, %1134 : vector<2x32xf32>
    %1137 = arith.divf %1135, %1136 : vector<2x32xf32>
    %1138 = arith.addf %1125, %650 : vector<2x32xf32>
    %1139 = arith.mulf %1131, %1138 : vector<2x32xf32>
    %1140 = arith.addf %1122, %1139 : vector<2x32xf32>
    %1141 = math.tanh %1140 : vector<2x32xf32>
    %cst_488 = arith.constant 1.000000e+00 : f32
    %1142 = vector.broadcast %cst_488 : f32 to vector<2x32xf32>
    %1143 = arith.subf %1142, %1137 : vector<2x32xf32>
    %1144 = arith.mulf %1143, %1141 : vector<2x32xf32>
    %1145 = arith.mulf %1137, %1113 : vector<2x32xf32>
    %1146 = arith.addf %1144, %1145 : vector<2x32xf32>
    %c15_i32_489 = arith.constant 15 : i32
    %1147 = arith.index_cast %c15_i32_489 : i32 to index
    %c0_490 = arith.constant 0 : index
    %c0_491 = arith.constant 0 : index
    %1148 = vector.load %arg25[%1147, %c0_490, %c0_491] : memref<16x2x32xf32, #tpu.memory_space<vmem>>, vector<1x2x32xf32>
    %1149 = vector.shape_cast %1148 : vector<1x2x32xf32> to vector<2x32xf32>
    %1150 = arith.index_cast %c15_i32_489 : i32 to index
    %c0_492 = arith.constant 0 : index
    %c0_493 = arith.constant 0 : index
    %1151 = vector.load %arg26[%1150, %c0_492, %c0_493] : memref<16x2x32xf32, #tpu.memory_space<vmem>>, vector<1x2x32xf32>
    %1152 = vector.shape_cast %1151 : vector<1x2x32xf32> to vector<2x32xf32>
    %1153 = arith.index_cast %c15_i32_489 : i32 to index
    %c0_494 = arith.constant 0 : index
    %c0_495 = arith.constant 0 : index
    %1154 = vector.load %arg27[%1153, %c0_494, %c0_495] : memref<16x2x32xf32, #tpu.memory_space<vmem>>, vector<1x2x32xf32>
    %1155 = vector.shape_cast %1154 : vector<1x2x32xf32> to vector<2x32xf32>
    %cst_496 = arith.constant dense<0.000000e+00> : vector<2x32xf32>
    %1156 = tpu.matmul %1146, %645, %cst_496 {dimension_numbers = #tpu.dot_dimension_numbers<[1], [0], [0], [1], [0, 0, 1, 1], [], []>} : vector<2x32xf32>, vector<32x32xf32>, vector<2x32xf32> -> vector<2x32xf32>
    %cst_497 = arith.constant dense<0.000000e+00> : vector<2x32xf32>
    %1157 = tpu.matmul %1146, %646, %cst_497 {dimension_numbers = #tpu.dot_dimension_numbers<[1], [0], [0], [1], [0, 0, 1, 1], [], []>} : vector<2x32xf32>, vector<32x32xf32>, vector<2x32xf32> -> vector<2x32xf32>
    %cst_498 = arith.constant dense<0.000000e+00> : vector<2x32xf32>
    %1158 = tpu.matmul %1146, %647, %cst_498 {dimension_numbers = #tpu.dot_dimension_numbers<[1], [0], [0], [1], [0, 0, 1, 1], [], []>} : vector<2x32xf32>, vector<32x32xf32>, vector<2x32xf32> -> vector<2x32xf32>
    %1159 = arith.addf %1149, %1156 : vector<2x32xf32>
    %1160 = arith.negf %1159 : vector<2x32xf32>
    %1161 = math.exp %1160 : vector<2x32xf32>
    %cst_499 = arith.constant 1.000000e+00 : f32
    %1162 = vector.broadcast %cst_499 : f32 to vector<2x32xf32>
    %1163 = arith.addf %1162, %1161 : vector<2x32xf32>
    %1164 = arith.divf %1162, %1163 : vector<2x32xf32>
    %1165 = arith.addf %1152, %1157 : vector<2x32xf32>
    %1166 = arith.negf %1165 : vector<2x32xf32>
    %1167 = math.exp %1166 : vector<2x32xf32>
    %cst_500 = arith.constant 1.000000e+00 : f32
    %1168 = vector.broadcast %cst_500 : f32 to vector<2x32xf32>
    %1169 = arith.addf %1168, %1167 : vector<2x32xf32>
    %1170 = arith.divf %1168, %1169 : vector<2x32xf32>
    %1171 = arith.addf %1158, %650 : vector<2x32xf32>
    %1172 = arith.mulf %1164, %1171 : vector<2x32xf32>
    %1173 = arith.addf %1155, %1172 : vector<2x32xf32>
    %1174 = math.tanh %1173 : vector<2x32xf32>
    %cst_501 = arith.constant 1.000000e+00 : f32
    %1175 = vector.broadcast %cst_501 : f32 to vector<2x32xf32>
    %1176 = arith.subf %1175, %1170 : vector<2x32xf32>
    %1177 = arith.mulf %1176, %1174 : vector<2x32xf32>
    %1178 = arith.mulf %1170, %1146 : vector<2x32xf32>
    %1179 = arith.addf %1177, %1178 : vector<2x32xf32>
    %c16_i32_502 = arith.constant 16 : i32
    %c0_503 = arith.constant 0 : index
    %c0_504 = arith.constant 0 : index
    %1180 = vector.load %arg21[%c0_503, %c0_504] : memref<1x32xf32, #tpu.memory_space<vmem>>, vector<1x32xf32>
    %1181 = vector.broadcast %1180 : vector<1x32xf32> to vector<2x32xf32>
    %1182 = arith.mulf %1179, %1181 : vector<2x32xf32>
    %cst_505 = arith.constant dense<0.000000e+00> : vector<2xf32>
    %1183 = vector.multi_reduction <add>, %1182, %cst_505 [1] : vector<2x32xf32> to vector<2xf32>
    %1184 = vector.shape_cast %1183 : vector<2xf32> to vector<2x1xf32>
    %c0_506 = arith.constant 0 : index
    %c0_507 = arith.constant 0 : index
    %1185 = vector.load %arg22[%c0_506, %c0_507] : memref<1x1xf32, #tpu.memory_space<vmem>>, vector<1x1xf32>
    %1186 = vector.broadcast %1185 : vector<1x1xf32> to vector<2x1xf32>
    %1187 = arith.addf %1184, %1186 : vector<2x1xf32>
    %c0_508 = arith.constant 0 : index
    %c0_509 = arith.constant 0 : index
    %1188 = vector.load %arg23[%c0_508, %c0_509] : memref<2x1xf32, #tpu.memory_space<vmem>>, vector<2x1xf32>
    tpu.vector_store %arg23[%c0_508, %c0_509], %1187 {strides = array<i32>} : memref<2x1xf32, #tpu.memory_space<vmem>>, vector<2x1xf32>,
    return
  }
}

</mosaic_0001>

<llo_original>
// kernel: gru_model_forward.1
$region0: #{gru_model_forward.1}
  #allocation0 [shape = 'u32[]', space=smem, size = 0x4, offset = 0x4, fixed_abs, tag = 'smem constant byte address 0x4 - core index']
  #allocation1 [shape = 'u32[72,128]{1,0:T(1,128)}', space=vmem, size = 0x9000, scoped, tag = 'internal scratch']
  #allocation2 [shape = 'f32[16,2,32]{2,1,0:T(2,128)}', space=vmem, size = 0x4000, scoped, tag = 'scratch operand']
  #allocation3 [shape = 'f32[16,2,32]{2,1,0:T(2,128)}', space=vmem, size = 0x4000, scoped, tag = 'scratch operand']
  #allocation4 [shape = 'f32[16,2,32]{2,1,0:T(2,128)}', space=vmem, size = 0x4000, scoped, tag = 'scratch operand']
  #allocation5 [shape = 'f32[16,2,32]{2,1,0:T(2,128)}', space=vmem, size = 0x4000, scoped, tag = 'scratch operand']
  #allocation6 [shape = 'f32[1,1]{1,0:T(1,128)S(1)}', space=vmem, size = 0x200, scoped, tag = 'scoped memory for gru_model_forward.1']
  %s0 = inlined_call_operand.vmem [shape: f32[16,2,4], index: 0, kind: input, shape index: {}]
  %s1 = inlined_call_operand.vmem [shape: f32[4,32], index: 1, kind: input, shape index: {}]
  %s2 = inlined_call_operand.vmem [shape: f32[4,32], index: 2, kind: input, shape index: {}]
  %s3 = inlined_call_operand.vmem [shape: f32[4,32], index: 3, kind: input, shape index: {}]
  %s4 = inlined_call_operand.vmem [shape: f32[32,32], index: 4, kind: input, shape index: {}]
  %s5 = inlined_call_operand.vmem [shape: f32[32,32], index: 5, kind: input, shape index: {}]
  %s6 = inlined_call_operand.vmem [shape: f32[32,32], index: 6, kind: input, shape index: {}]
  %s7 = inlined_call_operand.vmem [shape: f32[1,32], index: 7, kind: input, shape index: {}]
  %s8 = inlined_call_operand.vmem [shape: f32[1,32], index: 8, kind: input, shape index: {}]
  %s9 = inlined_call_operand.vmem [shape: f32[1,32], index: 9, kind: input, shape index: {}]
  %s10 = inlined_call_operand.vmem [shape: f32[1,32], index: 10, kind: input, shape index: {}]
  %s11 = inlined_call_operand.vmem [shape: f32[32,32], index: 11, kind: input, shape index: {}]
  %s12 = inlined_call_operand.vmem [shape: f32[32,32], index: 12, kind: input, shape index: {}]
  %s13 = inlined_call_operand.vmem [shape: f32[32,32], index: 13, kind: input, shape index: {}]
  %s14 = inlined_call_operand.vmem [shape: f32[32,32], index: 14, kind: input, shape index: {}]
  %s15 = inlined_call_operand.vmem [shape: f32[32,32], index: 15, kind: input, shape index: {}]
  %s16 = inlined_call_operand.vmem [shape: f32[32,32], index: 16, kind: input, shape index: {}]
  %s17 = inlined_call_operand.vmem [shape: f32[1,32], index: 17, kind: input, shape index: {}]
  %s18 = inlined_call_operand.vmem [shape: f32[1,32], index: 18, kind: input, shape index: {}]
  %s19 = inlined_call_operand.vmem [shape: f32[1,32], index: 19, kind: input, shape index: {}]
  %s20 = inlined_call_operand.vmem [shape: f32[1,32], index: 20, kind: input, shape index: {}]
  %s21 = inlined_call_operand.vmem [shape: f32[1,32], index: 21, kind: input, shape index: {}]
  %s22 = inlined_call_operand.<no memory space> [shape: f32[1,1], index: 22, kind: input, shape index: {}]
  %s23 = inlined_call_operand.vmem [shape: f32[2,1], index: 23, kind: output, shape index: {}]
  %s24 = sld [smem:[#allocation0]]
  $region102: #{gru_model_forward.1} parent=0
    _
  %s26 = ssub.s32 1, %s24
  %s27 = scalar_select 0, %s26, %s24
  %v28 = vstv %s22
  %29 = vst [vmem:[#allocation6] sm:$0x1] %v28
  // Predicated region
  $region2: #{gru_model_forward.1} parent=0 // pred_check
    _
  $region3: #{gru_model_forward.1} parent=0 // pred_check_branch
    %31 = sbr.rel (0) target = $region5
  $region4: #{gru_model_forward.1} parent=0 // pred_region
    _
  $region5: #{gru_model_forward.1} parent=0 // pred_fallthru
    _
  // Predicated region
  $region6: #{gru_model_forward.1} parent=0 // pred_check
    _
  $region7: #{gru_model_forward.1} parent=0 // pred_check_branch
    %33 = sbr.rel (0) target = $region9
  $region8: #{gru_model_forward.1} parent=0 // pred_region
    _
  $region9: #{gru_model_forward.1} parent=0 // pred_fallthru
    _
  // Predicated region
  $region10: #{gru_model_forward.1} parent=0 // pred_check
    _
  $region11: #{gru_model_forward.1} parent=0 // pred_check_branch
    %35 = sbr.rel (0) target = $region13
  $region12: #{gru_model_forward.1} parent=0 // pred_region
    _
  $region13: #{gru_model_forward.1} parent=0 // pred_fallthru
    _
  // Predicated region
  $region14: #{gru_model_forward.1} parent=0 // pred_check
    _
  $region15: #{gru_model_forward.1} parent=0 // pred_check_branch
    %37 = sbr.rel (0) target = $region17
  $region16: #{gru_model_forward.1} parent=0 // pred_region
    _
  $region17: #{gru_model_forward.1} parent=0 // pred_fallthru
    _
  // Predicated region
  $region18: #{gru_model_forward.1} parent=0 // pred_check
    _
  $region19: #{gru_model_forward.1} parent=0 // pred_check_branch
    %39 = sbr.rel (0) target = $region21
  $region20: #{gru_model_forward.1} parent=0 // pred_region
    _
  $region21: #{gru_model_forward.1} parent=0 // pred_fallthru
    _
  // Predicated region
  $region22: #{gru_model_forward.1} parent=0 // pred_check
    _
  $region23: #{gru_model_forward.1} parent=0 // pred_check_branch
    %41 = sbr.rel (0) target = $region25
  $region24: #{gru_model_forward.1} parent=0 // pred_region
    _
  $region25: #{gru_model_forward.1} parent=0 // pred_fallthru
    _
  // Predicated region
  $region26: #{gru_model_forward.1} parent=0 // pred_check
    _
  $region27: #{gru_model_forward.1} parent=0 // pred_check_branch
    %43 = sbr.rel (0) target = $region29
  $region28: #{gru_model_forward.1} parent=0 // pred_region
    _
  $region29: #{gru_model_forward.1} parent=0 // pred_fallthru
    _
  // Predicated region
  $region30: #{gru_model_forward.1} parent=0 // pred_check
    _
  $region31: #{gru_model_forward.1} parent=0 // pred_check_branch
    %45 = sbr.rel (0) target = $region33
  $region32: #{gru_model_forward.1} parent=0 // pred_region
    _
  $region33: #{gru_model_forward.1} parent=0 // pred_fallthru
    _
  // Predicated region
  $region34: #{gru_model_forward.1} parent=0 // pred_check
    _
  $region35: #{gru_model_forward.1} parent=0 // pred_check_branch
    %47 = sbr.rel (0) target = $region37
  $region36: #{gru_model_forward.1} parent=0 // pred_region
    _
  $region37: #{gru_model_forward.1} parent=0 // pred_fallthru
    _
  // Predicated region
  $region38: #{gru_model_forward.1} parent=0 // pred_check
    _
  $region39: #{gru_model_forward.1} parent=0 // pred_check_branch
    %49 = sbr.rel (0) target = $region41
  $region40: #{gru_model_forward.1} parent=0 // pred_region
    _
  $region41: #{gru_model_forward.1} parent=0 // pred_fallthru
    _
  // Predicated region
  $region42: #{gru_model_forward.1} parent=0 // pred_check
    _
  $region43: #{gru_model_forward.1} parent=0 // pred_check_branch
    %51 = sbr.rel (0) target = $region45
  $region44: #{gru_model_forward.1} parent=0 // pred_region
    _
  $region45: #{gru_model_forward.1} parent=0 // pred_fallthru
    _
  // Predicated region
  $region46: #{gru_model_forward.1} parent=0 // pred_check
    _
  $region47: #{gru_model_forward.1} parent=0 // pred_check_branch
    %53 = sbr.rel (0) target = $region49
  $region48: #{gru_model_forward.1} parent=0 // pred_region
    _
  $region49: #{gru_model_forward.1} parent=0 // pred_fallthru
    _
  // Predicated region
  $region50: #{gru_model_forward.1} parent=0 // pred_check
    _
  $region51: #{gru_model_forward.1} parent=0 // pred_check_branch
    %55 = sbr.rel (0) target = $region53
  $region52: #{gru_model_forward.1} parent=0 // pred_region
    _
  $region53: #{gru_model_forward.1} parent=0 // pred_fallthru
    _
  // Predicated region
  $region54: #{gru_model_forward.1} parent=0 // pred_check
    _
  $region55: #{gru_model_forward.1} parent=0 // pred_check_branch
    %57 = sbr.rel (0) target = $region57
  $region56: #{gru_model_forward.1} parent=0 // pred_region
    _
  $region57: #{gru_model_forward.1} parent=0 // pred_fallthru
    _
  // Predicated region
  $region58: #{gru_model_forward.1} parent=0 // pred_check
    _
  $region59: #{gru_model_forward.1} parent=0 // pred_check_branch
    %59 = sbr.rel (0) target = $region61
  $region60: #{gru_model_forward.1} parent=0 // pred_region
    _
  $region61: #{gru_model_forward.1} parent=0 // pred_fallthru
    _
  // Predicated region
  $region62: #{gru_model_forward.1} parent=0 // pred_check
    _
  $region63: #{gru_model_forward.1} parent=0 // pred_check_branch
    %61 = sbr.rel (0) target = $region65
  $region64: #{gru_model_forward.1} parent=0 // pred_region
    _
  $region65: #{gru_model_forward.1} parent=0 // pred_fallthru
    _
  // Predicated region
  $region66: #{gru_model_forward.1} parent=0 // pred_check
    _
  $region67: #{gru_model_forward.1} parent=0 // pred_check_branch
    %63 = sbr.rel (0) target = $region69
  $region68: #{gru_model_forward.1} parent=0 // pred_region
    _
  $region69: #{gru_model_forward.1} parent=0 // pred_fallthru
    _
  // Predicated region
  $region70: #{gru_model_forward.1} parent=0 // pred_check
    _
  $region71: #{gru_model_forward.1} parent=0 // pred_check_branch
    %65 = sbr.rel (0) target = $region73
  $region72: #{gru_model_forward.1} parent=0 // pred_region
    _
  $region73: #{gru_model_forward.1} parent=0 // pred_fallthru
    _
  // Predicated region
  $region74: #{gru_model_forward.1} parent=0 // pred_check
    _
  $region75: #{gru_model_forward.1} parent=0 // pred_check_branch
    %67 = sbr.rel (0) target = $region77
  $region76: #{gru_model_forward.1} parent=0 // pred_region
    _
  $region77: #{gru_model_forward.1} parent=0 // pred_fallthru
    _
  // Predicated region
  $region78: #{gru_model_forward.1} parent=0 // pred_check
    _
  $region79: #{gru_model_forward.1} parent=0 // pred_check_branch
    %69 = sbr.rel (0) target = $region81
  $region80: #{gru_model_forward.1} parent=0 // pred_region
    _
  $region81: #{gru_model_forward.1} parent=0 // pred_fallthru
    _
  // Predicated region
  $region82: #{gru_model_forward.1} parent=0 // pred_check
    _
  $region83: #{gru_model_forward.1} parent=0 // pred_check_branch
    %71 = sbr.rel (0) target = $region85
  $region84: #{gru_model_forward.1} parent=0 // pred_region
    _
  $region85: #{gru_model_forward.1} parent=0 // pred_fallthru
    _
  // Predicated region
  $region86: #{gru_model_forward.1} parent=0 // pred_check
    _
  $region87: #{gru_model_forward.1} parent=0 // pred_check_branch
    %73 = sbr.rel (0) target = $region89
  $region88: #{gru_model_forward.1} parent=0 // pred_region
    _
  $region89: #{gru_model_forward.1} parent=0 // pred_fallthru
    _
  // Predicated region
  $region90: #{gru_model_forward.1} parent=0 // pred_check
    _
  $region91: #{gru_model_forward.1} parent=0 // pred_check_branch
    %75 = sbr.rel (0) target = $region93
  $region92: #{gru_model_forward.1} parent=0 // pred_region
    _
  $region93: #{gru_model_forward.1} parent=0 // pred_fallthru
    _
  %v76 = vld [vmem:[%s0] sm:$0x3]
  %v77 = vld [vmem:[%s0 + $0x2] sm:$0x3]
  %v78 = vld [vmem:[%s0 + $0x4] sm:$0x3]
  %v79 = vld [vmem:[%s0 + $0x6] sm:$0x3]
  %v80 = vld [vmem:[%s0 + $0x8] sm:$0x3]
  %v81 = vld [vmem:[%s0 + $0xa] sm:$0x3]
  %v82 = vld [vmem:[%s0 + $0xc] sm:$0x3]
  %v83 = vld [vmem:[%s0 + $0xe] sm:$0x3]
  %v84 = vld [vmem:[%s0 + $0x10] sm:$0x3]
  %v85 = vld [vmem:[%s0 + $0x12] sm:$0x3]
  %v86 = vld [vmem:[%s0 + $0x14] sm:$0x3]
  %v87 = vld [vmem:[%s0 + $0x16] sm:$0x3]
  %v88 = vld [vmem:[%s0 + $0x18] sm:$0x3]
  %v89 = vld [vmem:[%s0 + $0x1a] sm:$0x3]
  %v90 = vld [vmem:[%s0 + $0x1c] sm:$0x3]
  %v91 = vld [vmem:[%s0 + $0x1e] sm:$0x3]
  %v92 = vld [vmem:[%s1] sm:$0xf]
  %v93 = vld [vmem:[%s7] sm:$0x1]
  %v95 = vperm.slane %v93, 0
  %113 = vst [vmem:[#allocation1] ss:$4 sm:$0xff] %v76
  %s114 = scalar_lea.vmem [#allocation1], 1
  %115 = vst [vmem:[%s114] ss:$4 sm:$0xff] %v77
  %s116 = scalar_lea.vmem [#allocation1], 2
  %117 = vst [vmem:[%s116] ss:$4 sm:$0xff] %v78
  %s118 = scalar_lea.vmem [#allocation1], 3
  %119 = vst [vmem:[%s118] ss:$4 sm:$0xff] %v79
  %s120 = scalar_lea.vmem [#allocation1], 32
  %121 = vst [vmem:[%s120] ss:$4 sm:$0xff] %v80
  %s122 = scalar_lea.vmem [#allocation1], 33
  %123 = vst [vmem:[%s122] ss:$4 sm:$0xff] %v81
  %s124 = scalar_lea.vmem [#allocation1], 34
  %125 = vst [vmem:[%s124] ss:$4 sm:$0xff] %v82
  %s126 = scalar_lea.vmem [#allocation1], 35
  %127 = vst [vmem:[%s126] ss:$4 sm:$0xff] %v83
  %v128 = vld.sshfl [vmem:[#allocation1] sm:$0xff pattern:$0x73625140]
  %v129 = vld.sshfl [vmem:[#allocation1 + $0x20] sm:$0xff pattern:$0x73625140]
  %130 = vst [vmem:[#allocation1] ss:$4 sm:$0xff] %v84
  %131 = vst [vmem:[%s114] ss:$4 sm:$0xff] %v85
  %132 = vst [vmem:[%s116] ss:$4 sm:$0xff] %v86
  %133 = vst [vmem:[%s118] ss:$4 sm:$0xff] %v87
  %134 = vst [vmem:[%s120] ss:$4 sm:$0xff] %v88
  %135 = vst [vmem:[%s122] ss:$4 sm:$0xff] %v89
  %136 = vst [vmem:[%s124] ss:$4 sm:$0xff] %v90
  %137 = vst [vmem:[%s126] ss:$4 sm:$0xff] %v91
  %v138 = vld.sshfl [vmem:[#allocation1] sm:$0xff pattern:$0x73625140]
  %v139 = vld.sshfl [vmem:[#allocation1 + $0x20] sm:$0xff pattern:$0x73625140]
  %vm140 = vcmask 31744
  %v141 = vsel %vm140, %v128, 0
  %v143 = vsel %vm140, %v129, 0
  %v145 = vsel %vm140, %v138, 0
  %v147 = vsel %vm140, %v139, 0
  %vm149 = vcmask 1043456
  %v151 = vsel %vm149, %v92, 0
  %153 = vmatpush.msra.mxu0 0.0
  %154 = vmatpush.msra.mxu0 0.0
  %155 = vmatpush.msra.mxu0 0.0
  %156 = vmatpush.msra.mxu0 0.0
  %157 = vmatpush.msra.mxu0 0.0
  %158 = vmatpush.msra.mxu0 0.0
  %159 = vmatpush.msra.mxu0 0.0
  %160 = vmatpush.msra.mxu0 0.0
  %161 = vmatpush.msra.mxu0 0.0
  %162 = vmatpush.msra.mxu0 0.0
  %163 = vmatpush.msra.mxu0 0.0
  %164 = vmatpush.msra.mxu0 0.0
  %165 = vmatpush.msra.mxu0 0.0
  %166 = vmatpush.msra.mxu0 0.0
  %167 = vmatpush.msra.mxu0 0.0
  %168 = vmatpush.msra.mxu0 %v151
  %169 = vmatmul.f32.gmra.mxu0 %v141
  %v170 = vpop.f32.mrf.mxu0
  %v171 = vadd.f32 %v95, %v170
  %172 = vmatmul.f32.gmra.mxu0 %v143
  %v173 = vpop.f32.mrf.mxu0
  %v174 = vadd.f32 %v95, %v173
  %175 = vmatmul.f32.gmra.mxu0 %v145
  %v176 = vpop.f32.mrf.mxu0
  %v177 = vadd.f32 %v95, %v176
  %178 = vmatmul.f32.gmra.mxu0 %v147
  %v179 = vpop.f32.mrf.mxu0
  %v180 = vadd.f32 %v95, %v179
  %181 = vdwg.mxu0
  %v186 = vrot.slane %v171, 2
  %v187 = vrot.slane %v171, 4
  %v188 = vrot.slane %v171, 6
  %v189 = vrot.slane %v174, 2
  %v190 = vrot.slane %v174, 4
  %v191 = vrot.slane %v174, 6
  %v192 = vrot.slane %v177, 2
  %v193 = vrot.slane %v177, 4
  %v194 = vrot.slane %v177, 6
  %v195 = vrot.slane %v180, 2
  %v196 = vrot.slane %v180, 4
  %v197 = vrot.slane %v180, 6
  %vm210 = vcmask 254976
  %211 = vst.msk [vmem:[#allocation3] sm:$0x3] %vm210, %v171
  %212 = vst.msk [vmem:[#allocation3 + $0x2] sm:$0x3] %vm210, %v186
  %213 = vst.msk [vmem:[#allocation3 + $0x4] sm:$0x3] %vm210, %v187
  %214 = vst.msk [vmem:[#allocation3 + $0x6] sm:$0x3] %vm210, %v188
  %215 = vst.msk [vmem:[#allocation3 + $0x8] sm:$0x3] %vm210, %v174
  %216 = vst.msk [vmem:[#allocation3 + $0xa] sm:$0x3] %vm210, %v189
  %217 = vst.msk [vmem:[#allocation3 + $0xc] sm:$0x3] %vm210, %v190
  %218 = vst.msk [vmem:[#allocation3 + $0xe] sm:$0x3] %vm210, %v191
  %219 = vst.msk [vmem:[#allocation3 + $0x10] sm:$0x3] %vm210, %v177
  %220 = vst.msk [vmem:[#allocation3 + $0x12] sm:$0x3] %vm210, %v192
  %221 = vst.msk [vmem:[#allocation3 + $0x14] sm:$0x3] %vm210, %v193
  %222 = vst.msk [vmem:[#allocation3 + $0x16] sm:$0x3] %vm210, %v194
  %223 = vst.msk [vmem:[#allocation3 + $0x18] sm:$0x3] %vm210, %v180
  %224 = vst.msk [vmem:[#allocation3 + $0x1a] sm:$0x3] %vm210, %v195
  %225 = vst.msk [vmem:[#allocation3 + $0x1c] sm:$0x3] %vm210, %v196
  %226 = vst.msk [vmem:[#allocation3 + $0x1e] sm:$0x3] %vm210, %v197
  %v227 = vld [vmem:[%s2] sm:$0xf]
  %v228 = vld [vmem:[%s8] sm:$0x1]
  %v230 = vperm.slane %v228, 0
  %232 = vst [vmem:[#allocation1] ss:$4 sm:$0xff] %v76
  %s233 = scalar_lea.vmem [#allocation1], 1
  %234 = vst [vmem:[%s233] ss:$4 sm:$0xff] %v77
  %s235 = scalar_lea.vmem [#allocation1], 2
  %236 = vst [vmem:[%s235] ss:$4 sm:$0xff] %v78
  %s237 = scalar_lea.vmem [#allocation1], 3
  %238 = vst [vmem:[%s237] ss:$4 sm:$0xff] %v79
  %s239 = scalar_lea.vmem [#allocation1], 32
  %240 = vst [vmem:[%s239] ss:$4 sm:$0xff] %v80
  %s241 = scalar_lea.vmem [#allocation1], 33
  %242 = vst [vmem:[%s241] ss:$4 sm:$0xff] %v81
  %s243 = scalar_lea.vmem [#allocation1], 34
  %244 = vst [vmem:[%s243] ss:$4 sm:$0xff] %v82
  %s245 = scalar_lea.vmem [#allocation1], 35
  %246 = vst [vmem:[%s245] ss:$4 sm:$0xff] %v83
  %v247 = vld.sshfl [vmem:[#allocation1] sm:$0xff pattern:$0x73625140]
  %v248 = vld.sshfl [vmem:[#allocation1 + $0x20] sm:$0xff pattern:$0x73625140]
  %249 = vst [vmem:[#allocation1] ss:$4 sm:$0xff] %v84
  %250 = vst [vmem:[%s233] ss:$4 sm:$0xff] %v85
  %251 = vst [vmem:[%s235] ss:$4 sm:$0xff] %v86
  %252 = vst [vmem:[%s237] ss:$4 sm:$0xff] %v87
  %253 = vst [vmem:[%s239] ss:$4 sm:$0xff] %v88
  %254 = vst [vmem:[%s241] ss:$4 sm:$0xff] %v89
  %255 = vst [vmem:[%s243] ss:$4 sm:$0xff] %v90
  %256 = vst [vmem:[%s245] ss:$4 sm:$0xff] %v91
  %v257 = vld.sshfl [vmem:[#allocation1] sm:$0xff pattern:$0x73625140]
  %v258 = vld.sshfl [vmem:[#allocation1 + $0x20] sm:$0xff pattern:$0x73625140]
  %v259 = vsel %vm140, %v247, 0
  %v261 = vsel %vm140, %v248, 0
  %v263 = vsel %vm140, %v257, 0
  %v265 = vsel %vm140, %v258, 0
  %v268 = vsel %vm149, %v227, 0
  %270 = vmatpush.msra.mxu0 0.0
  %271 = vmatpush.msra.mxu0 0.0
  %272 = vmatpush.msra.mxu0 0.0
  %273 = vmatpush.msra.mxu0 0.0
  %274 = vmatpush.msra.mxu0 0.0
  %275 = vmatpush.msra.mxu0 0.0
  %276 = vmatpush.msra.mxu0 0.0
  %277 = vmatpush.msra.mxu0 0.0
  %278 = vmatpush.msra.mxu0 0.0
  %279 = vmatpush.msra.mxu0 0.0
  %280 = vmatpush.msra.mxu0 0.0
  %281 = vmatpush.msra.mxu0 0.0
  %282 = vmatpush.msra.mxu0 0.0
  %283 = vmatpush.msra.mxu0 0.0
  %284 = vmatpush.msra.mxu0 0.0
  %285 = vmatpush.msra.mxu0 %v268
  %286 = vmatmul.f32.gmra.mxu0 %v259
  %v287 = vpop.f32.mrf.mxu0
  %v288 = vadd.f32 %v230, %v287
  %289 = vmatmul.f32.gmra.mxu0 %v261
  %v290 = vpop.f32.mrf.mxu0
  %v291 = vadd.f32 %v230, %v290
  %292 = vmatmul.f32.gmra.mxu0 %v263
  %v293 = vpop.f32.mrf.mxu0
  %v294 = vadd.f32 %v230, %v293
  %295 = vmatmul.f32.gmra.mxu0 %v265
  %v296 = vpop.f32.mrf.mxu0
  %v297 = vadd.f32 %v230, %v296
  %298 = vdwg.mxu0
  %v303 = vrot.slane %v288, 2
  %v304 = vrot.slane %v288, 4
  %v305 = vrot.slane %v288, 6
  %v306 = vrot.slane %v291, 2
  %v307 = vrot.slane %v291, 4
  %v308 = vrot.slane %v291, 6
  %v309 = vrot.slane %v294, 2
  %v310 = vrot.slane %v294, 4
  %v311 = vrot.slane %v294, 6
  %v312 = vrot.slane %v297, 2
  %v313 = vrot.slane %v297, 4
  %v314 = vrot.slane %v297, 6
  %327 = vst.msk [vmem:[#allocation4] sm:$0x3] %vm210, %v288
  %328 = vst.msk [vmem:[#allocation4 + $0x2] sm:$0x3] %vm210, %v303
  %329 = vst.msk [vmem:[#allocation4 + $0x4] sm:$0x3] %vm210, %v304
  %330 = vst.msk [vmem:[#allocation4 + $0x6] sm:$0x3] %vm210, %v305
  %331 = vst.msk [vmem:[#allocation4 + $0x8] sm:$0x3] %vm210, %v291
  %332 = vst.msk [vmem:[#allocation4 + $0xa] sm:$0x3] %vm210, %v306
  %333 = vst.msk [vmem:[#allocation4 + $0xc] sm:$0x3] %vm210, %v307
  %334 = vst.msk [vmem:[#allocation4 + $0xe] sm:$0x3] %vm210, %v308
  %335 = vst.msk [vmem:[#allocation4 + $0x10] sm:$0x3] %vm210, %v294
  %336 = vst.msk [vmem:[#allocation4 + $0x12] sm:$0x3] %vm210, %v309
  %337 = vst.msk [vmem:[#allocation4 + $0x14] sm:$0x3] %vm210, %v310
  %338 = vst.msk [vmem:[#allocation4 + $0x16] sm:$0x3] %vm210, %v311
  %339 = vst.msk [vmem:[#allocation4 + $0x18] sm:$0x3] %vm210, %v297
  %340 = vst.msk [vmem:[#allocation4 + $0x1a] sm:$0x3] %vm210, %v312
  %341 = vst.msk [vmem:[#allocation4 + $0x1c] sm:$0x3] %vm210, %v313
  %342 = vst.msk [vmem:[#allocation4 + $0x1e] sm:$0x3] %vm210, %v314
  %v343 = vld [vmem:[%s3] sm:$0xf]
  %v344 = vld [vmem:[%s9] sm:$0x1]
  %v346 = vperm.slane %v344, 0
  %348 = vst [vmem:[#allocation1] ss:$4 sm:$0xff] %v76
  %s349 = scalar_lea.vmem [#allocation1], 1
  %350 = vst [vmem:[%s349] ss:$4 sm:$0xff] %v77
  %s351 = scalar_lea.vmem [#allocation1], 2
  %352 = vst [vmem:[%s351] ss:$4 sm:$0xff] %v78
  %s353 = scalar_lea.vmem [#allocation1], 3
  %354 = vst [vmem:[%s353] ss:$4 sm:$0xff] %v79
  %s355 = scalar_lea.vmem [#allocation1], 32
  %356 = vst [vmem:[%s355] ss:$4 sm:$0xff] %v80
  %s357 = scalar_lea.vmem [#allocation1], 33
  %358 = vst [vmem:[%s357] ss:$4 sm:$0xff] %v81
  %s359 = scalar_lea.vmem [#allocation1], 34
  %360 = vst [vmem:[%s359] ss:$4 sm:$0xff] %v82
  %s361 = scalar_lea.vmem [#allocation1], 35
  %362 = vst [vmem:[%s361] ss:$4 sm:$0xff] %v83
  %v363 = vld.sshfl [vmem:[#allocation1] sm:$0xff pattern:$0x73625140]
  %v364 = vld.sshfl [vmem:[#allocation1 + $0x20] sm:$0xff pattern:$0x73625140]
  %365 = vst [vmem:[#allocation1] ss:$4 sm:$0xff] %v84
  %366 = vst [vmem:[%s349] ss:$4 sm:$0xff] %v85
  %367 = vst [vmem:[%s351] ss:$4 sm:$0xff] %v86
  %368 = vst [vmem:[%s353] ss:$4 sm:$0xff] %v87
  %369 = vst [vmem:[%s355] ss:$4 sm:$0xff] %v88
  %370 = vst [vmem:[%s357] ss:$4 sm:$0xff] %v89
  %371 = vst [vmem:[%s359] ss:$4 sm:$0xff] %v90
  %372 = vst [vmem:[%s361] ss:$4 sm:$0xff] %v91
  %v373 = vld.sshfl [vmem:[#allocation1] sm:$0xff pattern:$0x73625140]
  %v374 = vld.sshfl [vmem:[#allocation1 + $0x20] sm:$0xff pattern:$0x73625140]
  %v375 = vsel %vm140, %v363, 0
  %v377 = vsel %vm140, %v364, 0
  %v379 = vsel %vm140, %v373, 0
  %v381 = vsel %vm140, %v374, 0
  %v384 = vsel %vm149, %v343, 0
  %386 = vmatpush.msra.mxu0 0.0
  %387 = vmatpush.msra.mxu0 0.0
  %388 = vmatpush.msra.mxu0 0.0
  %389 = vmatpush.msra.mxu0 0.0
  %390 = vmatpush.msra.mxu0 0.0
  %391 = vmatpush.msra.mxu0 0.0
  %392 = vmatpush.msra.mxu0 0.0
  %393 = vmatpush.msra.mxu0 0.0
  %394 = vmatpush.msra.mxu0 0.0
  %395 = vmatpush.msra.mxu0 0.0
  %396 = vmatpush.msra.mxu0 0.0
  %397 = vmatpush.msra.mxu0 0.0
  %398 = vmatpush.msra.mxu0 0.0
  %399 = vmatpush.msra.mxu0 0.0
  %400 = vmatpush.msra.mxu0 0.0
  %401 = vmatpush.msra.mxu0 %v384
  %402 = vmatmul.f32.gmra.mxu0 %v375
  %v403 = vpop.f32.mrf.mxu0
  %v404 = vadd.f32 %v346, %v403
  %405 = vmatmul.f32.gmra.mxu0 %v377
  %v406 = vpop.f32.mrf.mxu0
  %v407 = vadd.f32 %v346, %v406
  %408 = vmatmul.f32.gmra.mxu0 %v379
  %v409 = vpop.f32.mrf.mxu0
  %v410 = vadd.f32 %v346, %v409
  %411 = vmatmul.f32.gmra.mxu0 %v381
  %v412 = vpop.f32.mrf.mxu0
  %v413 = vadd.f32 %v346, %v412
  %414 = vdwg.mxu0
  %v419 = vrot.slane %v404, 2
  %v420 = vrot.slane %v404, 4
  %v421 = vrot.slane %v404, 6
  %v422 = vrot.slane %v407, 2
  %v423 = vrot.slane %v407, 4
  %v424 = vrot.slane %v407, 6
  %v425 = vrot.slane %v410, 2
  %v426 = vrot.slane %v410, 4
  %v427 = vrot.slane %v410, 6
  %v428 = vrot.slane %v413, 2
  %v429 = vrot.slane %v413, 4
  %v430 = vrot.slane %v413, 6
  %443 = vst.msk [vmem:[#allocation5] sm:$0x3] %vm210, %v404
  %444 = vst.msk [vmem:[#allocation5 + $0x2] sm:$0x3] %vm210, %v419
  %445 = vst.msk [vmem:[#allocation5 + $0x4] sm:$0x3] %vm210, %v420
  %446 = vst.msk [vmem:[#allocation5 + $0x6] sm:$0x3] %vm210, %v421
  %447 = vst.msk [vmem:[#allocation5 + $0x8] sm:$0x3] %vm210, %v407
  %448 = vst.msk [vmem:[#allocation5 + $0xa] sm:$0x3] %vm210, %v422
  %449 = vst.msk [vmem:[#allocation5 + $0xc] sm:$0x3] %vm210, %v423
  %450 = vst.msk [vmem:[#allocation5 + $0xe] sm:$0x3] %vm210, %v424
  %451 = vst.msk [vmem:[#allocation5 + $0x10] sm:$0x3] %vm210, %v410
  %452 = vst.msk [vmem:[#allocation5 + $0x12] sm:$0x3] %vm210, %v425
  %453 = vst.msk [vmem:[#allocation5 + $0x14] sm:$0x3] %vm210, %v426
  %454 = vst.msk [vmem:[#allocation5 + $0x16] sm:$0x3] %vm210, %v427
  %455 = vst.msk [vmem:[#allocation5 + $0x18] sm:$0x3] %vm210, %v413
  %456 = vst.msk [vmem:[#allocation5 + $0x1a] sm:$0x3] %vm210, %v428
  %457 = vst.msk [vmem:[#allocation5 + $0x1c] sm:$0x3] %vm210, %v429
  %458 = vst.msk [vmem:[#allocation5 + $0x1e] sm:$0x3] %vm210, %v430
  %v459 = vld [vmem:[%s4] sm:$0xff]
  %v460 = vld [vmem:[%s4 + $0x8] sm:$0xff]
  %v461 = vld [vmem:[%s4 + $0x10] sm:$0xff]
  %v462 = vld [vmem:[%s4 + $0x18] sm:$0xff]
  %v463 = vld [vmem:[%s5] sm:$0xff]
  %v464 = vld [vmem:[%s5 + $0x8] sm:$0xff]
  %v465 = vld [vmem:[%s5 + $0x10] sm:$0xff]
  %v466 = vld [vmem:[%s5 + $0x18] sm:$0xff]
  %v467 = vld [vmem:[%s6] sm:$0xff]
  %v468 = vld [vmem:[%s6 + $0x8] sm:$0xff]
  %v469 = vld [vmem:[%s6 + $0x10] sm:$0xff]
  %v470 = vld [vmem:[%s6 + $0x18] sm:$0xff]
  %v471 = vld [vmem:[%s10] sm:$0x1]
  %v473 = vperm.slane %v471, 0
  %v475 = vld [vmem:[#allocation3] sm:$0x3]
  %v476 = vld [vmem:[#allocation4] sm:$0x3]
  %v477 = vld [vmem:[#allocation5] sm:$0x3]
  %vm478 = vcmask 261120
  %v480 = vsel %vm478, 0.0, 0
  %482 = vmatpush.msra.mxu0 0.0
  %483 = vmatpush.msra.mxu0 0.0
  %484 = vmatpush.msra.mxu0 0.0
  %485 = vmatpush.msra.mxu0 0.0
  %486 = vmatpush.msra.mxu0 0.0
  %487 = vmatpush.msra.mxu0 0.0
  %488 = vmatpush.msra.mxu0 0.0
  %489 = vmatpush.msra.mxu0 0.0
  %490 = vmatpush.msra.mxu0 0.0
  %491 = vmatpush.msra.mxu0 0.0
  %492 = vmatpush.msra.mxu0 0.0
  %493 = vmatpush.msra.mxu0 0.0
  %494 = vmatpush.msra.mxu0 %v462
  %495 = vmatpush.msra.mxu0 %v461
  %496 = vmatpush.msra.mxu0 %v460
  %497 = vmatpush.msra.mxu0 %v459
  %498 = vmatmul.f32.gmra.mxu0 %v480
  %v499 = vpop.f32.mrf.mxu0
  %v500 = vadd.f32 0.0, %v499
  %501 = vdwg.mxu0
  %502 = vmatpush.msra.mxu0 0.0
  %503 = vmatpush.msra.mxu0 0.0
  %504 = vmatpush.msra.mxu0 0.0
  %505 = vmatpush.msra.mxu0 0.0
  %506 = vmatpush.msra.mxu0 0.0
  %507 = vmatpush.msra.mxu0 0.0
  %508 = vmatpush.msra.mxu0 0.0
  %509 = vmatpush.msra.mxu0 0.0
  %510 = vmatpush.msra.mxu0 0.0
  %511 = vmatpush.msra.mxu0 0.0
  %512 = vmatpush.msra.mxu0 0.0
  %513 = vmatpush.msra.mxu0 0.0
  %514 = vmatpush.msra.mxu0 %v466
  %515 = vmatpush.msra.mxu0 %v465
  %516 = vmatpush.msra.mxu0 %v464
  %517 = vmatpush.msra.mxu0 %v463
  %518 = vmatmul.f32.gmra.mxu0 %v480
  %v519 = vpop.f32.mrf.mxu0
  %v520 = vadd.f32 0.0, %v519
  %521 = vdwg.mxu0
  %v522 = vadd.f32 %v475, %v500
  %v523 = vxor.u32 %v522, 2147483648
  %v524 = vmul.f32 %v523, 1.442695
  %v525 = vpow.pop %v524
  %v526 = vadd.f32 %v525, 1.0
  %v527 = vrcp.pop %v526
  %v528 = vmul.f32 %v526, %v527
  %v529 = vsub.f32 1.0, %v528
  %v530 = vmul.f32 %v527, %v529
  %v531 = vadd.f32 %v527, %v530
  %vm532 = vweird.f32 %v526
  %vm533 = vweird.f32 %v527
  %vm534 = vmor %vm532, %vm533
  %v535 = vsel %vm534, %v527, %v531
  %v536 = vand.u32 2147483647, %v526
  %vm537 = vcmp.eq.f32.partialorder %v536, 8.507059e+37
  %v538 = vand.u32 %v526, 2147483648
  %v539 = vor.u32 1.1754944e-38, %v538
  %v540 = vsel %vm537, %v539, %v535
  %v541 = vmul.f32 1.0, %v540
  %v542 = vadd.f32 %v476, %v520
  %v543 = vxor.u32 %v542, 2147483648
  %v544 = vmul.f32 %v543, 1.442695
  %v545 = vpow.pop %v544
  %v546 = vadd.f32 %v545, 1.0
  %v547 = vrcp.pop %v546
  %v548 = vmul.f32 %v546, %v547
  %v549 = vsub.f32 1.0, %v548
  %v550 = vmul.f32 %v547, %v549
  %v551 = vadd.f32 %v547, %v550
  %vm552 = vweird.f32 %v546
  %vm553 = vweird.f32 %v547
  %vm554 = vmor %vm552, %vm553
  %v555 = vsel %vm554, %v547, %v551
  %v556 = vand.u32 2147483647, %v546
  %vm557 = vcmp.eq.f32.partialorder %v556, 8.507059e+37
  %v558 = vand.u32 %v546, 2147483648
  %v559 = vor.u32 1.1754944e-38, %v558
  %v560 = vsel %vm557, %v559, %v555
  %v561 = vmul.f32 1.0, %v560
  %562 = vmatpush.msra.mxu0 0.0
  %563 = vmatpush.msra.mxu0 0.0
  %564 = vmatpush.msra.mxu0 0.0
  %565 = vmatpush.msra.mxu0 0.0
  %566 = vmatpush.msra.mxu0 0.0
  %567 = vmatpush.msra.mxu0 0.0
  %568 = vmatpush.msra.mxu0 0.0
  %569 = vmatpush.msra.mxu0 0.0
  %570 = vmatpush.msra.mxu0 0.0
  %571 = vmatpush.msra.mxu0 0.0
  %572 = vmatpush.msra.mxu0 0.0
  %573 = vmatpush.msra.mxu0 0.0
  %574 = vmatpush.msra.mxu0 %v470
  %575 = vmatpush.msra.mxu0 %v469
  %576 = vmatpush.msra.mxu0 %v468
  %577 = vmatpush.msra.mxu0 %v467
  %578 = vmatmul.f32.gmra.mxu0 %v480
  %v579 = vpop.f32.mrf.mxu0
  %v580 = vadd.f32 %v473, %v579
  %581 = vdwg.mxu0
  %v582 = vmul.f32 %v541, %v580
  %v583 = vadd.f32 %v477, %v582
  %v584 = vtanh.pop %v583
  %v585 = vsub.f32 1.0, %v561
  %v586 = vmul.f32 %v585, %v584
  %v587 = vmul.f32 %v561, 0.0
  %v588 = vadd.f32 %v586, %v587
  %589 = vst.msk [vmem:[#allocation2] sm:$0x3] %vm210, %v588
  %s590 = scalar_lea.vmem [#allocation3], 2
  %v591 = vld [vmem:[%s590] sm:$0x3]
  %s592 = scalar_lea.vmem [#allocation4], 2
  %v593 = vld [vmem:[%s592] sm:$0x3]
  %s594 = scalar_lea.vmem [#allocation5], 2
  %v595 = vld [vmem:[%s594] sm:$0x3]
  %v597 = vsel %vm478, %v588, 0
  %599 = vmatpush.msra.mxu0 0.0
  %600 = vmatpush.msra.mxu0 0.0
  %601 = vmatpush.msra.mxu0 0.0
  %602 = vmatpush.msra.mxu0 0.0
  %603 = vmatpush.msra.mxu0 0.0
  %604 = vmatpush.msra.mxu0 0.0
  %605 = vmatpush.msra.mxu0 0.0
  %606 = vmatpush.msra.mxu0 0.0
  %607 = vmatpush.msra.mxu0 0.0
  %608 = vmatpush.msra.mxu0 0.0
  %609 = vmatpush.msra.mxu0 0.0
  %610 = vmatpush.msra.mxu0 0.0
  %611 = vmatpush.msra.mxu0 %v462
  %612 = vmatpush.msra.mxu0 %v461
  %613 = vmatpush.msra.mxu0 %v460
  %614 = vmatpush.msra.mxu0 %v459
  %615 = vmatmul.f32.gmra.mxu0 %v597
  %v616 = vpop.f32.mrf.mxu0
  %v617 = vadd.f32 0.0, %v616
  %618 = vdwg.mxu0
  %619 = vmatpush.msra.mxu0 0.0
  %620 = vmatpush.msra.mxu0 0.0
  %621 = vmatpush.msra.mxu0 0.0
  %622 = vmatpush.msra.mxu0 0.0
  %623 = vmatpush.msra.mxu0 0.0
  %624 = vmatpush.msra.mxu0 0.0
  %625 = vmatpush.msra.mxu0 0.0
  %626 = vmatpush.msra.mxu0 0.0
  %627 = vmatpush.msra.mxu0 0.0
  %628 = vmatpush.msra.mxu0 0.0
  %629 = vmatpush.msra.mxu0 0.0
  %630 = vmatpush.msra.mxu0 0.0
  %631 = vmatpush.msra.mxu0 %v466
  %632 = vmatpush.msra.mxu0 %v465
  %633 = vmatpush.msra.mxu0 %v464
  %634 = vmatpush.msra.mxu0 %v463
  %635 = vmatmul.f32.gmra.mxu0 %v597
  %v636 = vpop.f32.mrf.mxu0
  %v637 = vadd.f32 0.0, %v636
  %638 = vdwg.mxu0
  %v639 = vadd.f32 %v591, %v617
  %v640 = vxor.u32 %v639, 2147483648
  %v641 = vmul.f32 %v640, 1.442695
  %v642 = vpow.pop %v641
  %v643 = vadd.f32 %v642, 1.0
  %v644 = vrcp.pop %v643
  %v645 = vmul.f32 %v643, %v644
  %v646 = vsub.f32 1.0, %v645
  %v647 = vmul.f32 %v644, %v646
  %v648 = vadd.f32 %v644, %v647
  %vm649 = vweird.f32 %v643
  %vm650 = vweird.f32 %v644
  %vm651 = vmor %vm649, %vm650
  %v652 = vsel %vm651, %v644, %v648
  %v653 = vand.u32 2147483647, %v643
  %vm654 = vcmp.eq.f32.partialorder %v653, 8.507059e+37
  %v655 = vand.u32 %v643, 2147483648
  %v656 = vor.u32 1.1754944e-38, %v655
  %v657 = vsel %vm654, %v656, %v652
  %v658 = vmul.f32 1.0, %v657
  %v659 = vadd.f32 %v593, %v637
  %v660 = vxor.u32 %v659, 2147483648
  %v661 = vmul.f32 %v660, 1.442695
  %v662 = vpow.pop %v661
  %v663 = vadd.f32 %v662, 1.0
  %v664 = vrcp.pop %v663
  %v665 = vmul.f32 %v663, %v664
  %v666 = vsub.f32 1.0, %v665
  %v667 = vmul.f32 %v664, %v666
  %v668 = vadd.f32 %v664, %v667
  %vm669 = vweird.f32 %v663
  %vm670 = vweird.f32 %v664
  %vm671 = vmor %vm669, %vm670
  %v672 = vsel %vm671, %v664, %v668
  %v673 = vand.u32 2147483647, %v663
  %vm674 = vcmp.eq.f32.partialorder %v673, 8.507059e+37
  %v675 = vand.u32 %v663, 2147483648
  %v676 = vor.u32 1.1754944e-38, %v675
  %v677 = vsel %vm674, %v676, %v672
  %v678 = vmul.f32 1.0, %v677
  %679 = vmatpush.msra.mxu0 0.0
  %680 = vmatpush.msra.mxu0 0.0
  %681 = vmatpush.msra.mxu0 0.0
  %682 = vmatpush.msra.mxu0 0.0
  %683 = vmatpush.msra.mxu0 0.0
  %684 = vmatpush.msra.mxu0 0.0
  %685 = vmatpush.msra.mxu0 0.0
  %686 = vmatpush.msra.mxu0 0.0
  %687 = vmatpush.msra.mxu0 0.0
  %688 = vmatpush.msra.mxu0 0.0
  %689 = vmatpush.msra.mxu0 0.0
  %690 = vmatpush.msra.mxu0 0.0
  %691 = vmatpush.msra.mxu0 %v470
  %692 = vmatpush.msra.mxu0 %v469
  %693 = vmatpush.msra.mxu0 %v468
  %694 = vmatpush.msra.mxu0 %v467
  %695 = vmatmul.f32.gmra.mxu0 %v597
  %v696 = vpop.f32.mrf.mxu0
  %v697 = vadd.f32 %v473, %v696
  %698 = vdwg.mxu0
  %v699 = vmul.f32 %v658, %v697
  %v700 = vadd.f32 %v595, %v699
  %v701 = vtanh.pop %v700
  %v702 = vsub.f32 1.0, %v678
  %v703 = vmul.f32 %v702, %v701
  %v704 = vmul.f32 %v678, %v588
  %v705 = vadd.f32 %v703, %v704
  %s706 = scalar_lea.vmem [#allocation2], 2
  %707 = vst.msk [vmem:[%s706] sm:$0x3] %vm210, %v705
  %s708 = scalar_lea.vmem [#allocation3], 4
  %v709 = vld [vmem:[%s708] sm:$0x3]
  %s710 = scalar_lea.vmem [#allocation4], 4
  %v711 = vld [vmem:[%s710] sm:$0x3]
  %s712 = scalar_lea.vmem [#allocation5], 4
  %v713 = vld [vmem:[%s712] sm:$0x3]
  %v715 = vsel %vm478, %v705, 0
  %717 = vmatpush.msra.mxu0 0.0
  %718 = vmatpush.msra.mxu0 0.0
  %719 = vmatpush.msra.mxu0 0.0
  %720 = vmatpush.msra.mxu0 0.0
  %721 = vmatpush.msra.mxu0 0.0
  %722 = vmatpush.msra.mxu0 0.0
  %723 = vmatpush.msra.mxu0 0.0
  %724 = vmatpush.msra.mxu0 0.0
  %725 = vmatpush.msra.mxu0 0.0
  %726 = vmatpush.msra.mxu0 0.0
  %727 = vmatpush.msra.mxu0 0.0
  %728 = vmatpush.msra.mxu0 0.0
  %729 = vmatpush.msra.mxu0 %v462
  %730 = vmatpush.msra.mxu0 %v461
  %731 = vmatpush.msra.mxu0 %v460
  %732 = vmatpush.msra.mxu0 %v459
  %733 = vmatmul.f32.gmra.mxu0 %v715
  %v734 = vpop.f32.mrf.mxu0
  %v735 = vadd.f32 0.0, %v734
  %736 = vdwg.mxu0
  %737 = vmatpush.msra.mxu0 0.0
  %738 = vmatpush.msra.mxu0 0.0
  %739 = vmatpush.msra.mxu0 0.0
  %740 = vmatpush.msra.mxu0 0.0
  %741 = vmatpush.msra.mxu0 0.0
  %742 = vmatpush.msra.mxu0 0.0
  %743 = vmatpush.msra.mxu0 0.0
  %744 = vmatpush.msra.mxu0 0.0
  %745 = vmatpush.msra.mxu0 0.0
  %746 = vmatpush.msra.mxu0 0.0
  %747 = vmatpush.msra.mxu0 0.0
  %748 = vmatpush.msra.mxu0 0.0
  %749 = vmatpush.msra.mxu0 %v466
  %750 = vmatpush.msra.mxu0 %v465
  %751 = vmatpush.msra.mxu0 %v464
  %752 = vmatpush.msra.mxu0 %v463
  %753 = vmatmul.f32.gmra.mxu0 %v715
  %v754 = vpop.f32.mrf.mxu0
  %v755 = vadd.f32 0.0, %v754
  %756 = vdwg.mxu0
  %v757 = vadd.f32 %v709, %v735
  %v758 = vxor.u32 %v757, 2147483648
  %v759 = vmul.f32 %v758, 1.442695
  %v760 = vpow.pop %v759
  %v761 = vadd.f32 %v760, 1.0
  %v762 = vrcp.pop %v761
  %v763 = vmul.f32 %v761, %v762
  %v764 = vsub.f32 1.0, %v763
  %v765 = vmul.f32 %v762, %v764
  %v766 = vadd.f32 %v762, %v765
  %vm767 = vweird.f32 %v761
  %vm768 = vweird.f32 %v762
  %vm769 = vmor %vm767, %vm768
  %v770 = vsel %vm769, %v762, %v766
  %v771 = vand.u32 2147483647, %v761
  %vm772 = vcmp.eq.f32.partialorder %v771, 8.507059e+37
  %v773 = vand.u32 %v761, 2147483648
  %v774 = vor.u32 1.1754944e-38, %v773
  %v775 = vsel %vm772, %v774, %v770
  %v776 = vmul.f32 1.0, %v775
  %v777 = vadd.f32 %v711, %v755
  %v778 = vxor.u32 %v777, 2147483648
  %v779 = vmul.f32 %v778, 1.442695
  %v780 = vpow.pop %v779
  %v781 = vadd.f32 %v780, 1.0
  %v782 = vrcp.pop %v781
  %v783 = vmul.f32 %v781, %v782
  %v784 = vsub.f32 1.0, %v783
  %v785 = vmul.f32 %v782, %v784
  %v786 = vadd.f32 %v782, %v785
  %vm787 = vweird.f32 %v781
  %vm788 = vweird.f32 %v782
  %vm789 = vmor %vm787, %vm788
  %v790 = vsel %vm789, %v782, %v786
  %v791 = vand.u32 2147483647, %v781
  %vm792 = vcmp.eq.f32.partialorder %v791, 8.507059e+37
  %v793 = vand.u32 %v781, 2147483648
  %v794 = vor.u32 1.1754944e-38, %v793
  %v795 = vsel %vm792, %v794, %v790
  %v796 = vmul.f32 1.0, %v795
  %797 = vmatpush.msra.mxu0 0.0
  %798 = vmatpush.msra.mxu0 0.0
  %799 = vmatpush.msra.mxu0 0.0
  %800 = vmatpush.msra.mxu0 0.0
  %801 = vmatpush.msra.mxu0 0.0
  %802 = vmatpush.msra.mxu0 0.0
  %803 = vmatpush.msra.mxu0 0.0
  %804 = vmatpush.msra.mxu0 0.0
  %805 = vmatpush.msra.mxu0 0.0
  %806 = vmatpush.msra.mxu0 0.0
  %807 = vmatpush.msra.mxu0 0.0
  %808 = vmatpush.msra.mxu0 0.0
  %809 = vmatpush.msra.mxu0 %v470
  %810 = vmatpush.msra.mxu0 %v469
  %811 = vmatpush.msra.mxu0 %v468
  %812 = vmatpush.msra.mxu0 %v467
  %813 = vmatmul.f32.gmra.mxu0 %v715
  %v814 = vpop.f32.mrf.mxu0
  %v815 = vadd.f32 %v473, %v814
  %816 = vdwg.mxu0
  %v817 = vmul.f32 %v776, %v815
  %v818 = vadd.f32 %v713, %v817
  %v819 = vtanh.pop %v818
  %v820 = vsub.f32 1.0, %v796
  %v821 = vmul.f32 %v820, %v819
  %v822 = vmul.f32 %v796, %v705
  %v823 = vadd.f32 %v821, %v822
  %s824 = scalar_lea.vmem [#allocation2], 4
  %825 = vst.msk [vmem:[%s824] sm:$0x3] %vm210, %v823
  %s826 = scalar_lea.vmem [#allocation3], 6
  %v827 = vld [vmem:[%s826] sm:$0x3]
  %s828 = scalar_lea.vmem [#allocation4], 6
  %v829 = vld [vmem:[%s828] sm:$0x3]
  %s830 = scalar_lea.vmem [#allocation5], 6
  %v831 = vld [vmem:[%s830] sm:$0x3]
  %v833 = vsel %vm478, %v823, 0
  %835 = vmatpush.msra.mxu0 0.0
  %836 = vmatpush.msra.mxu0 0.0
  %837 = vmatpush.msra.mxu0 0.0
  %838 = vmatpush.msra.mxu0 0.0
  %839 = vmatpush.msra.mxu0 0.0
  %840 = vmatpush.msra.mxu0 0.0
  %841 = vmatpush.msra.mxu0 0.0
  %842 = vmatpush.msra.mxu0 0.0
  %843 = vmatpush.msra.mxu0 0.0
  %844 = vmatpush.msra.mxu0 0.0
  %845 = vmatpush.msra.mxu0 0.0
  %846 = vmatpush.msra.mxu0 0.0
  %847 = vmatpush.msra.mxu0 %v462
  %848 = vmatpush.msra.mxu0 %v461
  %849 = vmatpush.msra.mxu0 %v460
  %850 = vmatpush.msra.mxu0 %v459
  %851 = vmatmul.f32.gmra.mxu0 %v833
  %v852 = vpop.f32.mrf.mxu0
  %v853 = vadd.f32 0.0, %v852
  %854 = vdwg.mxu0
  %855 = vmatpush.msra.mxu0 0.0
  %856 = vmatpush.msra.mxu0 0.0
  %857 = vmatpush.msra.mxu0 0.0
  %858 = vmatpush.msra.mxu0 0.0
  %859 = vmatpush.msra.mxu0 0.0
  %860 = vmatpush.msra.mxu0 0.0
  %861 = vmatpush.msra.mxu0 0.0
  %862 = vmatpush.msra.mxu0 0.0
  %863 = vmatpush.msra.mxu0 0.0
  %864 = vmatpush.msra.mxu0 0.0
  %865 = vmatpush.msra.mxu0 0.0
  %866 = vmatpush.msra.mxu0 0.0
  %867 = vmatpush.msra.mxu0 %v466
  %868 = vmatpush.msra.mxu0 %v465
  %869 = vmatpush.msra.mxu0 %v464
  %870 = vmatpush.msra.mxu0 %v463
  %871 = vmatmul.f32.gmra.mxu0 %v833
  %v872 = vpop.f32.mrf.mxu0
  %v873 = vadd.f32 0.0, %v872
  %874 = vdwg.mxu0
  %v875 = vadd.f32 %v827, %v853
  %v876 = vxor.u32 %v875, 2147483648
  %v877 = vmul.f32 %v876, 1.442695
  %v878 = vpow.pop %v877
  %v879 = vadd.f32 %v878, 1.0
  %v880 = vrcp.pop %v879
  %v881 = vmul.f32 %v879, %v880
  %v882 = vsub.f32 1.0, %v881
  %v883 = vmul.f32 %v880, %v882
  %v884 = vadd.f32 %v880, %v883
  %vm885 = vweird.f32 %v879
  %vm886 = vweird.f32 %v880
  %vm887 = vmor %vm885, %vm886
  %v888 = vsel %vm887, %v880, %v884
  %v889 = vand.u32 2147483647, %v879
  %vm890 = vcmp.eq.f32.partialorder %v889, 8.507059e+37
  %v891 = vand.u32 %v879, 2147483648
  %v892 = vor.u32 1.1754944e-38, %v891
  %v893 = vsel %vm890, %v892, %v888
  %v894 = vmul.f32 1.0, %v893
  %v895 = vadd.f32 %v829, %v873
  %v896 = vxor.u32 %v895, 2147483648
  %v897 = vmul.f32 %v896, 1.442695
  %v898 = vpow.pop %v897
  %v899 = vadd.f32 %v898, 1.0
  %v900 = vrcp.pop %v899
  %v901 = vmul.f32 %v899, %v900
  %v902 = vsub.f32 1.0, %v901
  %v903 = vmul.f32 %v900, %v902
  %v904 = vadd.f32 %v900, %v903
  %vm905 = vweird.f32 %v899
  %vm906 = vweird.f32 %v900
  %vm907 = vmor %vm905, %vm906
  %v908 = vsel %vm907, %v900, %v904
  %v909 = vand.u32 2147483647, %v899
  %vm910 = vcmp.eq.f32.partialorder %v909, 8.507059e+37
  %v911 = vand.u32 %v899, 2147483648
  %v912 = vor.u32 1.1754944e-38, %v911
  %v913 = vsel %vm910, %v912, %v908
  %v914 = vmul.f32 1.0, %v913
  %915 = vmatpush.msra.mxu0 0.0
  %916 = vmatpush.msra.mxu0 0.0
  %917 = vmatpush.msra.mxu0 0.0
  %918 = vmatpush.msra.mxu0 0.0
  %919 = vmatpush.msra.mxu0 0.0
  %920 = vmatpush.msra.mxu0 0.0
  %921 = vmatpush.msra.mxu0 0.0
  %922 = vmatpush.msra.mxu0 0.0
  %923 = vmatpush.msra.mxu0 0.0
  %924 = vmatpush.msra.mxu0 0.0
  %925 = vmatpush.msra.mxu0 0.0
  %926 = vmatpush.msra.mxu0 0.0
  %927 = vmatpush.msra.mxu0 %v470
  %928 = vmatpush.msra.mxu0 %v469
  %929 = vmatpush.msra.mxu0 %v468
  %930 = vmatpush.msra.mxu0 %v467
  %931 = vmatmul.f32.gmra.mxu0 %v833
  %v932 = vpop.f32.mrf.mxu0
  %v933 = vadd.f32 %v473, %v932
  %934 = vdwg.mxu0
  %v935 = vmul.f32 %v894, %v933
  %v936 = vadd.f32 %v831, %v935
  %v937 = vtanh.pop %v936
  %v938 = vsub.f32 1.0, %v914
  %v939 = vmul.f32 %v938, %v937
  %v940 = vmul.f32 %v914, %v823
  %v941 = vadd.f32 %v939, %v940
  %s942 = scalar_lea.vmem [#allocation2], 6
  %943 = vst.msk [vmem:[%s942] sm:$0x3] %vm210, %v941
  %s944 = scalar_lea.vmem [#allocation3], 8
  %v945 = vld [vmem:[%s944] sm:$0x3]
  %s946 = scalar_lea.vmem [#allocation4], 8
  %v947 = vld [vmem:[%s946] sm:$0x3]
  %s948 = scalar_lea.vmem [#allocation5], 8
  %v949 = vld [vmem:[%s948] sm:$0x3]
  %v951 = vsel %vm478, %v941, 0
  %953 = vmatpush.msra.mxu0 0.0
  %954 = vmatpush.msra.mxu0 0.0
  %955 = vmatpush.msra.mxu0 0.0
  %956 = vmatpush.msra.mxu0 0.0
  %957 = vmatpush.msra.mxu0 0.0
  %958 = vmatpush.msra.mxu0 0.0
  %959 = vmatpush.msra.mxu0 0.0
  %960 = vmatpush.msra.mxu0 0.0
  %961 = vmatpush.msra.mxu0 0.0
  %962 = vmatpush.msra.mxu0 0.0
  %963 = vmatpush.msra.mxu0 0.0
  %964 = vmatpush.msra.mxu0 0.0
  %965 = vmatpush.msra.mxu0 %v462
  %966 = vmatpush.msra.mxu0 %v461
  %967 = vmatpush.msra.mxu0 %v460
  %968 = vmatpush.msra.mxu0 %v459
  %969 = vmatmul.f32.gmra.mxu0 %v951
  %v970 = vpop.f32.mrf.mxu0
  %v971 = vadd.f32 0.0, %v970
  %972 = vdwg.mxu0
  %973 = vmatpush.msra.mxu0 0.0
  %974 = vmatpush.msra.mxu0 0.0
  %975 = vmatpush.msra.mxu0 0.0
  %976 = vmatpush.msra.mxu0 0.0
  %977 = vmatpush.msra.mxu0 0.0
  %978 = vmatpush.msra.mxu0 0.0
  %979 = vmatpush.msra.mxu0 0.0
  %980 = vmatpush.msra.mxu0 0.0
  %981 = vmatpush.msra.mxu0 0.0
  %982 = vmatpush.msra.mxu0 0.0
  %983 = vmatpush.msra.mxu0 0.0
  %984 = vmatpush.msra.mxu0 0.0
  %985 = vmatpush.msra.mxu0 %v466
  %986 = vmatpush.msra.mxu0 %v465
  %987 = vmatpush.msra.mxu0 %v464
  %988 = vmatpush.msra.mxu0 %v463
  %989 = vmatmul.f32.gmra.mxu0 %v951
  %v990 = vpop.f32.mrf.mxu0
  %v991 = vadd.f32 0.0, %v990
  %992 = vdwg.mxu0
  %v993 = vadd.f32 %v945, %v971
  %v994 = vxor.u32 %v993, 2147483648
  %v995 = vmul.f32 %v994, 1.442695
  %v996 = vpow.pop %v995
  %v997 = vadd.f32 %v996, 1.0
  %v998 = vrcp.pop %v997
  %v999 = vmul.f32 %v997, %v998
  %v1000 = vsub.f32 1.0, %v999
  %v1001 = vmul.f32 %v998, %v1000
  %v1002 = vadd.f32 %v998, %v1001
  %vm1003 = vweird.f32 %v997
  %vm1004 = vweird.f32 %v998
  %vm1005 = vmor %vm1003, %vm1004
  %v1006 = vsel %vm1005, %v998, %v1002
  %v1007 = vand.u32 2147483647, %v997
  %vm1008 = vcmp.eq.f32.partialorder %v1007, 8.507059e+37
  %v1009 = vand.u32 %v997, 2147483648
  %v1010 = vor.u32 1.1754944e-38, %v1009
  %v1011 = vsel %vm1008, %v1010, %v1006
  %v1012 = vmul.f32 1.0, %v1011
  %v1013 = vadd.f32 %v947, %v991
  %v1014 = vxor.u32 %v1013, 2147483648
  %v1015 = vmul.f32 %v1014, 1.442695
  %v1016 = vpow.pop %v1015
  %v1017 = vadd.f32 %v1016, 1.0
  %v1018 = vrcp.pop %v1017
  %v1019 = vmul.f32 %v1017, %v1018
  %v1020 = vsub.f32 1.0, %v1019
  %v1021 = vmul.f32 %v1018, %v1020
  %v1022 = vadd.f32 %v1018, %v1021
  %vm1023 = vweird.f32 %v1017
  %vm1024 = vweird.f32 %v1018
  %vm1025 = vmor %vm1023, %vm1024
  %v1026 = vsel %vm1025, %v1018, %v1022
  %v1027 = vand.u32 2147483647, %v1017
  %vm1028 = vcmp.eq.f32.partialorder %v1027, 8.507059e+37
  %v1029 = vand.u32 %v1017, 2147483648
  %v1030 = vor.u32 1.1754944e-38, %v1029
  %v1031 = vsel %vm1028, %v1030, %v1026
  %v1032 = vmul.f32 1.0, %v1031
  %1033 = vmatpush.msra.mxu0 0.0
  %1034 = vmatpush.msra.mxu0 0.0
  %1035 = vmatpush.msra.mxu0 0.0
  %1036 = vmatpush.msra.mxu0 0.0
  %1037 = vmatpush.msra.mxu0 0.0
  %1038 = vmatpush.msra.mxu0 0.0
  %1039 = vmatpush.msra.mxu0 0.0
  %1040 = vmatpush.msra.mxu0 0.0
  %1041 = vmatpush.msra.mxu0 0.0
  %1042 = vmatpush.msra.mxu0 0.0
  %1043 = vmatpush.msra.mxu0 0.0
  %1044 = vmatpush.msra.mxu0 0.0
  %1045 = vmatpush.msra.mxu0 %v470
  %1046 = vmatpush.msra.mxu0 %v469
  %1047 = vmatpush.msra.mxu0 %v468
  %1048 = vmatpush.msra.mxu0 %v467
  %1049 = vmatmul.f32.gmra.mxu0 %v951
  %v1050 = vpop.f32.mrf.mxu0
  %v1051 = vadd.f32 %v473, %v1050
  %1052 = vdwg.mxu0
  %v1053 = vmul.f32 %v1012, %v1051
  %v1054 = vadd.f32 %v949, %v1053
  %v1055 = vtanh.pop %v1054
  %v1056 = vsub.f32 1.0, %v1032
  %v1057 = vmul.f32 %v1056, %v1055
  %v1058 = vmul.f32 %v1032, %v941
  %v1059 = vadd.f32 %v1057, %v1058
  %s1060 = scalar_lea.vmem [#allocation2], 8
  %1061 = vst.msk [vmem:[%s1060] sm:$0x3] %vm210, %v1059
  %s1062 = scalar_lea.vmem [#allocation3], 10
  %v1063 = vld [vmem:[%s1062] sm:$0x3]
  %s1064 = scalar_lea.vmem [#allocation4], 10
  %v1065 = vld [vmem:[%s1064] sm:$0x3]
  %s1066 = scalar_lea.vmem [#allocation5], 10
  %v1067 = vld [vmem:[%s1066] sm:$0x3]
  %v1069 = vsel %vm478, %v1059, 0
  %1071 = vmatpush.msra.mxu0 0.0
  %1072 = vmatpush.msra.mxu0 0.0
  %1073 = vmatpush.msra.mxu0 0.0
  %1074 = vmatpush.msra.mxu0 0.0
  %1075 = vmatpush.msra.mxu0 0.0
  %1076 = vmatpush.msra.mxu0 0.0
  %1077 = vmatpush.msra.mxu0 0.0
  %1078 = vmatpush.msra.mxu0 0.0
  %1079 = vmatpush.msra.mxu0 0.0
  %1080 = vmatpush.msra.mxu0 0.0
  %1081 = vmatpush.msra.mxu0 0.0
  %1082 = vmatpush.msra.mxu0 0.0
  %1083 = vmatpush.msra.mxu0 %v462
  %1084 = vmatpush.msra.mxu0 %v461
  %1085 = vmatpush.msra.mxu0 %v460
  %1086 = vmatpush.msra.mxu0 %v459
  %1087 = vmatmul.f32.gmra.mxu0 %v1069
  %v1088 = vpop.f32.mrf.mxu0
  %v1089 = vadd.f32 0.0, %v1088
  %1090 = vdwg.mxu0
  %1091 = vmatpush.msra.mxu0 0.0
  %1092 = vmatpush.msra.mxu0 0.0
  %1093 = vmatpush.msra.mxu0 0.0
  %1094 = vmatpush.msra.mxu0 0.0
  %1095 = vmatpush.msra.mxu0 0.0
  %1096 = vmatpush.msra.mxu0 0.0
  %1097 = vmatpush.msra.mxu0 0.0
  %1098 = vmatpush.msra.mxu0 0.0
  %1099 = vmatpush.msra.mxu0 0.0
  %1100 = vmatpush.msra.mxu0 0.0
  %1101 = vmatpush.msra.mxu0 0.0
  %1102 = vmatpush.msra.mxu0 0.0
  %1103 = vmatpush.msra.mxu0 %v466
  %1104 = vmatpush.msra.mxu0 %v465
  %1105 = vmatpush.msra.mxu0 %v464
  %1106 = vmatpush.msra.mxu0 %v463
  %1107 = vmatmul.f32.gmra.mxu0 %v1069
  %v1108 = vpop.f32.mrf.mxu0
  %v1109 = vadd.f32 0.0, %v1108
  %1110 = vdwg.mxu0
  %v1111 = vadd.f32 %v1063, %v1089
  %v1112 = vxor.u32 %v1111, 2147483648
  %v1113 = vmul.f32 %v1112, 1.442695
  %v1114 = vpow.pop %v1113
  %v1115 = vadd.f32 %v1114, 1.0
  %v1116 = vrcp.pop %v1115
  %v1117 = vmul.f32 %v1115, %v1116
  %v1118 = vsub.f32 1.0, %v1117
  %v1119 = vmul.f32 %v1116, %v1118
  %v1120 = vadd.f32 %v1116, %v1119
  %vm1121 = vweird.f32 %v1115
  %vm1122 = vweird.f32 %v1116
  %vm1123 = vmor %vm1121, %vm1122
  %v1124 = vsel %vm1123, %v1116, %v1120
  %v1125 = vand.u32 2147483647, %v1115
  %vm1126 = vcmp.eq.f32.partialorder %v1125, 8.507059e+37
  %v1127 = vand.u32 %v1115, 2147483648
  %v1128 = vor.u32 1.1754944e-38, %v1127
  %v1129 = vsel %vm1126, %v1128, %v1124
  %v1130 = vmul.f32 1.0, %v1129
  %v1131 = vadd.f32 %v1065, %v1109
  %v1132 = vxor.u32 %v1131, 2147483648
  %v1133 = vmul.f32 %v1132, 1.442695
  %v1134 = vpow.pop %v1133
  %v1135 = vadd.f32 %v1134, 1.0
  %v1136 = vrcp.pop %v1135
  %v1137 = vmul.f32 %v1135, %v1136
  %v1138 = vsub.f32 1.0, %v1137
  %v1139 = vmul.f32 %v1136, %v1138
  %v1140 = vadd.f32 %v1136, %v1139
  %vm1141 = vweird.f32 %v1135
  %vm1142 = vweird.f32 %v1136
  %vm1143 = vmor %vm1141, %vm1142
  %v1144 = vsel %vm1143, %v1136, %v1140
  %v1145 = vand.u32 2147483647, %v1135
  %vm1146 = vcmp.eq.f32.partialorder %v1145, 8.507059e+37
  %v1147 = vand.u32 %v1135, 2147483648
  %v1148 = vor.u32 1.1754944e-38, %v1147
  %v1149 = vsel %vm1146, %v1148, %v1144
  %v1150 = vmul.f32 1.0, %v1149
  %1151 = vmatpush.msra.mxu0 0.0
  %1152 = vmatpush.msra.mxu0 0.0
  %1153 = vmatpush.msra.mxu0 0.0
  %1154 = vmatpush.msra.mxu0 0.0
  %1155 = vmatpush.msra.mxu0 0.0
  %1156 = vmatpush.msra.mxu0 0.0
  %1157 = vmatpush.msra.mxu0 0.0
  %1158 = vmatpush.msra.mxu0 0.0
  %1159 = vmatpush.msra.mxu0 0.0
  %1160 = vmatpush.msra.mxu0 0.0
  %1161 = vmatpush.msra.mxu0 0.0
  %1162 = vmatpush.msra.mxu0 0.0
  %1163 = vmatpush.msra.mxu0 %v470
  %1164 = vmatpush.msra.mxu0 %v469
  %1165 = vmatpush.msra.mxu0 %v468
  %1166 = vmatpush.msra.mxu0 %v467
  %1167 = vmatmul.f32.gmra.mxu0 %v1069
  %v1168 = vpop.f32.mrf.mxu0
  %v1169 = vadd.f32 %v473, %v1168
  %1170 = vdwg.mxu0
  %v1171 = vmul.f32 %v1130, %v1169
  %v1172 = vadd.f32 %v1067, %v1171
  %v1173 = vtanh.pop %v1172
  %v1174 = vsub.f32 1.0, %v1150
  %v1175 = vmul.f32 %v1174, %v1173
  %v1176 = vmul.f32 %v1150, %v1059
  %v1177 = vadd.f32 %v1175, %v1176
  %s1178 = scalar_lea.vmem [#allocation2], 10
  %1179 = vst.msk [vmem:[%s1178] sm:$0x3] %vm210, %v1177
  %s1180 = scalar_lea.vmem [#allocation3], 12
  %v1181 = vld [vmem:[%s1180] sm:$0x3]
  %s1182 = scalar_lea.vmem [#allocation4], 12
  %v1183 = vld [vmem:[%s1182] sm:$0x3]
  %s1184 = scalar_lea.vmem [#allocation5], 12
  %v1185 = vld [vmem:[%s1184] sm:$0x3]
  %v1187 = vsel %vm478, %v1177, 0
  %1189 = vmatpush.msra.mxu0 0.0
  %1190 = vmatpush.msra.mxu0 0.0
  %1191 = vmatpush.msra.mxu0 0.0
  %1192 = vmatpush.msra.mxu0 0.0
  %1193 = vmatpush.msra.mxu0 0.0
  %1194 = vmatpush.msra.mxu0 0.0
  %1195 = vmatpush.msra.mxu0 0.0
  %1196 = vmatpush.msra.mxu0 0.0
  %1197 = vmatpush.msra.mxu0 0.0
  %1198 = vmatpush.msra.mxu0 0.0
  %1199 = vmatpush.msra.mxu0 0.0
  %1200 = vmatpush.msra.mxu0 0.0
  %1201 = vmatpush.msra.mxu0 %v462
  %1202 = vmatpush.msra.mxu0 %v461
  %1203 = vmatpush.msra.mxu0 %v460
  %1204 = vmatpush.msra.mxu0 %v459
  %1205 = vmatmul.f32.gmra.mxu0 %v1187
  %v1206 = vpop.f32.mrf.mxu0
  %v1207 = vadd.f32 0.0, %v1206
  %1208 = vdwg.mxu0
  %1209 = vmatpush.msra.mxu0 0.0
  %1210 = vmatpush.msra.mxu0 0.0
  %1211 = vmatpush.msra.mxu0 0.0
  %1212 = vmatpush.msra.mxu0 0.0
  %1213 = vmatpush.msra.mxu0 0.0
  %1214 = vmatpush.msra.mxu0 0.0
  %1215 = vmatpush.msra.mxu0 0.0
  %1216 = vmatpush.msra.mxu0 0.0
  %1217 = vmatpush.msra.mxu0 0.0
  %1218 = vmatpush.msra.mxu0 0.0
  %1219 = vmatpush.msra.mxu0 0.0
  %1220 = vmatpush.msra.mxu0 0.0
  %1221 = vmatpush.msra.mxu0 %v466
  %1222 = vmatpush.msra.mxu0 %v465
  %1223 = vmatpush.msra.mxu0 %v464
  %1224 = vmatpush.msra.mxu0 %v463
  %1225 = vmatmul.f32.gmra.mxu0 %v1187
  %v1226 = vpop.f32.mrf.mxu0
  %v1227 = vadd.f32 0.0, %v1226
  %1228 = vdwg.mxu0
  %v1229 = vadd.f32 %v1181, %v1207
  %v1230 = vxor.u32 %v1229, 2147483648
  %v1231 = vmul.f32 %v1230, 1.442695
  %v1232 = vpow.pop %v1231
  %v1233 = vadd.f32 %v1232, 1.0
  %v1234 = vrcp.pop %v1233
  %v1235 = vmul.f32 %v1233, %v1234
  %v1236 = vsub.f32 1.0, %v1235
  %v1237 = vmul.f32 %v1234, %v1236
  %v1238 = vadd.f32 %v1234, %v1237
  %vm1239 = vweird.f32 %v1233
  %vm1240 = vweird.f32 %v1234
  %vm1241 = vmor %vm1239, %vm1240
  %v1242 = vsel %vm1241, %v1234, %v1238
  %v1243 = vand.u32 2147483647, %v1233
  %vm1244 = vcmp.eq.f32.partialorder %v1243, 8.507059e+37
  %v1245 = vand.u32 %v1233, 2147483648
  %v1246 = vor.u32 1.1754944e-38, %v1245
  %v1247 = vsel %vm1244, %v1246, %v1242
  %v1248 = vmul.f32 1.0, %v1247
  %v1249 = vadd.f32 %v1183, %v1227
  %v1250 = vxor.u32 %v1249, 2147483648
  %v1251 = vmul.f32 %v1250, 1.442695
  %v1252 = vpow.pop %v1251
  %v1253 = vadd.f32 %v1252, 1.0
  %v1254 = vrcp.pop %v1253
  %v1255 = vmul.f32 %v1253, %v1254
  %v1256 = vsub.f32 1.0, %v1255
  %v1257 = vmul.f32 %v1254, %v1256
  %v1258 = vadd.f32 %v1254, %v1257
  %vm1259 = vweird.f32 %v1253
  %vm1260 = vweird.f32 %v1254
  %vm1261 = vmor %vm1259, %vm1260
  %v1262 = vsel %vm1261, %v1254, %v1258
  %v1263 = vand.u32 2147483647, %v1253
  %vm1264 = vcmp.eq.f32.partialorder %v1263, 8.507059e+37
  %v1265 = vand.u32 %v1253, 2147483648
  %v1266 = vor.u32 1.1754944e-38, %v1265
  %v1267 = vsel %vm1264, %v1266, %v1262
  %v1268 = vmul.f32 1.0, %v1267
  %1269 = vmatpush.msra.mxu0 0.0
  %1270 = vmatpush.msra.mxu0 0.0
  %1271 = vmatpush.msra.mxu0 0.0
  %1272 = vmatpush.msra.mxu0 0.0
  %1273 = vmatpush.msra.mxu0 0.0
  %1274 = vmatpush.msra.mxu0 0.0
  %1275 = vmatpush.msra.mxu0 0.0
  %1276 = vmatpush.msra.mxu0 0.0
  %1277 = vmatpush.msra.mxu0 0.0
  %1278 = vmatpush.msra.mxu0 0.0
  %1279 = vmatpush.msra.mxu0 0.0
  %1280 = vmatpush.msra.mxu0 0.0
  %1281 = vmatpush.msra.mxu0 %v470
  %1282 = vmatpush.msra.mxu0 %v469
  %1283 = vmatpush.msra.mxu0 %v468
  %1284 = vmatpush.msra.mxu0 %v467
  %1285 = vmatmul.f32.gmra.mxu0 %v1187
  %v1286 = vpop.f32.mrf.mxu0
  %v1287 = vadd.f32 %v473, %v1286
  %1288 = vdwg.mxu0
  %v1289 = vmul.f32 %v1248, %v1287
  %v1290 = vadd.f32 %v1185, %v1289
  %v1291 = vtanh.pop %v1290
  %v1292 = vsub.f32 1.0, %v1268
  %v1293 = vmul.f32 %v1292, %v1291
  %v1294 = vmul.f32 %v1268, %v1177
  %v1295 = vadd.f32 %v1293, %v1294
  %s1296 = scalar_lea.vmem [#allocation2], 12
  %1297 = vst.msk [vmem:[%s1296] sm:$0x3] %vm210, %v1295
  %s1298 = scalar_lea.vmem [#allocation3], 14
  %v1299 = vld [vmem:[%s1298] sm:$0x3]
  %s1300 = scalar_lea.vmem [#allocation4], 14
  %v1301 = vld [vmem:[%s1300] sm:$0x3]
  %s1302 = scalar_lea.vmem [#allocation5], 14
  %v1303 = vld [vmem:[%s1302] sm:$0x3]
  %v1305 = vsel %vm478, %v1295, 0
  %1307 = vmatpush.msra.mxu0 0.0
  %1308 = vmatpush.msra.mxu0 0.0
  %1309 = vmatpush.msra.mxu0 0.0
  %1310 = vmatpush.msra.mxu0 0.0
  %1311 = vmatpush.msra.mxu0 0.0
  %1312 = vmatpush.msra.mxu0 0.0
  %1313 = vmatpush.msra.mxu0 0.0
  %1314 = vmatpush.msra.mxu0 0.0
  %1315 = vmatpush.msra.mxu0 0.0
  %1316 = vmatpush.msra.mxu0 0.0
  %1317 = vmatpush.msra.mxu0 0.0
  %1318 = vmatpush.msra.mxu0 0.0
  %1319 = vmatpush.msra.mxu0 %v462
  %1320 = vmatpush.msra.mxu0 %v461
  %1321 = vmatpush.msra.mxu0 %v460
  %1322 = vmatpush.msra.mxu0 %v459
  %1323 = vmatmul.f32.gmra.mxu0 %v1305
  %v1324 = vpop.f32.mrf.mxu0
  %v1325 = vadd.f32 0.0, %v1324
  %1326 = vdwg.mxu0
  %1327 = vmatpush.msra.mxu0 0.0
  %1328 = vmatpush.msra.mxu0 0.0
  %1329 = vmatpush.msra.mxu0 0.0
  %1330 = vmatpush.msra.mxu0 0.0
  %1331 = vmatpush.msra.mxu0 0.0
  %1332 = vmatpush.msra.mxu0 0.0
  %1333 = vmatpush.msra.mxu0 0.0
  %1334 = vmatpush.msra.mxu0 0.0
  %1335 = vmatpush.msra.mxu0 0.0
  %1336 = vmatpush.msra.mxu0 0.0
  %1337 = vmatpush.msra.mxu0 0.0
  %1338 = vmatpush.msra.mxu0 0.0
  %1339 = vmatpush.msra.mxu0 %v466
  %1340 = vmatpush.msra.mxu0 %v465
  %1341 = vmatpush.msra.mxu0 %v464
  %1342 = vmatpush.msra.mxu0 %v463
  %1343 = vmatmul.f32.gmra.mxu0 %v1305
  %v1344 = vpop.f32.mrf.mxu0
  %v1345 = vadd.f32 0.0, %v1344
  %1346 = vdwg.mxu0
  %v1347 = vadd.f32 %v1299, %v1325
  %v1348 = vxor.u32 %v1347, 2147483648
  %v1349 = vmul.f32 %v1348, 1.442695
  %v1350 = vpow.pop %v1349
  %v1351 = vadd.f32 %v1350, 1.0
  %v1352 = vrcp.pop %v1351
  %v1353 = vmul.f32 %v1351, %v1352
  %v1354 = vsub.f32 1.0, %v1353
  %v1355 = vmul.f32 %v1352, %v1354
  %v1356 = vadd.f32 %v1352, %v1355
  %vm1357 = vweird.f32 %v1351
  %vm1358 = vweird.f32 %v1352
  %vm1359 = vmor %vm1357, %vm1358
  %v1360 = vsel %vm1359, %v1352, %v1356
  %v1361 = vand.u32 2147483647, %v1351
  %vm1362 = vcmp.eq.f32.partialorder %v1361, 8.507059e+37
  %v1363 = vand.u32 %v1351, 2147483648
  %v1364 = vor.u32 1.1754944e-38, %v1363
  %v1365 = vsel %vm1362, %v1364, %v1360
  %v1366 = vmul.f32 1.0, %v1365
  %v1367 = vadd.f32 %v1301, %v1345
  %v1368 = vxor.u32 %v1367, 2147483648
  %v1369 = vmul.f32 %v1368, 1.442695
  %v1370 = vpow.pop %v1369
  %v1371 = vadd.f32 %v1370, 1.0
  %v1372 = vrcp.pop %v1371
  %v1373 = vmul.f32 %v1371, %v1372
  %v1374 = vsub.f32 1.0, %v1373
  %v1375 = vmul.f32 %v1372, %v1374
  %v1376 = vadd.f32 %v1372, %v1375
  %vm1377 = vweird.f32 %v1371
  %vm1378 = vweird.f32 %v1372
  %vm1379 = vmor %vm1377, %vm1378
  %v1380 = vsel %vm1379, %v1372, %v1376
  %v1381 = vand.u32 2147483647, %v1371
  %vm1382 = vcmp.eq.f32.partialorder %v1381, 8.507059e+37
  %v1383 = vand.u32 %v1371, 2147483648
  %v1384 = vor.u32 1.1754944e-38, %v1383
  %v1385 = vsel %vm1382, %v1384, %v1380
  %v1386 = vmul.f32 1.0, %v1385
  %1387 = vmatpush.msra.mxu0 0.0
  %1388 = vmatpush.msra.mxu0 0.0
  %1389 = vmatpush.msra.mxu0 0.0
  %1390 = vmatpush.msra.mxu0 0.0
  %1391 = vmatpush.msra.mxu0 0.0
  %1392 = vmatpush.msra.mxu0 0.0
  %1393 = vmatpush.msra.mxu0 0.0
  %1394 = vmatpush.msra.mxu0 0.0
  %1395 = vmatpush.msra.mxu0 0.0
  %1396 = vmatpush.msra.mxu0 0.0
  %1397 = vmatpush.msra.mxu0 0.0
  %1398 = vmatpush.msra.mxu0 0.0
  %1399 = vmatpush.msra.mxu0 %v470
  %1400 = vmatpush.msra.mxu0 %v469
  %1401 = vmatpush.msra.mxu0 %v468
  %1402 = vmatpush.msra.mxu0 %v467
  %1403 = vmatmul.f32.gmra.mxu0 %v1305
  %v1404 = vpop.f32.mrf.mxu0
  %v1405 = vadd.f32 %v473, %v1404
  %1406 = vdwg.mxu0
  %v1407 = vmul.f32 %v1366, %v1405
  %v1408 = vadd.f32 %v1303, %v1407
  %v1409 = vtanh.pop %v1408
  %v1410 = vsub.f32 1.0, %v1386
  %v1411 = vmul.f32 %v1410, %v1409
  %v1412 = vmul.f32 %v1386, %v1295
  %v1413 = vadd.f32 %v1411, %v1412
  %s1414 = scalar_lea.vmem [#allocation2], 14
  %1415 = vst.msk [vmem:[%s1414] sm:$0x3] %vm210, %v1413
  %s1416 = scalar_lea.vmem [#allocation3], 16
  %v1417 = vld [vmem:[%s1416] sm:$0x3]
  %s1418 = scalar_lea.vmem [#allocation4], 16
  %v1419 = vld [vmem:[%s1418] sm:$0x3]
  %s1420 = scalar_lea.vmem [#allocation5], 16
  %v1421 = vld [vmem:[%s1420] sm:$0x3]
  %v1423 = vsel %vm478, %v1413, 0
  %1425 = vmatpush.msra.mxu0 0.0
  %1426 = vmatpush.msra.mxu0 0.0
  %1427 = vmatpush.msra.mxu0 0.0
  %1428 = vmatpush.msra.mxu0 0.0
  %1429 = vmatpush.msra.mxu0 0.0
  %1430 = vmatpush.msra.mxu0 0.0
  %1431 = vmatpush.msra.mxu0 0.0
  %1432 = vmatpush.msra.mxu0 0.0
  %1433 = vmatpush.msra.mxu0 0.0
  %1434 = vmatpush.msra.mxu0 0.0
  %1435 = vmatpush.msra.mxu0 0.0
  %1436 = vmatpush.msra.mxu0 0.0
  %1437 = vmatpush.msra.mxu0 %v462
  %1438 = vmatpush.msra.mxu0 %v461
  %1439 = vmatpush.msra.mxu0 %v460
  %1440 = vmatpush.msra.mxu0 %v459
  %1441 = vmatmul.f32.gmra.mxu0 %v1423
  %v1442 = vpop.f32.mrf.mxu0
  %v1443 = vadd.f32 0.0, %v1442
  %1444 = vdwg.mxu0
  %1445 = vmatpush.msra.mxu0 0.0
  %1446 = vmatpush.msra.mxu0 0.0
  %1447 = vmatpush.msra.mxu0 0.0
  %1448 = vmatpush.msra.mxu0 0.0
  %1449 = vmatpush.msra.mxu0 0.0
  %1450 = vmatpush.msra.mxu0 0.0
  %1451 = vmatpush.msra.mxu0 0.0
  %1452 = vmatpush.msra.mxu0 0.0
  %1453 = vmatpush.msra.mxu0 0.0
  %1454 = vmatpush.msra.mxu0 0.0
  %1455 = vmatpush.msra.mxu0 0.0
  %1456 = vmatpush.msra.mxu0 0.0
  %1457 = vmatpush.msra.mxu0 %v466
  %1458 = vmatpush.msra.mxu0 %v465
  %1459 = vmatpush.msra.mxu0 %v464
  %1460 = vmatpush.msra.mxu0 %v463
  %1461 = vmatmul.f32.gmra.mxu0 %v1423
  %v1462 = vpop.f32.mrf.mxu0
  %v1463 = vadd.f32 0.0, %v1462
  %1464 = vdwg.mxu0
  %v1465 = vadd.f32 %v1417, %v1443
  %v1466 = vxor.u32 %v1465, 2147483648
  %v1467 = vmul.f32 %v1466, 1.442695
  %v1468 = vpow.pop %v1467
  %v1469 = vadd.f32 %v1468, 1.0
  %v1470 = vrcp.pop %v1469
  %v1471 = vmul.f32 %v1469, %v1470
  %v1472 = vsub.f32 1.0, %v1471
  %v1473 = vmul.f32 %v1470, %v1472
  %v1474 = vadd.f32 %v1470, %v1473
  %vm1475 = vweird.f32 %v1469
  %vm1476 = vweird.f32 %v1470
  %vm1477 = vmor %vm1475, %vm1476
  %v1478 = vsel %vm1477, %v1470, %v1474
  %v1479 = vand.u32 2147483647, %v1469
  %vm1480 = vcmp.eq.f32.partialorder %v1479, 8.507059e+37
  %v1481 = vand.u32 %v1469, 2147483648
  %v1482 = vor.u32 1.1754944e-38, %v1481
  %v1483 = vsel %vm1480, %v1482, %v1478
  %v1484 = vmul.f32 1.0, %v1483
  %v1485 = vadd.f32 %v1419, %v1463
  %v1486 = vxor.u32 %v1485, 2147483648
  %v1487 = vmul.f32 %v1486, 1.442695
  %v1488 = vpow.pop %v1487
  %v1489 = vadd.f32 %v1488, 1.0
  %v1490 = vrcp.pop %v1489
  %v1491 = vmul.f32 %v1489, %v1490
  %v1492 = vsub.f32 1.0, %v1491
  %v1493 = vmul.f32 %v1490, %v1492
  %v1494 = vadd.f32 %v1490, %v1493
  %vm1495 = vweird.f32 %v1489
  %vm1496 = vweird.f32 %v1490
  %vm1497 = vmor %vm1495, %vm1496
  %v1498 = vsel %vm1497, %v1490, %v1494
  %v1499 = vand.u32 2147483647, %v1489
  %vm1500 = vcmp.eq.f32.partialorder %v1499, 8.507059e+37
  %v1501 = vand.u32 %v1489, 2147483648
  %v1502 = vor.u32 1.1754944e-38, %v1501
  %v1503 = vsel %vm1500, %v1502, %v1498
  %v1504 = vmul.f32 1.0, %v1503
  %1505 = vmatpush.msra.mxu0 0.0
  %1506 = vmatpush.msra.mxu0 0.0
  %1507 = vmatpush.msra.mxu0 0.0
  %1508 = vmatpush.msra.mxu0 0.0
  %1509 = vmatpush.msra.mxu0 0.0
  %1510 = vmatpush.msra.mxu0 0.0
  %1511 = vmatpush.msra.mxu0 0.0
  %1512 = vmatpush.msra.mxu0 0.0
  %1513 = vmatpush.msra.mxu0 0.0
  %1514 = vmatpush.msra.mxu0 0.0
  %1515 = vmatpush.msra.mxu0 0.0
  %1516 = vmatpush.msra.mxu0 0.0
  %1517 = vmatpush.msra.mxu0 %v470
  %1518 = vmatpush.msra.mxu0 %v469
  %1519 = vmatpush.msra.mxu0 %v468
  %1520 = vmatpush.msra.mxu0 %v467
  %1521 = vmatmul.f32.gmra.mxu0 %v1423
  %v1522 = vpop.f32.mrf.mxu0
  %v1523 = vadd.f32 %v473, %v1522
  %1524 = vdwg.mxu0
  %v1525 = vmul.f32 %v1484, %v1523
  %v1526 = vadd.f32 %v1421, %v1525
  %v1527 = vtanh.pop %v1526
  %v1528 = vsub.f32 1.0, %v1504
  %v1529 = vmul.f32 %v1528, %v1527
  %v1530 = vmul.f32 %v1504, %v1413
  %v1531 = vadd.f32 %v1529, %v1530
  %s1532 = scalar_lea.vmem [#allocation2], 16
  %1533 = vst.msk [vmem:[%s1532] sm:$0x3] %vm210, %v1531
  %s1534 = scalar_lea.vmem [#allocation3], 18
  %v1535 = vld [vmem:[%s1534] sm:$0x3]
  %s1536 = scalar_lea.vmem [#allocation4], 18
  %v1537 = vld [vmem:[%s1536] sm:$0x3]
  %s1538 = scalar_lea.vmem [#allocation5], 18
  %v1539 = vld [vmem:[%s1538] sm:$0x3]
  %v1541 = vsel %vm478, %v1531, 0
  %1543 = vmatpush.msra.mxu0 0.0
  %1544 = vmatpush.msra.mxu0 0.0
  %1545 = vmatpush.msra.mxu0 0.0
  %1546 = vmatpush.msra.mxu0 0.0
  %1547 = vmatpush.msra.mxu0 0.0
  %1548 = vmatpush.msra.mxu0 0.0
  %1549 = vmatpush.msra.mxu0 0.0
  %1550 = vmatpush.msra.mxu0 0.0
  %1551 = vmatpush.msra.mxu0 0.0
  %1552 = vmatpush.msra.mxu0 0.0
  %1553 = vmatpush.msra.mxu0 0.0
  %1554 = vmatpush.msra.mxu0 0.0
  %1555 = vmatpush.msra.mxu0 %v462
  %1556 = vmatpush.msra.mxu0 %v461
  %1557 = vmatpush.msra.mxu0 %v460
  %1558 = vmatpush.msra.mxu0 %v459
  %1559 = vmatmul.f32.gmra.mxu0 %v1541
  %v1560 = vpop.f32.mrf.mxu0
  %v1561 = vadd.f32 0.0, %v1560
  %1562 = vdwg.mxu0
  %1563 = vmatpush.msra.mxu0 0.0
  %1564 = vmatpush.msra.mxu0 0.0
  %1565 = vmatpush.msra.mxu0 0.0
  %1566 = vmatpush.msra.mxu0 0.0
  %1567 = vmatpush.msra.mxu0 0.0
  %1568 = vmatpush.msra.mxu0 0.0
  %1569 = vmatpush.msra.mxu0 0.0
  %1570 = vmatpush.msra.mxu0 0.0
  %1571 = vmatpush.msra.mxu0 0.0
  %1572 = vmatpush.msra.mxu0 0.0
  %1573 = vmatpush.msra.mxu0 0.0
  %1574 = vmatpush.msra.mxu0 0.0
  %1575 = vmatpush.msra.mxu0 %v466
  %1576 = vmatpush.msra.mxu0 %v465
  %1577 = vmatpush.msra.mxu0 %v464
  %1578 = vmatpush.msra.mxu0 %v463
  %1579 = vmatmul.f32.gmra.mxu0 %v1541
  %v1580 = vpop.f32.mrf.mxu0
  %v1581 = vadd.f32 0.0, %v1580
  %1582 = vdwg.mxu0
  %v1583 = vadd.f32 %v1535, %v1561
  %v1584 = vxor.u32 %v1583, 2147483648
  %v1585 = vmul.f32 %v1584, 1.442695
  %v1586 = vpow.pop %v1585
  %v1587 = vadd.f32 %v1586, 1.0
  %v1588 = vrcp.pop %v1587
  %v1589 = vmul.f32 %v1587, %v1588
  %v1590 = vsub.f32 1.0, %v1589
  %v1591 = vmul.f32 %v1588, %v1590
  %v1592 = vadd.f32 %v1588, %v1591
  %vm1593 = vweird.f32 %v1587
  %vm1594 = vweird.f32 %v1588
  %vm1595 = vmor %vm1593, %vm1594
  %v1596 = vsel %vm1595, %v1588, %v1592
  %v1597 = vand.u32 2147483647, %v1587
  %vm1598 = vcmp.eq.f32.partialorder %v1597, 8.507059e+37
  %v1599 = vand.u32 %v1587, 2147483648
  %v1600 = vor.u32 1.1754944e-38, %v1599
  %v1601 = vsel %vm1598, %v1600, %v1596
  %v1602 = vmul.f32 1.0, %v1601
  %v1603 = vadd.f32 %v1537, %v1581
  %v1604 = vxor.u32 %v1603, 2147483648
  %v1605 = vmul.f32 %v1604, 1.442695
  %v1606 = vpow.pop %v1605
  %v1607 = vadd.f32 %v1606, 1.0
  %v1608 = vrcp.pop %v1607
  %v1609 = vmul.f32 %v1607, %v1608
  %v1610 = vsub.f32 1.0, %v1609
  %v1611 = vmul.f32 %v1608, %v1610
  %v1612 = vadd.f32 %v1608, %v1611
  %vm1613 = vweird.f32 %v1607
  %vm1614 = vweird.f32 %v1608
  %vm1615 = vmor %vm1613, %vm1614
  %v1616 = vsel %vm1615, %v1608, %v1612
  %v1617 = vand.u32 2147483647, %v1607
  %vm1618 = vcmp.eq.f32.partialorder %v1617, 8.507059e+37
  %v1619 = vand.u32 %v1607, 2147483648
  %v1620 = vor.u32 1.1754944e-38, %v1619
  %v1621 = vsel %vm1618, %v1620, %v1616
  %v1622 = vmul.f32 1.0, %v1621
  %1623 = vmatpush.msra.mxu0 0.0
  %1624 = vmatpush.msra.mxu0 0.0
  %1625 = vmatpush.msra.mxu0 0.0
  %1626 = vmatpush.msra.mxu0 0.0
  %1627 = vmatpush.msra.mxu0 0.0
  %1628 = vmatpush.msra.mxu0 0.0
  %1629 = vmatpush.msra.mxu0 0.0
  %1630 = vmatpush.msra.mxu0 0.0
  %1631 = vmatpush.msra.mxu0 0.0
  %1632 = vmatpush.msra.mxu0 0.0
  %1633 = vmatpush.msra.mxu0 0.0
  %1634 = vmatpush.msra.mxu0 0.0
  %1635 = vmatpush.msra.mxu0 %v470
  %1636 = vmatpush.msra.mxu0 %v469
  %1637 = vmatpush.msra.mxu0 %v468
  %1638 = vmatpush.msra.mxu0 %v467
  %1639 = vmatmul.f32.gmra.mxu0 %v1541
  %v1640 = vpop.f32.mrf.mxu0
  %v1641 = vadd.f32 %v473, %v1640
  %1642 = vdwg.mxu0
  %v1643 = vmul.f32 %v1602, %v1641
  %v1644 = vadd.f32 %v1539, %v1643
  %v1645 = vtanh.pop %v1644
  %v1646 = vsub.f32 1.0, %v1622
  %v1647 = vmul.f32 %v1646, %v1645
  %v1648 = vmul.f32 %v1622, %v1531
  %v1649 = vadd.f32 %v1647, %v1648
  %s1650 = scalar_lea.vmem [#allocation2], 18
  %1651 = vst.msk [vmem:[%s1650] sm:$0x3] %vm210, %v1649
  %s1652 = scalar_lea.vmem [#allocation3], 20
  %v1653 = vld [vmem:[%s1652] sm:$0x3]
  %s1654 = scalar_lea.vmem [#allocation4], 20
  %v1655 = vld [vmem:[%s1654] sm:$0x3]
  %s1656 = scalar_lea.vmem [#allocation5], 20
  %v1657 = vld [vmem:[%s1656] sm:$0x3]
  %v1659 = vsel %vm478, %v1649, 0
  %1661 = vmatpush.msra.mxu0 0.0
  %1662 = vmatpush.msra.mxu0 0.0
  %1663 = vmatpush.msra.mxu0 0.0
  %1664 = vmatpush.msra.mxu0 0.0
  %1665 = vmatpush.msra.mxu0 0.0
  %1666 = vmatpush.msra.mxu0 0.0
  %1667 = vmatpush.msra.mxu0 0.0
  %1668 = vmatpush.msra.mxu0 0.0
  %1669 = vmatpush.msra.mxu0 0.0
  %1670 = vmatpush.msra.mxu0 0.0
  %1671 = vmatpush.msra.mxu0 0.0
  %1672 = vmatpush.msra.mxu0 0.0
  %1673 = vmatpush.msra.mxu0 %v462
  %1674 = vmatpush.msra.mxu0 %v461
  %1675 = vmatpush.msra.mxu0 %v460
  %1676 = vmatpush.msra.mxu0 %v459
  %1677 = vmatmul.f32.gmra.mxu0 %v1659
  %v1678 = vpop.f32.mrf.mxu0
  %v1679 = vadd.f32 0.0, %v1678
  %1680 = vdwg.mxu0
  %1681 = vmatpush.msra.mxu0 0.0
  %1682 = vmatpush.msra.mxu0 0.0
  %1683 = vmatpush.msra.mxu0 0.0
  %1684 = vmatpush.msra.mxu0 0.0
  %1685 = vmatpush.msra.mxu0 0.0
  %1686 = vmatpush.msra.mxu0 0.0
  %1687 = vmatpush.msra.mxu0 0.0
  %1688 = vmatpush.msra.mxu0 0.0
  %1689 = vmatpush.msra.mxu0 0.0
  %1690 = vmatpush.msra.mxu0 0.0
  %1691 = vmatpush.msra.mxu0 0.0
  %1692 = vmatpush.msra.mxu0 0.0
  %1693 = vmatpush.msra.mxu0 %v466
  %1694 = vmatpush.msra.mxu0 %v465
  %1695 = vmatpush.msra.mxu0 %v464
  %1696 = vmatpush.msra.mxu0 %v463
  %1697 = vmatmul.f32.gmra.mxu0 %v1659
  %v1698 = vpop.f32.mrf.mxu0
  %v1699 = vadd.f32 0.0, %v1698
  %1700 = vdwg.mxu0
  %v1701 = vadd.f32 %v1653, %v1679
  %v1702 = vxor.u32 %v1701, 2147483648
  %v1703 = vmul.f32 %v1702, 1.442695
  %v1704 = vpow.pop %v1703
  %v1705 = vadd.f32 %v1704, 1.0
  %v1706 = vrcp.pop %v1705
  %v1707 = vmul.f32 %v1705, %v1706
  %v1708 = vsub.f32 1.0, %v1707
  %v1709 = vmul.f32 %v1706, %v1708
  %v1710 = vadd.f32 %v1706, %v1709
  %vm1711 = vweird.f32 %v1705
  %vm1712 = vweird.f32 %v1706
  %vm1713 = vmor %vm1711, %vm1712
  %v1714 = vsel %vm1713, %v1706, %v1710
  %v1715 = vand.u32 2147483647, %v1705
  %vm1716 = vcmp.eq.f32.partialorder %v1715, 8.507059e+37
  %v1717 = vand.u32 %v1705, 2147483648
  %v1718 = vor.u32 1.1754944e-38, %v1717
  %v1719 = vsel %vm1716, %v1718, %v1714
  %v1720 = vmul.f32 1.0, %v1719
  %v1721 = vadd.f32 %v1655, %v1699
  %v1722 = vxor.u32 %v1721, 2147483648
  %v1723 = vmul.f32 %v1722, 1.442695
  %v1724 = vpow.pop %v1723
  %v1725 = vadd.f32 %v1724, 1.0
  %v1726 = vrcp.pop %v1725
  %v1727 = vmul.f32 %v1725, %v1726
  %v1728 = vsub.f32 1.0, %v1727
  %v1729 = vmul.f32 %v1726, %v1728
  %v1730 = vadd.f32 %v1726, %v1729
  %vm1731 = vweird.f32 %v1725
  %vm1732 = vweird.f32 %v1726
  %vm1733 = vmor %vm1731, %vm1732
  %v1734 = vsel %vm1733, %v1726, %v1730
  %v1735 = vand.u32 2147483647, %v1725
  %vm1736 = vcmp.eq.f32.partialorder %v1735, 8.507059e+37
  %v1737 = vand.u32 %v1725, 2147483648
  %v1738 = vor.u32 1.1754944e-38, %v1737
  %v1739 = vsel %vm1736, %v1738, %v1734
  %v1740 = vmul.f32 1.0, %v1739
  %1741 = vmatpush.msra.mxu0 0.0
  %1742 = vmatpush.msra.mxu0 0.0
  %1743 = vmatpush.msra.mxu0 0.0
  %1744 = vmatpush.msra.mxu0 0.0
  %1745 = vmatpush.msra.mxu0 0.0
  %1746 = vmatpush.msra.mxu0 0.0
  %1747 = vmatpush.msra.mxu0 0.0
  %1748 = vmatpush.msra.mxu0 0.0
  %1749 = vmatpush.msra.mxu0 0.0
  %1750 = vmatpush.msra.mxu0 0.0
  %1751 = vmatpush.msra.mxu0 0.0
  %1752 = vmatpush.msra.mxu0 0.0
  %1753 = vmatpush.msra.mxu0 %v470
  %1754 = vmatpush.msra.mxu0 %v469
  %1755 = vmatpush.msra.mxu0 %v468
  %1756 = vmatpush.msra.mxu0 %v467
  %1757 = vmatmul.f32.gmra.mxu0 %v1659
  %v1758 = vpop.f32.mrf.mxu0
  %v1759 = vadd.f32 %v473, %v1758
  %1760 = vdwg.mxu0
  %v1761 = vmul.f32 %v1720, %v1759
  %v1762 = vadd.f32 %v1657, %v1761
  %v1763 = vtanh.pop %v1762
  %v1764 = vsub.f32 1.0, %v1740
  %v1765 = vmul.f32 %v1764, %v1763
  %v1766 = vmul.f32 %v1740, %v1649
  %v1767 = vadd.f32 %v1765, %v1766
  %s1768 = scalar_lea.vmem [#allocation2], 20
  %1769 = vst.msk [vmem:[%s1768] sm:$0x3] %vm210, %v1767
  %s1770 = scalar_lea.vmem [#allocation3], 22
  %v1771 = vld [vmem:[%s1770] sm:$0x3]
  %s1772 = scalar_lea.vmem [#allocation4], 22
  %v1773 = vld [vmem:[%s1772] sm:$0x3]
  %s1774 = scalar_lea.vmem [#allocation5], 22
  %v1775 = vld [vmem:[%s1774] sm:$0x3]
  %v1777 = vsel %vm478, %v1767, 0
  %1779 = vmatpush.msra.mxu0 0.0
  %1780 = vmatpush.msra.mxu0 0.0
  %1781 = vmatpush.msra.mxu0 0.0
  %1782 = vmatpush.msra.mxu0 0.0
  %1783 = vmatpush.msra.mxu0 0.0
  %1784 = vmatpush.msra.mxu0 0.0
  %1785 = vmatpush.msra.mxu0 0.0
  %1786 = vmatpush.msra.mxu0 0.0
  %1787 = vmatpush.msra.mxu0 0.0
  %1788 = vmatpush.msra.mxu0 0.0
  %1789 = vmatpush.msra.mxu0 0.0
  %1790 = vmatpush.msra.mxu0 0.0
  %1791 = vmatpush.msra.mxu0 %v462
  %1792 = vmatpush.msra.mxu0 %v461
  %1793 = vmatpush.msra.mxu0 %v460
  %1794 = vmatpush.msra.mxu0 %v459
  %1795 = vmatmul.f32.gmra.mxu0 %v1777
  %v1796 = vpop.f32.mrf.mxu0
  %v1797 = vadd.f32 0.0, %v1796
  %1798 = vdwg.mxu0
  %1799 = vmatpush.msra.mxu0 0.0
  %1800 = vmatpush.msra.mxu0 0.0
  %1801 = vmatpush.msra.mxu0 0.0
  %1802 = vmatpush.msra.mxu0 0.0
  %1803 = vmatpush.msra.mxu0 0.0
  %1804 = vmatpush.msra.mxu0 0.0
  %1805 = vmatpush.msra.mxu0 0.0
  %1806 = vmatpush.msra.mxu0 0.0
  %1807 = vmatpush.msra.mxu0 0.0
  %1808 = vmatpush.msra.mxu0 0.0
  %1809 = vmatpush.msra.mxu0 0.0
  %1810 = vmatpush.msra.mxu0 0.0
  %1811 = vmatpush.msra.mxu0 %v466
  %1812 = vmatpush.msra.mxu0 %v465
  %1813 = vmatpush.msra.mxu0 %v464
  %1814 = vmatpush.msra.mxu0 %v463
  %1815 = vmatmul.f32.gmra.mxu0 %v1777
  %v1816 = vpop.f32.mrf.mxu0
  %v1817 = vadd.f32 0.0, %v1816
  %1818 = vdwg.mxu0
  %v1819 = vadd.f32 %v1771, %v1797
  %v1820 = vxor.u32 %v1819, 2147483648
  %v1821 = vmul.f32 %v1820, 1.442695
  %v1822 = vpow.pop %v1821
  %v1823 = vadd.f32 %v1822, 1.0
  %v1824 = vrcp.pop %v1823
  %v1825 = vmul.f32 %v1823, %v1824
  %v1826 = vsub.f32 1.0, %v1825
  %v1827 = vmul.f32 %v1824, %v1826
  %v1828 = vadd.f32 %v1824, %v1827
  %vm1829 = vweird.f32 %v1823
  %vm1830 = vweird.f32 %v1824
  %vm1831 = vmor %vm1829, %vm1830
  %v1832 = vsel %vm1831, %v1824, %v1828
  %v1833 = vand.u32 2147483647, %v1823
  %vm1834 = vcmp.eq.f32.partialorder %v1833, 8.507059e+37
  %v1835 = vand.u32 %v1823, 2147483648
  %v1836 = vor.u32 1.1754944e-38, %v1835
  %v1837 = vsel %vm1834, %v1836, %v1832
  %v1838 = vmul.f32 1.0, %v1837
  %v1839 = vadd.f32 %v1773, %v1817
  %v1840 = vxor.u32 %v1839, 2147483648
  %v1841 = vmul.f32 %v1840, 1.442695
  %v1842 = vpow.pop %v1841
  %v1843 = vadd.f32 %v1842, 1.0
  %v1844 = vrcp.pop %v1843
  %v1845 = vmul.f32 %v1843, %v1844
  %v1846 = vsub.f32 1.0, %v1845
  %v1847 = vmul.f32 %v1844, %v1846
  %v1848 = vadd.f32 %v1844, %v1847
  %vm1849 = vweird.f32 %v1843
  %vm1850 = vweird.f32 %v1844
  %vm1851 = vmor %vm1849, %vm1850
  %v1852 = vsel %vm1851, %v1844, %v1848
  %v1853 = vand.u32 2147483647, %v1843
  %vm1854 = vcmp.eq.f32.partialorder %v1853, 8.507059e+37
  %v1855 = vand.u32 %v1843, 2147483648
  %v1856 = vor.u32 1.1754944e-38, %v1855
  %v1857 = vsel %vm1854, %v1856, %v1852
  %v1858 = vmul.f32 1.0, %v1857
  %1859 = vmatpush.msra.mxu0 0.0
  %1860 = vmatpush.msra.mxu0 0.0
  %1861 = vmatpush.msra.mxu0 0.0
  %1862 = vmatpush.msra.mxu0 0.0
  %1863 = vmatpush.msra.mxu0 0.0
  %1864 = vmatpush.msra.mxu0 0.0
  %1865 = vmatpush.msra.mxu0 0.0
  %1866 = vmatpush.msra.mxu0 0.0
  %1867 = vmatpush.msra.mxu0 0.0
  %1868 = vmatpush.msra.mxu0 0.0
  %1869 = vmatpush.msra.mxu0 0.0
  %1870 = vmatpush.msra.mxu0 0.0
  %1871 = vmatpush.msra.mxu0 %v470
  %1872 = vmatpush.msra.mxu0 %v469
  %1873 = vmatpush.msra.mxu0 %v468
  %1874 = vmatpush.msra.mxu0 %v467
  %1875 = vmatmul.f32.gmra.mxu0 %v1777
  %v1876 = vpop.f32.mrf.mxu0
  %v1877 = vadd.f32 %v473, %v1876
  %1878 = vdwg.mxu0
  %v1879 = vmul.f32 %v1838, %v1877
  %v1880 = vadd.f32 %v1775, %v1879
  %v1881 = vtanh.pop %v1880
  %v1882 = vsub.f32 1.0, %v1858
  %v1883 = vmul.f32 %v1882, %v1881
  %v1884 = vmul.f32 %v1858, %v1767
  %v1885 = vadd.f32 %v1883, %v1884
  %s1886 = scalar_lea.vmem [#allocation2], 22
  %1887 = vst.msk [vmem:[%s1886] sm:$0x3] %vm210, %v1885
  %s1888 = scalar_lea.vmem [#allocation3], 24
  %v1889 = vld [vmem:[%s1888] sm:$0x3]
  %s1890 = scalar_lea.vmem [#allocation4], 24
  %v1891 = vld [vmem:[%s1890] sm:$0x3]
  %s1892 = scalar_lea.vmem [#allocation5], 24
  %v1893 = vld [vmem:[%s1892] sm:$0x3]
  %v1895 = vsel %vm478, %v1885, 0
  %1897 = vmatpush.msra.mxu0 0.0
  %1898 = vmatpush.msra.mxu0 0.0
  %1899 = vmatpush.msra.mxu0 0.0
  %1900 = vmatpush.msra.mxu0 0.0
  %1901 = vmatpush.msra.mxu0 0.0
  %1902 = vmatpush.msra.mxu0 0.0
  %1903 = vmatpush.msra.mxu0 0.0
  %1904 = vmatpush.msra.mxu0 0.0
  %1905 = vmatpush.msra.mxu0 0.0
  %1906 = vmatpush.msra.mxu0 0.0
  %1907 = vmatpush.msra.mxu0 0.0
  %1908 = vmatpush.msra.mxu0 0.0
  %1909 = vmatpush.msra.mxu0 %v462
  %1910 = vmatpush.msra.mxu0 %v461
  %1911 = vmatpush.msra.mxu0 %v460
  %1912 = vmatpush.msra.mxu0 %v459
  %1913 = vmatmul.f32.gmra.mxu0 %v1895
  %v1914 = vpop.f32.mrf.mxu0
  %v1915 = vadd.f32 0.0, %v1914
  %1916 = vdwg.mxu0
  %1917 = vmatpush.msra.mxu0 0.0
  %1918 = vmatpush.msra.mxu0 0.0
  %1919 = vmatpush.msra.mxu0 0.0
  %1920 = vmatpush.msra.mxu0 0.0
  %1921 = vmatpush.msra.mxu0 0.0
  %1922 = vmatpush.msra.mxu0 0.0
  %1923 = vmatpush.msra.mxu0 0.0
  %1924 = vmatpush.msra.mxu0 0.0
  %1925 = vmatpush.msra.mxu0 0.0
  %1926 = vmatpush.msra.mxu0 0.0
  %1927 = vmatpush.msra.mxu0 0.0
  %1928 = vmatpush.msra.mxu0 0.0
  %1929 = vmatpush.msra.mxu0 %v466
  %1930 = vmatpush.msra.mxu0 %v465
  %1931 = vmatpush.msra.mxu0 %v464
  %1932 = vmatpush.msra.mxu0 %v463
  %1933 = vmatmul.f32.gmra.mxu0 %v1895
  %v1934 = vpop.f32.mrf.mxu0
  %v1935 = vadd.f32 0.0, %v1934
  %1936 = vdwg.mxu0
  %v1937 = vadd.f32 %v1889, %v1915
  %v1938 = vxor.u32 %v1937, 2147483648
  %v1939 = vmul.f32 %v1938, 1.442695
  %v1940 = vpow.pop %v1939
  %v1941 = vadd.f32 %v1940, 1.0
  %v1942 = vrcp.pop %v1941
  %v1943 = vmul.f32 %v1941, %v1942
  %v1944 = vsub.f32 1.0, %v1943
  %v1945 = vmul.f32 %v1942, %v1944
  %v1946 = vadd.f32 %v1942, %v1945
  %vm1947 = vweird.f32 %v1941
  %vm1948 = vweird.f32 %v1942
  %vm1949 = vmor %vm1947, %vm1948
  %v1950 = vsel %vm1949, %v1942, %v1946
  %v1951 = vand.u32 2147483647, %v1941
  %vm1952 = vcmp.eq.f32.partialorder %v1951, 8.507059e+37
  %v1953 = vand.u32 %v1941, 2147483648
  %v1954 = vor.u32 1.1754944e-38, %v1953
  %v1955 = vsel %vm1952, %v1954, %v1950
  %v1956 = vmul.f32 1.0, %v1955
  %v1957 = vadd.f32 %v1891, %v1935
  %v1958 = vxor.u32 %v1957, 2147483648
  %v1959 = vmul.f32 %v1958, 1.442695
  %v1960 = vpow.pop %v1959
  %v1961 = vadd.f32 %v1960, 1.0
  %v1962 = vrcp.pop %v1961
  %v1963 = vmul.f32 %v1961, %v1962
  %v1964 = vsub.f32 1.0, %v1963
  %v1965 = vmul.f32 %v1962, %v1964
  %v1966 = vadd.f32 %v1962, %v1965
  %vm1967 = vweird.f32 %v1961
  %vm1968 = vweird.f32 %v1962
  %vm1969 = vmor %vm1967, %vm1968
  %v1970 = vsel %vm1969, %v1962, %v1966
  %v1971 = vand.u32 2147483647, %v1961
  %vm1972 = vcmp.eq.f32.partialorder %v1971, 8.507059e+37
  %v1973 = vand.u32 %v1961, 2147483648
  %v1974 = vor.u32 1.1754944e-38, %v1973
  %v1975 = vsel %vm1972, %v1974, %v1970
  %v1976 = vmul.f32 1.0, %v1975
  %1977 = vmatpush.msra.mxu0 0.0
  %1978 = vmatpush.msra.mxu0 0.0
  %1979 = vmatpush.msra.mxu0 0.0
  %1980 = vmatpush.msra.mxu0 0.0
  %1981 = vmatpush.msra.mxu0 0.0
  %1982 = vmatpush.msra.mxu0 0.0
  %1983 = vmatpush.msra.mxu0 0.0
  %1984 = vmatpush.msra.mxu0 0.0
  %1985 = vmatpush.msra.mxu0 0.0
  %1986 = vmatpush.msra.mxu0 0.0
  %1987 = vmatpush.msra.mxu0 0.0
  %1988 = vmatpush.msra.mxu0 0.0
  %1989 = vmatpush.msra.mxu0 %v470
  %1990 = vmatpush.msra.mxu0 %v469
  %1991 = vmatpush.msra.mxu0 %v468
  %1992 = vmatpush.msra.mxu0 %v467
  %1993 = vmatmul.f32.gmra.mxu0 %v1895
  %v1994 = vpop.f32.mrf.mxu0
  %v1995 = vadd.f32 %v473, %v1994
  %1996 = vdwg.mxu0
  %v1997 = vmul.f32 %v1956, %v1995
  %v1998 = vadd.f32 %v1893, %v1997
  %v1999 = vtanh.pop %v1998
  %v2000 = vsub.f32 1.0, %v1976
  %v2001 = vmul.f32 %v2000, %v1999
  %v2002 = vmul.f32 %v1976, %v1885
  %v2003 = vadd.f32 %v2001, %v2002
  %s2004 = scalar_lea.vmem [#allocation2], 24
  %2005 = vst.msk [vmem:[%s2004] sm:$0x3] %vm210, %v2003
  %s2006 = scalar_lea.vmem [#allocation3], 26
  %v2007 = vld [vmem:[%s2006] sm:$0x3]
  %s2008 = scalar_lea.vmem [#allocation4], 26
  %v2009 = vld [vmem:[%s2008] sm:$0x3]
  %s2010 = scalar_lea.vmem [#allocation5], 26
  %v2011 = vld [vmem:[%s2010] sm:$0x3]
  %v2013 = vsel %vm478, %v2003, 0
  %2015 = vmatpush.msra.mxu0 0.0
  %2016 = vmatpush.msra.mxu0 0.0
  %2017 = vmatpush.msra.mxu0 0.0
  %2018 = vmatpush.msra.mxu0 0.0
  %2019 = vmatpush.msra.mxu0 0.0
  %2020 = vmatpush.msra.mxu0 0.0
  %2021 = vmatpush.msra.mxu0 0.0
  %2022 = vmatpush.msra.mxu0 0.0
  %2023 = vmatpush.msra.mxu0 0.0
  %2024 = vmatpush.msra.mxu0 0.0
  %2025 = vmatpush.msra.mxu0 0.0
  %2026 = vmatpush.msra.mxu0 0.0
  %2027 = vmatpush.msra.mxu0 %v462
  %2028 = vmatpush.msra.mxu0 %v461
  %2029 = vmatpush.msra.mxu0 %v460
  %2030 = vmatpush.msra.mxu0 %v459
  %2031 = vmatmul.f32.gmra.mxu0 %v2013
  %v2032 = vpop.f32.mrf.mxu0
  %v2033 = vadd.f32 0.0, %v2032
  %2034 = vdwg.mxu0
  %2035 = vmatpush.msra.mxu0 0.0
  %2036 = vmatpush.msra.mxu0 0.0
  %2037 = vmatpush.msra.mxu0 0.0
  %2038 = vmatpush.msra.mxu0 0.0
  %2039 = vmatpush.msra.mxu0 0.0
  %2040 = vmatpush.msra.mxu0 0.0
  %2041 = vmatpush.msra.mxu0 0.0
  %2042 = vmatpush.msra.mxu0 0.0
  %2043 = vmatpush.msra.mxu0 0.0
  %2044 = vmatpush.msra.mxu0 0.0
  %2045 = vmatpush.msra.mxu0 0.0
  %2046 = vmatpush.msra.mxu0 0.0
  %2047 = vmatpush.msra.mxu0 %v466
  %2048 = vmatpush.msra.mxu0 %v465
  %2049 = vmatpush.msra.mxu0 %v464
  %2050 = vmatpush.msra.mxu0 %v463
  %2051 = vmatmul.f32.gmra.mxu0 %v2013
  %v2052 = vpop.f32.mrf.mxu0
  %v2053 = vadd.f32 0.0, %v2052
  %2054 = vdwg.mxu0
  %v2055 = vadd.f32 %v2007, %v2033
  %v2056 = vxor.u32 %v2055, 2147483648
  %v2057 = vmul.f32 %v2056, 1.442695
  %v2058 = vpow.pop %v2057
  %v2059 = vadd.f32 %v2058, 1.0
  %v2060 = vrcp.pop %v2059
  %v2061 = vmul.f32 %v2059, %v2060
  %v2062 = vsub.f32 1.0, %v2061
  %v2063 = vmul.f32 %v2060, %v2062
  %v2064 = vadd.f32 %v2060, %v2063
  %vm2065 = vweird.f32 %v2059
  %vm2066 = vweird.f32 %v2060
  %vm2067 = vmor %vm2065, %vm2066
  %v2068 = vsel %vm2067, %v2060, %v2064
  %v2069 = vand.u32 2147483647, %v2059
  %vm2070 = vcmp.eq.f32.partialorder %v2069, 8.507059e+37
  %v2071 = vand.u32 %v2059, 2147483648
  %v2072 = vor.u32 1.1754944e-38, %v2071
  %v2073 = vsel %vm2070, %v2072, %v2068
  %v2074 = vmul.f32 1.0, %v2073
  %v2075 = vadd.f32 %v2009, %v2053
  %v2076 = vxor.u32 %v2075, 2147483648
  %v2077 = vmul.f32 %v2076, 1.442695
  %v2078 = vpow.pop %v2077
  %v2079 = vadd.f32 %v2078, 1.0
  %v2080 = vrcp.pop %v2079
  %v2081 = vmul.f32 %v2079, %v2080
  %v2082 = vsub.f32 1.0, %v2081
  %v2083 = vmul.f32 %v2080, %v2082
  %v2084 = vadd.f32 %v2080, %v2083
  %vm2085 = vweird.f32 %v2079
  %vm2086 = vweird.f32 %v2080
  %vm2087 = vmor %vm2085, %vm2086
  %v2088 = vsel %vm2087, %v2080, %v2084
  %v2089 = vand.u32 2147483647, %v2079
  %vm2090 = vcmp.eq.f32.partialorder %v2089, 8.507059e+37
  %v2091 = vand.u32 %v2079, 2147483648
  %v2092 = vor.u32 1.1754944e-38, %v2091
  %v2093 = vsel %vm2090, %v2092, %v2088
  %v2094 = vmul.f32 1.0, %v2093
  %2095 = vmatpush.msra.mxu0 0.0
  %2096 = vmatpush.msra.mxu0 0.0
  %2097 = vmatpush.msra.mxu0 0.0
  %2098 = vmatpush.msra.mxu0 0.0
  %2099 = vmatpush.msra.mxu0 0.0
  %2100 = vmatpush.msra.mxu0 0.0
  %2101 = vmatpush.msra.mxu0 0.0
  %2102 = vmatpush.msra.mxu0 0.0
  %2103 = vmatpush.msra.mxu0 0.0
  %2104 = vmatpush.msra.mxu0 0.0
  %2105 = vmatpush.msra.mxu0 0.0
  %2106 = vmatpush.msra.mxu0 0.0
  %2107 = vmatpush.msra.mxu0 %v470
  %2108 = vmatpush.msra.mxu0 %v469
  %2109 = vmatpush.msra.mxu0 %v468
  %2110 = vmatpush.msra.mxu0 %v467
  %2111 = vmatmul.f32.gmra.mxu0 %v2013
  %v2112 = vpop.f32.mrf.mxu0
  %v2113 = vadd.f32 %v473, %v2112
  %2114 = vdwg.mxu0
  %v2115 = vmul.f32 %v2074, %v2113
  %v2116 = vadd.f32 %v2011, %v2115
  %v2117 = vtanh.pop %v2116
  %v2118 = vsub.f32 1.0, %v2094
  %v2119 = vmul.f32 %v2118, %v2117
  %v2120 = vmul.f32 %v2094, %v2003
  %v2121 = vadd.f32 %v2119, %v2120
  %s2122 = scalar_lea.vmem [#allocation2], 26
  %2123 = vst.msk [vmem:[%s2122] sm:$0x3] %vm210, %v2121
  %s2124 = scalar_lea.vmem [#allocation3], 28
  %v2125 = vld [vmem:[%s2124] sm:$0x3]
  %s2126 = scalar_lea.vmem [#allocation4], 28
  %v2127 = vld [vmem:[%s2126] sm:$0x3]
  %s2128 = scalar_lea.vmem [#allocation5], 28
  %v2129 = vld [vmem:[%s2128] sm:$0x3]
  %v2131 = vsel %vm478, %v2121, 0
  %2133 = vmatpush.msra.mxu0 0.0
  %2134 = vmatpush.msra.mxu0 0.0
  %2135 = vmatpush.msra.mxu0 0.0
  %2136 = vmatpush.msra.mxu0 0.0
  %2137 = vmatpush.msra.mxu0 0.0
  %2138 = vmatpush.msra.mxu0 0.0
  %2139 = vmatpush.msra.mxu0 0.0
  %2140 = vmatpush.msra.mxu0 0.0
  %2141 = vmatpush.msra.mxu0 0.0
  %2142 = vmatpush.msra.mxu0 0.0
  %2143 = vmatpush.msra.mxu0 0.0
  %2144 = vmatpush.msra.mxu0 0.0
  %2145 = vmatpush.msra.mxu0 %v462
  %2146 = vmatpush.msra.mxu0 %v461
  %2147 = vmatpush.msra.mxu0 %v460
  %2148 = vmatpush.msra.mxu0 %v459
  %2149 = vmatmul.f32.gmra.mxu0 %v2131
  %v2150 = vpop.f32.mrf.mxu0
  %v2151 = vadd.f32 0.0, %v2150
  %2152 = vdwg.mxu0
  %2153 = vmatpush.msra.mxu0 0.0
  %2154 = vmatpush.msra.mxu0 0.0
  %2155 = vmatpush.msra.mxu0 0.0
  %2156 = vmatpush.msra.mxu0 0.0
  %2157 = vmatpush.msra.mxu0 0.0
  %2158 = vmatpush.msra.mxu0 0.0
  %2159 = vmatpush.msra.mxu0 0.0
  %2160 = vmatpush.msra.mxu0 0.0
  %2161 = vmatpush.msra.mxu0 0.0
  %2162 = vmatpush.msra.mxu0 0.0
  %2163 = vmatpush.msra.mxu0 0.0
  %2164 = vmatpush.msra.mxu0 0.0
  %2165 = vmatpush.msra.mxu0 %v466
  %2166 = vmatpush.msra.mxu0 %v465
  %2167 = vmatpush.msra.mxu0 %v464
  %2168 = vmatpush.msra.mxu0 %v463
  %2169 = vmatmul.f32.gmra.mxu0 %v2131
  %v2170 = vpop.f32.mrf.mxu0
  %v2171 = vadd.f32 0.0, %v2170
  %2172 = vdwg.mxu0
  %v2173 = vadd.f32 %v2125, %v2151
  %v2174 = vxor.u32 %v2173, 2147483648
  %v2175 = vmul.f32 %v2174, 1.442695
  %v2176 = vpow.pop %v2175
  %v2177 = vadd.f32 %v2176, 1.0
  %v2178 = vrcp.pop %v2177
  %v2179 = vmul.f32 %v2177, %v2178
  %v2180 = vsub.f32 1.0, %v2179
  %v2181 = vmul.f32 %v2178, %v2180
  %v2182 = vadd.f32 %v2178, %v2181
  %vm2183 = vweird.f32 %v2177
  %vm2184 = vweird.f32 %v2178
  %vm2185 = vmor %vm2183, %vm2184
  %v2186 = vsel %vm2185, %v2178, %v2182
  %v2187 = vand.u32 2147483647, %v2177
  %vm2188 = vcmp.eq.f32.partialorder %v2187, 8.507059e+37
  %v2189 = vand.u32 %v2177, 2147483648
  %v2190 = vor.u32 1.1754944e-38, %v2189
  %v2191 = vsel %vm2188, %v2190, %v2186
  %v2192 = vmul.f32 1.0, %v2191
  %v2193 = vadd.f32 %v2127, %v2171
  %v2194 = vxor.u32 %v2193, 2147483648
  %v2195 = vmul.f32 %v2194, 1.442695
  %v2196 = vpow.pop %v2195
  %v2197 = vadd.f32 %v2196, 1.0
  %v2198 = vrcp.pop %v2197
  %v2199 = vmul.f32 %v2197, %v2198
  %v2200 = vsub.f32 1.0, %v2199
  %v2201 = vmul.f32 %v2198, %v2200
  %v2202 = vadd.f32 %v2198, %v2201
  %vm2203 = vweird.f32 %v2197
  %vm2204 = vweird.f32 %v2198
  %vm2205 = vmor %vm2203, %vm2204
  %v2206 = vsel %vm2205, %v2198, %v2202
  %v2207 = vand.u32 2147483647, %v2197
  %vm2208 = vcmp.eq.f32.partialorder %v2207, 8.507059e+37
  %v2209 = vand.u32 %v2197, 2147483648
  %v2210 = vor.u32 1.1754944e-38, %v2209
  %v2211 = vsel %vm2208, %v2210, %v2206
  %v2212 = vmul.f32 1.0, %v2211
  %2213 = vmatpush.msra.mxu0 0.0
  %2214 = vmatpush.msra.mxu0 0.0
  %2215 = vmatpush.msra.mxu0 0.0
  %2216 = vmatpush.msra.mxu0 0.0
  %2217 = vmatpush.msra.mxu0 0.0
  %2218 = vmatpush.msra.mxu0 0.0
  %2219 = vmatpush.msra.mxu0 0.0
  %2220 = vmatpush.msra.mxu0 0.0
  %2221 = vmatpush.msra.mxu0 0.0
  %2222 = vmatpush.msra.mxu0 0.0
  %2223 = vmatpush.msra.mxu0 0.0
  %2224 = vmatpush.msra.mxu0 0.0
  %2225 = vmatpush.msra.mxu0 %v470
  %2226 = vmatpush.msra.mxu0 %v469
  %2227 = vmatpush.msra.mxu0 %v468
  %2228 = vmatpush.msra.mxu0 %v467
  %2229 = vmatmul.f32.gmra.mxu0 %v2131
  %v2230 = vpop.f32.mrf.mxu0
  %v2231 = vadd.f32 %v473, %v2230
  %2232 = vdwg.mxu0
  %v2233 = vmul.f32 %v2192, %v2231
  %v2234 = vadd.f32 %v2129, %v2233
  %v2235 = vtanh.pop %v2234
  %v2236 = vsub.f32 1.0, %v2212
  %v2237 = vmul.f32 %v2236, %v2235
  %v2238 = vmul.f32 %v2212, %v2121
  %v2239 = vadd.f32 %v2237, %v2238
  %s2240 = scalar_lea.vmem [#allocation2], 28
  %2241 = vst.msk [vmem:[%s2240] sm:$0x3] %vm210, %v2239
  %s2242 = scalar_lea.vmem [#allocation3], 30
  %v2243 = vld [vmem:[%s2242] sm:$0x3]
  %s2244 = scalar_lea.vmem [#allocation4], 30
  %v2245 = vld [vmem:[%s2244] sm:$0x3]
  %s2246 = scalar_lea.vmem [#allocation5], 30
  %v2247 = vld [vmem:[%s2246] sm:$0x3]
  %v2249 = vsel %vm478, %v2239, 0
  %2251 = vmatpush.msra.mxu0 0.0
  %2252 = vmatpush.msra.mxu0 0.0
  %2253 = vmatpush.msra.mxu0 0.0
  %2254 = vmatpush.msra.mxu0 0.0
  %2255 = vmatpush.msra.mxu0 0.0
  %2256 = vmatpush.msra.mxu0 0.0
  %2257 = vmatpush.msra.mxu0 0.0
  %2258 = vmatpush.msra.mxu0 0.0
  %2259 = vmatpush.msra.mxu0 0.0
  %2260 = vmatpush.msra.mxu0 0.0
  %2261 = vmatpush.msra.mxu0 0.0
  %2262 = vmatpush.msra.mxu0 0.0
  %2263 = vmatpush.msra.mxu0 %v462
  %2264 = vmatpush.msra.mxu0 %v461
  %2265 = vmatpush.msra.mxu0 %v460
  %2266 = vmatpush.msra.mxu0 %v459
  %2267 = vmatmul.f32.gmra.mxu0 %v2249
  %v2268 = vpop.f32.mrf.mxu0
  %v2269 = vadd.f32 0.0, %v2268
  %2270 = vdwg.mxu0
  %2271 = vmatpush.msra.mxu0 0.0
  %2272 = vmatpush.msra.mxu0 0.0
  %2273 = vmatpush.msra.mxu0 0.0
  %2274 = vmatpush.msra.mxu0 0.0
  %2275 = vmatpush.msra.mxu0 0.0
  %2276 = vmatpush.msra.mxu0 0.0
  %2277 = vmatpush.msra.mxu0 0.0
  %2278 = vmatpush.msra.mxu0 0.0
  %2279 = vmatpush.msra.mxu0 0.0
  %2280 = vmatpush.msra.mxu0 0.0
  %2281 = vmatpush.msra.mxu0 0.0
  %2282 = vmatpush.msra.mxu0 0.0
  %2283 = vmatpush.msra.mxu0 %v466
  %2284 = vmatpush.msra.mxu0 %v465
  %2285 = vmatpush.msra.mxu0 %v464
  %2286 = vmatpush.msra.mxu0 %v463
  %2287 = vmatmul.f32.gmra.mxu0 %v2249
  %v2288 = vpop.f32.mrf.mxu0
  %v2289 = vadd.f32 0.0, %v2288
  %2290 = vdwg.mxu0
  %v2291 = vadd.f32 %v2243, %v2269
  %v2292 = vxor.u32 %v2291, 2147483648
  %v2293 = vmul.f32 %v2292, 1.442695
  %v2294 = vpow.pop %v2293
  %v2295 = vadd.f32 %v2294, 1.0
  %v2296 = vrcp.pop %v2295
  %v2297 = vmul.f32 %v2295, %v2296
  %v2298 = vsub.f32 1.0, %v2297
  %v2299 = vmul.f32 %v2296, %v2298
  %v2300 = vadd.f32 %v2296, %v2299
  %vm2301 = vweird.f32 %v2295
  %vm2302 = vweird.f32 %v2296
  %vm2303 = vmor %vm2301, %vm2302
  %v2304 = vsel %vm2303, %v2296, %v2300
  %v2305 = vand.u32 2147483647, %v2295
  %vm2306 = vcmp.eq.f32.partialorder %v2305, 8.507059e+37
  %v2307 = vand.u32 %v2295, 2147483648
  %v2308 = vor.u32 1.1754944e-38, %v2307
  %v2309 = vsel %vm2306, %v2308, %v2304
  %v2310 = vmul.f32 1.0, %v2309
  %v2311 = vadd.f32 %v2245, %v2289
  %v2312 = vxor.u32 %v2311, 2147483648
  %v2313 = vmul.f32 %v2312, 1.442695
  %v2314 = vpow.pop %v2313
  %v2315 = vadd.f32 %v2314, 1.0
  %v2316 = vrcp.pop %v2315
  %v2317 = vmul.f32 %v2315, %v2316
  %v2318 = vsub.f32 1.0, %v2317
  %v2319 = vmul.f32 %v2316, %v2318
  %v2320 = vadd.f32 %v2316, %v2319
  %vm2321 = vweird.f32 %v2315
  %vm2322 = vweird.f32 %v2316
  %vm2323 = vmor %vm2321, %vm2322
  %v2324 = vsel %vm2323, %v2316, %v2320
  %v2325 = vand.u32 2147483647, %v2315
  %vm2326 = vcmp.eq.f32.partialorder %v2325, 8.507059e+37
  %v2327 = vand.u32 %v2315, 2147483648
  %v2328 = vor.u32 1.1754944e-38, %v2327
  %v2329 = vsel %vm2326, %v2328, %v2324
  %v2330 = vmul.f32 1.0, %v2329
  %2331 = vmatpush.msra.mxu0 0.0
  %2332 = vmatpush.msra.mxu0 0.0
  %2333 = vmatpush.msra.mxu0 0.0
  %2334 = vmatpush.msra.mxu0 0.0
  %2335 = vmatpush.msra.mxu0 0.0
  %2336 = vmatpush.msra.mxu0 0.0
  %2337 = vmatpush.msra.mxu0 0.0
  %2338 = vmatpush.msra.mxu0 0.0
  %2339 = vmatpush.msra.mxu0 0.0
  %2340 = vmatpush.msra.mxu0 0.0
  %2341 = vmatpush.msra.mxu0 0.0
  %2342 = vmatpush.msra.mxu0 0.0
  %2343 = vmatpush.msra.mxu0 %v470
  %2344 = vmatpush.msra.mxu0 %v469
  %2345 = vmatpush.msra.mxu0 %v468
  %2346 = vmatpush.msra.mxu0 %v467
  %2347 = vmatmul.f32.gmra.mxu0 %v2249
  %v2348 = vpop.f32.mrf.mxu0
  %v2349 = vadd.f32 %v473, %v2348
  %2350 = vdwg.mxu0
  %v2351 = vmul.f32 %v2310, %v2349
  %v2352 = vadd.f32 %v2247, %v2351
  %v2353 = vtanh.pop %v2352
  %v2354 = vsub.f32 1.0, %v2330
  %v2355 = vmul.f32 %v2354, %v2353
  %v2356 = vmul.f32 %v2330, %v2239
  %v2357 = vadd.f32 %v2355, %v2356
  %s2358 = scalar_lea.vmem [#allocation2], 30
  %2359 = vst.msk [vmem:[%s2358] sm:$0x3] %vm210, %v2357
  %v2360 = vld [vmem:[#allocation2] sm:$0x3]
  %v2361 = vld [vmem:[#allocation2 + $0x2] sm:$0x3]
  %v2362 = vld [vmem:[#allocation2 + $0x4] sm:$0x3]
  %v2363 = vld [vmem:[#allocation2 + $0x6] sm:$0x3]
  %v2364 = vld [vmem:[#allocation2 + $0x8] sm:$0x3]
  %v2365 = vld [vmem:[#allocation2 + $0xa] sm:$0x3]
  %v2366 = vld [vmem:[#allocation2 + $0xc] sm:$0x3]
  %v2367 = vld [vmem:[#allocation2 + $0xe] sm:$0x3]
  %v2368 = vld [vmem:[#allocation2 + $0x10] sm:$0x3]
  %v2369 = vld [vmem:[#allocation2 + $0x12] sm:$0x3]
  %v2370 = vld [vmem:[#allocation2 + $0x14] sm:$0x3]
  %v2371 = vld [vmem:[#allocation2 + $0x16] sm:$0x3]
  %v2372 = vld [vmem:[#allocation2 + $0x18] sm:$0x3]
  %v2373 = vld [vmem:[#allocation2 + $0x1a] sm:$0x3]
  %v2374 = vld [vmem:[#allocation2 + $0x1c] sm:$0x3]
  %v2375 = vld [vmem:[#allocation2 + $0x1e] sm:$0x3]
  %v2376 = vld [vmem:[%s11] sm:$0xff]
  %v2377 = vld [vmem:[%s11 + $0x8] sm:$0xff]
  %v2378 = vld [vmem:[%s11 + $0x10] sm:$0xff]
  %v2379 = vld [vmem:[%s11 + $0x18] sm:$0xff]
  %v2380 = vld [vmem:[%s17] sm:$0x1]
  %v2382 = vperm.slane %v2380, 0
  %2400 = vst [vmem:[#allocation1] ss:$4 sm:$0xff] %v2360
  %s2401 = scalar_lea.vmem [#allocation1], 1
  %2402 = vst [vmem:[%s2401] ss:$4 sm:$0xff] %v2361
  %s2403 = scalar_lea.vmem [#allocation1], 2
  %2404 = vst [vmem:[%s2403] ss:$4 sm:$0xff] %v2362
  %s2405 = scalar_lea.vmem [#allocation1], 3
  %2406 = vst [vmem:[%s2405] ss:$4 sm:$0xff] %v2363
  %s2407 = scalar_lea.vmem [#allocation1], 32
  %2408 = vst [vmem:[%s2407] ss:$4 sm:$0xff] %v2364
  %s2409 = scalar_lea.vmem [#allocation1], 33
  %2410 = vst [vmem:[%s2409] ss:$4 sm:$0xff] %v2365
  %s2411 = scalar_lea.vmem [#allocation1], 34
  %2412 = vst [vmem:[%s2411] ss:$4 sm:$0xff] %v2366
  %s2413 = scalar_lea.vmem [#allocation1], 35
  %2414 = vst [vmem:[%s2413] ss:$4 sm:$0xff] %v2367
  %v2415 = vld.sshfl [vmem:[#allocation1] sm:$0xff pattern:$0x73625140]
  %v2416 = vld.sshfl [vmem:[#allocation1 + $0x20] sm:$0xff pattern:$0x73625140]
  %2417 = vst [vmem:[#allocation1] ss:$4 sm:$0xff] %v2368
  %2418 = vst [vmem:[%s2401] ss:$4 sm:$0xff] %v2369
  %2419 = vst [vmem:[%s2403] ss:$4 sm:$0xff] %v2370
  %2420 = vst [vmem:[%s2405] ss:$4 sm:$0xff] %v2371
  %2421 = vst [vmem:[%s2407] ss:$4 sm:$0xff] %v2372
  %2422 = vst [vmem:[%s2409] ss:$4 sm:$0xff] %v2373
  %2423 = vst [vmem:[%s2411] ss:$4 sm:$0xff] %v2374
  %2424 = vst [vmem:[%s2413] ss:$4 sm:$0xff] %v2375
  %v2425 = vld.sshfl [vmem:[#allocation1] sm:$0xff pattern:$0x73625140]
  %v2426 = vld.sshfl [vmem:[#allocation1 + $0x20] sm:$0xff pattern:$0x73625140]
  %v2427 = vsel %vm478, %v2415, 0
  %v2429 = vsel %vm478, %v2416, 0
  %v2431 = vsel %vm478, %v2425, 0
  %v2433 = vsel %vm478, %v2426, 0
  %2435 = vmatpush.msra.mxu0 0.0
  %2436 = vmatpush.msra.mxu0 0.0
  %2437 = vmatpush.msra.mxu0 0.0
  %2438 = vmatpush.msra.mxu0 0.0
  %2439 = vmatpush.msra.mxu0 0.0
  %2440 = vmatpush.msra.mxu0 0.0
  %2441 = vmatpush.msra.mxu0 0.0
  %2442 = vmatpush.msra.mxu0 0.0
  %2443 = vmatpush.msra.mxu0 0.0
  %2444 = vmatpush.msra.mxu0 0.0
  %2445 = vmatpush.msra.mxu0 0.0
  %2446 = vmatpush.msra.mxu0 0.0
  %2447 = vmatpush.msra.mxu0 %v2379
  %2448 = vmatpush.msra.mxu0 %v2378
  %2449 = vmatpush.msra.mxu0 %v2377
  %2450 = vmatpush.msra.mxu0 %v2376
  %2451 = vmatmul.f32.gmra.mxu0 %v2427
  %v2452 = vpop.f32.mrf.mxu0
  %v2453 = vadd.f32 %v2382, %v2452
  %2454 = vmatmul.f32.gmra.mxu0 %v2429
  %v2455 = vpop.f32.mrf.mxu0
  %v2456 = vadd.f32 %v2382, %v2455
  %2457 = vmatmul.f32.gmra.mxu0 %v2431
  %v2458 = vpop.f32.mrf.mxu0
  %v2459 = vadd.f32 %v2382, %v2458
  %2460 = vmatmul.f32.gmra.mxu0 %v2433
  %v2461 = vpop.f32.mrf.mxu0
  %v2462 = vadd.f32 %v2382, %v2461
  %2463 = vdwg.mxu0
  %v2468 = vrot.slane %v2453, 2
  %v2469 = vrot.slane %v2453, 4
  %v2470 = vrot.slane %v2453, 6
  %v2471 = vrot.slane %v2456, 2
  %v2472 = vrot.slane %v2456, 4
  %v2473 = vrot.slane %v2456, 6
  %v2474 = vrot.slane %v2459, 2
  %v2475 = vrot.slane %v2459, 4
  %v2476 = vrot.slane %v2459, 6
  %v2477 = vrot.slane %v2462, 2
  %v2478 = vrot.slane %v2462, 4
  %v2479 = vrot.slane %v2462, 6
  %2492 = vst.msk [vmem:[#allocation3] sm:$0x3] %vm210, %v2453
  %2493 = vst.msk [vmem:[#allocation3 + $0x2] sm:$0x3] %vm210, %v2468
  %2494 = vst.msk [vmem:[#allocation3 + $0x4] sm:$0x3] %vm210, %v2469
  %2495 = vst.msk [vmem:[#allocation3 + $0x6] sm:$0x3] %vm210, %v2470
  %2496 = vst.msk [vmem:[#allocation3 + $0x8] sm:$0x3] %vm210, %v2456
  %2497 = vst.msk [vmem:[#allocation3 + $0xa] sm:$0x3] %vm210, %v2471
  %2498 = vst.msk [vmem:[#allocation3 + $0xc] sm:$0x3] %vm210, %v2472
  %2499 = vst.msk [vmem:[#allocation3 + $0xe] sm:$0x3] %vm210, %v2473
  %2500 = vst.msk [vmem:[#allocation3 + $0x10] sm:$0x3] %vm210, %v2459
  %2501 = vst.msk [vmem:[#allocation3 + $0x12] sm:$0x3] %vm210, %v2474
  %2502 = vst.msk [vmem:[#allocation3 + $0x14] sm:$0x3] %vm210, %v2475
  %2503 = vst.msk [vmem:[#allocation3 + $0x16] sm:$0x3] %vm210, %v2476
  %2504 = vst.msk [vmem:[#allocation3 + $0x18] sm:$0x3] %vm210, %v2462
  %2505 = vst.msk [vmem:[#allocation3 + $0x1a] sm:$0x3] %vm210, %v2477
  %2506 = vst.msk [vmem:[#allocation3 + $0x1c] sm:$0x3] %vm210, %v2478
  %2507 = vst.msk [vmem:[#allocation3 + $0x1e] sm:$0x3] %vm210, %v2479
  %v2508 = vld [vmem:[%s12] sm:$0xff]
  %v2509 = vld [vmem:[%s12 + $0x8] sm:$0xff]
  %v2510 = vld [vmem:[%s12 + $0x10] sm:$0xff]
  %v2511 = vld [vmem:[%s12 + $0x18] sm:$0xff]
  %v2512 = vld [vmem:[%s18] sm:$0x1]
  %v2514 = vperm.slane %v2512, 0
  %2516 = vst [vmem:[#allocation1] ss:$4 sm:$0xff] %v2360
  %s2517 = scalar_lea.vmem [#allocation1], 1
  %2518 = vst [vmem:[%s2517] ss:$4 sm:$0xff] %v2361
  %s2519 = scalar_lea.vmem [#allocation1], 2
  %2520 = vst [vmem:[%s2519] ss:$4 sm:$0xff] %v2362
  %s2521 = scalar_lea.vmem [#allocation1], 3
  %2522 = vst [vmem:[%s2521] ss:$4 sm:$0xff] %v2363
  %s2523 = scalar_lea.vmem [#allocation1], 32
  %2524 = vst [vmem:[%s2523] ss:$4 sm:$0xff] %v2364
  %s2525 = scalar_lea.vmem [#allocation1], 33
  %2526 = vst [vmem:[%s2525] ss:$4 sm:$0xff] %v2365
  %s2527 = scalar_lea.vmem [#allocation1], 34
  %2528 = vst [vmem:[%s2527] ss:$4 sm:$0xff] %v2366
  %s2529 = scalar_lea.vmem [#allocation1], 35
  %2530 = vst [vmem:[%s2529] ss:$4 sm:$0xff] %v2367
  %v2531 = vld.sshfl [vmem:[#allocation1] sm:$0xff pattern:$0x73625140]
  %v2532 = vld.sshfl [vmem:[#allocation1 + $0x20] sm:$0xff pattern:$0x73625140]
  %2533 = vst [vmem:[#allocation1] ss:$4 sm:$0xff] %v2368
  %2534 = vst [vmem:[%s2517] ss:$4 sm:$0xff] %v2369
  %2535 = vst [vmem:[%s2519] ss:$4 sm:$0xff] %v2370
  %2536 = vst [vmem:[%s2521] ss:$4 sm:$0xff] %v2371
  %2537 = vst [vmem:[%s2523] ss:$4 sm:$0xff] %v2372
  %2538 = vst [vmem:[%s2525] ss:$4 sm:$0xff] %v2373
  %2539 = vst [vmem:[%s2527] ss:$4 sm:$0xff] %v2374
  %2540 = vst [vmem:[%s2529] ss:$4 sm:$0xff] %v2375
  %v2541 = vld.sshfl [vmem:[#allocation1] sm:$0xff pattern:$0x73625140]
  %v2542 = vld.sshfl [vmem:[#allocation1 + $0x20] sm:$0xff pattern:$0x73625140]
  %v2543 = vsel %vm478, %v2531, 0
  %v2545 = vsel %vm478, %v2532, 0
  %v2547 = vsel %vm478, %v2541, 0
  %v2549 = vsel %vm478, %v2542, 0
  %2551 = vmatpush.msra.mxu0 0.0
  %2552 = vmatpush.msra.mxu0 0.0
  %2553 = vmatpush.msra.mxu0 0.0
  %2554 = vmatpush.msra.mxu0 0.0
  %2555 = vmatpush.msra.mxu0 0.0
  %2556 = vmatpush.msra.mxu0 0.0
  %2557 = vmatpush.msra.mxu0 0.0
  %2558 = vmatpush.msra.mxu0 0.0
  %2559 = vmatpush.msra.mxu0 0.0
  %2560 = vmatpush.msra.mxu0 0.0
  %2561 = vmatpush.msra.mxu0 0.0
  %2562 = vmatpush.msra.mxu0 0.0
  %2563 = vmatpush.msra.mxu0 %v2511
  %2564 = vmatpush.msra.mxu0 %v2510
  %2565 = vmatpush.msra.mxu0 %v2509
  %2566 = vmatpush.msra.mxu0 %v2508
  %2567 = vmatmul.f32.gmra.mxu0 %v2543
  %v2568 = vpop.f32.mrf.mxu0
  %v2569 = vadd.f32 %v2514, %v2568
  %2570 = vmatmul.f32.gmra.mxu0 %v2545
  %v2571 = vpop.f32.mrf.mxu0
  %v2572 = vadd.f32 %v2514, %v2571
  %2573 = vmatmul.f32.gmra.mxu0 %v2547
  %v2574 = vpop.f32.mrf.mxu0
  %v2575 = vadd.f32 %v2514, %v2574
  %2576 = vmatmul.f32.gmra.mxu0 %v2549
  %v2577 = vpop.f32.mrf.mxu0
  %v2578 = vadd.f32 %v2514, %v2577
  %2579 = vdwg.mxu0
  %v2584 = vrot.slane %v2569, 2
  %v2585 = vrot.slane %v2569, 4
  %v2586 = vrot.slane %v2569, 6
  %v2587 = vrot.slane %v2572, 2
  %v2588 = vrot.slane %v2572, 4
  %v2589 = vrot.slane %v2572, 6
  %v2590 = vrot.slane %v2575, 2
  %v2591 = vrot.slane %v2575, 4
  %v2592 = vrot.slane %v2575, 6
  %v2593 = vrot.slane %v2578, 2
  %v2594 = vrot.slane %v2578, 4
  %v2595 = vrot.slane %v2578, 6
  %2608 = vst.msk [vmem:[#allocation4] sm:$0x3] %vm210, %v2569
  %2609 = vst.msk [vmem:[#allocation4 + $0x2] sm:$0x3] %vm210, %v2584
  %2610 = vst.msk [vmem:[#allocation4 + $0x4] sm:$0x3] %vm210, %v2585
  %2611 = vst.msk [vmem:[#allocation4 + $0x6] sm:$0x3] %vm210, %v2586
  %2612 = vst.msk [vmem:[#allocation4 + $0x8] sm:$0x3] %vm210, %v2572
  %2613 = vst.msk [vmem:[#allocation4 + $0xa] sm:$0x3] %vm210, %v2587
  %2614 = vst.msk [vmem:[#allocation4 + $0xc] sm:$0x3] %vm210, %v2588
  %2615 = vst.msk [vmem:[#allocation4 + $0xe] sm:$0x3] %vm210, %v2589
  %2616 = vst.msk [vmem:[#allocation4 + $0x10] sm:$0x3] %vm210, %v2575
  %2617 = vst.msk [vmem:[#allocation4 + $0x12] sm:$0x3] %vm210, %v2590
  %2618 = vst.msk [vmem:[#allocation4 + $0x14] sm:$0x3] %vm210, %v2591
  %2619 = vst.msk [vmem:[#allocation4 + $0x16] sm:$0x3] %vm210, %v2592
  %2620 = vst.msk [vmem:[#allocation4 + $0x18] sm:$0x3] %vm210, %v2578
  %2621 = vst.msk [vmem:[#allocation4 + $0x1a] sm:$0x3] %vm210, %v2593
  %2622 = vst.msk [vmem:[#allocation4 + $0x1c] sm:$0x3] %vm210, %v2594
  %2623 = vst.msk [vmem:[#allocation4 + $0x1e] sm:$0x3] %vm210, %v2595
  %v2624 = vld [vmem:[%s13] sm:$0xff]
  %v2625 = vld [vmem:[%s13 + $0x8] sm:$0xff]
  %v2626 = vld [vmem:[%s13 + $0x10] sm:$0xff]
  %v2627 = vld [vmem:[%s13 + $0x18] sm:$0xff]
  %v2628 = vld [vmem:[%s19] sm:$0x1]
  %v2630 = vperm.slane %v2628, 0
  %2632 = vst [vmem:[#allocation1] ss:$4 sm:$0xff] %v2360
  %s2633 = scalar_lea.vmem [#allocation1], 1
  %2634 = vst [vmem:[%s2633] ss:$4 sm:$0xff] %v2361
  %s2635 = scalar_lea.vmem [#allocation1], 2
  %2636 = vst [vmem:[%s2635] ss:$4 sm:$0xff] %v2362
  %s2637 = scalar_lea.vmem [#allocation1], 3
  %2638 = vst [vmem:[%s2637] ss:$4 sm:$0xff] %v2363
  %s2639 = scalar_lea.vmem [#allocation1], 32
  %2640 = vst [vmem:[%s2639] ss:$4 sm:$0xff] %v2364
  %s2641 = scalar_lea.vmem [#allocation1], 33
  %2642 = vst [vmem:[%s2641] ss:$4 sm:$0xff] %v2365
  %s2643 = scalar_lea.vmem [#allocation1], 34
  %2644 = vst [vmem:[%s2643] ss:$4 sm:$0xff] %v2366
  %s2645 = scalar_lea.vmem [#allocation1], 35
  %2646 = vst [vmem:[%s2645] ss:$4 sm:$0xff] %v2367
  %v2647 = vld.sshfl [vmem:[#allocation1] sm:$0xff pattern:$0x73625140]
  %v2648 = vld.sshfl [vmem:[#allocation1 + $0x20] sm:$0xff pattern:$0x73625140]
  %2649 = vst [vmem:[#allocation1] ss:$4 sm:$0xff] %v2368
  %2650 = vst [vmem:[%s2633] ss:$4 sm:$0xff] %v2369
  %2651 = vst [vmem:[%s2635] ss:$4 sm:$0xff] %v2370
  %2652 = vst [vmem:[%s2637] ss:$4 sm:$0xff] %v2371
  %2653 = vst [vmem:[%s2639] ss:$4 sm:$0xff] %v2372
  %2654 = vst [vmem:[%s2641] ss:$4 sm:$0xff] %v2373
  %2655 = vst [vmem:[%s2643] ss:$4 sm:$0xff] %v2374
  %2656 = vst [vmem:[%s2645] ss:$4 sm:$0xff] %v2375
  %v2657 = vld.sshfl [vmem:[#allocation1] sm:$0xff pattern:$0x73625140]
  %v2658 = vld.sshfl [vmem:[#allocation1 + $0x20] sm:$0xff pattern:$0x73625140]
  %v2659 = vsel %vm478, %v2647, 0
  %v2661 = vsel %vm478, %v2648, 0
  %v2663 = vsel %vm478, %v2657, 0
  %v2665 = vsel %vm478, %v2658, 0
  %2667 = vmatpush.msra.mxu0 0.0
  %2668 = vmatpush.msra.mxu0 0.0
  %2669 = vmatpush.msra.mxu0 0.0
  %2670 = vmatpush.msra.mxu0 0.0
  %2671 = vmatpush.msra.mxu0 0.0
  %2672 = vmatpush.msra.mxu0 0.0
  %2673 = vmatpush.msra.mxu0 0.0
  %2674 = vmatpush.msra.mxu0 0.0
  %2675 = vmatpush.msra.mxu0 0.0
  %2676 = vmatpush.msra.mxu0 0.0
  %2677 = vmatpush.msra.mxu0 0.0
  %2678 = vmatpush.msra.mxu0 0.0
  %2679 = vmatpush.msra.mxu0 %v2627
  %2680 = vmatpush.msra.mxu0 %v2626
  %2681 = vmatpush.msra.mxu0 %v2625
  %2682 = vmatpush.msra.mxu0 %v2624
  %2683 = vmatmul.f32.gmra.mxu0 %v2659
  %v2684 = vpop.f32.mrf.mxu0
  %v2685 = vadd.f32 %v2630, %v2684
  %2686 = vmatmul.f32.gmra.mxu0 %v2661
  %v2687 = vpop.f32.mrf.mxu0
  %v2688 = vadd.f32 %v2630, %v2687
  %2689 = vmatmul.f32.gmra.mxu0 %v2663
  %v2690 = vpop.f32.mrf.mxu0
  %v2691 = vadd.f32 %v2630, %v2690
  %2692 = vmatmul.f32.gmra.mxu0 %v2665
  %v2693 = vpop.f32.mrf.mxu0
  %v2694 = vadd.f32 %v2630, %v2693
  %2695 = vdwg.mxu0
  %v2700 = vrot.slane %v2685, 2
  %v2701 = vrot.slane %v2685, 4
  %v2702 = vrot.slane %v2685, 6
  %v2703 = vrot.slane %v2688, 2
  %v2704 = vrot.slane %v2688, 4
  %v2705 = vrot.slane %v2688, 6
  %v2706 = vrot.slane %v2691, 2
  %v2707 = vrot.slane %v2691, 4
  %v2708 = vrot.slane %v2691, 6
  %v2709 = vrot.slane %v2694, 2
  %v2710 = vrot.slane %v2694, 4
  %v2711 = vrot.slane %v2694, 6
  %2724 = vst.msk [vmem:[#allocation5] sm:$0x3] %vm210, %v2685
  %2725 = vst.msk [vmem:[#allocation5 + $0x2] sm:$0x3] %vm210, %v2700
  %2726 = vst.msk [vmem:[#allocation5 + $0x4] sm:$0x3] %vm210, %v2701
  %2727 = vst.msk [vmem:[#allocation5 + $0x6] sm:$0x3] %vm210, %v2702
  %2728 = vst.msk [vmem:[#allocation5 + $0x8] sm:$0x3] %vm210, %v2688
  %2729 = vst.msk [vmem:[#allocation5 + $0xa] sm:$0x3] %vm210, %v2703
  %2730 = vst.msk [vmem:[#allocation5 + $0xc] sm:$0x3] %vm210, %v2704
  %2731 = vst.msk [vmem:[#allocation5 + $0xe] sm:$0x3] %vm210, %v2705
  %2732 = vst.msk [vmem:[#allocation5 + $0x10] sm:$0x3] %vm210, %v2691
  %2733 = vst.msk [vmem:[#allocation5 + $0x12] sm:$0x3] %vm210, %v2706
  %2734 = vst.msk [vmem:[#allocation5 + $0x14] sm:$0x3] %vm210, %v2707
  %2735 = vst.msk [vmem:[#allocation5 + $0x16] sm:$0x3] %vm210, %v2708
  %2736 = vst.msk [vmem:[#allocation5 + $0x18] sm:$0x3] %vm210, %v2694
  %2737 = vst.msk [vmem:[#allocation5 + $0x1a] sm:$0x3] %vm210, %v2709
  %2738 = vst.msk [vmem:[#allocation5 + $0x1c] sm:$0x3] %vm210, %v2710
  %2739 = vst.msk [vmem:[#allocation5 + $0x1e] sm:$0x3] %vm210, %v2711
  %v2740 = vld [vmem:[%s14] sm:$0xff]
  %v2741 = vld [vmem:[%s14 + $0x8] sm:$0xff]
  %v2742 = vld [vmem:[%s14 + $0x10] sm:$0xff]
  %v2743 = vld [vmem:[%s14 + $0x18] sm:$0xff]
  %v2744 = vld [vmem:[%s15] sm:$0xff]
  %v2745 = vld [vmem:[%s15 + $0x8] sm:$0xff]
  %v2746 = vld [vmem:[%s15 + $0x10] sm:$0xff]
  %v2747 = vld [vmem:[%s15 + $0x18] sm:$0xff]
  %v2748 = vld [vmem:[%s16] sm:$0xff]
  %v2749 = vld [vmem:[%s16 + $0x8] sm:$0xff]
  %v2750 = vld [vmem:[%s16 + $0x10] sm:$0xff]
  %v2751 = vld [vmem:[%s16 + $0x18] sm:$0xff]
  %v2752 = vld [vmem:[%s20] sm:$0x1]
  %v2754 = vperm.slane %v2752, 0
  %v2756 = vld [vmem:[#allocation3] sm:$0x3]
  %v2757 = vld [vmem:[#allocation4] sm:$0x3]
  %v2758 = vld [vmem:[#allocation5] sm:$0x3]
  %2759 = vmatpush.msra.mxu0 0.0
  %2760 = vmatpush.msra.mxu0 0.0
  %2761 = vmatpush.msra.mxu0 0.0
  %2762 = vmatpush.msra.mxu0 0.0
  %2763 = vmatpush.msra.mxu0 0.0
  %2764 = vmatpush.msra.mxu0 0.0
  %2765 = vmatpush.msra.mxu0 0.0
  %2766 = vmatpush.msra.mxu0 0.0
  %2767 = vmatpush.msra.mxu0 0.0
  %2768 = vmatpush.msra.mxu0 0.0
  %2769 = vmatpush.msra.mxu0 0.0
  %2770 = vmatpush.msra.mxu0 0.0
  %2771 = vmatpush.msra.mxu0 %v2743
  %2772 = vmatpush.msra.mxu0 %v2742
  %2773 = vmatpush.msra.mxu0 %v2741
  %2774 = vmatpush.msra.mxu0 %v2740
  %2775 = vmatmul.f32.gmra.mxu0 %v480
  %v2776 = vpop.f32.mrf.mxu0
  %v2777 = vadd.f32 0.0, %v2776
  %2778 = vdwg.mxu0
  %2779 = vmatpush.msra.mxu0 0.0
  %2780 = vmatpush.msra.mxu0 0.0
  %2781 = vmatpush.msra.mxu0 0.0
  %2782 = vmatpush.msra.mxu0 0.0
  %2783 = vmatpush.msra.mxu0 0.0
  %2784 = vmatpush.msra.mxu0 0.0
  %2785 = vmatpush.msra.mxu0 0.0
  %2786 = vmatpush.msra.mxu0 0.0
  %2787 = vmatpush.msra.mxu0 0.0
  %2788 = vmatpush.msra.mxu0 0.0
  %2789 = vmatpush.msra.mxu0 0.0
  %2790 = vmatpush.msra.mxu0 0.0
  %2791 = vmatpush.msra.mxu0 %v2747
  %2792 = vmatpush.msra.mxu0 %v2746
  %2793 = vmatpush.msra.mxu0 %v2745
  %2794 = vmatpush.msra.mxu0 %v2744
  %2795 = vmatmul.f32.gmra.mxu0 %v480
  %v2796 = vpop.f32.mrf.mxu0
  %v2797 = vadd.f32 0.0, %v2796
  %2798 = vdwg.mxu0
  %v2799 = vadd.f32 %v2756, %v2777
  %v2800 = vxor.u32 %v2799, 2147483648
  %v2801 = vmul.f32 %v2800, 1.442695
  %v2802 = vpow.pop %v2801
  %v2803 = vadd.f32 %v2802, 1.0
  %v2804 = vrcp.pop %v2803
  %v2805 = vmul.f32 %v2803, %v2804
  %v2806 = vsub.f32 1.0, %v2805
  %v2807 = vmul.f32 %v2804, %v2806
  %v2808 = vadd.f32 %v2804, %v2807
  %vm2809 = vweird.f32 %v2803
  %vm2810 = vweird.f32 %v2804
  %vm2811 = vmor %vm2809, %vm2810
  %v2812 = vsel %vm2811, %v2804, %v2808
  %v2813 = vand.u32 2147483647, %v2803
  %vm2814 = vcmp.eq.f32.partialorder %v2813, 8.507059e+37
  %v2815 = vand.u32 %v2803, 2147483648
  %v2816 = vor.u32 1.1754944e-38, %v2815
  %v2817 = vsel %vm2814, %v2816, %v2812
  %v2818 = vmul.f32 1.0, %v2817
  %v2819 = vadd.f32 %v2757, %v2797
  %v2820 = vxor.u32 %v2819, 2147483648
  %v2821 = vmul.f32 %v2820, 1.442695
  %v2822 = vpow.pop %v2821
  %v2823 = vadd.f32 %v2822, 1.0
  %v2824 = vrcp.pop %v2823
  %v2825 = vmul.f32 %v2823, %v2824
  %v2826 = vsub.f32 1.0, %v2825
  %v2827 = vmul.f32 %v2824, %v2826
  %v2828 = vadd.f32 %v2824, %v2827
  %vm2829 = vweird.f32 %v2823
  %vm2830 = vweird.f32 %v2824
  %vm2831 = vmor %vm2829, %vm2830
  %v2832 = vsel %vm2831, %v2824, %v2828
  %v2833 = vand.u32 2147483647, %v2823
  %vm2834 = vcmp.eq.f32.partialorder %v2833, 8.507059e+37
  %v2835 = vand.u32 %v2823, 2147483648
  %v2836 = vor.u32 1.1754944e-38, %v2835
  %v2837 = vsel %vm2834, %v2836, %v2832
  %v2838 = vmul.f32 1.0, %v2837
  %2839 = vmatpush.msra.mxu0 0.0
  %2840 = vmatpush.msra.mxu0 0.0
  %2841 = vmatpush.msra.mxu0 0.0
  %2842 = vmatpush.msra.mxu0 0.0
  %2843 = vmatpush.msra.mxu0 0.0
  %2844 = vmatpush.msra.mxu0 0.0
  %2845 = vmatpush.msra.mxu0 0.0
  %2846 = vmatpush.msra.mxu0 0.0
  %2847 = vmatpush.msra.mxu0 0.0
  %2848 = vmatpush.msra.mxu0 0.0
  %2849 = vmatpush.msra.mxu0 0.0
  %2850 = vmatpush.msra.mxu0 0.0
  %2851 = vmatpush.msra.mxu0 %v2751
  %2852 = vmatpush.msra.mxu0 %v2750
  %2853 = vmatpush.msra.mxu0 %v2749
  %2854 = vmatpush.msra.mxu0 %v2748
  %2855 = vmatmul.f32.gmra.mxu0 %v480
  %v2856 = vpop.f32.mrf.mxu0
  %v2857 = vadd.f32 %v2754, %v2856
  %2858 = vdwg.mxu0
  %v2859 = vmul.f32 %v2818, %v2857
  %v2860 = vadd.f32 %v2758, %v2859
  %v2861 = vtanh.pop %v2860
  %v2862 = vsub.f32 1.0, %v2838
  %v2863 = vmul.f32 %v2862, %v2861
  %v2864 = vmul.f32 %v2838, 0.0
  %v2865 = vadd.f32 %v2863, %v2864
  %v2866 = vld [vmem:[%s590] sm:$0x3]
  %v2867 = vld [vmem:[%s592] sm:$0x3]
  %v2868 = vld [vmem:[%s594] sm:$0x3]
  %v2870 = vsel %vm478, %v2865, 0
  %2872 = vmatpush.msra.mxu0 0.0
  %2873 = vmatpush.msra.mxu0 0.0
  %2874 = vmatpush.msra.mxu0 0.0
  %2875 = vmatpush.msra.mxu0 0.0
  %2876 = vmatpush.msra.mxu0 0.0
  %2877 = vmatpush.msra.mxu0 0.0
  %2878 = vmatpush.msra.mxu0 0.0
  %2879 = vmatpush.msra.mxu0 0.0
  %2880 = vmatpush.msra.mxu0 0.0
  %2881 = vmatpush.msra.mxu0 0.0
  %2882 = vmatpush.msra.mxu0 0.0
  %2883 = vmatpush.msra.mxu0 0.0
  %2884 = vmatpush.msra.mxu0 %v2743
  %2885 = vmatpush.msra.mxu0 %v2742
  %2886 = vmatpush.msra.mxu0 %v2741
  %2887 = vmatpush.msra.mxu0 %v2740
  %2888 = vmatmul.f32.gmra.mxu0 %v2870
  %v2889 = vpop.f32.mrf.mxu0
  %v2890 = vadd.f32 0.0, %v2889
  %2891 = vdwg.mxu0
  %2892 = vmatpush.msra.mxu0 0.0
  %2893 = vmatpush.msra.mxu0 0.0
  %2894 = vmatpush.msra.mxu0 0.0
  %2895 = vmatpush.msra.mxu0 0.0
  %2896 = vmatpush.msra.mxu0 0.0
  %2897 = vmatpush.msra.mxu0 0.0
  %2898 = vmatpush.msra.mxu0 0.0
  %2899 = vmatpush.msra.mxu0 0.0
  %2900 = vmatpush.msra.mxu0 0.0
  %2901 = vmatpush.msra.mxu0 0.0
  %2902 = vmatpush.msra.mxu0 0.0
  %2903 = vmatpush.msra.mxu0 0.0
  %2904 = vmatpush.msra.mxu0 %v2747
  %2905 = vmatpush.msra.mxu0 %v2746
  %2906 = vmatpush.msra.mxu0 %v2745
  %2907 = vmatpush.msra.mxu0 %v2744
  %2908 = vmatmul.f32.gmra.mxu0 %v2870
  %v2909 = vpop.f32.mrf.mxu0
  %v2910 = vadd.f32 0.0, %v2909
  %2911 = vdwg.mxu0
  %v2912 = vadd.f32 %v2866, %v2890
  %v2913 = vxor.u32 %v2912, 2147483648
  %v2914 = vmul.f32 %v2913, 1.442695
  %v2915 = vpow.pop %v2914
  %v2916 = vadd.f32 %v2915, 1.0
  %v2917 = vrcp.pop %v2916
  %v2918 = vmul.f32 %v2916, %v2917
  %v2919 = vsub.f32 1.0, %v2918
  %v2920 = vmul.f32 %v2917, %v2919
  %v2921 = vadd.f32 %v2917, %v2920
  %vm2922 = vweird.f32 %v2916
  %vm2923 = vweird.f32 %v2917
  %vm2924 = vmor %vm2922, %vm2923
  %v2925 = vsel %vm2924, %v2917, %v2921
  %v2926 = vand.u32 2147483647, %v2916
  %vm2927 = vcmp.eq.f32.partialorder %v2926, 8.507059e+37
  %v2928 = vand.u32 %v2916, 2147483648
  %v2929 = vor.u32 1.1754944e-38, %v2928
  %v2930 = vsel %vm2927, %v2929, %v2925
  %v2931 = vmul.f32 1.0, %v2930
  %v2932 = vadd.f32 %v2867, %v2910
  %v2933 = vxor.u32 %v2932, 2147483648
  %v2934 = vmul.f32 %v2933, 1.442695
  %v2935 = vpow.pop %v2934
  %v2936 = vadd.f32 %v2935, 1.0
  %v2937 = vrcp.pop %v2936
  %v2938 = vmul.f32 %v2936, %v2937
  %v2939 = vsub.f32 1.0, %v2938
  %v2940 = vmul.f32 %v2937, %v2939
  %v2941 = vadd.f32 %v2937, %v2940
  %vm2942 = vweird.f32 %v2936
  %vm2943 = vweird.f32 %v2937
  %vm2944 = vmor %vm2942, %vm2943
  %v2945 = vsel %vm2944, %v2937, %v2941
  %v2946 = vand.u32 2147483647, %v2936
  %vm2947 = vcmp.eq.f32.partialorder %v2946, 8.507059e+37
  %v2948 = vand.u32 %v2936, 2147483648
  %v2949 = vor.u32 1.1754944e-38, %v2948
  %v2950 = vsel %vm2947, %v2949, %v2945
  %v2951 = vmul.f32 1.0, %v2950
  %2952 = vmatpush.msra.mxu0 0.0
  %2953 = vmatpush.msra.mxu0 0.0
  %2954 = vmatpush.msra.mxu0 0.0
  %2955 = vmatpush.msra.mxu0 0.0
  %2956 = vmatpush.msra.mxu0 0.0
  %2957 = vmatpush.msra.mxu0 0.0
  %2958 = vmatpush.msra.mxu0 0.0
  %2959 = vmatpush.msra.mxu0 0.0
  %2960 = vmatpush.msra.mxu0 0.0
  %2961 = vmatpush.msra.mxu0 0.0
  %2962 = vmatpush.msra.mxu0 0.0
  %2963 = vmatpush.msra.mxu0 0.0
  %2964 = vmatpush.msra.mxu0 %v2751
  %2965 = vmatpush.msra.mxu0 %v2750
  %2966 = vmatpush.msra.mxu0 %v2749
  %2967 = vmatpush.msra.mxu0 %v2748
  %2968 = vmatmul.f32.gmra.mxu0 %v2870
  %v2969 = vpop.f32.mrf.mxu0
  %v2970 = vadd.f32 %v2754, %v2969
  %2971 = vdwg.mxu0
  %v2972 = vmul.f32 %v2931, %v2970
  %v2973 = vadd.f32 %v2868, %v2972
  %v2974 = vtanh.pop %v2973
  %v2975 = vsub.f32 1.0, %v2951
  %v2976 = vmul.f32 %v2975, %v2974
  %v2977 = vmul.f32 %v2951, %v2865
  %v2978 = vadd.f32 %v2976, %v2977
  %v2979 = vld [vmem:[%s708] sm:$0x3]
  %v2980 = vld [vmem:[%s710] sm:$0x3]
  %v2981 = vld [vmem:[%s712] sm:$0x3]
  %v2983 = vsel %vm478, %v2978, 0
  %2985 = vmatpush.msra.mxu0 0.0
  %2986 = vmatpush.msra.mxu0 0.0
  %2987 = vmatpush.msra.mxu0 0.0
  %2988 = vmatpush.msra.mxu0 0.0
  %2989 = vmatpush.msra.mxu0 0.0
  %2990 = vmatpush.msra.mxu0 0.0
  %2991 = vmatpush.msra.mxu0 0.0
  %2992 = vmatpush.msra.mxu0 0.0
  %2993 = vmatpush.msra.mxu0 0.0
  %2994 = vmatpush.msra.mxu0 0.0
  %2995 = vmatpush.msra.mxu0 0.0
  %2996 = vmatpush.msra.mxu0 0.0
  %2997 = vmatpush.msra.mxu0 %v2743
  %2998 = vmatpush.msra.mxu0 %v2742
  %2999 = vmatpush.msra.mxu0 %v2741
  %3000 = vmatpush.msra.mxu0 %v2740
  %3001 = vmatmul.f32.gmra.mxu0 %v2983
  %v3002 = vpop.f32.mrf.mxu0
  %v3003 = vadd.f32 0.0, %v3002
  %3004 = vdwg.mxu0
  %3005 = vmatpush.msra.mxu0 0.0
  %3006 = vmatpush.msra.mxu0 0.0
  %3007 = vmatpush.msra.mxu0 0.0
  %3008 = vmatpush.msra.mxu0 0.0
  %3009 = vmatpush.msra.mxu0 0.0
  %3010 = vmatpush.msra.mxu0 0.0
  %3011 = vmatpush.msra.mxu0 0.0
  %3012 = vmatpush.msra.mxu0 0.0
  %3013 = vmatpush.msra.mxu0 0.0
  %3014 = vmatpush.msra.mxu0 0.0
  %3015 = vmatpush.msra.mxu0 0.0
  %3016 = vmatpush.msra.mxu0 0.0
  %3017 = vmatpush.msra.mxu0 %v2747
  %3018 = vmatpush.msra.mxu0 %v2746
  %3019 = vmatpush.msra.mxu0 %v2745
  %3020 = vmatpush.msra.mxu0 %v2744
  %3021 = vmatmul.f32.gmra.mxu0 %v2983
  %v3022 = vpop.f32.mrf.mxu0
  %v3023 = vadd.f32 0.0, %v3022
  %3024 = vdwg.mxu0
  %v3025 = vadd.f32 %v2979, %v3003
  %v3026 = vxor.u32 %v3025, 2147483648
  %v3027 = vmul.f32 %v3026, 1.442695
  %v3028 = vpow.pop %v3027
  %v3029 = vadd.f32 %v3028, 1.0
  %v3030 = vrcp.pop %v3029
  %v3031 = vmul.f32 %v3029, %v3030
  %v3032 = vsub.f32 1.0, %v3031
  %v3033 = vmul.f32 %v3030, %v3032
  %v3034 = vadd.f32 %v3030, %v3033
  %vm3035 = vweird.f32 %v3029
  %vm3036 = vweird.f32 %v3030
  %vm3037 = vmor %vm3035, %vm3036
  %v3038 = vsel %vm3037, %v3030, %v3034
  %v3039 = vand.u32 2147483647, %v3029
  %vm3040 = vcmp.eq.f32.partialorder %v3039, 8.507059e+37
  %v3041 = vand.u32 %v3029, 2147483648
  %v3042 = vor.u32 1.1754944e-38, %v3041
  %v3043 = vsel %vm3040, %v3042, %v3038
  %v3044 = vmul.f32 1.0, %v3043
  %v3045 = vadd.f32 %v2980, %v3023
  %v3046 = vxor.u32 %v3045, 2147483648
  %v3047 = vmul.f32 %v3046, 1.442695
  %v3048 = vpow.pop %v3047
  %v3049 = vadd.f32 %v3048, 1.0
  %v3050 = vrcp.pop %v3049
  %v3051 = vmul.f32 %v3049, %v3050
  %v3052 = vsub.f32 1.0, %v3051
  %v3053 = vmul.f32 %v3050, %v3052
  %v3054 = vadd.f32 %v3050, %v3053
  %vm3055 = vweird.f32 %v3049
  %vm3056 = vweird.f32 %v3050
  %vm3057 = vmor %vm3055, %vm3056
  %v3058 = vsel %vm3057, %v3050, %v3054
  %v3059 = vand.u32 2147483647, %v3049
  %vm3060 = vcmp.eq.f32.partialorder %v3059, 8.507059e+37
  %v3061 = vand.u32 %v3049, 2147483648
  %v3062 = vor.u32 1.1754944e-38, %v3061
  %v3063 = vsel %vm3060, %v3062, %v3058
  %v3064 = vmul.f32 1.0, %v3063
  %3065 = vmatpush.msra.mxu0 0.0
  %3066 = vmatpush.msra.mxu0 0.0
  %3067 = vmatpush.msra.mxu0 0.0
  %3068 = vmatpush.msra.mxu0 0.0
  %3069 = vmatpush.msra.mxu0 0.0
  %3070 = vmatpush.msra.mxu0 0.0
  %3071 = vmatpush.msra.mxu0 0.0
  %3072 = vmatpush.msra.mxu0 0.0
  %3073 = vmatpush.msra.mxu0 0.0
  %3074 = vmatpush.msra.mxu0 0.0
  %3075 = vmatpush.msra.mxu0 0.0
  %3076 = vmatpush.msra.mxu0 0.0
  %3077 = vmatpush.msra.mxu0 %v2751
  %3078 = vmatpush.msra.mxu0 %v2750
  %3079 = vmatpush.msra.mxu0 %v2749
  %3080 = vmatpush.msra.mxu0 %v2748
  %3081 = vmatmul.f32.gmra.mxu0 %v2983
  %v3082 = vpop.f32.mrf.mxu0
  %v3083 = vadd.f32 %v2754, %v3082
  %3084 = vdwg.mxu0
  %v3085 = vmul.f32 %v3044, %v3083
  %v3086 = vadd.f32 %v2981, %v3085
  %v3087 = vtanh.pop %v3086
  %v3088 = vsub.f32 1.0, %v3064
  %v3089 = vmul.f32 %v3088, %v3087
  %v3090 = vmul.f32 %v3064, %v2978
  %v3091 = vadd.f32 %v3089, %v3090
  %v3092 = vld [vmem:[%s826] sm:$0x3]
  %v3093 = vld [vmem:[%s828] sm:$0x3]
  %v3094 = vld [vmem:[%s830] sm:$0x3]
  %v3096 = vsel %vm478, %v3091, 0
  %3098 = vmatpush.msra.mxu0 0.0
  %3099 = vmatpush.msra.mxu0 0.0
  %3100 = vmatpush.msra.mxu0 0.0
  %3101 = vmatpush.msra.mxu0 0.0
  %3102 = vmatpush.msra.mxu0 0.0
  %3103 = vmatpush.msra.mxu0 0.0
  %3104 = vmatpush.msra.mxu0 0.0
  %3105 = vmatpush.msra.mxu0 0.0
  %3106 = vmatpush.msra.mxu0 0.0
  %3107 = vmatpush.msra.mxu0 0.0
  %3108 = vmatpush.msra.mxu0 0.0
  %3109 = vmatpush.msra.mxu0 0.0
  %3110 = vmatpush.msra.mxu0 %v2743
  %3111 = vmatpush.msra.mxu0 %v2742
  %3112 = vmatpush.msra.mxu0 %v2741
  %3113 = vmatpush.msra.mxu0 %v2740
  %3114 = vmatmul.f32.gmra.mxu0 %v3096
  %v3115 = vpop.f32.mrf.mxu0
  %v3116 = vadd.f32 0.0, %v3115
  %3117 = vdwg.mxu0
  %3118 = vmatpush.msra.mxu0 0.0
  %3119 = vmatpush.msra.mxu0 0.0
  %3120 = vmatpush.msra.mxu0 0.0
  %3121 = vmatpush.msra.mxu0 0.0
  %3122 = vmatpush.msra.mxu0 0.0
  %3123 = vmatpush.msra.mxu0 0.0
  %3124 = vmatpush.msra.mxu0 0.0
  %3125 = vmatpush.msra.mxu0 0.0
  %3126 = vmatpush.msra.mxu0 0.0
  %3127 = vmatpush.msra.mxu0 0.0
  %3128 = vmatpush.msra.mxu0 0.0
  %3129 = vmatpush.msra.mxu0 0.0
  %3130 = vmatpush.msra.mxu0 %v2747
  %3131 = vmatpush.msra.mxu0 %v2746
  %3132 = vmatpush.msra.mxu0 %v2745
  %3133 = vmatpush.msra.mxu0 %v2744
  %3134 = vmatmul.f32.gmra.mxu0 %v3096
  %v3135 = vpop.f32.mrf.mxu0
  %v3136 = vadd.f32 0.0, %v3135
  %3137 = vdwg.mxu0
  %v3138 = vadd.f32 %v3092, %v3116
  %v3139 = vxor.u32 %v3138, 2147483648
  %v3140 = vmul.f32 %v3139, 1.442695
  %v3141 = vpow.pop %v3140
  %v3142 = vadd.f32 %v3141, 1.0
  %v3143 = vrcp.pop %v3142
  %v3144 = vmul.f32 %v3142, %v3143
  %v3145 = vsub.f32 1.0, %v3144
  %v3146 = vmul.f32 %v3143, %v3145
  %v3147 = vadd.f32 %v3143, %v3146
  %vm3148 = vweird.f32 %v3142
  %vm3149 = vweird.f32 %v3143
  %vm3150 = vmor %vm3148, %vm3149
  %v3151 = vsel %vm3150, %v3143, %v3147
  %v3152 = vand.u32 2147483647, %v3142
  %vm3153 = vcmp.eq.f32.partialorder %v3152, 8.507059e+37
  %v3154 = vand.u32 %v3142, 2147483648
  %v3155 = vor.u32 1.1754944e-38, %v3154
  %v3156 = vsel %vm3153, %v3155, %v3151
  %v3157 = vmul.f32 1.0, %v3156
  %v3158 = vadd.f32 %v3093, %v3136
  %v3159 = vxor.u32 %v3158, 2147483648
  %v3160 = vmul.f32 %v3159, 1.442695
  %v3161 = vpow.pop %v3160
  %v3162 = vadd.f32 %v3161, 1.0
  %v3163 = vrcp.pop %v3162
  %v3164 = vmul.f32 %v3162, %v3163
  %v3165 = vsub.f32 1.0, %v3164
  %v3166 = vmul.f32 %v3163, %v3165
  %v3167 = vadd.f32 %v3163, %v3166
  %vm3168 = vweird.f32 %v3162
  %vm3169 = vweird.f32 %v3163
  %vm3170 = vmor %vm3168, %vm3169
  %v3171 = vsel %vm3170, %v3163, %v3167
  %v3172 = vand.u32 2147483647, %v3162
  %vm3173 = vcmp.eq.f32.partialorder %v3172, 8.507059e+37
  %v3174 = vand.u32 %v3162, 2147483648
  %v3175 = vor.u32 1.1754944e-38, %v3174
  %v3176 = vsel %vm3173, %v3175, %v3171
  %v3177 = vmul.f32 1.0, %v3176
  %3178 = vmatpush.msra.mxu0 0.0
  %3179 = vmatpush.msra.mxu0 0.0
  %3180 = vmatpush.msra.mxu0 0.0
  %3181 = vmatpush.msra.mxu0 0.0
  %3182 = vmatpush.msra.mxu0 0.0
  %3183 = vmatpush.msra.mxu0 0.0
  %3184 = vmatpush.msra.mxu0 0.0
  %3185 = vmatpush.msra.mxu0 0.0
  %3186 = vmatpush.msra.mxu0 0.0
  %3187 = vmatpush.msra.mxu0 0.0
  %3188 = vmatpush.msra.mxu0 0.0
  %3189 = vmatpush.msra.mxu0 0.0
  %3190 = vmatpush.msra.mxu0 %v2751
  %3191 = vmatpush.msra.mxu0 %v2750
  %3192 = vmatpush.msra.mxu0 %v2749
  %3193 = vmatpush.msra.mxu0 %v2748
  %3194 = vmatmul.f32.gmra.mxu0 %v3096
  %v3195 = vpop.f32.mrf.mxu0
  %v3196 = vadd.f32 %v2754, %v3195
  %3197 = vdwg.mxu0
  %v3198 = vmul.f32 %v3157, %v3196
  %v3199 = vadd.f32 %v3094, %v3198
  %v3200 = vtanh.pop %v3199
  %v3201 = vsub.f32 1.0, %v3177
  %v3202 = vmul.f32 %v3201, %v3200
  %v3203 = vmul.f32 %v3177, %v3091
  %v3204 = vadd.f32 %v3202, %v3203
  %v3205 = vld [vmem:[%s944] sm:$0x3]
  %v3206 = vld [vmem:[%s946] sm:$0x3]
  %v3207 = vld [vmem:[%s948] sm:$0x3]
  %v3209 = vsel %vm478, %v3204, 0
  %3211 = vmatpush.msra.mxu0 0.0
  %3212 = vmatpush.msra.mxu0 0.0
  %3213 = vmatpush.msra.mxu0 0.0
  %3214 = vmatpush.msra.mxu0 0.0
  %3215 = vmatpush.msra.mxu0 0.0
  %3216 = vmatpush.msra.mxu0 0.0
  %3217 = vmatpush.msra.mxu0 0.0
  %3218 = vmatpush.msra.mxu0 0.0
  %3219 = vmatpush.msra.mxu0 0.0
  %3220 = vmatpush.msra.mxu0 0.0
  %3221 = vmatpush.msra.mxu0 0.0
  %3222 = vmatpush.msra.mxu0 0.0
  %3223 = vmatpush.msra.mxu0 %v2743
  %3224 = vmatpush.msra.mxu0 %v2742
  %3225 = vmatpush.msra.mxu0 %v2741
  %3226 = vmatpush.msra.mxu0 %v2740
  %3227 = vmatmul.f32.gmra.mxu0 %v3209
  %v3228 = vpop.f32.mrf.mxu0
  %v3229 = vadd.f32 0.0, %v3228
  %3230 = vdwg.mxu0
  %3231 = vmatpush.msra.mxu0 0.0
  %3232 = vmatpush.msra.mxu0 0.0
  %3233 = vmatpush.msra.mxu0 0.0
  %3234 = vmatpush.msra.mxu0 0.0
  %3235 = vmatpush.msra.mxu0 0.0
  %3236 = vmatpush.msra.mxu0 0.0
  %3237 = vmatpush.msra.mxu0 0.0
  %3238 = vmatpush.msra.mxu0 0.0
  %3239 = vmatpush.msra.mxu0 0.0
  %3240 = vmatpush.msra.mxu0 0.0
  %3241 = vmatpush.msra.mxu0 0.0
  %3242 = vmatpush.msra.mxu0 0.0
  %3243 = vmatpush.msra.mxu0 %v2747
  %3244 = vmatpush.msra.mxu0 %v2746
  %3245 = vmatpush.msra.mxu0 %v2745
  %3246 = vmatpush.msra.mxu0 %v2744
  %3247 = vmatmul.f32.gmra.mxu0 %v3209
  %v3248 = vpop.f32.mrf.mxu0
  %v3249 = vadd.f32 0.0, %v3248
  %3250 = vdwg.mxu0
  %v3251 = vadd.f32 %v3205, %v3229
  %v3252 = vxor.u32 %v3251, 2147483648
  %v3253 = vmul.f32 %v3252, 1.442695
  %v3254 = vpow.pop %v3253
  %v3255 = vadd.f32 %v3254, 1.0
  %v3256 = vrcp.pop %v3255
  %v3257 = vmul.f32 %v3255, %v3256
  %v3258 = vsub.f32 1.0, %v3257
  %v3259 = vmul.f32 %v3256, %v3258
  %v3260 = vadd.f32 %v3256, %v3259
  %vm3261 = vweird.f32 %v3255
  %vm3262 = vweird.f32 %v3256
  %vm3263 = vmor %vm3261, %vm3262
  %v3264 = vsel %vm3263, %v3256, %v3260
  %v3265 = vand.u32 2147483647, %v3255
  %vm3266 = vcmp.eq.f32.partialorder %v3265, 8.507059e+37
  %v3267 = vand.u32 %v3255, 2147483648
  %v3268 = vor.u32 1.1754944e-38, %v3267
  %v3269 = vsel %vm3266, %v3268, %v3264
  %v3270 = vmul.f32 1.0, %v3269
  %v3271 = vadd.f32 %v3206, %v3249
  %v3272 = vxor.u32 %v3271, 2147483648
  %v3273 = vmul.f32 %v3272, 1.442695
  %v3274 = vpow.pop %v3273
  %v3275 = vadd.f32 %v3274, 1.0
  %v3276 = vrcp.pop %v3275
  %v3277 = vmul.f32 %v3275, %v3276
  %v3278 = vsub.f32 1.0, %v3277
  %v3279 = vmul.f32 %v3276, %v3278
  %v3280 = vadd.f32 %v3276, %v3279
  %vm3281 = vweird.f32 %v3275
  %vm3282 = vweird.f32 %v3276
  %vm3283 = vmor %vm3281, %vm3282
  %v3284 = vsel %vm3283, %v3276, %v3280
  %v3285 = vand.u32 2147483647, %v3275
  %vm3286 = vcmp.eq.f32.partialorder %v3285, 8.507059e+37
  %v3287 = vand.u32 %v3275, 2147483648
  %v3288 = vor.u32 1.1754944e-38, %v3287
  %v3289 = vsel %vm3286, %v3288, %v3284
  %v3290 = vmul.f32 1.0, %v3289
  %3291 = vmatpush.msra.mxu0 0.0
  %3292 = vmatpush.msra.mxu0 0.0
  %3293 = vmatpush.msra.mxu0 0.0
  %3294 = vmatpush.msra.mxu0 0.0
  %3295 = vmatpush.msra.mxu0 0.0
  %3296 = vmatpush.msra.mxu0 0.0
  %3297 = vmatpush.msra.mxu0 0.0
  %3298 = vmatpush.msra.mxu0 0.0
  %3299 = vmatpush.msra.mxu0 0.0
  %3300 = vmatpush.msra.mxu0 0.0
  %3301 = vmatpush.msra.mxu0 0.0
  %3302 = vmatpush.msra.mxu0 0.0
  %3303 = vmatpush.msra.mxu0 %v2751
  %3304 = vmatpush.msra.mxu0 %v2750
  %3305 = vmatpush.msra.mxu0 %v2749
  %3306 = vmatpush.msra.mxu0 %v2748
  %3307 = vmatmul.f32.gmra.mxu0 %v3209
  %v3308 = vpop.f32.mrf.mxu0
  %v3309 = vadd.f32 %v2754, %v3308
  %3310 = vdwg.mxu0
  %v3311 = vmul.f32 %v3270, %v3309
  %v3312 = vadd.f32 %v3207, %v3311
  %v3313 = vtanh.pop %v3312
  %v3314 = vsub.f32 1.0, %v3290
  %v3315 = vmul.f32 %v3314, %v3313
  %v3316 = vmul.f32 %v3290, %v3204
  %v3317 = vadd.f32 %v3315, %v3316
  %v3318 = vld [vmem:[%s1062] sm:$0x3]
  %v3319 = vld [vmem:[%s1064] sm:$0x3]
  %v3320 = vld [vmem:[%s1066] sm:$0x3]
  %v3322 = vsel %vm478, %v3317, 0
  %3324 = vmatpush.msra.mxu0 0.0
  %3325 = vmatpush.msra.mxu0 0.0
  %3326 = vmatpush.msra.mxu0 0.0
  %3327 = vmatpush.msra.mxu0 0.0
  %3328 = vmatpush.msra.mxu0 0.0
  %3329 = vmatpush.msra.mxu0 0.0
  %3330 = vmatpush.msra.mxu0 0.0
  %3331 = vmatpush.msra.mxu0 0.0
  %3332 = vmatpush.msra.mxu0 0.0
  %3333 = vmatpush.msra.mxu0 0.0
  %3334 = vmatpush.msra.mxu0 0.0
  %3335 = vmatpush.msra.mxu0 0.0
  %3336 = vmatpush.msra.mxu0 %v2743
  %3337 = vmatpush.msra.mxu0 %v2742
  %3338 = vmatpush.msra.mxu0 %v2741
  %3339 = vmatpush.msra.mxu0 %v2740
  %3340 = vmatmul.f32.gmra.mxu0 %v3322
  %v3341 = vpop.f32.mrf.mxu0
  %v3342 = vadd.f32 0.0, %v3341
  %3343 = vdwg.mxu0
  %3344 = vmatpush.msra.mxu0 0.0
  %3345 = vmatpush.msra.mxu0 0.0
  %3346 = vmatpush.msra.mxu0 0.0
  %3347 = vmatpush.msra.mxu0 0.0
  %3348 = vmatpush.msra.mxu0 0.0
  %3349 = vmatpush.msra.mxu0 0.0
  %3350 = vmatpush.msra.mxu0 0.0
  %3351 = vmatpush.msra.mxu0 0.0
  %3352 = vmatpush.msra.mxu0 0.0
  %3353 = vmatpush.msra.mxu0 0.0
  %3354 = vmatpush.msra.mxu0 0.0
  %3355 = vmatpush.msra.mxu0 0.0
  %3356 = vmatpush.msra.mxu0 %v2747
  %3357 = vmatpush.msra.mxu0 %v2746
  %3358 = vmatpush.msra.mxu0 %v2745
  %3359 = vmatpush.msra.mxu0 %v2744
  %3360 = vmatmul.f32.gmra.mxu0 %v3322
  %v3361 = vpop.f32.mrf.mxu0
  %v3362 = vadd.f32 0.0, %v3361
  %3363 = vdwg.mxu0
  %v3364 = vadd.f32 %v3318, %v3342
  %v3365 = vxor.u32 %v3364, 2147483648
  %v3366 = vmul.f32 %v3365, 1.442695
  %v3367 = vpow.pop %v3366
  %v3368 = vadd.f32 %v3367, 1.0
  %v3369 = vrcp.pop %v3368
  %v3370 = vmul.f32 %v3368, %v3369
  %v3371 = vsub.f32 1.0, %v3370
  %v3372 = vmul.f32 %v3369, %v3371
  %v3373 = vadd.f32 %v3369, %v3372
  %vm3374 = vweird.f32 %v3368
  %vm3375 = vweird.f32 %v3369
  %vm3376 = vmor %vm3374, %vm3375
  %v3377 = vsel %vm3376, %v3369, %v3373
  %v3378 = vand.u32 2147483647, %v3368
  %vm3379 = vcmp.eq.f32.partialorder %v3378, 8.507059e+37
  %v3380 = vand.u32 %v3368, 2147483648
  %v3381 = vor.u32 1.1754944e-38, %v3380
  %v3382 = vsel %vm3379, %v3381, %v3377
  %v3383 = vmul.f32 1.0, %v3382
  %v3384 = vadd.f32 %v3319, %v3362
  %v3385 = vxor.u32 %v3384, 2147483648
  %v3386 = vmul.f32 %v3385, 1.442695
  %v3387 = vpow.pop %v3386
  %v3388 = vadd.f32 %v3387, 1.0
  %v3389 = vrcp.pop %v3388
  %v3390 = vmul.f32 %v3388, %v3389
  %v3391 = vsub.f32 1.0, %v3390
  %v3392 = vmul.f32 %v3389, %v3391
  %v3393 = vadd.f32 %v3389, %v3392
  %vm3394 = vweird.f32 %v3388
  %vm3395 = vweird.f32 %v3389
  %vm3396 = vmor %vm3394, %vm3395
  %v3397 = vsel %vm3396, %v3389, %v3393
  %v3398 = vand.u32 2147483647, %v3388
  %vm3399 = vcmp.eq.f32.partialorder %v3398, 8.507059e+37
  %v3400 = vand.u32 %v3388, 2147483648
  %v3401 = vor.u32 1.1754944e-38, %v3400
  %v3402 = vsel %vm3399, %v3401, %v3397
  %v3403 = vmul.f32 1.0, %v3402
  %3404 = vmatpush.msra.mxu0 0.0
  %3405 = vmatpush.msra.mxu0 0.0
  %3406 = vmatpush.msra.mxu0 0.0
  %3407 = vmatpush.msra.mxu0 0.0
  %3408 = vmatpush.msra.mxu0 0.0
  %3409 = vmatpush.msra.mxu0 0.0
  %3410 = vmatpush.msra.mxu0 0.0
  %3411 = vmatpush.msra.mxu0 0.0
  %3412 = vmatpush.msra.mxu0 0.0
  %3413 = vmatpush.msra.mxu0 0.0
  %3414 = vmatpush.msra.mxu0 0.0
  %3415 = vmatpush.msra.mxu0 0.0
  %3416 = vmatpush.msra.mxu0 %v2751
  %3417 = vmatpush.msra.mxu0 %v2750
  %3418 = vmatpush.msra.mxu0 %v2749
  %3419 = vmatpush.msra.mxu0 %v2748
  %3420 = vmatmul.f32.gmra.mxu0 %v3322
  %v3421 = vpop.f32.mrf.mxu0
  %v3422 = vadd.f32 %v2754, %v3421
  %3423 = vdwg.mxu0
  %v3424 = vmul.f32 %v3383, %v3422
  %v3425 = vadd.f32 %v3320, %v3424
  %v3426 = vtanh.pop %v3425
  %v3427 = vsub.f32 1.0, %v3403
  %v3428 = vmul.f32 %v3427, %v3426
  %v3429 = vmul.f32 %v3403, %v3317
  %v3430 = vadd.f32 %v3428, %v3429
  %v3431 = vld [vmem:[%s1180] sm:$0x3]
  %v3432 = vld [vmem:[%s1182] sm:$0x3]
  %v3433 = vld [vmem:[%s1184] sm:$0x3]
  %v3435 = vsel %vm478, %v3430, 0
  %3437 = vmatpush.msra.mxu0 0.0
  %3438 = vmatpush.msra.mxu0 0.0
  %3439 = vmatpush.msra.mxu0 0.0
  %3440 = vmatpush.msra.mxu0 0.0
  %3441 = vmatpush.msra.mxu0 0.0
  %3442 = vmatpush.msra.mxu0 0.0
  %3443 = vmatpush.msra.mxu0 0.0
  %3444 = vmatpush.msra.mxu0 0.0
  %3445 = vmatpush.msra.mxu0 0.0
  %3446 = vmatpush.msra.mxu0 0.0
  %3447 = vmatpush.msra.mxu0 0.0
  %3448 = vmatpush.msra.mxu0 0.0
  %3449 = vmatpush.msra.mxu0 %v2743
  %3450 = vmatpush.msra.mxu0 %v2742
  %3451 = vmatpush.msra.mxu0 %v2741
  %3452 = vmatpush.msra.mxu0 %v2740
  %3453 = vmatmul.f32.gmra.mxu0 %v3435
  %v3454 = vpop.f32.mrf.mxu0
  %v3455 = vadd.f32 0.0, %v3454
  %3456 = vdwg.mxu0
  %3457 = vmatpush.msra.mxu0 0.0
  %3458 = vmatpush.msra.mxu0 0.0
  %3459 = vmatpush.msra.mxu0 0.0
  %3460 = vmatpush.msra.mxu0 0.0
  %3461 = vmatpush.msra.mxu0 0.0
  %3462 = vmatpush.msra.mxu0 0.0
  %3463 = vmatpush.msra.mxu0 0.0
  %3464 = vmatpush.msra.mxu0 0.0
  %3465 = vmatpush.msra.mxu0 0.0
  %3466 = vmatpush.msra.mxu0 0.0
  %3467 = vmatpush.msra.mxu0 0.0
  %3468 = vmatpush.msra.mxu0 0.0
  %3469 = vmatpush.msra.mxu0 %v2747
  %3470 = vmatpush.msra.mxu0 %v2746
  %3471 = vmatpush.msra.mxu0 %v2745
  %3472 = vmatpush.msra.mxu0 %v2744
  %3473 = vmatmul.f32.gmra.mxu0 %v3435
  %v3474 = vpop.f32.mrf.mxu0
  %v3475 = vadd.f32 0.0, %v3474
  %3476 = vdwg.mxu0
  %v3477 = vadd.f32 %v3431, %v3455
  %v3478 = vxor.u32 %v3477, 2147483648
  %v3479 = vmul.f32 %v3478, 1.442695
  %v3480 = vpow.pop %v3479
  %v3481 = vadd.f32 %v3480, 1.0
  %v3482 = vrcp.pop %v3481
  %v3483 = vmul.f32 %v3481, %v3482
  %v3484 = vsub.f32 1.0, %v3483
  %v3485 = vmul.f32 %v3482, %v3484
  %v3486 = vadd.f32 %v3482, %v3485
  %vm3487 = vweird.f32 %v3481
  %vm3488 = vweird.f32 %v3482
  %vm3489 = vmor %vm3487, %vm3488
  %v3490 = vsel %vm3489, %v3482, %v3486
  %v3491 = vand.u32 2147483647, %v3481
  %vm3492 = vcmp.eq.f32.partialorder %v3491, 8.507059e+37
  %v3493 = vand.u32 %v3481, 2147483648
  %v3494 = vor.u32 1.1754944e-38, %v3493
  %v3495 = vsel %vm3492, %v3494, %v3490
  %v3496 = vmul.f32 1.0, %v3495
  %v3497 = vadd.f32 %v3432, %v3475
  %v3498 = vxor.u32 %v3497, 2147483648
  %v3499 = vmul.f32 %v3498, 1.442695
  %v3500 = vpow.pop %v3499
  %v3501 = vadd.f32 %v3500, 1.0
  %v3502 = vrcp.pop %v3501
  %v3503 = vmul.f32 %v3501, %v3502
  %v3504 = vsub.f32 1.0, %v3503
  %v3505 = vmul.f32 %v3502, %v3504
  %v3506 = vadd.f32 %v3502, %v3505
  %vm3507 = vweird.f32 %v3501
  %vm3508 = vweird.f32 %v3502
  %vm3509 = vmor %vm3507, %vm3508
  %v3510 = vsel %vm3509, %v3502, %v3506
  %v3511 = vand.u32 2147483647, %v3501
  %vm3512 = vcmp.eq.f32.partialorder %v3511, 8.507059e+37
  %v3513 = vand.u32 %v3501, 2147483648
  %v3514 = vor.u32 1.1754944e-38, %v3513
  %v3515 = vsel %vm3512, %v3514, %v3510
  %v3516 = vmul.f32 1.0, %v3515
  %3517 = vmatpush.msra.mxu0 0.0
  %3518 = vmatpush.msra.mxu0 0.0
  %3519 = vmatpush.msra.mxu0 0.0
  %3520 = vmatpush.msra.mxu0 0.0
  %3521 = vmatpush.msra.mxu0 0.0
  %3522 = vmatpush.msra.mxu0 0.0
  %3523 = vmatpush.msra.mxu0 0.0
  %3524 = vmatpush.msra.mxu0 0.0
  %3525 = vmatpush.msra.mxu0 0.0
  %3526 = vmatpush.msra.mxu0 0.0
  %3527 = vmatpush.msra.mxu0 0.0
  %3528 = vmatpush.msra.mxu0 0.0
  %3529 = vmatpush.msra.mxu0 %v2751
  %3530 = vmatpush.msra.mxu0 %v2750
  %3531 = vmatpush.msra.mxu0 %v2749
  %3532 = vmatpush.msra.mxu0 %v2748
  %3533 = vmatmul.f32.gmra.mxu0 %v3435
  %v3534 = vpop.f32.mrf.mxu0
  %v3535 = vadd.f32 %v2754, %v3534
  %3536 = vdwg.mxu0
  %v3537 = vmul.f32 %v3496, %v3535
  %v3538 = vadd.f32 %v3433, %v3537
  %v3539 = vtanh.pop %v3538
  %v3540 = vsub.f32 1.0, %v3516
  %v3541 = vmul.f32 %v3540, %v3539
  %v3542 = vmul.f32 %v3516, %v3430
  %v3543 = vadd.f32 %v3541, %v3542
  %v3544 = vld [vmem:[%s1298] sm:$0x3]
  %v3545 = vld [vmem:[%s1300] sm:$0x3]
  %v3546 = vld [vmem:[%s1302] sm:$0x3]
  %v3548 = vsel %vm478, %v3543, 0
  %3550 = vmatpush.msra.mxu0 0.0
  %3551 = vmatpush.msra.mxu0 0.0
  %3552 = vmatpush.msra.mxu0 0.0
  %3553 = vmatpush.msra.mxu0 0.0
  %3554 = vmatpush.msra.mxu0 0.0
  %3555 = vmatpush.msra.mxu0 0.0
  %3556 = vmatpush.msra.mxu0 0.0
  %3557 = vmatpush.msra.mxu0 0.0
  %3558 = vmatpush.msra.mxu0 0.0
  %3559 = vmatpush.msra.mxu0 0.0
  %3560 = vmatpush.msra.mxu0 0.0
  %3561 = vmatpush.msra.mxu0 0.0
  %3562 = vmatpush.msra.mxu0 %v2743
  %3563 = vmatpush.msra.mxu0 %v2742
  %3564 = vmatpush.msra.mxu0 %v2741
  %3565 = vmatpush.msra.mxu0 %v2740
  %3566 = vmatmul.f32.gmra.mxu0 %v3548
  %v3567 = vpop.f32.mrf.mxu0
  %v3568 = vadd.f32 0.0, %v3567
  %3569 = vdwg.mxu0
  %3570 = vmatpush.msra.mxu0 0.0
  %3571 = vmatpush.msra.mxu0 0.0
  %3572 = vmatpush.msra.mxu0 0.0
  %3573 = vmatpush.msra.mxu0 0.0
  %3574 = vmatpush.msra.mxu0 0.0
  %3575 = vmatpush.msra.mxu0 0.0
  %3576 = vmatpush.msra.mxu0 0.0
  %3577 = vmatpush.msra.mxu0 0.0
  %3578 = vmatpush.msra.mxu0 0.0
  %3579 = vmatpush.msra.mxu0 0.0
  %3580 = vmatpush.msra.mxu0 0.0
  %3581 = vmatpush.msra.mxu0 0.0
  %3582 = vmatpush.msra.mxu0 %v2747
  %3583 = vmatpush.msra.mxu0 %v2746
  %3584 = vmatpush.msra.mxu0 %v2745
  %3585 = vmatpush.msra.mxu0 %v2744
  %3586 = vmatmul.f32.gmra.mxu0 %v3548
  %v3587 = vpop.f32.mrf.mxu0
  %v3588 = vadd.f32 0.0, %v3587
  %3589 = vdwg.mxu0
  %v3590 = vadd.f32 %v3544, %v3568
  %v3591 = vxor.u32 %v3590, 2147483648
  %v3592 = vmul.f32 %v3591, 1.442695
  %v3593 = vpow.pop %v3592
  %v3594 = vadd.f32 %v3593, 1.0
  %v3595 = vrcp.pop %v3594
  %v3596 = vmul.f32 %v3594, %v3595
  %v3597 = vsub.f32 1.0, %v3596
  %v3598 = vmul.f32 %v3595, %v3597
  %v3599 = vadd.f32 %v3595, %v3598
  %vm3600 = vweird.f32 %v3594
  %vm3601 = vweird.f32 %v3595
  %vm3602 = vmor %vm3600, %vm3601
  %v3603 = vsel %vm3602, %v3595, %v3599
  %v3604 = vand.u32 2147483647, %v3594
  %vm3605 = vcmp.eq.f32.partialorder %v3604, 8.507059e+37
  %v3606 = vand.u32 %v3594, 2147483648
  %v3607 = vor.u32 1.1754944e-38, %v3606
  %v3608 = vsel %vm3605, %v3607, %v3603
  %v3609 = vmul.f32 1.0, %v3608
  %v3610 = vadd.f32 %v3545, %v3588
  %v3611 = vxor.u32 %v3610, 2147483648
  %v3612 = vmul.f32 %v3611, 1.442695
  %v3613 = vpow.pop %v3612
  %v3614 = vadd.f32 %v3613, 1.0
  %v3615 = vrcp.pop %v3614
  %v3616 = vmul.f32 %v3614, %v3615
  %v3617 = vsub.f32 1.0, %v3616
  %v3618 = vmul.f32 %v3615, %v3617
  %v3619 = vadd.f32 %v3615, %v3618
  %vm3620 = vweird.f32 %v3614
  %vm3621 = vweird.f32 %v3615
  %vm3622 = vmor %vm3620, %vm3621
  %v3623 = vsel %vm3622, %v3615, %v3619
  %v3624 = vand.u32 2147483647, %v3614
  %vm3625 = vcmp.eq.f32.partialorder %v3624, 8.507059e+37
  %v3626 = vand.u32 %v3614, 2147483648
  %v3627 = vor.u32 1.1754944e-38, %v3626
  %v3628 = vsel %vm3625, %v3627, %v3623
  %v3629 = vmul.f32 1.0, %v3628
  %3630 = vmatpush.msra.mxu0 0.0
  %3631 = vmatpush.msra.mxu0 0.0
  %3632 = vmatpush.msra.mxu0 0.0
  %3633 = vmatpush.msra.mxu0 0.0
  %3634 = vmatpush.msra.mxu0 0.0
  %3635 = vmatpush.msra.mxu0 0.0
  %3636 = vmatpush.msra.mxu0 0.0
  %3637 = vmatpush.msra.mxu0 0.0
  %3638 = vmatpush.msra.mxu0 0.0
  %3639 = vmatpush.msra.mxu0 0.0
  %3640 = vmatpush.msra.mxu0 0.0
  %3641 = vmatpush.msra.mxu0 0.0
  %3642 = vmatpush.msra.mxu0 %v2751
  %3643 = vmatpush.msra.mxu0 %v2750
  %3644 = vmatpush.msra.mxu0 %v2749
  %3645 = vmatpush.msra.mxu0 %v2748
  %3646 = vmatmul.f32.gmra.mxu0 %v3548
  %v3647 = vpop.f32.mrf.mxu0
  %v3648 = vadd.f32 %v2754, %v3647
  %3649 = vdwg.mxu0
  %v3650 = vmul.f32 %v3609, %v3648
  %v3651 = vadd.f32 %v3546, %v3650
  %v3652 = vtanh.pop %v3651
  %v3653 = vsub.f32 1.0, %v3629
  %v3654 = vmul.f32 %v3653, %v3652
  %v3655 = vmul.f32 %v3629, %v3543
  %v3656 = vadd.f32 %v3654, %v3655
  %v3657 = vld [vmem:[%s1416] sm:$0x3]
  %v3658 = vld [vmem:[%s1418] sm:$0x3]
  %v3659 = vld [vmem:[%s1420] sm:$0x3]
  %v3661 = vsel %vm478, %v3656, 0
  %3663 = vmatpush.msra.mxu0 0.0
  %3664 = vmatpush.msra.mxu0 0.0
  %3665 = vmatpush.msra.mxu0 0.0
  %3666 = vmatpush.msra.mxu0 0.0
  %3667 = vmatpush.msra.mxu0 0.0
  %3668 = vmatpush.msra.mxu0 0.0
  %3669 = vmatpush.msra.mxu0 0.0
  %3670 = vmatpush.msra.mxu0 0.0
  %3671 = vmatpush.msra.mxu0 0.0
  %3672 = vmatpush.msra.mxu0 0.0
  %3673 = vmatpush.msra.mxu0 0.0
  %3674 = vmatpush.msra.mxu0 0.0
  %3675 = vmatpush.msra.mxu0 %v2743
  %3676 = vmatpush.msra.mxu0 %v2742
  %3677 = vmatpush.msra.mxu0 %v2741
  %3678 = vmatpush.msra.mxu0 %v2740
  %3679 = vmatmul.f32.gmra.mxu0 %v3661
  %v3680 = vpop.f32.mrf.mxu0
  %v3681 = vadd.f32 0.0, %v3680
  %3682 = vdwg.mxu0
  %3683 = vmatpush.msra.mxu0 0.0
  %3684 = vmatpush.msra.mxu0 0.0
  %3685 = vmatpush.msra.mxu0 0.0
  %3686 = vmatpush.msra.mxu0 0.0
  %3687 = vmatpush.msra.mxu0 0.0
  %3688 = vmatpush.msra.mxu0 0.0
  %3689 = vmatpush.msra.mxu0 0.0
  %3690 = vmatpush.msra.mxu0 0.0
  %3691 = vmatpush.msra.mxu0 0.0
  %3692 = vmatpush.msra.mxu0 0.0
  %3693 = vmatpush.msra.mxu0 0.0
  %3694 = vmatpush.msra.mxu0 0.0
  %3695 = vmatpush.msra.mxu0 %v2747
  %3696 = vmatpush.msra.mxu0 %v2746
  %3697 = vmatpush.msra.mxu0 %v2745
  %3698 = vmatpush.msra.mxu0 %v2744
  %3699 = vmatmul.f32.gmra.mxu0 %v3661
  %v3700 = vpop.f32.mrf.mxu0
  %v3701 = vadd.f32 0.0, %v3700
  %3702 = vdwg.mxu0
  %v3703 = vadd.f32 %v3657, %v3681
  %v3704 = vxor.u32 %v3703, 2147483648
  %v3705 = vmul.f32 %v3704, 1.442695
  %v3706 = vpow.pop %v3705
  %v3707 = vadd.f32 %v3706, 1.0
  %v3708 = vrcp.pop %v3707
  %v3709 = vmul.f32 %v3707, %v3708
  %v3710 = vsub.f32 1.0, %v3709
  %v3711 = vmul.f32 %v3708, %v3710
  %v3712 = vadd.f32 %v3708, %v3711
  %vm3713 = vweird.f32 %v3707
  %vm3714 = vweird.f32 %v3708
  %vm3715 = vmor %vm3713, %vm3714
  %v3716 = vsel %vm3715, %v3708, %v3712
  %v3717 = vand.u32 2147483647, %v3707
  %vm3718 = vcmp.eq.f32.partialorder %v3717, 8.507059e+37
  %v3719 = vand.u32 %v3707, 2147483648
  %v3720 = vor.u32 1.1754944e-38, %v3719
  %v3721 = vsel %vm3718, %v3720, %v3716
  %v3722 = vmul.f32 1.0, %v3721
  %v3723 = vadd.f32 %v3658, %v3701
  %v3724 = vxor.u32 %v3723, 2147483648
  %v3725 = vmul.f32 %v3724, 1.442695
  %v3726 = vpow.pop %v3725
  %v3727 = vadd.f32 %v3726, 1.0
  %v3728 = vrcp.pop %v3727
  %v3729 = vmul.f32 %v3727, %v3728
  %v3730 = vsub.f32 1.0, %v3729
  %v3731 = vmul.f32 %v3728, %v3730
  %v3732 = vadd.f32 %v3728, %v3731
  %vm3733 = vweird.f32 %v3727
  %vm3734 = vweird.f32 %v3728
  %vm3735 = vmor %vm3733, %vm3734
  %v3736 = vsel %vm3735, %v3728, %v3732
  %v3737 = vand.u32 2147483647, %v3727
  %vm3738 = vcmp.eq.f32.partialorder %v3737, 8.507059e+37
  %v3739 = vand.u32 %v3727, 2147483648
  %v3740 = vor.u32 1.1754944e-38, %v3739
  %v3741 = vsel %vm3738, %v3740, %v3736
  %v3742 = vmul.f32 1.0, %v3741
  %3743 = vmatpush.msra.mxu0 0.0
  %3744 = vmatpush.msra.mxu0 0.0
  %3745 = vmatpush.msra.mxu0 0.0
  %3746 = vmatpush.msra.mxu0 0.0
  %3747 = vmatpush.msra.mxu0 0.0
  %3748 = vmatpush.msra.mxu0 0.0
  %3749 = vmatpush.msra.mxu0 0.0
  %3750 = vmatpush.msra.mxu0 0.0
  %3751 = vmatpush.msra.mxu0 0.0
  %3752 = vmatpush.msra.mxu0 0.0
  %3753 = vmatpush.msra.mxu0 0.0
  %3754 = vmatpush.msra.mxu0 0.0
  %3755 = vmatpush.msra.mxu0 %v2751
  %3756 = vmatpush.msra.mxu0 %v2750
  %3757 = vmatpush.msra.mxu0 %v2749
  %3758 = vmatpush.msra.mxu0 %v2748
  %3759 = vmatmul.f32.gmra.mxu0 %v3661
  %v3760 = vpop.f32.mrf.mxu0
  %v3761 = vadd.f32 %v2754, %v3760
  %3762 = vdwg.mxu0
  %v3763 = vmul.f32 %v3722, %v3761
  %v3764 = vadd.f32 %v3659, %v3763
  %v3765 = vtanh.pop %v3764
  %v3766 = vsub.f32 1.0, %v3742
  %v3767 = vmul.f32 %v3766, %v3765
  %v3768 = vmul.f32 %v3742, %v3656
  %v3769 = vadd.f32 %v3767, %v3768
  %v3770 = vld [vmem:[%s1534] sm:$0x3]
  %v3771 = vld [vmem:[%s1536] sm:$0x3]
  %v3772 = vld [vmem:[%s1538] sm:$0x3]
  %v3774 = vsel %vm478, %v3769, 0
  %3776 = vmatpush.msra.mxu0 0.0
  %3777 = vmatpush.msra.mxu0 0.0
  %3778 = vmatpush.msra.mxu0 0.0
  %3779 = vmatpush.msra.mxu0 0.0
  %3780 = vmatpush.msra.mxu0 0.0
  %3781 = vmatpush.msra.mxu0 0.0
  %3782 = vmatpush.msra.mxu0 0.0
  %3783 = vmatpush.msra.mxu0 0.0
  %3784 = vmatpush.msra.mxu0 0.0
  %3785 = vmatpush.msra.mxu0 0.0
  %3786 = vmatpush.msra.mxu0 0.0
  %3787 = vmatpush.msra.mxu0 0.0
  %3788 = vmatpush.msra.mxu0 %v2743
  %3789 = vmatpush.msra.mxu0 %v2742
  %3790 = vmatpush.msra.mxu0 %v2741
  %3791 = vmatpush.msra.mxu0 %v2740
  %3792 = vmatmul.f32.gmra.mxu0 %v3774
  %v3793 = vpop.f32.mrf.mxu0
  %v3794 = vadd.f32 0.0, %v3793
  %3795 = vdwg.mxu0
  %3796 = vmatpush.msra.mxu0 0.0
  %3797 = vmatpush.msra.mxu0 0.0
  %3798 = vmatpush.msra.mxu0 0.0
  %3799 = vmatpush.msra.mxu0 0.0
  %3800 = vmatpush.msra.mxu0 0.0
  %3801 = vmatpush.msra.mxu0 0.0
  %3802 = vmatpush.msra.mxu0 0.0
  %3803 = vmatpush.msra.mxu0 0.0
  %3804 = vmatpush.msra.mxu0 0.0
  %3805 = vmatpush.msra.mxu0 0.0
  %3806 = vmatpush.msra.mxu0 0.0
  %3807 = vmatpush.msra.mxu0 0.0
  %3808 = vmatpush.msra.mxu0 %v2747
  %3809 = vmatpush.msra.mxu0 %v2746
  %3810 = vmatpush.msra.mxu0 %v2745
  %3811 = vmatpush.msra.mxu0 %v2744
  %3812 = vmatmul.f32.gmra.mxu0 %v3774
  %v3813 = vpop.f32.mrf.mxu0
  %v3814 = vadd.f32 0.0, %v3813
  %3815 = vdwg.mxu0
  %v3816 = vadd.f32 %v3770, %v3794
  %v3817 = vxor.u32 %v3816, 2147483648
  %v3818 = vmul.f32 %v3817, 1.442695
  %v3819 = vpow.pop %v3818
  %v3820 = vadd.f32 %v3819, 1.0
  %v3821 = vrcp.pop %v3820
  %v3822 = vmul.f32 %v3820, %v3821
  %v3823 = vsub.f32 1.0, %v3822
  %v3824 = vmul.f32 %v3821, %v3823
  %v3825 = vadd.f32 %v3821, %v3824
  %vm3826 = vweird.f32 %v3820
  %vm3827 = vweird.f32 %v3821
  %vm3828 = vmor %vm3826, %vm3827
  %v3829 = vsel %vm3828, %v3821, %v3825
  %v3830 = vand.u32 2147483647, %v3820
  %vm3831 = vcmp.eq.f32.partialorder %v3830, 8.507059e+37
  %v3832 = vand.u32 %v3820, 2147483648
  %v3833 = vor.u32 1.1754944e-38, %v3832
  %v3834 = vsel %vm3831, %v3833, %v3829
  %v3835 = vmul.f32 1.0, %v3834
  %v3836 = vadd.f32 %v3771, %v3814
  %v3837 = vxor.u32 %v3836, 2147483648
  %v3838 = vmul.f32 %v3837, 1.442695
  %v3839 = vpow.pop %v3838
  %v3840 = vadd.f32 %v3839, 1.0
  %v3841 = vrcp.pop %v3840
  %v3842 = vmul.f32 %v3840, %v3841
  %v3843 = vsub.f32 1.0, %v3842
  %v3844 = vmul.f32 %v3841, %v3843
  %v3845 = vadd.f32 %v3841, %v3844
  %vm3846 = vweird.f32 %v3840
  %vm3847 = vweird.f32 %v3841
  %vm3848 = vmor %vm3846, %vm3847
  %v3849 = vsel %vm3848, %v3841, %v3845
  %v3850 = vand.u32 2147483647, %v3840
  %vm3851 = vcmp.eq.f32.partialorder %v3850, 8.507059e+37
  %v3852 = vand.u32 %v3840, 2147483648
  %v3853 = vor.u32 1.1754944e-38, %v3852
  %v3854 = vsel %vm3851, %v3853, %v3849
  %v3855 = vmul.f32 1.0, %v3854
  %3856 = vmatpush.msra.mxu0 0.0
  %3857 = vmatpush.msra.mxu0 0.0
  %3858 = vmatpush.msra.mxu0 0.0
  %3859 = vmatpush.msra.mxu0 0.0
  %3860 = vmatpush.msra.mxu0 0.0
  %3861 = vmatpush.msra.mxu0 0.0
  %3862 = vmatpush.msra.mxu0 0.0
  %3863 = vmatpush.msra.mxu0 0.0
  %3864 = vmatpush.msra.mxu0 0.0
  %3865 = vmatpush.msra.mxu0 0.0
  %3866 = vmatpush.msra.mxu0 0.0
  %3867 = vmatpush.msra.mxu0 0.0
  %3868 = vmatpush.msra.mxu0 %v2751
  %3869 = vmatpush.msra.mxu0 %v2750
  %3870 = vmatpush.msra.mxu0 %v2749
  %3871 = vmatpush.msra.mxu0 %v2748
  %3872 = vmatmul.f32.gmra.mxu0 %v3774
  %v3873 = vpop.f32.mrf.mxu0
  %v3874 = vadd.f32 %v2754, %v3873
  %3875 = vdwg.mxu0
  %v3876 = vmul.f32 %v3835, %v3874
  %v3877 = vadd.f32 %v3772, %v3876
  %v3878 = vtanh.pop %v3877
  %v3879 = vsub.f32 1.0, %v3855
  %v3880 = vmul.f32 %v3879, %v3878
  %v3881 = vmul.f32 %v3855, %v3769
  %v3882 = vadd.f32 %v3880, %v3881
  %v3883 = vld [vmem:[%s1652] sm:$0x3]
  %v3884 = vld [vmem:[%s1654] sm:$0x3]
  %v3885 = vld [vmem:[%s1656] sm:$0x3]
  %v3887 = vsel %vm478, %v3882, 0
  %3889 = vmatpush.msra.mxu0 0.0
  %3890 = vmatpush.msra.mxu0 0.0
  %3891 = vmatpush.msra.mxu0 0.0
  %3892 = vmatpush.msra.mxu0 0.0
  %3893 = vmatpush.msra.mxu0 0.0
  %3894 = vmatpush.msra.mxu0 0.0
  %3895 = vmatpush.msra.mxu0 0.0
  %3896 = vmatpush.msra.mxu0 0.0
  %3897 = vmatpush.msra.mxu0 0.0
  %3898 = vmatpush.msra.mxu0 0.0
  %3899 = vmatpush.msra.mxu0 0.0
  %3900 = vmatpush.msra.mxu0 0.0
  %3901 = vmatpush.msra.mxu0 %v2743
  %3902 = vmatpush.msra.mxu0 %v2742
  %3903 = vmatpush.msra.mxu0 %v2741
  %3904 = vmatpush.msra.mxu0 %v2740
  %3905 = vmatmul.f32.gmra.mxu0 %v3887
  %v3906 = vpop.f32.mrf.mxu0
  %v3907 = vadd.f32 0.0, %v3906
  %3908 = vdwg.mxu0
  %3909 = vmatpush.msra.mxu0 0.0
  %3910 = vmatpush.msra.mxu0 0.0
  %3911 = vmatpush.msra.mxu0 0.0
  %3912 = vmatpush.msra.mxu0 0.0
  %3913 = vmatpush.msra.mxu0 0.0
  %3914 = vmatpush.msra.mxu0 0.0
  %3915 = vmatpush.msra.mxu0 0.0
  %3916 = vmatpush.msra.mxu0 0.0
  %3917 = vmatpush.msra.mxu0 0.0
  %3918 = vmatpush.msra.mxu0 0.0
  %3919 = vmatpush.msra.mxu0 0.0
  %3920 = vmatpush.msra.mxu0 0.0
  %3921 = vmatpush.msra.mxu0 %v2747
  %3922 = vmatpush.msra.mxu0 %v2746
  %3923 = vmatpush.msra.mxu0 %v2745
  %3924 = vmatpush.msra.mxu0 %v2744
  %3925 = vmatmul.f32.gmra.mxu0 %v3887
  %v3926 = vpop.f32.mrf.mxu0
  %v3927 = vadd.f32 0.0, %v3926
  %3928 = vdwg.mxu0
  %v3929 = vadd.f32 %v3883, %v3907
  %v3930 = vxor.u32 %v3929, 2147483648
  %v3931 = vmul.f32 %v3930, 1.442695
  %v3932 = vpow.pop %v3931
  %v3933 = vadd.f32 %v3932, 1.0
  %v3934 = vrcp.pop %v3933
  %v3935 = vmul.f32 %v3933, %v3934
  %v3936 = vsub.f32 1.0, %v3935
  %v3937 = vmul.f32 %v3934, %v3936
  %v3938 = vadd.f32 %v3934, %v3937
  %vm3939 = vweird.f32 %v3933
  %vm3940 = vweird.f32 %v3934
  %vm3941 = vmor %vm3939, %vm3940
  %v3942 = vsel %vm3941, %v3934, %v3938
  %v3943 = vand.u32 2147483647, %v3933
  %vm3944 = vcmp.eq.f32.partialorder %v3943, 8.507059e+37
  %v3945 = vand.u32 %v3933, 2147483648
  %v3946 = vor.u32 1.1754944e-38, %v3945
  %v3947 = vsel %vm3944, %v3946, %v3942
  %v3948 = vmul.f32 1.0, %v3947
  %v3949 = vadd.f32 %v3884, %v3927
  %v3950 = vxor.u32 %v3949, 2147483648
  %v3951 = vmul.f32 %v3950, 1.442695
  %v3952 = vpow.pop %v3951
  %v3953 = vadd.f32 %v3952, 1.0
  %v3954 = vrcp.pop %v3953
  %v3955 = vmul.f32 %v3953, %v3954
  %v3956 = vsub.f32 1.0, %v3955
  %v3957 = vmul.f32 %v3954, %v3956
  %v3958 = vadd.f32 %v3954, %v3957
  %vm3959 = vweird.f32 %v3953
  %vm3960 = vweird.f32 %v3954
  %vm3961 = vmor %vm3959, %vm3960
  %v3962 = vsel %vm3961, %v3954, %v3958
  %v3963 = vand.u32 2147483647, %v3953
  %vm3964 = vcmp.eq.f32.partialorder %v3963, 8.507059e+37
  %v3965 = vand.u32 %v3953, 2147483648
  %v3966 = vor.u32 1.1754944e-38, %v3965
  %v3967 = vsel %vm3964, %v3966, %v3962
  %v3968 = vmul.f32 1.0, %v3967
  %3969 = vmatpush.msra.mxu0 0.0
  %3970 = vmatpush.msra.mxu0 0.0
  %3971 = vmatpush.msra.mxu0 0.0
  %3972 = vmatpush.msra.mxu0 0.0
  %3973 = vmatpush.msra.mxu0 0.0
  %3974 = vmatpush.msra.mxu0 0.0
  %3975 = vmatpush.msra.mxu0 0.0
  %3976 = vmatpush.msra.mxu0 0.0
  %3977 = vmatpush.msra.mxu0 0.0
  %3978 = vmatpush.msra.mxu0 0.0
  %3979 = vmatpush.msra.mxu0 0.0
  %3980 = vmatpush.msra.mxu0 0.0
  %3981 = vmatpush.msra.mxu0 %v2751
  %3982 = vmatpush.msra.mxu0 %v2750
  %3983 = vmatpush.msra.mxu0 %v2749
  %3984 = vmatpush.msra.mxu0 %v2748
  %3985 = vmatmul.f32.gmra.mxu0 %v3887
  %v3986 = vpop.f32.mrf.mxu0
  %v3987 = vadd.f32 %v2754, %v3986
  %3988 = vdwg.mxu0
  %v3989 = vmul.f32 %v3948, %v3987
  %v3990 = vadd.f32 %v3885, %v3989
  %v3991 = vtanh.pop %v3990
  %v3992 = vsub.f32 1.0, %v3968
  %v3993 = vmul.f32 %v3992, %v3991
  %v3994 = vmul.f32 %v3968, %v3882
  %v3995 = vadd.f32 %v3993, %v3994
  %v3996 = vld [vmem:[%s1770] sm:$0x3]
  %v3997 = vld [vmem:[%s1772] sm:$0x3]
  %v3998 = vld [vmem:[%s1774] sm:$0x3]
  %v4000 = vsel %vm478, %v3995, 0
  %4002 = vmatpush.msra.mxu0 0.0
  %4003 = vmatpush.msra.mxu0 0.0
  %4004 = vmatpush.msra.mxu0 0.0
  %4005 = vmatpush.msra.mxu0 0.0
  %4006 = vmatpush.msra.mxu0 0.0
  %4007 = vmatpush.msra.mxu0 0.0
  %4008 = vmatpush.msra.mxu0 0.0
  %4009 = vmatpush.msra.mxu0 0.0
  %4010 = vmatpush.msra.mxu0 0.0
  %4011 = vmatpush.msra.mxu0 0.0
  %4012 = vmatpush.msra.mxu0 0.0
  %4013 = vmatpush.msra.mxu0 0.0
  %4014 = vmatpush.msra.mxu0 %v2743
  %4015 = vmatpush.msra.mxu0 %v2742
  %4016 = vmatpush.msra.mxu0 %v2741
  %4017 = vmatpush.msra.mxu0 %v2740
  %4018 = vmatmul.f32.gmra.mxu0 %v4000
  %v4019 = vpop.f32.mrf.mxu0
  %v4020 = vadd.f32 0.0, %v4019
  %4021 = vdwg.mxu0
  %4022 = vmatpush.msra.mxu0 0.0
  %4023 = vmatpush.msra.mxu0 0.0
  %4024 = vmatpush.msra.mxu0 0.0
  %4025 = vmatpush.msra.mxu0 0.0
  %4026 = vmatpush.msra.mxu0 0.0
  %4027 = vmatpush.msra.mxu0 0.0
  %4028 = vmatpush.msra.mxu0 0.0
  %4029 = vmatpush.msra.mxu0 0.0
  %4030 = vmatpush.msra.mxu0 0.0
  %4031 = vmatpush.msra.mxu0 0.0
  %4032 = vmatpush.msra.mxu0 0.0
  %4033 = vmatpush.msra.mxu0 0.0
  %4034 = vmatpush.msra.mxu0 %v2747
  %4035 = vmatpush.msra.mxu0 %v2746
  %4036 = vmatpush.msra.mxu0 %v2745
  %4037 = vmatpush.msra.mxu0 %v2744
  %4038 = vmatmul.f32.gmra.mxu0 %v4000
  %v4039 = vpop.f32.mrf.mxu0
  %v4040 = vadd.f32 0.0, %v4039
  %4041 = vdwg.mxu0
  %v4042 = vadd.f32 %v3996, %v4020
  %v4043 = vxor.u32 %v4042, 2147483648
  %v4044 = vmul.f32 %v4043, 1.442695
  %v4045 = vpow.pop %v4044
  %v4046 = vadd.f32 %v4045, 1.0
  %v4047 = vrcp.pop %v4046
  %v4048 = vmul.f32 %v4046, %v4047
  %v4049 = vsub.f32 1.0, %v4048
  %v4050 = vmul.f32 %v4047, %v4049
  %v4051 = vadd.f32 %v4047, %v4050
  %vm4052 = vweird.f32 %v4046
  %vm4053 = vweird.f32 %v4047
  %vm4054 = vmor %vm4052, %vm4053
  %v4055 = vsel %vm4054, %v4047, %v4051
  %v4056 = vand.u32 2147483647, %v4046
  %vm4057 = vcmp.eq.f32.partialorder %v4056, 8.507059e+37
  %v4058 = vand.u32 %v4046, 2147483648
  %v4059 = vor.u32 1.1754944e-38, %v4058
  %v4060 = vsel %vm4057, %v4059, %v4055
  %v4061 = vmul.f32 1.0, %v4060
  %v4062 = vadd.f32 %v3997, %v4040
  %v4063 = vxor.u32 %v4062, 2147483648
  %v4064 = vmul.f32 %v4063, 1.442695
  %v4065 = vpow.pop %v4064
  %v4066 = vadd.f32 %v4065, 1.0
  %v4067 = vrcp.pop %v4066
  %v4068 = vmul.f32 %v4066, %v4067
  %v4069 = vsub.f32 1.0, %v4068
  %v4070 = vmul.f32 %v4067, %v4069
  %v4071 = vadd.f32 %v4067, %v4070
  %vm4072 = vweird.f32 %v4066
  %vm4073 = vweird.f32 %v4067
  %vm4074 = vmor %vm4072, %vm4073
  %v4075 = vsel %vm4074, %v4067, %v4071
  %v4076 = vand.u32 2147483647, %v4066
  %vm4077 = vcmp.eq.f32.partialorder %v4076, 8.507059e+37
  %v4078 = vand.u32 %v4066, 2147483648
  %v4079 = vor.u32 1.1754944e-38, %v4078
  %v4080 = vsel %vm4077, %v4079, %v4075
  %v4081 = vmul.f32 1.0, %v4080
  %4082 = vmatpush.msra.mxu0 0.0
  %4083 = vmatpush.msra.mxu0 0.0
  %4084 = vmatpush.msra.mxu0 0.0
  %4085 = vmatpush.msra.mxu0 0.0
  %4086 = vmatpush.msra.mxu0 0.0
  %4087 = vmatpush.msra.mxu0 0.0
  %4088 = vmatpush.msra.mxu0 0.0
  %4089 = vmatpush.msra.mxu0 0.0
  %4090 = vmatpush.msra.mxu0 0.0
  %4091 = vmatpush.msra.mxu0 0.0
  %4092 = vmatpush.msra.mxu0 0.0
  %4093 = vmatpush.msra.mxu0 0.0
  %4094 = vmatpush.msra.mxu0 %v2751
  %4095 = vmatpush.msra.mxu0 %v2750
  %4096 = vmatpush.msra.mxu0 %v2749
  %4097 = vmatpush.msra.mxu0 %v2748
  %4098 = vmatmul.f32.gmra.mxu0 %v4000
  %v4099 = vpop.f32.mrf.mxu0
  %v4100 = vadd.f32 %v2754, %v4099
  %4101 = vdwg.mxu0
  %v4102 = vmul.f32 %v4061, %v4100
  %v4103 = vadd.f32 %v3998, %v4102
  %v4104 = vtanh.pop %v4103
  %v4105 = vsub.f32 1.0, %v4081
  %v4106 = vmul.f32 %v4105, %v4104
  %v4107 = vmul.f32 %v4081, %v3995
  %v4108 = vadd.f32 %v4106, %v4107
  %v4109 = vld [vmem:[%s1888] sm:$0x3]
  %v4110 = vld [vmem:[%s1890] sm:$0x3]
  %v4111 = vld [vmem:[%s1892] sm:$0x3]
  %v4113 = vsel %vm478, %v4108, 0
  %4115 = vmatpush.msra.mxu0 0.0
  %4116 = vmatpush.msra.mxu0 0.0
  %4117 = vmatpush.msra.mxu0 0.0
  %4118 = vmatpush.msra.mxu0 0.0
  %4119 = vmatpush.msra.mxu0 0.0
  %4120 = vmatpush.msra.mxu0 0.0
  %4121 = vmatpush.msra.mxu0 0.0
  %4122 = vmatpush.msra.mxu0 0.0
  %4123 = vmatpush.msra.mxu0 0.0
  %4124 = vmatpush.msra.mxu0 0.0
  %4125 = vmatpush.msra.mxu0 0.0
  %4126 = vmatpush.msra.mxu0 0.0
  %4127 = vmatpush.msra.mxu0 %v2743
  %4128 = vmatpush.msra.mxu0 %v2742
  %4129 = vmatpush.msra.mxu0 %v2741
  %4130 = vmatpush.msra.mxu0 %v2740
  %4131 = vmatmul.f32.gmra.mxu0 %v4113
  %v4132 = vpop.f32.mrf.mxu0
  %v4133 = vadd.f32 0.0, %v4132
  %4134 = vdwg.mxu0
  %4135 = vmatpush.msra.mxu0 0.0
  %4136 = vmatpush.msra.mxu0 0.0
  %4137 = vmatpush.msra.mxu0 0.0
  %4138 = vmatpush.msra.mxu0 0.0
  %4139 = vmatpush.msra.mxu0 0.0
  %4140 = vmatpush.msra.mxu0 0.0
  %4141 = vmatpush.msra.mxu0 0.0
  %4142 = vmatpush.msra.mxu0 0.0
  %4143 = vmatpush.msra.mxu0 0.0
  %4144 = vmatpush.msra.mxu0 0.0
  %4145 = vmatpush.msra.mxu0 0.0
  %4146 = vmatpush.msra.mxu0 0.0
  %4147 = vmatpush.msra.mxu0 %v2747
  %4148 = vmatpush.msra.mxu0 %v2746
  %4149 = vmatpush.msra.mxu0 %v2745
  %4150 = vmatpush.msra.mxu0 %v2744
  %4151 = vmatmul.f32.gmra.mxu0 %v4113
  %v4152 = vpop.f32.mrf.mxu0
  %v4153 = vadd.f32 0.0, %v4152
  %4154 = vdwg.mxu0
  %v4155 = vadd.f32 %v4109, %v4133
  %v4156 = vxor.u32 %v4155, 2147483648
  %v4157 = vmul.f32 %v4156, 1.442695
  %v4158 = vpow.pop %v4157
  %v4159 = vadd.f32 %v4158, 1.0
  %v4160 = vrcp.pop %v4159
  %v4161 = vmul.f32 %v4159, %v4160
  %v4162 = vsub.f32 1.0, %v4161
  %v4163 = vmul.f32 %v4160, %v4162
  %v4164 = vadd.f32 %v4160, %v4163
  %vm4165 = vweird.f32 %v4159
  %vm4166 = vweird.f32 %v4160
  %vm4167 = vmor %vm4165, %vm4166
  %v4168 = vsel %vm4167, %v4160, %v4164
  %v4169 = vand.u32 2147483647, %v4159
  %vm4170 = vcmp.eq.f32.partialorder %v4169, 8.507059e+37
  %v4171 = vand.u32 %v4159, 2147483648
  %v4172 = vor.u32 1.1754944e-38, %v4171
  %v4173 = vsel %vm4170, %v4172, %v4168
  %v4174 = vmul.f32 1.0, %v4173
  %v4175 = vadd.f32 %v4110, %v4153
  %v4176 = vxor.u32 %v4175, 2147483648
  %v4177 = vmul.f32 %v4176, 1.442695
  %v4178 = vpow.pop %v4177
  %v4179 = vadd.f32 %v4178, 1.0
  %v4180 = vrcp.pop %v4179
  %v4181 = vmul.f32 %v4179, %v4180
  %v4182 = vsub.f32 1.0, %v4181
  %v4183 = vmul.f32 %v4180, %v4182
  %v4184 = vadd.f32 %v4180, %v4183
  %vm4185 = vweird.f32 %v4179
  %vm4186 = vweird.f32 %v4180
  %vm4187 = vmor %vm4185, %vm4186
  %v4188 = vsel %vm4187, %v4180, %v4184
  %v4189 = vand.u32 2147483647, %v4179
  %vm4190 = vcmp.eq.f32.partialorder %v4189, 8.507059e+37
  %v4191 = vand.u32 %v4179, 2147483648
  %v4192 = vor.u32 1.1754944e-38, %v4191
  %v4193 = vsel %vm4190, %v4192, %v4188
  %v4194 = vmul.f32 1.0, %v4193
  %4195 = vmatpush.msra.mxu0 0.0
  %4196 = vmatpush.msra.mxu0 0.0
  %4197 = vmatpush.msra.mxu0 0.0
  %4198 = vmatpush.msra.mxu0 0.0
  %4199 = vmatpush.msra.mxu0 0.0
  %4200 = vmatpush.msra.mxu0 0.0
  %4201 = vmatpush.msra.mxu0 0.0
  %4202 = vmatpush.msra.mxu0 0.0
  %4203 = vmatpush.msra.mxu0 0.0
  %4204 = vmatpush.msra.mxu0 0.0
  %4205 = vmatpush.msra.mxu0 0.0
  %4206 = vmatpush.msra.mxu0 0.0
  %4207 = vmatpush.msra.mxu0 %v2751
  %4208 = vmatpush.msra.mxu0 %v2750
  %4209 = vmatpush.msra.mxu0 %v2749
  %4210 = vmatpush.msra.mxu0 %v2748
  %4211 = vmatmul.f32.gmra.mxu0 %v4113
  %v4212 = vpop.f32.mrf.mxu0
  %v4213 = vadd.f32 %v2754, %v4212
  %4214 = vdwg.mxu0
  %v4215 = vmul.f32 %v4174, %v4213
  %v4216 = vadd.f32 %v4111, %v4215
  %v4217 = vtanh.pop %v4216
  %v4218 = vsub.f32 1.0, %v4194
  %v4219 = vmul.f32 %v4218, %v4217
  %v4220 = vmul.f32 %v4194, %v4108
  %v4221 = vadd.f32 %v4219, %v4220
  %v4222 = vld [vmem:[%s2006] sm:$0x3]
  %v4223 = vld [vmem:[%s2008] sm:$0x3]
  %v4224 = vld [vmem:[%s2010] sm:$0x3]
  %v4226 = vsel %vm478, %v4221, 0
  %4228 = vmatpush.msra.mxu0 0.0
  %4229 = vmatpush.msra.mxu0 0.0
  %4230 = vmatpush.msra.mxu0 0.0
  %4231 = vmatpush.msra.mxu0 0.0
  %4232 = vmatpush.msra.mxu0 0.0
  %4233 = vmatpush.msra.mxu0 0.0
  %4234 = vmatpush.msra.mxu0 0.0
  %4235 = vmatpush.msra.mxu0 0.0
  %4236 = vmatpush.msra.mxu0 0.0
  %4237 = vmatpush.msra.mxu0 0.0
  %4238 = vmatpush.msra.mxu0 0.0
  %4239 = vmatpush.msra.mxu0 0.0
  %4240 = vmatpush.msra.mxu0 %v2743
  %4241 = vmatpush.msra.mxu0 %v2742
  %4242 = vmatpush.msra.mxu0 %v2741
  %4243 = vmatpush.msra.mxu0 %v2740
  %4244 = vmatmul.f32.gmra.mxu0 %v4226
  %v4245 = vpop.f32.mrf.mxu0
  %v4246 = vadd.f32 0.0, %v4245
  %4247 = vdwg.mxu0
  %4248 = vmatpush.msra.mxu0 0.0
  %4249 = vmatpush.msra.mxu0 0.0
  %4250 = vmatpush.msra.mxu0 0.0
  %4251 = vmatpush.msra.mxu0 0.0
  %4252 = vmatpush.msra.mxu0 0.0
  %4253 = vmatpush.msra.mxu0 0.0
  %4254 = vmatpush.msra.mxu0 0.0
  %4255 = vmatpush.msra.mxu0 0.0
  %4256 = vmatpush.msra.mxu0 0.0
  %4257 = vmatpush.msra.mxu0 0.0
  %4258 = vmatpush.msra.mxu0 0.0
  %4259 = vmatpush.msra.mxu0 0.0
  %4260 = vmatpush.msra.mxu0 %v2747
  %4261 = vmatpush.msra.mxu0 %v2746
  %4262 = vmatpush.msra.mxu0 %v2745
  %4263 = vmatpush.msra.mxu0 %v2744
  %4264 = vmatmul.f32.gmra.mxu0 %v4226
  %v4265 = vpop.f32.mrf.mxu0
  %v4266 = vadd.f32 0.0, %v4265
  %4267 = vdwg.mxu0
  %v4268 = vadd.f32 %v4222, %v4246
  %v4269 = vxor.u32 %v4268, 2147483648
  %v4270 = vmul.f32 %v4269, 1.442695
  %v4271 = vpow.pop %v4270
  %v4272 = vadd.f32 %v4271, 1.0
  %v4273 = vrcp.pop %v4272
  %v4274 = vmul.f32 %v4272, %v4273
  %v4275 = vsub.f32 1.0, %v4274
  %v4276 = vmul.f32 %v4273, %v4275
  %v4277 = vadd.f32 %v4273, %v4276
  %vm4278 = vweird.f32 %v4272
  %vm4279 = vweird.f32 %v4273
  %vm4280 = vmor %vm4278, %vm4279
  %v4281 = vsel %vm4280, %v4273, %v4277
  %v4282 = vand.u32 2147483647, %v4272
  %vm4283 = vcmp.eq.f32.partialorder %v4282, 8.507059e+37
  %v4284 = vand.u32 %v4272, 2147483648
  %v4285 = vor.u32 1.1754944e-38, %v4284
  %v4286 = vsel %vm4283, %v4285, %v4281
  %v4287 = vmul.f32 1.0, %v4286
  %v4288 = vadd.f32 %v4223, %v4266
  %v4289 = vxor.u32 %v4288, 2147483648
  %v4290 = vmul.f32 %v4289, 1.442695
  %v4291 = vpow.pop %v4290
  %v4292 = vadd.f32 %v4291, 1.0
  %v4293 = vrcp.pop %v4292
  %v4294 = vmul.f32 %v4292, %v4293
  %v4295 = vsub.f32 1.0, %v4294
  %v4296 = vmul.f32 %v4293, %v4295
  %v4297 = vadd.f32 %v4293, %v4296
  %vm4298 = vweird.f32 %v4292
  %vm4299 = vweird.f32 %v4293
  %vm4300 = vmor %vm4298, %vm4299
  %v4301 = vsel %vm4300, %v4293, %v4297
  %v4302 = vand.u32 2147483647, %v4292
  %vm4303 = vcmp.eq.f32.partialorder %v4302, 8.507059e+37
  %v4304 = vand.u32 %v4292, 2147483648
  %v4305 = vor.u32 1.1754944e-38, %v4304
  %v4306 = vsel %vm4303, %v4305, %v4301
  %v4307 = vmul.f32 1.0, %v4306
  %4308 = vmatpush.msra.mxu0 0.0
  %4309 = vmatpush.msra.mxu0 0.0
  %4310 = vmatpush.msra.mxu0 0.0
  %4311 = vmatpush.msra.mxu0 0.0
  %4312 = vmatpush.msra.mxu0 0.0
  %4313 = vmatpush.msra.mxu0 0.0
  %4314 = vmatpush.msra.mxu0 0.0
  %4315 = vmatpush.msra.mxu0 0.0
  %4316 = vmatpush.msra.mxu0 0.0
  %4317 = vmatpush.msra.mxu0 0.0
  %4318 = vmatpush.msra.mxu0 0.0
  %4319 = vmatpush.msra.mxu0 0.0
  %4320 = vmatpush.msra.mxu0 %v2751
  %4321 = vmatpush.msra.mxu0 %v2750
  %4322 = vmatpush.msra.mxu0 %v2749
  %4323 = vmatpush.msra.mxu0 %v2748
  %4324 = vmatmul.f32.gmra.mxu0 %v4226
  %v4325 = vpop.f32.mrf.mxu0
  %v4326 = vadd.f32 %v2754, %v4325
  %4327 = vdwg.mxu0
  %v4328 = vmul.f32 %v4287, %v4326
  %v4329 = vadd.f32 %v4224, %v4328
  %v4330 = vtanh.pop %v4329
  %v4331 = vsub.f32 1.0, %v4307
  %v4332 = vmul.f32 %v4331, %v4330
  %v4333 = vmul.f32 %v4307, %v4221
  %v4334 = vadd.f32 %v4332, %v4333
  %v4335 = vld [vmem:[%s2124] sm:$0x3]
  %v4336 = vld [vmem:[%s2126] sm:$0x3]
  %v4337 = vld [vmem:[%s2128] sm:$0x3]
  %v4339 = vsel %vm478, %v4334, 0
  %4341 = vmatpush.msra.mxu0 0.0
  %4342 = vmatpush.msra.mxu0 0.0
  %4343 = vmatpush.msra.mxu0 0.0
  %4344 = vmatpush.msra.mxu0 0.0
  %4345 = vmatpush.msra.mxu0 0.0
  %4346 = vmatpush.msra.mxu0 0.0
  %4347 = vmatpush.msra.mxu0 0.0
  %4348 = vmatpush.msra.mxu0 0.0
  %4349 = vmatpush.msra.mxu0 0.0
  %4350 = vmatpush.msra.mxu0 0.0
  %4351 = vmatpush.msra.mxu0 0.0
  %4352 = vmatpush.msra.mxu0 0.0
  %4353 = vmatpush.msra.mxu0 %v2743
  %4354 = vmatpush.msra.mxu0 %v2742
  %4355 = vmatpush.msra.mxu0 %v2741
  %4356 = vmatpush.msra.mxu0 %v2740
  %4357 = vmatmul.f32.gmra.mxu0 %v4339
  %v4358 = vpop.f32.mrf.mxu0
  %v4359 = vadd.f32 0.0, %v4358
  %4360 = vdwg.mxu0
  %4361 = vmatpush.msra.mxu0 0.0
  %4362 = vmatpush.msra.mxu0 0.0
  %4363 = vmatpush.msra.mxu0 0.0
  %4364 = vmatpush.msra.mxu0 0.0
  %4365 = vmatpush.msra.mxu0 0.0
  %4366 = vmatpush.msra.mxu0 0.0
  %4367 = vmatpush.msra.mxu0 0.0
  %4368 = vmatpush.msra.mxu0 0.0
  %4369 = vmatpush.msra.mxu0 0.0
  %4370 = vmatpush.msra.mxu0 0.0
  %4371 = vmatpush.msra.mxu0 0.0
  %4372 = vmatpush.msra.mxu0 0.0
  %4373 = vmatpush.msra.mxu0 %v2747
  %4374 = vmatpush.msra.mxu0 %v2746
  %4375 = vmatpush.msra.mxu0 %v2745
  %4376 = vmatpush.msra.mxu0 %v2744
  %4377 = vmatmul.f32.gmra.mxu0 %v4339
  %v4378 = vpop.f32.mrf.mxu0
  %v4379 = vadd.f32 0.0, %v4378
  %4380 = vdwg.mxu0
  %v4381 = vadd.f32 %v4335, %v4359
  %v4382 = vxor.u32 %v4381, 2147483648
  %v4383 = vmul.f32 %v4382, 1.442695
  %v4384 = vpow.pop %v4383
  %v4385 = vadd.f32 %v4384, 1.0
  %v4386 = vrcp.pop %v4385
  %v4387 = vmul.f32 %v4385, %v4386
  %v4388 = vsub.f32 1.0, %v4387
  %v4389 = vmul.f32 %v4386, %v4388
  %v4390 = vadd.f32 %v4386, %v4389
  %vm4391 = vweird.f32 %v4385
  %vm4392 = vweird.f32 %v4386
  %vm4393 = vmor %vm4391, %vm4392
  %v4394 = vsel %vm4393, %v4386, %v4390
  %v4395 = vand.u32 2147483647, %v4385
  %vm4396 = vcmp.eq.f32.partialorder %v4395, 8.507059e+37
  %v4397 = vand.u32 %v4385, 2147483648
  %v4398 = vor.u32 1.1754944e-38, %v4397
  %v4399 = vsel %vm4396, %v4398, %v4394
  %v4400 = vmul.f32 1.0, %v4399
  %v4401 = vadd.f32 %v4336, %v4379
  %v4402 = vxor.u32 %v4401, 2147483648
  %v4403 = vmul.f32 %v4402, 1.442695
  %v4404 = vpow.pop %v4403
  %v4405 = vadd.f32 %v4404, 1.0
  %v4406 = vrcp.pop %v4405
  %v4407 = vmul.f32 %v4405, %v4406
  %v4408 = vsub.f32 1.0, %v4407
  %v4409 = vmul.f32 %v4406, %v4408
  %v4410 = vadd.f32 %v4406, %v4409
  %vm4411 = vweird.f32 %v4405
  %vm4412 = vweird.f32 %v4406
  %vm4413 = vmor %vm4411, %vm4412
  %v4414 = vsel %vm4413, %v4406, %v4410
  %v4415 = vand.u32 2147483647, %v4405
  %vm4416 = vcmp.eq.f32.partialorder %v4415, 8.507059e+37
  %v4417 = vand.u32 %v4405, 2147483648
  %v4418 = vor.u32 1.1754944e-38, %v4417
  %v4419 = vsel %vm4416, %v4418, %v4414
  %v4420 = vmul.f32 1.0, %v4419
  %4421 = vmatpush.msra.mxu0 0.0
  %4422 = vmatpush.msra.mxu0 0.0
  %4423 = vmatpush.msra.mxu0 0.0
  %4424 = vmatpush.msra.mxu0 0.0
  %4425 = vmatpush.msra.mxu0 0.0
  %4426 = vmatpush.msra.mxu0 0.0
  %4427 = vmatpush.msra.mxu0 0.0
  %4428 = vmatpush.msra.mxu0 0.0
  %4429 = vmatpush.msra.mxu0 0.0
  %4430 = vmatpush.msra.mxu0 0.0
  %4431 = vmatpush.msra.mxu0 0.0
  %4432 = vmatpush.msra.mxu0 0.0
  %4433 = vmatpush.msra.mxu0 %v2751
  %4434 = vmatpush.msra.mxu0 %v2750
  %4435 = vmatpush.msra.mxu0 %v2749
  %4436 = vmatpush.msra.mxu0 %v2748
  %4437 = vmatmul.f32.gmra.mxu0 %v4339
  %v4438 = vpop.f32.mrf.mxu0
  %v4439 = vadd.f32 %v2754, %v4438
  %4440 = vdwg.mxu0
  %v4441 = vmul.f32 %v4400, %v4439
  %v4442 = vadd.f32 %v4337, %v4441
  %v4443 = vtanh.pop %v4442
  %v4444 = vsub.f32 1.0, %v4420
  %v4445 = vmul.f32 %v4444, %v4443
  %v4446 = vmul.f32 %v4420, %v4334
  %v4447 = vadd.f32 %v4445, %v4446
  %v4448 = vld [vmem:[%s2242] sm:$0x3]
  %v4449 = vld [vmem:[%s2244] sm:$0x3]
  %v4450 = vld [vmem:[%s2246] sm:$0x3]
  %v4452 = vsel %vm478, %v4447, 0
  %4454 = vmatpush.msra.mxu0 0.0
  %4455 = vmatpush.msra.mxu0 0.0
  %4456 = vmatpush.msra.mxu0 0.0
  %4457 = vmatpush.msra.mxu0 0.0
  %4458 = vmatpush.msra.mxu0 0.0
  %4459 = vmatpush.msra.mxu0 0.0
  %4460 = vmatpush.msra.mxu0 0.0
  %4461 = vmatpush.msra.mxu0 0.0
  %4462 = vmatpush.msra.mxu0 0.0
  %4463 = vmatpush.msra.mxu0 0.0
  %4464 = vmatpush.msra.mxu0 0.0
  %4465 = vmatpush.msra.mxu0 0.0
  %4466 = vmatpush.msra.mxu0 %v2743
  %4467 = vmatpush.msra.mxu0 %v2742
  %4468 = vmatpush.msra.mxu0 %v2741
  %4469 = vmatpush.msra.mxu0 %v2740
  %4470 = vmatmul.f32.gmra.mxu0 %v4452
  %v4471 = vpop.f32.mrf.mxu0
  %v4472 = vadd.f32 0.0, %v4471
  %4473 = vdwg.mxu0
  %4474 = vmatpush.msra.mxu0 0.0
  %4475 = vmatpush.msra.mxu0 0.0
  %4476 = vmatpush.msra.mxu0 0.0
  %4477 = vmatpush.msra.mxu0 0.0
  %4478 = vmatpush.msra.mxu0 0.0
  %4479 = vmatpush.msra.mxu0 0.0
  %4480 = vmatpush.msra.mxu0 0.0
  %4481 = vmatpush.msra.mxu0 0.0
  %4482 = vmatpush.msra.mxu0 0.0
  %4483 = vmatpush.msra.mxu0 0.0
  %4484 = vmatpush.msra.mxu0 0.0
  %4485 = vmatpush.msra.mxu0 0.0
  %4486 = vmatpush.msra.mxu0 %v2747
  %4487 = vmatpush.msra.mxu0 %v2746
  %4488 = vmatpush.msra.mxu0 %v2745
  %4489 = vmatpush.msra.mxu0 %v2744
  %4490 = vmatmul.f32.gmra.mxu0 %v4452
  %v4491 = vpop.f32.mrf.mxu0
  %v4492 = vadd.f32 0.0, %v4491
  %4493 = vdwg.mxu0
  %v4494 = vadd.f32 %v4448, %v4472
  %v4495 = vxor.u32 %v4494, 2147483648
  %v4496 = vmul.f32 %v4495, 1.442695
  %v4497 = vpow.pop %v4496
  %v4498 = vadd.f32 %v4497, 1.0
  %v4499 = vrcp.pop %v4498
  %v4500 = vmul.f32 %v4498, %v4499
  %v4501 = vsub.f32 1.0, %v4500
  %v4502 = vmul.f32 %v4499, %v4501
  %v4503 = vadd.f32 %v4499, %v4502
  %vm4504 = vweird.f32 %v4498
  %vm4505 = vweird.f32 %v4499
  %vm4506 = vmor %vm4504, %vm4505
  %v4507 = vsel %vm4506, %v4499, %v4503
  %v4508 = vand.u32 2147483647, %v4498
  %vm4509 = vcmp.eq.f32.partialorder %v4508, 8.507059e+37
  %v4510 = vand.u32 %v4498, 2147483648
  %v4511 = vor.u32 1.1754944e-38, %v4510
  %v4512 = vsel %vm4509, %v4511, %v4507
  %v4513 = vmul.f32 1.0, %v4512
  %v4514 = vadd.f32 %v4449, %v4492
  %v4515 = vxor.u32 %v4514, 2147483648
  %v4516 = vmul.f32 %v4515, 1.442695
  %v4517 = vpow.pop %v4516
  %v4518 = vadd.f32 %v4517, 1.0
  %v4519 = vrcp.pop %v4518
  %v4520 = vmul.f32 %v4518, %v4519
  %v4521 = vsub.f32 1.0, %v4520
  %v4522 = vmul.f32 %v4519, %v4521
  %v4523 = vadd.f32 %v4519, %v4522
  %vm4524 = vweird.f32 %v4518
  %vm4525 = vweird.f32 %v4519
  %vm4526 = vmor %vm4524, %vm4525
  %v4527 = vsel %vm4526, %v4519, %v4523
  %v4528 = vand.u32 2147483647, %v4518
  %vm4529 = vcmp.eq.f32.partialorder %v4528, 8.507059e+37
  %v4530 = vand.u32 %v4518, 2147483648
  %v4531 = vor.u32 1.1754944e-38, %v4530
  %v4532 = vsel %vm4529, %v4531, %v4527
  %v4533 = vmul.f32 1.0, %v4532
  %4534 = vmatpush.msra.mxu0 0.0
  %4535 = vmatpush.msra.mxu0 0.0
  %4536 = vmatpush.msra.mxu0 0.0
  %4537 = vmatpush.msra.mxu0 0.0
  %4538 = vmatpush.msra.mxu0 0.0
  %4539 = vmatpush.msra.mxu0 0.0
  %4540 = vmatpush.msra.mxu0 0.0
  %4541 = vmatpush.msra.mxu0 0.0
  %4542 = vmatpush.msra.mxu0 0.0
  %4543 = vmatpush.msra.mxu0 0.0
  %4544 = vmatpush.msra.mxu0 0.0
  %4545 = vmatpush.msra.mxu0 0.0
  %4546 = vmatpush.msra.mxu0 %v2751
  %4547 = vmatpush.msra.mxu0 %v2750
  %4548 = vmatpush.msra.mxu0 %v2749
  %4549 = vmatpush.msra.mxu0 %v2748
  %4550 = vmatmul.f32.gmra.mxu0 %v4452
  %v4551 = vpop.f32.mrf.mxu0
  %v4552 = vadd.f32 %v2754, %v4551
  %4553 = vdwg.mxu0
  %v4554 = vmul.f32 %v4513, %v4552
  %v4555 = vadd.f32 %v4450, %v4554
  %v4556 = vtanh.pop %v4555
  %v4557 = vsub.f32 1.0, %v4533
  %v4558 = vmul.f32 %v4557, %v4556
  %v4559 = vmul.f32 %v4533, %v4447
  %v4560 = vadd.f32 %v4558, %v4559
  %v4561 = vld [vmem:[%s21] sm:$0x1]
  %v4563 = vperm.slane %v4561, 0
  %v4565 = vmul.f32 %v4560, %v4563
  %v4566 = vsel %vm210, %v4565, 0.0
  %4567 = vadd.xlane.f32.xlu0 %v4566
  %v4568 = vpop.xlane.xlu0 %4567
  %v4569 = vld [vmem:[#allocation6] sm:$0x1]
  %v4571 = vperm.slane %v4569, 0
  %v4573 = vadd.f32 %v4568, %v4571
  %vm4574 = vcmask 1024
  %4575 = vst.msk [vmem:[%s23] sm:$0x3] %vm4574, %v4573
  // Predicated region
  $region94: #{gru_model_forward.1} parent=0 // pred_check
    _
  $region95: #{gru_model_forward.1} parent=0 // pred_check_branch
    %4577 = sbr.rel (0) target = $region97
  $region96: #{gru_model_forward.1} parent=0 // pred_region
    _
  $region97: #{gru_model_forward.1} parent=0 // pred_fallthru
    _
  // Predicated region
  $region98: #{gru_model_forward.1} parent=0 // pred_check
    _
  $region99: #{gru_model_forward.1} parent=0 // pred_check_branch
    %4579 = sbr.rel (0) target = $region101
  $region100: #{gru_model_forward.1} parent=0 // pred_region
    _
  $region101: #{gru_model_forward.1} parent=0 // pred_fallthru
    _

</llo_original>
